<compile_context>
chip_gen: v5e
topology: v5e:2x2
jax: 0.10.0
libtpu: 0.0.40
codegen_flags: <defaults>
</compile_context>

<pallas_src>
import functools

import jax
import jax.numpy as jnp
import numpy as np
from jax import lax
from jax.experimental import pallas as pl
from jax.experimental.pallas import tpu as pltpu

_VMEM = pl.BlockSpec(memory_space=pltpu.MemorySpace.VMEM)
_LANES = 128


# --------------------------------------------------------------------------
# Pallas kernels
# --------------------------------------------------------------------------
def _linear_kernel(z_ref, w_ref, b_ref, o_ref):
    """y = z @ w + b (f32).  Tiny: rows = batch, K = latent_dim."""
    o_ref[...] = (
        jnp.dot(z_ref[...], w_ref[...], preferred_element_type=jnp.float32)
        + b_ref[...]
    )


def _channel_stats_kernel(x_ref, s_ref):
    """Per-channel [sum, sum-of-squares] over the rows of one batch item."""
    x = x_ref[0]                                           # (R, C) f32
    s1 = jnp.sum(x, axis=0, keepdims=True)
    s2 = jnp.sum(x * x, axis=0, keepdims=True)
    s_ref[0] = jnp.concatenate([s1, s2], axis=0)           # (2, C)


def _conv_stage_kernel(x_ref, scale_ref, shift_ref, w_ref, *rest,
                       upsample, lrelu_in, out_tanh, has_bias, has_stats):
    """Fused conv stage for one batch item.

    input path : x * scale + shift   (previous BatchNorm, folded in)
                 [-> LeakyReLU(0.2)] [-> nearest x2 upsample along H]
    conv       : 3x3 / pad 1 as 9 shifted bf16 matmuls, f32 accumulate
                 (W was already duplicated + zero-padded by 1 host-side; those
                  pad columns are re-zeroed after the affine so the conv sees
                  true zero padding).
    output     : raw conv result (+ bias + tanh on the last stage) and,
                 optionally, per-channel [sum, sumsq] partials for the next BN.
    """
    idx = 0
    if has_bias:
        b_ref = rest[idx]
        idx += 1
    o_ref = rest[idx]
    idx += 1
    if has_stats:
        stats_ref = rest[idx]

    f32 = jnp.float32
    x = x_ref[0]                                           # (Hin, Wp, Cin) f32
    hin, wp, cin = x.shape
    cout = o_ref.shape[-1]

    # Folded BatchNorm affine of the preceding stage (+ optional LeakyReLU).
    scale = scale_ref[...].reshape(1, 1, cin)
    shift = shift_ref[...].reshape(1, 1, cin)
    x = x * scale + shift
    if lrelu_in:
        x = jnp.where(x >= 0.0, x, 0.2 * x)
    # Re-zero the host-padded border columns (conv zero-pad happens after BN).
    col = lax.broadcasted_iota(jnp.int32, (hin, wp, cin), 1)
    x = jnp.where((col == 0) | (col == wp - 1), 0.0, x)

    # Nearest x2 upsample along H: duplicate rows (layout-trivial reshape).
    if upsample:
        x = jnp.broadcast_to(x[:, None, :, :], (hin, 2, wp, cin))
        x = x.reshape(2 * hin, wp, cin)
    hout = x.shape[0]
    wout = wp - 2

    # Zero-pad along H (leading-dim concat), then 9 shifted-tap bf16 matmuls.
    zrow = jnp.zeros((1, wp, cin), f32)
    xp = jnp.concatenate([zrow, x, zrow], axis=0)          # (Hout+2, Wp, Cin)

    acc = jnp.zeros((hout * wout, cout), f32)
    for ky in range(3):
        for kx in range(3):
            tap = xp[ky:ky + hout, kx:kx + wout, :]        # (Hout, Wout, Cin)
            tap = tap.reshape(hout * wout, cin).astype(jnp.bfloat16)
            acc = acc + jnp.dot(tap, w_ref[ky * 3 + kx],
                                preferred_element_type=f32)

    if has_bias:
        acc = acc + b_ref[...]
    if out_tanh:
        acc = jnp.tanh(acc)
    o_ref[0] = acc

    if has_stats:
        s1 = jnp.sum(acc, axis=0, keepdims=True)
        s2 = jnp.sum(acc * acc, axis=0, keepdims=True)
        stats_ref[0] = jnp.concatenate([s1, s2], axis=0)


# --------------------------------------------------------------------------
# pallas_call wrappers
# --------------------------------------------------------------------------
def linear(z, w, b):
    B = z.shape[0]
    D = w.shape[1]
    return pl.pallas_call(
        _linear_kernel,
        out_shape=jax.ShapeDtypeStruct((B, D), jnp.float32),
        in_specs=[_VMEM, _VMEM, _VMEM],
        out_specs=_VMEM,
    )(z, w, b.reshape(1, -1))


def channel_stats(x3d):
    """x3d: (B, R, C) f32 -> per-item (B, 2, C) [sum, sumsq] partials."""
    B, R, C = x3d.shape
    return pl.pallas_call(
        _channel_stats_kernel,
        grid=(B,),
        out_shape=jax.ShapeDtypeStruct((B, 2, C), jnp.float32),
        in_specs=[pl.BlockSpec((1, R, C), lambda b: (b, 0, 0))],
        out_specs=pl.BlockSpec((1, 2, C), lambda b: (b, 0, 0)),
        compiler_params=pltpu.CompilerParams(dimension_semantics=("parallel",)),
    )(x3d)


def conv_stage(x_nhwc, scale, shift, w9, bias, *, upsample, lrelu_in,
               out_tanh, has_stats):
    """One fused [BN-affine (+LReLU)] -> [up x2] -> conv3x3 stage.

    x_nhwc : (B, Hin, Win, Cin) f32 raw previous-stage output
    w9     : (9, Cin, Cout) bf16 tap-major conv weights (Cout lane-dense)
    returns: (B, Hout*Wout, Cout) f32 raw conv output
             [, (B, 2, Cout) f32 per-item sum/sumsq partials]
    """
    B, Hin, Win, Cin = x_nhwc.shape
    Cout = w9.shape[-1]
    if upsample:
        x_nhwc = jnp.repeat(x_nhwc, 2, axis=2)      # W duplication (cheap glue)
        Hout, Wout = 2 * Hin, 2 * Win
    else:
        Hout, Wout = Hin, Win
    xp = jnp.pad(x_nhwc, ((0, 0), (0, 0), (1, 1), (0, 0)))   # W zero-pad
    Wp = Wout + 2
    Rout = Hout * Wout

    in_specs = [
        pl.BlockSpec((1, Hin, Wp, Cin), lambda b: (b, 0, 0, 0)),
        pl.BlockSpec((1, Cin), lambda b: (0, 0)),          # resident
        pl.BlockSpec((1, Cin), lambda b: (0, 0)),          # resident
        pl.BlockSpec((9, Cin, Cout), lambda b: (0, 0, 0)),  # resident weights
    ]
    args = [xp, scale.reshape(1, -1), shift.reshape(1, -1), w9]
    if bias is not None:
        in_specs.append(pl.BlockSpec((1, Cout), lambda b: (0, 0)))
        args.append(bias.reshape(1, -1))

    out_shape = [jax.ShapeDtypeStruct((B, Rout, Cout), jnp.float32)]
    out_specs = [pl.BlockSpec((1, Rout, Cout), lambda b: (b, 0, 0))]
    if has_stats:
        out_shape.append(jax.ShapeDtypeStruct((B, 2, Cout), jnp.float32))
        out_specs.append(pl.BlockSpec((1, 2, Cout), lambda b: (b, 0, 0)))

    kernel = functools.partial(
        _conv_stage_kernel, upsample=upsample, lrelu_in=lrelu_in,
        out_tanh=out_tanh, has_bias=bias is not None, has_stats=has_stats)

    outs = pl.pallas_call(
        kernel,
        grid=(B,),
        out_shape=tuple(out_shape),
        in_specs=in_specs,
        out_specs=tuple(out_specs),
        compiler_params=pltpu.CompilerParams(dimension_semantics=("parallel",)),
    )(*args)
    return outs if has_stats else outs[0]


def _bn_scale_shift(part_sums, count, gamma, beta, eps):
    """Per-channel affine from [sum, sumsq] partials (tiny, per-channel)."""
    s = part_sums
    if s.ndim == 3:
        s = jnp.sum(s, axis=0)
    mean = s[0] / count
    var = jnp.maximum(s[1] / count - mean * mean, 0.0)
    scale = gamma * lax.rsqrt(var + eps)
    shift = beta - mean * scale
    return scale, shift


# --------------------------------------------------------------------------
# Generator forward (Pallas) and plain-JAX reference
# --------------------------------------------------------------------------
def generator_forward(params, z, *, init_size):
    B = z.shape[0]
    S = init_size
    C = _LANES
    channels = params["c3_w"].shape[0]
    L = params["l1_w"].shape[1]

    # ---- parameter prep (layout-only, tiny) ---------------------------------
    # Linear weight columns pre-permuted so the output is directly NHWC order
    # (removes the NCHW->NHWC transpose of the activation).
    w1p = (params["l1_w"].reshape(C, S * S, L).transpose(1, 0, 2)
           .reshape(S * S * C, L).T)                        # (L, S*S*128)
    b1p = params["l1_b"].reshape(C, S * S).T.reshape(-1)

    wc1 = params["c1_w"].transpose(2, 3, 1, 0).reshape(9, C, C)
    wc1 = wc1.astype(jnp.bfloat16)
    wc2 = params["c2_w"].transpose(2, 3, 1, 0).reshape(9, C, 64)
    wc2 = jnp.pad(wc2, ((0, 0), (0, 0), (0, C - 64))).astype(jnp.bfloat16)
    wc3 = params["c3_w"].transpose(2, 3, 1, 0).reshape(9, 64, channels)
    wc3 = jnp.pad(wc3, ((0, 0), (0, C - 64), (0, C - channels)))
    wc3 = wc3.astype(jnp.bfloat16)
    bc3 = jnp.pad(params["c3_b"], (0, C - channels))
    g3 = jnp.pad(params["bn3_g"], (0, C - 64))   # zero gamma/beta on pad lanes
    be3 = jnp.pad(params["bn3_b"], (0, C - 64))  # -> padded channels stay 0

    # ---- l1: Linear -> (B, S, S, 128) NHWC directly -------------------------
    h = linear(z, w1p, b1p)                                 # (B, S*S*128)
    x0 = h.reshape(B, S, S, C)

    # ---- BatchNorm2d(128) batch stats (Pallas reduction) --------------------
    st0 = channel_stats(h.reshape(B, S * S, C))
    sc1, sh1 = _bn_scale_shift(st0, B * S * S,
                               params["bn1_g"], params["bn1_b"], eps=1e-5)

    # ---- [BN1] -> Up x2 -> Conv1(128->128); bias dropped (cancelled by BN2) -
    y1, st1 = conv_stage(x0, sc1, sh1, wc1, None,
                         upsample=True, lrelu_in=False, out_tanh=False,
                         has_stats=True)
    sc2, sh2 = _bn_scale_shift(st1, B * (2 * S) ** 2,
                               params["bn2_g"], params["bn2_b"], eps=0.8)

    # ---- [BN2 -> LReLU] -> Up x2 -> Conv2(128->64, lane-padded to 128) ------
    x1 = y1.reshape(B, 2 * S, 2 * S, C)
    y2, st2 = conv_stage(x1, sc2, sh2, wc2, None,
                         upsample=True, lrelu_in=True, out_tanh=False,
                         has_stats=True)
    sc3, sh3 = _bn_scale_shift(st2, B * (4 * S) ** 2, g3, be3, eps=0.8)

    # ---- [BN3 -> LReLU] -> Conv3(64->channels, lane-padded) + bias + Tanh ---
    x2 = y2.reshape(B, 4 * S, 4 * S, C)
    y3 = conv_stage(x2, sc3, sh3, wc3, bc3,
                    upsample=False, lrelu_in=True, out_tanh=True,
                    has_stats=False)

    img = y3.reshape(B, 4 * S, 4 * S, C)[..., :channels]
    return img.transpose(0, 3, 1, 2)                        # NCHW, like PyTorch


def reference_forward(params, z, *, init_size):
    B = z.shape[0]
    S = init_size
    h = z @ params["l1_w"].T + params["l1_b"]
    x = h.reshape(B, 128, S, S)

    def bn(x, g, b, eps):
        m = x.mean(axis=(0, 2, 3), keepdims=True)
        v = ((x - m) ** 2).mean(axis=(0, 2, 3), keepdims=True)
        return (x - m) / jnp.sqrt(v + eps) * g.reshape(1, -1, 1, 1) \
            + b.reshape(1, -1, 1, 1)

    def conv(x, w, b):
        y = lax.conv_general_dilated(
            x, w, (1, 1), ((1, 1), (1, 1)),
            dimension_numbers=("NCHW", "OIHW", "NCHW"))
        return y + b.reshape(1, -1, 1, 1)

    up = lambda t: jnp.repeat(jnp.repeat(t, 2, axis=2), 2, axis=3)
    lrelu = lambda t: jnp.where(t >= 0.0, t, 0.2 * t)

    x = bn(x, params["bn1_g"], params["bn1_b"], 1e-5)
    x = up(x)
    x = lrelu(bn(conv(x, params["c1_w"], params["c1_b"]),
                 params["bn2_g"], params["bn2_b"], 0.8))
    x = up(x)
    x = lrelu(bn(conv(x, params["c2_w"], params["c2_b"]),
                 params["bn3_g"], params["bn3_b"], 0.8))
    return jnp.tanh(conv(x, params["c3_w"], params["c3_b"]))


def init_params(key, latent_dim, init_size, channels):
    ks = jax.random.split(key, 16)
    nrm = lambda k, shape, s=0.05: s * jax.random.normal(k, shape, jnp.float32)
    p = {}
    p["l1_w"] = nrm(ks[0], (128 * init_size * init_size, latent_dim))  # (out,in)
    p["l1_b"] = nrm(ks[1], (128 * init_size * init_size,))
    p["bn1_g"] = 1.0 + nrm(ks[2], (128,), 0.1)
    p["bn1_b"] = nrm(ks[3], (128,), 0.1)
    p["c1_w"] = nrm(ks[4], (128, 128, 3, 3))
    p["c1_b"] = nrm(ks[5], (128,))
    p["bn2_g"] = 1.0 + nrm(ks[6], (128,), 0.1)
    p["bn2_b"] = nrm(ks[7], (128,), 0.1)
    p["c2_w"] = nrm(ks[8], (64, 128, 3, 3))
    p["c2_b"] = nrm(ks[9], (64,))
    p["bn3_g"] = 1.0 + nrm(ks[10], (64,), 0.1)
    p["bn3_b"] = nrm(ks[11], (64,), 0.1)
    p["c3_w"] = nrm(ks[12], (channels, 64, 3, 3))
    p["c3_b"] = nrm(ks[13], (channels,))
    return p


if __name__ == "__main__":
    # opt: size=16 -> img_size = size + int(size % 2 == 0) = 17, init_size = 4
    size = 16
    img_size = size + int(size % 2 == 0)
    init_size = img_size // 4
    latent_dim = 32
    channels = 3
    batch = 2

    key = jax.random.PRNGKey(0)
    kp, kz = jax.random.split(key)
    params = init_params(kp, latent_dim, init_size, channels)
    z = jax.random.normal(kz, (batch, latent_dim), jnp.float32)

    fwd = jax.jit(functools.partial(generator_forward, init_size=init_size))
    img = fwd(params, z)
    jax.block_until_ready(img)

    assert img.shape == (batch, channels, 4 * init_size, 4 * init_size), img.shape

    ref = reference_forward(params, z, init_size=init_size)
    # bf16 MXU inputs (f32 accumulate) vs f32 reference -> slightly looser tol.
    np.testing.assert_allclose(np.asarray(img), np.asarray(ref),
                               atol=3e-2, rtol=3e-2)
    print("KERNEL_OK")
</pallas_src>

<mosaic_0001>
module attributes {stable_mosaic.version = 11 : i64} {
  func.func @_linear_kernel(%arg0: memref<2x32xf32, #tpu.memory_space<vmem>>, %arg1: memref<32x2048xf32, #tpu.memory_space<vmem>>, %arg2: memref<1x2048xf32, #tpu.memory_space<vmem>>, %arg3: memref<2x2048xf32, #tpu.memory_space<vmem>>) attributes {dimension_semantics = [], scalar_prefetch = 0 : i64, scratch_operands = 0 : i64, tpu.core_type = #tpu.core_type<tc>} {
    %c0 = arith.constant 0 : index
    %c0_0 = arith.constant 0 : index
    %0 = vector.load %arg0[%c0, %c0_0] : memref<2x32xf32, #tpu.memory_space<vmem>>, vector<2x32xf32>
    %c0_1 = arith.constant 0 : index
    %c0_2 = arith.constant 0 : index
    %1 = vector.load %arg1[%c0_1, %c0_2] : memref<32x2048xf32, #tpu.memory_space<vmem>>, vector<32x2048xf32>
    %cst = arith.constant dense<0.000000e+00> : vector<2x2048xf32>
    %2 = tpu.matmul %0, %1, %cst {dimension_numbers = #tpu.dot_dimension_numbers<[1], [0], [0], [1], [0, 0, 1, 1], [], []>} : vector<2x32xf32>, vector<32x2048xf32>, vector<2x2048xf32> -> vector<2x2048xf32>
    %c0_3 = arith.constant 0 : index
    %c0_4 = arith.constant 0 : index
    %3 = vector.load %arg2[%c0_3, %c0_4] : memref<1x2048xf32, #tpu.memory_space<vmem>>, vector<1x2048xf32>
    %4 = vector.broadcast %3 : vector<1x2048xf32> to vector<2x2048xf32>
    %5 = arith.addf %2, %4 : vector<2x2048xf32>
    %c0_5 = arith.constant 0 : index
    %c0_6 = arith.constant 0 : index
    %6 = vector.load %arg3[%c0_5, %c0_6] : memref<2x2048xf32, #tpu.memory_space<vmem>>, vector<2x2048xf32>
    tpu.vector_store %arg3[%c0_5, %c0_6], %5 {strides = array<i32>} : memref<2x2048xf32, #tpu.memory_space<vmem>>, vector<2x2048xf32>,
    return
  }
}

module attributes {stable_mosaic.version = 11 : i64} {
  func.func @_channel_stats_kernel(%arg0: i32, %arg1: memref<1x16x128xf32, #tpu.memory_space<vmem>>, %arg2: memref<1x2x128xf32, #tpu.memory_space<vmem>>) attributes {dimension_semantics = [#tpu.dimension_semantics<parallel>], iteration_bounds = array<i64: 2>, scalar_prefetch = 0 : i64, scratch_operands = 0 : i64, tpu.core_type = #tpu.core_type<tc>, window_params = [{transform_indices = @transform_0, window_bounds = array<i64: 1, 16, 128>}, {transform_indices = @transform_1, window_bounds = array<i64: 1, 2, 128>}]} {
    %c0 = arith.constant 0 : index
    %c0_0 = arith.constant 0 : index
    %c0_1 = arith.constant 0 : index
    %0 = vector.load %arg1[%c0, %c0_0, %c0_1] : memref<1x16x128xf32, #tpu.memory_space<vmem>>, vector<1x16x128xf32>
    %1 = vector.shape_cast %0 : vector<1x16x128xf32> to vector<16x128xf32>
    %cst = arith.constant dense<0.000000e+00> : vector<128xf32>
    %2 = vector.multi_reduction <add>, %1, %cst [0] : vector<16x128xf32> to vector<128xf32>
    %3 = vector.shape_cast %2 : vector<128xf32> to vector<1x128xf32>
    %4 = arith.mulf %1, %1 : vector<16x128xf32>
    %cst_2 = arith.constant dense<0.000000e+00> : vector<128xf32>
    %5 = vector.multi_reduction <add>, %4, %cst_2 [0] : vector<16x128xf32> to vector<128xf32>
    %6 = vector.shape_cast %5 : vector<128xf32> to vector<1x128xf32>
    %7 = tpu.concatenate %3, %6 in 0 : vector<1x128xf32>, vector<1x128xf32> -> vector<2x128xf32>
    %c0_3 = arith.constant 0 : index
    %c0_4 = arith.constant 0 : index
    %c0_5 = arith.constant 0 : index
    %8 = vector.load %arg2[%c0_3, %c0_4, %c0_5] : memref<1x2x128xf32, #tpu.memory_space<vmem>>, vector<1x2x128xf32>
    %9 = vector.shape_cast %8 : vector<1x2x128xf32> to vector<2x128xf32>
    %10 = vector.shape_cast %7 : vector<2x128xf32> to vector<1x2x128xf32>
    tpu.vector_store %arg2[%c0_3, %c0_4, %c0_5], %10 {strides = array<i32>} : memref<1x2x128xf32, #tpu.memory_space<vmem>>, vector<1x2x128xf32>,
    return
  }
  func.func @transform_0(%arg0: i32) -> (i32, i32, i32) {
    %c0_i32 = arith.constant 0 : i32
    %c0_i32_0 = arith.constant 0 : i32
    %c0_i32_1 = arith.constant 0 : i32
    return %arg0, %c0_i32, %c0_i32_0 : i32, i32, i32
  }
  func.func @transform_1(%arg0: i32) -> (i32, i32, i32) {
    %c0_i32 = arith.constant 0 : i32
    %c0_i32_0 = arith.constant 0 : i32
    %c0_i32_1 = arith.constant 0 : i32
    return %arg0, %c0_i32, %c0_i32_0 : i32, i32, i32
  }
}

module attributes {stable_mosaic.version = 11 : i64} {
  func.func @_conv_stage_kernel(%arg0: i32, %arg1: memref<1x4x10x128xf32, #tpu.memory_space<vmem>>, %arg2: memref<1x128xf32, #tpu.memory_space<vmem>>, %arg3: memref<1x128xf32, #tpu.memory_space<vmem>>, %arg4: memref<9x128x128xbf16, #tpu.memory_space<vmem>>, %arg5: memref<1x64x128xf32, #tpu.memory_space<vmem>>, %arg6: memref<1x2x128xf32, #tpu.memory_space<vmem>>) attributes {dimension_semantics = [#tpu.dimension_semantics<parallel>], iteration_bounds = array<i64: 2>, scalar_prefetch = 0 : i64, scratch_operands = 0 : i64, tpu.core_type = #tpu.core_type<tc>, window_params = [{transform_indices = @transform_0, window_bounds = array<i64: 1, 4, 10, 128>}, {pipeline_mode = #tpu.pipeline_mode<synchronous>, transform_indices = @transform_1, window_bounds = array<i64: 1, 128>}, {pipeline_mode = #tpu.pipeline_mode<synchronous>, transform_indices = @transform_2, window_bounds = array<i64: 1, 128>}, {pipeline_mode = #tpu.pipeline_mode<synchronous>, transform_indices = @transform_3, window_bounds = array<i64: 9, 128, 128>}, {transform_indices = @transform_4, window_bounds = array<i64: 1, 64, 128>}, {transform_indices = @transform_5, window_bounds = array<i64: 1, 2, 128>}]} {
    %c0 = arith.constant 0 : index
    %c0_0 = arith.constant 0 : index
    %c0_1 = arith.constant 0 : index
    %c0_2 = arith.constant 0 : index
    %0 = vector.load %arg1[%c0, %c0_0, %c0_1, %c0_2] : memref<1x4x10x128xf32, #tpu.memory_space<vmem>>, vector<1x4x10x128xf32>
    %1 = vector.shape_cast %0 : vector<1x4x10x128xf32> to vector<4x10x128xf32>
    %c0_3 = arith.constant 0 : index
    %c0_4 = arith.constant 0 : index
    %2 = vector.load %arg2[%c0_3, %c0_4] : memref<1x128xf32, #tpu.memory_space<vmem>>, vector<1x128xf32>
    %3 = vector.shape_cast %2 : vector<1x128xf32> to vector<1x1x128xf32>
    %c0_5 = arith.constant 0 : index
    %c0_6 = arith.constant 0 : index
    %4 = vector.load %arg3[%c0_5, %c0_6] : memref<1x128xf32, #tpu.memory_space<vmem>>, vector<1x128xf32>
    %5 = vector.shape_cast %4 : vector<1x128xf32> to vector<1x1x128xf32>
    %6 = vector.broadcast %3 : vector<1x1x128xf32> to vector<4x10x128xf32>
    %7 = arith.mulf %1, %6 : vector<4x10x128xf32>
    %8 = vector.broadcast %5 : vector<1x1x128xf32> to vector<4x10x128xf32>
    %9 = arith.addf %7, %8 : vector<4x10x128xf32>
    %10 = tpu.iota {dimensions = array<i32: 1>} : vector<4x10x128xi32>
    %c0_i32 = arith.constant 0 : i32
    %11 = vector.broadcast %c0_i32 : i32 to vector<4x10x128xi32>
    %12 = arith.cmpi eq, %10, %11 : vector<4x10x128xi32>
    %c9_i32 = arith.constant 9 : i32
    %13 = vector.broadcast %c9_i32 : i32 to vector<4x10x128xi32>
    %14 = arith.cmpi eq, %10, %13 : vector<4x10x128xi32>
    %15 = arith.ori %12, %14 : vector<4x10x128xi1>
    %cst = arith.constant 0.000000e+00 : f32
    %16 = vector.broadcast %cst : f32 to vector<4x10x128xf32>
    %17 = arith.select %15, %16, %9 : vector<4x10x128xi1>, vector<4x10x128xf32>
    %18 = vector.shape_cast %17 : vector<4x10x128xf32> to vector<4x1x10x128xf32>
    %19 = vector.shape_cast %18 : vector<4x1x10x128xf32> to vector<4x1x10x128xf32>
    %20 = vector.broadcast %19 : vector<4x1x10x128xf32> to vector<4x2x10x128xf32>
    %21 = vector.shape_cast %20 : vector<4x2x10x128xf32> to vector<8x10x128xf32>
    %cst_7 = arith.constant 0.000000e+00 : f32
    %22 = vector.broadcast %cst_7 : f32 to vector<1x10x128xf32>
    %23 = tpu.concatenate %22, %21, %22 in 0 : vector<1x10x128xf32>, vector<8x10x128xf32>, vector<1x10x128xf32> -> vector<10x10x128xf32>
    %cst_8 = arith.constant 0.000000e+00 : f32
    %24 = vector.broadcast %cst_8 : f32 to vector<64x128xf32>
    %25 = vector.extract_strided_slice %23 {offsets = [0, 0, 0], sizes = [8, 8, 128], strides = [1, 1, 1]} : vector<10x10x128xf32> to vector<8x8x128xf32>
    %26 = vector.shape_cast %25 : vector<8x8x128xf32> to vector<64x128xf32>
    %27 = arith.truncf %26 : vector<64x128xf32> to vector<64x128xbf16>
    %c0_9 = arith.constant 0 : index
    %c0_10 = arith.constant 0 : index
    %c0_11 = arith.constant 0 : index
    %28 = vector.load %arg4[%c0_9, %c0_10, %c0_11] : memref<9x128x128xbf16, #tpu.memory_space<vmem>>, vector<1x128x128xbf16>
    %29 = vector.shape_cast %28 : vector<1x128x128xbf16> to vector<128x128xbf16>
    %cst_12 = arith.constant dense<0.000000e+00> : vector<64x128xf32>
    %30 = tpu.matmul %27, %29, %cst_12 {dimension_numbers = #tpu.dot_dimension_numbers<[1], [0], [0], [1], [0, 0, 1, 1], [], []>} : vector<64x128xbf16>, vector<128x128xbf16>, vector<64x128xf32> -> vector<64x128xf32>
    %31 = arith.addf %24, %30 : vector<64x128xf32>
    %32 = vector.extract_strided_slice %23 {offsets = [0, 1, 0], sizes = [8, 8, 128], strides = [1, 1, 1]} : vector<10x10x128xf32> to vector<8x8x128xf32>
    %33 = vector.shape_cast %32 : vector<8x8x128xf32> to vector<64x128xf32>
    %34 = arith.truncf %33 : vector<64x128xf32> to vector<64x128xbf16>
    %c1 = arith.constant 1 : index
    %c0_13 = arith.constant 0 : index
    %c0_14 = arith.constant 0 : index
    %35 = vector.load %arg4[%c1, %c0_13, %c0_14] : memref<9x128x128xbf16, #tpu.memory_space<vmem>>, vector<1x128x128xbf16>
    %36 = vector.shape_cast %35 : vector<1x128x128xbf16> to vector<128x128xbf16>
    %cst_15 = arith.constant dense<0.000000e+00> : vector<64x128xf32>
    %37 = tpu.matmul %34, %36, %cst_15 {dimension_numbers = #tpu.dot_dimension_numbers<[1], [0], [0], [1], [0, 0, 1, 1], [], []>} : vector<64x128xbf16>, vector<128x128xbf16>, vector<64x128xf32> -> vector<64x128xf32>
    %38 = arith.addf %31, %37 : vector<64x128xf32>
    %39 = vector.extract_strided_slice %23 {offsets = [0, 2, 0], sizes = [8, 8, 128], strides = [1, 1, 1]} : vector<10x10x128xf32> to vector<8x8x128xf32>
    %40 = vector.shape_cast %39 : vector<8x8x128xf32> to vector<64x128xf32>
    %41 = arith.truncf %40 : vector<64x128xf32> to vector<64x128xbf16>
    %c2 = arith.constant 2 : index
    %c0_16 = arith.constant 0 : index
    %c0_17 = arith.constant 0 : index
    %42 = vector.load %arg4[%c2, %c0_16, %c0_17] : memref<9x128x128xbf16, #tpu.memory_space<vmem>>, vector<1x128x128xbf16>
    %43 = vector.shape_cast %42 : vector<1x128x128xbf16> to vector<128x128xbf16>
    %cst_18 = arith.constant dense<0.000000e+00> : vector<64x128xf32>
    %44 = tpu.matmul %41, %43, %cst_18 {dimension_numbers = #tpu.dot_dimension_numbers<[1], [0], [0], [1], [0, 0, 1, 1], [], []>} : vector<64x128xbf16>, vector<128x128xbf16>, vector<64x128xf32> -> vector<64x128xf32>
    %45 = arith.addf %38, %44 : vector<64x128xf32>
    %46 = vector.extract_strided_slice %23 {offsets = [1, 0, 0], sizes = [8, 8, 128], strides = [1, 1, 1]} : vector<10x10x128xf32> to vector<8x8x128xf32>
    %47 = vector.shape_cast %46 : vector<8x8x128xf32> to vector<64x128xf32>
    %48 = arith.truncf %47 : vector<64x128xf32> to vector<64x128xbf16>
    %c3 = arith.constant 3 : index
    %c0_19 = arith.constant 0 : index
    %c0_20 = arith.constant 0 : index
    %49 = vector.load %arg4[%c3, %c0_19, %c0_20] : memref<9x128x128xbf16, #tpu.memory_space<vmem>>, vector<1x128x128xbf16>
    %50 = vector.shape_cast %49 : vector<1x128x128xbf16> to vector<128x128xbf16>
    %cst_21 = arith.constant dense<0.000000e+00> : vector<64x128xf32>
    %51 = tpu.matmul %48, %50, %cst_21 {dimension_numbers = #tpu.dot_dimension_numbers<[1], [0], [0], [1], [0, 0, 1, 1], [], []>} : vector<64x128xbf16>, vector<128x128xbf16>, vector<64x128xf32> -> vector<64x128xf32>
    %52 = arith.addf %45, %51 : vector<64x128xf32>
    %53 = vector.extract_strided_slice %23 {offsets = [1, 1, 0], sizes = [8, 8, 128], strides = [1, 1, 1]} : vector<10x10x128xf32> to vector<8x8x128xf32>
    %54 = vector.shape_cast %53 : vector<8x8x128xf32> to vector<64x128xf32>
    %55 = arith.truncf %54 : vector<64x128xf32> to vector<64x128xbf16>
    %c4 = arith.constant 4 : index
    %c0_22 = arith.constant 0 : index
    %c0_23 = arith.constant 0 : index
    %56 = vector.load %arg4[%c4, %c0_22, %c0_23] : memref<9x128x128xbf16, #tpu.memory_space<vmem>>, vector<1x128x128xbf16>
    %57 = vector.shape_cast %56 : vector<1x128x128xbf16> to vector<128x128xbf16>
    %cst_24 = arith.constant dense<0.000000e+00> : vector<64x128xf32>
    %58 = tpu.matmul %55, %57, %cst_24 {dimension_numbers = #tpu.dot_dimension_numbers<[1], [0], [0], [1], [0, 0, 1, 1], [], []>} : vector<64x128xbf16>, vector<128x128xbf16>, vector<64x128xf32> -> vector<64x128xf32>
    %59 = arith.addf %52, %58 : vector<64x128xf32>
    %60 = vector.extract_strided_slice %23 {offsets = [1, 2, 0], sizes = [8, 8, 128], strides = [1, 1, 1]} : vector<10x10x128xf32> to vector<8x8x128xf32>
    %61 = vector.shape_cast %60 : vector<8x8x128xf32> to vector<64x128xf32>
    %62 = arith.truncf %61 : vector<64x128xf32> to vector<64x128xbf16>
    %c5 = arith.constant 5 : index
    %c0_25 = arith.constant 0 : index
    %c0_26 = arith.constant 0 : index
    %63 = vector.load %arg4[%c5, %c0_25, %c0_26] : memref<9x128x128xbf16, #tpu.memory_space<vmem>>, vector<1x128x128xbf16>
    %64 = vector.shape_cast %63 : vector<1x128x128xbf16> to vector<128x128xbf16>
    %cst_27 = arith.constant dense<0.000000e+00> : vector<64x128xf32>
    %65 = tpu.matmul %62, %64, %cst_27 {dimension_numbers = #tpu.dot_dimension_numbers<[1], [0], [0], [1], [0, 0, 1, 1], [], []>} : vector<64x128xbf16>, vector<128x128xbf16>, vector<64x128xf32> -> vector<64x128xf32>
    %66 = arith.addf %59, %65 : vector<64x128xf32>
    %67 = vector.extract_strided_slice %23 {offsets = [2, 0, 0], sizes = [8, 8, 128], strides = [1, 1, 1]} : vector<10x10x128xf32> to vector<8x8x128xf32>
    %68 = vector.shape_cast %67 : vector<8x8x128xf32> to vector<64x128xf32>
    %69 = arith.truncf %68 : vector<64x128xf32> to vector<64x128xbf16>
    %c6 = arith.constant 6 : index
    %c0_28 = arith.constant 0 : index
    %c0_29 = arith.constant 0 : index
    %70 = vector.load %arg4[%c6, %c0_28, %c0_29] : memref<9x128x128xbf16, #tpu.memory_space<vmem>>, vector<1x128x128xbf16>
    %71 = vector.shape_cast %70 : vector<1x128x128xbf16> to vector<128x128xbf16>
    %cst_30 = arith.constant dense<0.000000e+00> : vector<64x128xf32>
    %72 = tpu.matmul %69, %71, %cst_30 {dimension_numbers = #tpu.dot_dimension_numbers<[1], [0], [0], [1], [0, 0, 1, 1], [], []>} : vector<64x128xbf16>, vector<128x128xbf16>, vector<64x128xf32> -> vector<64x128xf32>
    %73 = arith.addf %66, %72 : vector<64x128xf32>
    %74 = vector.extract_strided_slice %23 {offsets = [2, 1, 0], sizes = [8, 8, 128], strides = [1, 1, 1]} : vector<10x10x128xf32> to vector<8x8x128xf32>
    %75 = vector.shape_cast %74 : vector<8x8x128xf32> to vector<64x128xf32>
    %76 = arith.truncf %75 : vector<64x128xf32> to vector<64x128xbf16>
    %c7 = arith.constant 7 : index
    %c0_31 = arith.constant 0 : index
    %c0_32 = arith.constant 0 : index
    %77 = vector.load %arg4[%c7, %c0_31, %c0_32] : memref<9x128x128xbf16, #tpu.memory_space<vmem>>, vector<1x128x128xbf16>
    %78 = vector.shape_cast %77 : vector<1x128x128xbf16> to vector<128x128xbf16>
    %cst_33 = arith.constant dense<0.000000e+00> : vector<64x128xf32>
    %79 = tpu.matmul %76, %78, %cst_33 {dimension_numbers = #tpu.dot_dimension_numbers<[1], [0], [0], [1], [0, 0, 1, 1], [], []>} : vector<64x128xbf16>, vector<128x128xbf16>, vector<64x128xf32> -> vector<64x128xf32>
    %80 = arith.addf %73, %79 : vector<64x128xf32>
    %81 = vector.extract_strided_slice %23 {offsets = [2, 2, 0], sizes = [8, 8, 128], strides = [1, 1, 1]} : vector<10x10x128xf32> to vector<8x8x128xf32>
    %82 = vector.shape_cast %81 : vector<8x8x128xf32> to vector<64x128xf32>
    %83 = arith.truncf %82 : vector<64x128xf32> to vector<64x128xbf16>
    %c8 = arith.constant 8 : index
    %c0_34 = arith.constant 0 : index
    %c0_35 = arith.constant 0 : index
    %84 = vector.load %arg4[%c8, %c0_34, %c0_35] : memref<9x128x128xbf16, #tpu.memory_space<vmem>>, vector<1x128x128xbf16>
    %85 = vector.shape_cast %84 : vector<1x128x128xbf16> to vector<128x128xbf16>
    %cst_36 = arith.constant dense<0.000000e+00> : vector<64x128xf32>
    %86 = tpu.matmul %83, %85, %cst_36 {dimension_numbers = #tpu.dot_dimension_numbers<[1], [0], [0], [1], [0, 0, 1, 1], [], []>} : vector<64x128xbf16>, vector<128x128xbf16>, vector<64x128xf32> -> vector<64x128xf32>
    %87 = arith.addf %80, %86 : vector<64x128xf32>
    %c0_37 = arith.constant 0 : index
    %c0_38 = arith.constant 0 : index
    %c0_39 = arith.constant 0 : index
    %88 = vector.load %arg5[%c0_37, %c0_38, %c0_39] : memref<1x64x128xf32, #tpu.memory_space<vmem>>, vector<1x64x128xf32>
    %89 = vector.shape_cast %88 : vector<1x64x128xf32> to vector<64x128xf32>
    %90 = vector.shape_cast %87 : vector<64x128xf32> to vector<1x64x128xf32>
    tpu.vector_store %arg5[%c0_37, %c0_38, %c0_39], %90 {strides = array<i32>} : memref<1x64x128xf32, #tpu.memory_space<vmem>>, vector<1x64x128xf32>,
    %cst_40 = arith.constant dense<0.000000e+00> : vector<128xf32>
    %91 = vector.multi_reduction <add>, %87, %cst_40 [0] : vector<64x128xf32> to vector<128xf32>
    %92 = vector.shape_cast %91 : vector<128xf32> to vector<1x128xf32>
    %93 = arith.mulf %87, %87 : vector<64x128xf32>
    %cst_41 = arith.constant dense<0.000000e+00> : vector<128xf32>
    %94 = vector.multi_reduction <add>, %93, %cst_41 [0] : vector<64x128xf32> to vector<128xf32>
    %95 = vector.shape_cast %94 : vector<128xf32> to vector<1x128xf32>
    %96 = tpu.concatenate %92, %95 in 0 : vector<1x128xf32>, vector<1x128xf32> -> vector<2x128xf32>
    %c0_42 = arith.constant 0 : index
    %c0_43 = arith.constant 0 : index
    %c0_44 = arith.constant 0 : index
    %97 = vector.load %arg6[%c0_42, %c0_43, %c0_44] : memref<1x2x128xf32, #tpu.memory_space<vmem>>, vector<1x2x128xf32>
    %98 = vector.shape_cast %97 : vector<1x2x128xf32> to vector<2x128xf32>
    %99 = vector.shape_cast %96 : vector<2x128xf32> to vector<1x2x128xf32>
    tpu.vector_store %arg6[%c0_42, %c0_43, %c0_44], %99 {strides = array<i32>} : memref<1x2x128xf32, #tpu.memory_space<vmem>>, vector<1x2x128xf32>,
    return
  }
  func.func @transform_0(%arg0: i32) -> (i32, i32, i32, i32) {
    %c0_i32 = arith.constant 0 : i32
    %c0_i32_0 = arith.constant 0 : i32
    %c0_i32_1 = arith.constant 0 : i32
    %c0_i32_2 = arith.constant 0 : i32
    return %arg0, %c0_i32, %c0_i32_0, %c0_i32_1 : i32, i32, i32, i32
  }
  func.func @transform_1(%arg0: i32) -> (i32, i32) {
    %c0_i32 = arith.constant 0 : i32
    %c0_i32_0 = arith.constant 0 : i32
    %c0_i32_1 = arith.constant 0 : i32
    return %c0_i32, %c0_i32_0 : i32, i32
  }
  func.func @transform_2(%arg0: i32) -> (i32, i32) {
    %c0_i32 = arith.constant 0 : i32
    %c0_i32_0 = arith.constant 0 : i32
    %c0_i32_1 = arith.constant 0 : i32
    return %c0_i32, %c0_i32_0 : i32, i32
  }
  func.func @transform_3(%arg0: i32) -> (i32, i32, i32) {
    %c0_i32 = arith.constant 0 : i32
    %c0_i32_0 = arith.constant 0 : i32
    %c0_i32_1 = arith.constant 0 : i32
    %c0_i32_2 = arith.constant 0 : i32
    return %c0_i32, %c0_i32_0, %c0_i32_1 : i32, i32, i32
  }
  func.func @transform_4(%arg0: i32) -> (i32, i32, i32) {
    %c0_i32 = arith.constant 0 : i32
    %c0_i32_0 = arith.constant 0 : i32
    %c0_i32_1 = arith.constant 0 : i32
    return %arg0, %c0_i32, %c0_i32_0 : i32, i32, i32
  }
  func.func @transform_5(%arg0: i32) -> (i32, i32, i32) {
    %c0_i32 = arith.constant 0 : i32
    %c0_i32_0 = arith.constant 0 : i32
    %c0_i32_1 = arith.constant 0 : i32
    return %arg0, %c0_i32, %c0_i32_0 : i32, i32, i32
  }
}

module attributes {stable_mosaic.version = 11 : i64} {
  func.func @_conv_stage_kernel(%arg0: i32, %arg1: memref<1x8x18x128xf32, #tpu.memory_space<vmem>>, %arg2: memref<1x128xf32, #tpu.memory_space<vmem>>, %arg3: memref<1x128xf32, #tpu.memory_space<vmem>>, %arg4: memref<9x128x128xbf16, #tpu.memory_space<vmem>>, %arg5: memref<1x256x128xf32, #tpu.memory_space<vmem>>, %arg6: memref<1x2x128xf32, #tpu.memory_space<vmem>>) attributes {dimension_semantics = [#tpu.dimension_semantics<parallel>], iteration_bounds = array<i64: 2>, scalar_prefetch = 0 : i64, scratch_operands = 0 : i64, tpu.core_type = #tpu.core_type<tc>, window_params = [{transform_indices = @transform_0, window_bounds = array<i64: 1, 8, 18, 128>}, {pipeline_mode = #tpu.pipeline_mode<synchronous>, transform_indices = @transform_1, window_bounds = array<i64: 1, 128>}, {pipeline_mode = #tpu.pipeline_mode<synchronous>, transform_indices = @transform_2, window_bounds = array<i64: 1, 128>}, {pipeline_mode = #tpu.pipeline_mode<synchronous>, transform_indices = @transform_3, window_bounds = array<i64: 9, 128, 128>}, {transform_indices = @transform_4, window_bounds = array<i64: 1, 256, 128>}, {transform_indices = @transform_5, window_bounds = array<i64: 1, 2, 128>}]} {
    %c0 = arith.constant 0 : index
    %c0_0 = arith.constant 0 : index
    %c0_1 = arith.constant 0 : index
    %c0_2 = arith.constant 0 : index
    %0 = vector.load %arg1[%c0, %c0_0, %c0_1, %c0_2] : memref<1x8x18x128xf32, #tpu.memory_space<vmem>>, vector<1x8x18x128xf32>
    %1 = vector.shape_cast %0 : vector<1x8x18x128xf32> to vector<8x18x128xf32>
    %c0_3 = arith.constant 0 : index
    %c0_4 = arith.constant 0 : index
    %2 = vector.load %arg2[%c0_3, %c0_4] : memref<1x128xf32, #tpu.memory_space<vmem>>, vector<1x128xf32>
    %3 = vector.shape_cast %2 : vector<1x128xf32> to vector<1x1x128xf32>
    %c0_5 = arith.constant 0 : index
    %c0_6 = arith.constant 0 : index
    %4 = vector.load %arg3[%c0_5, %c0_6] : memref<1x128xf32, #tpu.memory_space<vmem>>, vector<1x128xf32>
    %5 = vector.shape_cast %4 : vector<1x128xf32> to vector<1x1x128xf32>
    %6 = vector.broadcast %3 : vector<1x1x128xf32> to vector<8x18x128xf32>
    %7 = arith.mulf %1, %6 : vector<8x18x128xf32>
    %8 = vector.broadcast %5 : vector<1x1x128xf32> to vector<8x18x128xf32>
    %9 = arith.addf %7, %8 : vector<8x18x128xf32>
    %cst = arith.constant 0.000000e+00 : f32
    %10 = vector.broadcast %cst : f32 to vector<8x18x128xf32>
    %11 = arith.cmpf oge, %9, %10 : vector<8x18x128xf32>
    %cst_7 = arith.constant 2.000000e-01 : f32
    %12 = vector.broadcast %cst_7 : f32 to vector<8x18x128xf32>
    %13 = arith.mulf %12, %9 : vector<8x18x128xf32>
    %14 = arith.select %11, %9, %13 : vector<8x18x128xi1>, vector<8x18x128xf32>
    %15 = tpu.iota {dimensions = array<i32: 1>} : vector<8x18x128xi32>
    %c0_i32 = arith.constant 0 : i32
    %16 = vector.broadcast %c0_i32 : i32 to vector<8x18x128xi32>
    %17 = arith.cmpi eq, %15, %16 : vector<8x18x128xi32>
    %c17_i32 = arith.constant 17 : i32
    %18 = vector.broadcast %c17_i32 : i32 to vector<8x18x128xi32>
    %19 = arith.cmpi eq, %15, %18 : vector<8x18x128xi32>
    %20 = arith.ori %17, %19 : vector<8x18x128xi1>
    %cst_8 = arith.constant 0.000000e+00 : f32
    %21 = vector.broadcast %cst_8 : f32 to vector<8x18x128xf32>
    %22 = arith.select %20, %21, %14 : vector<8x18x128xi1>, vector<8x18x128xf32>
    %23 = vector.shape_cast %22 : vector<8x18x128xf32> to vector<8x1x18x128xf32>
    %24 = vector.shape_cast %23 : vector<8x1x18x128xf32> to vector<8x1x18x128xf32>
    %25 = vector.broadcast %24 : vector<8x1x18x128xf32> to vector<8x2x18x128xf32>
    %26 = vector.shape_cast %25 : vector<8x2x18x128xf32> to vector<16x18x128xf32>
    %cst_9 = arith.constant 0.000000e+00 : f32
    %27 = vector.broadcast %cst_9 : f32 to vector<1x18x128xf32>
    %28 = tpu.concatenate %27, %26, %27 in 0 : vector<1x18x128xf32>, vector<16x18x128xf32>, vector<1x18x128xf32> -> vector<18x18x128xf32>
    %cst_10 = arith.constant 0.000000e+00 : f32
    %29 = vector.broadcast %cst_10 : f32 to vector<256x128xf32>
    %30 = vector.extract_strided_slice %28 {offsets = [0, 0, 0], sizes = [16, 16, 128], strides = [1, 1, 1]} : vector<18x18x128xf32> to vector<16x16x128xf32>
    %31 = vector.shape_cast %30 : vector<16x16x128xf32> to vector<256x128xf32>
    %32 = arith.truncf %31 : vector<256x128xf32> to vector<256x128xbf16>
    %c0_11 = arith.constant 0 : index
    %c0_12 = arith.constant 0 : index
    %c0_13 = arith.constant 0 : index
    %33 = vector.load %arg4[%c0_11, %c0_12, %c0_13] : memref<9x128x128xbf16, #tpu.memory_space<vmem>>, vector<1x128x128xbf16>
    %34 = vector.shape_cast %33 : vector<1x128x128xbf16> to vector<128x128xbf16>
    %cst_14 = arith.constant dense<0.000000e+00> : vector<256x128xf32>
    %35 = tpu.matmul %32, %34, %cst_14 {dimension_numbers = #tpu.dot_dimension_numbers<[1], [0], [0], [1], [0, 0, 1, 1], [], []>} : vector<256x128xbf16>, vector<128x128xbf16>, vector<256x128xf32> -> vector<256x128xf32>
    %36 = arith.addf %29, %35 : vector<256x128xf32>
    %37 = vector.extract_strided_slice %28 {offsets = [0, 1, 0], sizes = [16, 16, 128], strides = [1, 1, 1]} : vector<18x18x128xf32> to vector<16x16x128xf32>
    %38 = vector.shape_cast %37 : vector<16x16x128xf32> to vector<256x128xf32>
    %39 = arith.truncf %38 : vector<256x128xf32> to vector<256x128xbf16>
    %c1 = arith.constant 1 : index
    %c0_15 = arith.constant 0 : index
    %c0_16 = arith.constant 0 : index
    %40 = vector.load %arg4[%c1, %c0_15, %c0_16] : memref<9x128x128xbf16, #tpu.memory_space<vmem>>, vector<1x128x128xbf16>
    %41 = vector.shape_cast %40 : vector<1x128x128xbf16> to vector<128x128xbf16>
    %cst_17 = arith.constant dense<0.000000e+00> : vector<256x128xf32>
    %42 = tpu.matmul %39, %41, %cst_17 {dimension_numbers = #tpu.dot_dimension_numbers<[1], [0], [0], [1], [0, 0, 1, 1], [], []>} : vector<256x128xbf16>, vector<128x128xbf16>, vector<256x128xf32> -> vector<256x128xf32>
    %43 = arith.addf %36, %42 : vector<256x128xf32>
    %44 = vector.extract_strided_slice %28 {offsets = [0, 2, 0], sizes = [16, 16, 128], strides = [1, 1, 1]} : vector<18x18x128xf32> to vector<16x16x128xf32>
    %45 = vector.shape_cast %44 : vector<16x16x128xf32> to vector<256x128xf32>
    %46 = arith.truncf %45 : vector<256x128xf32> to vector<256x128xbf16>
    %c2 = arith.constant 2 : index
    %c0_18 = arith.constant 0 : index
    %c0_19 = arith.constant 0 : index
    %47 = vector.load %arg4[%c2, %c0_18, %c0_19] : memref<9x128x128xbf16, #tpu.memory_space<vmem>>, vector<1x128x128xbf16>
    %48 = vector.shape_cast %47 : vector<1x128x128xbf16> to vector<128x128xbf16>
    %cst_20 = arith.constant dense<0.000000e+00> : vector<256x128xf32>
    %49 = tpu.matmul %46, %48, %cst_20 {dimension_numbers = #tpu.dot_dimension_numbers<[1], [0], [0], [1], [0, 0, 1, 1], [], []>} : vector<256x128xbf16>, vector<128x128xbf16>, vector<256x128xf32> -> vector<256x128xf32>
    %50 = arith.addf %43, %49 : vector<256x128xf32>
    %51 = vector.extract_strided_slice %28 {offsets = [1, 0, 0], sizes = [16, 16, 128], strides = [1, 1, 1]} : vector<18x18x128xf32> to vector<16x16x128xf32>
    %52 = vector.shape_cast %51 : vector<16x16x128xf32> to vector<256x128xf32>
    %53 = arith.truncf %52 : vector<256x128xf32> to vector<256x128xbf16>
    %c3 = arith.constant 3 : index
    %c0_21 = arith.constant 0 : index
    %c0_22 = arith.constant 0 : index
    %54 = vector.load %arg4[%c3, %c0_21, %c0_22] : memref<9x128x128xbf16, #tpu.memory_space<vmem>>, vector<1x128x128xbf16>
    %55 = vector.shape_cast %54 : vector<1x128x128xbf16> to vector<128x128xbf16>
    %cst_23 = arith.constant dense<0.000000e+00> : vector<256x128xf32>
    %56 = tpu.matmul %53, %55, %cst_23 {dimension_numbers = #tpu.dot_dimension_numbers<[1], [0], [0], [1], [0, 0, 1, 1], [], []>} : vector<256x128xbf16>, vector<128x128xbf16>, vector<256x128xf32> -> vector<256x128xf32>
    %57 = arith.addf %50, %56 : vector<256x128xf32>
    %58 = vector.extract_strided_slice %28 {offsets = [1, 1, 0], sizes = [16, 16, 128], strides = [1, 1, 1]} : vector<18x18x128xf32> to vector<16x16x128xf32>
    %59 = vector.shape_cast %58 : vector<16x16x128xf32> to vector<256x128xf32>
    %60 = arith.truncf %59 : vector<256x128xf32> to vector<256x128xbf16>
    %c4 = arith.constant 4 : index
    %c0_24 = arith.constant 0 : index
    %c0_25 = arith.constant 0 : index
    %61 = vector.load %arg4[%c4, %c0_24, %c0_25] : memref<9x128x128xbf16, #tpu.memory_space<vmem>>, vector<1x128x128xbf16>
    %62 = vector.shape_cast %61 : vector<1x128x128xbf16> to vector<128x128xbf16>
    %cst_26 = arith.constant dense<0.000000e+00> : vector<256x128xf32>
    %63 = tpu.matmul %60, %62, %cst_26 {dimension_numbers = #tpu.dot_dimension_numbers<[1], [0], [0], [1], [0, 0, 1, 1], [], []>} : vector<256x128xbf16>, vector<128x128xbf16>, vector<256x128xf32> -> vector<256x128xf32>
    %64 = arith.addf %57, %63 : vector<256x128xf32>
    %65 = vector.extract_strided_slice %28 {offsets = [1, 2, 0], sizes = [16, 16, 128], strides = [1, 1, 1]} : vector<18x18x128xf32> to vector<16x16x128xf32>
    %66 = vector.shape_cast %65 : vector<16x16x128xf32> to vector<256x128xf32>
    %67 = arith.truncf %66 : vector<256x128xf32> to vector<256x128xbf16>
    %c5 = arith.constant 5 : index
    %c0_27 = arith.constant 0 : index
    %c0_28 = arith.constant 0 : index
    %68 = vector.load %arg4[%c5, %c0_27, %c0_28] : memref<9x128x128xbf16, #tpu.memory_space<vmem>>, vector<1x128x128xbf16>
    %69 = vector.shape_cast %68 : vector<1x128x128xbf16> to vector<128x128xbf16>
    %cst_29 = arith.constant dense<0.000000e+00> : vector<256x128xf32>
    %70 = tpu.matmul %67, %69, %cst_29 {dimension_numbers = #tpu.dot_dimension_numbers<[1], [0], [0], [1], [0, 0, 1, 1], [], []>} : vector<256x128xbf16>, vector<128x128xbf16>, vector<256x128xf32> -> vector<256x128xf32>
    %71 = arith.addf %64, %70 : vector<256x128xf32>
    %72 = vector.extract_strided_slice %28 {offsets = [2, 0, 0], sizes = [16, 16, 128], strides = [1, 1, 1]} : vector<18x18x128xf32> to vector<16x16x128xf32>
    %73 = vector.shape_cast %72 : vector<16x16x128xf32> to vector<256x128xf32>
    %74 = arith.truncf %73 : vector<256x128xf32> to vector<256x128xbf16>
    %c6 = arith.constant 6 : index
    %c0_30 = arith.constant 0 : index
    %c0_31 = arith.constant 0 : index
    %75 = vector.load %arg4[%c6, %c0_30, %c0_31] : memref<9x128x128xbf16, #tpu.memory_space<vmem>>, vector<1x128x128xbf16>
    %76 = vector.shape_cast %75 : vector<1x128x128xbf16> to vector<128x128xbf16>
    %cst_32 = arith.constant dense<0.000000e+00> : vector<256x128xf32>
    %77 = tpu.matmul %74, %76, %cst_32 {dimension_numbers = #tpu.dot_dimension_numbers<[1], [0], [0], [1], [0, 0, 1, 1], [], []>} : vector<256x128xbf16>, vector<128x128xbf16>, vector<256x128xf32> -> vector<256x128xf32>
    %78 = arith.addf %71, %77 : vector<256x128xf32>
    %79 = vector.extract_strided_slice %28 {offsets = [2, 1, 0], sizes = [16, 16, 128], strides = [1, 1, 1]} : vector<18x18x128xf32> to vector<16x16x128xf32>
    %80 = vector.shape_cast %79 : vector<16x16x128xf32> to vector<256x128xf32>
    %81 = arith.truncf %80 : vector<256x128xf32> to vector<256x128xbf16>
    %c7 = arith.constant 7 : index
    %c0_33 = arith.constant 0 : index
    %c0_34 = arith.constant 0 : index
    %82 = vector.load %arg4[%c7, %c0_33, %c0_34] : memref<9x128x128xbf16, #tpu.memory_space<vmem>>, vector<1x128x128xbf16>
    %83 = vector.shape_cast %82 : vector<1x128x128xbf16> to vector<128x128xbf16>
    %cst_35 = arith.constant dense<0.000000e+00> : vector<256x128xf32>
    %84 = tpu.matmul %81, %83, %cst_35 {dimension_numbers = #tpu.dot_dimension_numbers<[1], [0], [0], [1], [0, 0, 1, 1], [], []>} : vector<256x128xbf16>, vector<128x128xbf16>, vector<256x128xf32> -> vector<256x128xf32>
    %85 = arith.addf %78, %84 : vector<256x128xf32>
    %86 = vector.extract_strided_slice %28 {offsets = [2, 2, 0], sizes = [16, 16, 128], strides = [1, 1, 1]} : vector<18x18x128xf32> to vector<16x16x128xf32>
    %87 = vector.shape_cast %86 : vector<16x16x128xf32> to vector<256x128xf32>
    %88 = arith.truncf %87 : vector<256x128xf32> to vector<256x128xbf16>
    %c8 = arith.constant 8 : index
    %c0_36 = arith.constant 0 : index
    %c0_37 = arith.constant 0 : index
    %89 = vector.load %arg4[%c8, %c0_36, %c0_37] : memref<9x128x128xbf16, #tpu.memory_space<vmem>>, vector<1x128x128xbf16>
    %90 = vector.shape_cast %89 : vector<1x128x128xbf16> to vector<128x128xbf16>
    %cst_38 = arith.constant dense<0.000000e+00> : vector<256x128xf32>
    %91 = tpu.matmul %88, %90, %cst_38 {dimension_numbers = #tpu.dot_dimension_numbers<[1], [0], [0], [1], [0, 0, 1, 1], [], []>} : vector<256x128xbf16>, vector<128x128xbf16>, vector<256x128xf32> -> vector<256x128xf32>
    %92 = arith.addf %85, %91 : vector<256x128xf32>
    %c0_39 = arith.constant 0 : index
    %c0_40 = arith.constant 0 : index
    %c0_41 = arith.constant 0 : index
    %93 = vector.load %arg5[%c0_39, %c0_40, %c0_41] : memref<1x256x128xf32, #tpu.memory_space<vmem>>, vector<1x256x128xf32>
    %94 = vector.shape_cast %93 : vector<1x256x128xf32> to vector<256x128xf32>
    %95 = vector.shape_cast %92 : vector<256x128xf32> to vector<1x256x128xf32>
    tpu.vector_store %arg5[%c0_39, %c0_40, %c0_41], %95 {strides = array<i32>} : memref<1x256x128xf32, #tpu.memory_space<vmem>>, vector<1x256x128xf32>,
    %cst_42 = arith.constant dense<0.000000e+00> : vector<128xf32>
    %96 = vector.multi_reduction <add>, %92, %cst_42 [0] : vector<256x128xf32> to vector<128xf32>
    %97 = vector.shape_cast %96 : vector<128xf32> to vector<1x128xf32>
    %98 = arith.mulf %92, %92 : vector<256x128xf32>
    %cst_43 = arith.constant dense<0.000000e+00> : vector<128xf32>
    %99 = vector.multi_reduction <add>, %98, %cst_43 [0] : vector<256x128xf32> to vector<128xf32>
    %100 = vector.shape_cast %99 : vector<128xf32> to vector<1x128xf32>
    %101 = tpu.concatenate %97, %100 in 0 : vector<1x128xf32>, vector<1x128xf32> -> vector<2x128xf32>
    %c0_44 = arith.constant 0 : index
    %c0_45 = arith.constant 0 : index
    %c0_46 = arith.constant 0 : index
    %102 = vector.load %arg6[%c0_44, %c0_45, %c0_46] : memref<1x2x128xf32, #tpu.memory_space<vmem>>, vector<1x2x128xf32>
    %103 = vector.shape_cast %102 : vector<1x2x128xf32> to vector<2x128xf32>
    %104 = vector.shape_cast %101 : vector<2x128xf32> to vector<1x2x128xf32>
    tpu.vector_store %arg6[%c0_44, %c0_45, %c0_46], %104 {strides = array<i32>} : memref<1x2x128xf32, #tpu.memory_space<vmem>>, vector<1x2x128xf32>,
    return
  }
  func.func @transform_0(%arg0: i32) -> (i32, i32, i32, i32) {
    %c0_i32 = arith.constant 0 : i32
    %c0_i32_0 = arith.constant 0 : i32
    %c0_i32_1 = arith.constant 0 : i32
    %c0_i32_2 = arith.constant 0 : i32
    return %arg0, %c0_i32, %c0_i32_0, %c0_i32_1 : i32, i32, i32, i32
  }
  func.func @transform_1(%arg0: i32) -> (i32, i32) {
    %c0_i32 = arith.constant 0 : i32
    %c0_i32_0 = arith.constant 0 : i32
    %c0_i32_1 = arith.constant 0 : i32
    return %c0_i32, %c0_i32_0 : i32, i32
  }
  func.func @transform_2(%arg0: i32) -> (i32, i32) {
    %c0_i32 = arith.constant 0 : i32
    %c0_i32_0 = arith.constant 0 : i32
    %c0_i32_1 = arith.constant 0 : i32
    return %c0_i32, %c0_i32_0 : i32, i32
  }
  func.func @transform_3(%arg0: i32) -> (i32, i32, i32) {
    %c0_i32 = arith.constant 0 : i32
    %c0_i32_0 = arith.constant 0 : i32
    %c0_i32_1 = arith.constant 0 : i32
    %c0_i32_2 = arith.constant 0 : i32
    return %c0_i32, %c0_i32_0, %c0_i32_1 : i32, i32, i32
  }
  func.func @transform_4(%arg0: i32) -> (i32, i32, i32) {
    %c0_i32 = arith.constant 0 : i32
    %c0_i32_0 = arith.constant 0 : i32
    %c0_i32_1 = arith.constant 0 : i32
    return %arg0, %c0_i32, %c0_i32_0 : i32, i32, i32
  }
  func.func @transform_5(%arg0: i32) -> (i32, i32, i32) {
    %c0_i32 = arith.constant 0 : i32
    %c0_i32_0 = arith.constant 0 : i32
    %c0_i32_1 = arith.constant 0 : i32
    return %arg0, %c0_i32, %c0_i32_0 : i32, i32, i32
  }
}

module attributes {stable_mosaic.version = 11 : i64} {
  func.func @_conv_stage_kernel(%arg0: i32, %arg1: memref<1x16x18x128xf32, #tpu.memory_space<vmem>>, %arg2: memref<1x128xf32, #tpu.memory_space<vmem>>, %arg3: memref<1x128xf32, #tpu.memory_space<vmem>>, %arg4: memref<9x128x128xbf16, #tpu.memory_space<vmem>>, %arg5: memref<1x128xf32, #tpu.memory_space<vmem>>, %arg6: memref<1x256x128xf32, #tpu.memory_space<vmem>>) attributes {dimension_semantics = [#tpu.dimension_semantics<parallel>], iteration_bounds = array<i64: 2>, scalar_prefetch = 0 : i64, scratch_operands = 0 : i64, tpu.core_type = #tpu.core_type<tc>, window_params = [{transform_indices = @transform_0, window_bounds = array<i64: 1, 16, 18, 128>}, {pipeline_mode = #tpu.pipeline_mode<synchronous>, transform_indices = @transform_1, window_bounds = array<i64: 1, 128>}, {pipeline_mode = #tpu.pipeline_mode<synchronous>, transform_indices = @transform_2, window_bounds = array<i64: 1, 128>}, {pipeline_mode = #tpu.pipeline_mode<synchronous>, transform_indices = @transform_3, window_bounds = array<i64: 9, 128, 128>}, {pipeline_mode = #tpu.pipeline_mode<synchronous>, transform_indices = @transform_4, window_bounds = array<i64: 1, 128>}, {transform_indices = @transform_5, window_bounds = array<i64: 1, 256, 128>}]} {
    %c0 = arith.constant 0 : index
    %c0_0 = arith.constant 0 : index
    %c0_1 = arith.constant 0 : index
    %c0_2 = arith.constant 0 : index
    %0 = vector.load %arg1[%c0, %c0_0, %c0_1, %c0_2] : memref<1x16x18x128xf32, #tpu.memory_space<vmem>>, vector<1x16x18x128xf32>
    %1 = vector.shape_cast %0 : vector<1x16x18x128xf32> to vector<16x18x128xf32>
    %c0_3 = arith.constant 0 : index
    %c0_4 = arith.constant 0 : index
    %2 = vector.load %arg2[%c0_3, %c0_4] : memref<1x128xf32, #tpu.memory_space<vmem>>, vector<1x128xf32>
    %3 = vector.shape_cast %2 : vector<1x128xf32> to vector<1x1x128xf32>
    %c0_5 = arith.constant 0 : index
    %c0_6 = arith.constant 0 : index
    %4 = vector.load %arg3[%c0_5, %c0_6] : memref<1x128xf32, #tpu.memory_space<vmem>>, vector<1x128xf32>
    %5 = vector.shape_cast %4 : vector<1x128xf32> to vector<1x1x128xf32>
    %6 = vector.broadcast %3 : vector<1x1x128xf32> to vector<16x18x128xf32>
    %7 = arith.mulf %1, %6 : vector<16x18x128xf32>
    %8 = vector.broadcast %5 : vector<1x1x128xf32> to vector<16x18x128xf32>
    %9 = arith.addf %7, %8 : vector<16x18x128xf32>
    %cst = arith.constant 0.000000e+00 : f32
    %10 = vector.broadcast %cst : f32 to vector<16x18x128xf32>
    %11 = arith.cmpf oge, %9, %10 : vector<16x18x128xf32>
    %cst_7 = arith.constant 2.000000e-01 : f32
    %12 = vector.broadcast %cst_7 : f32 to vector<16x18x128xf32>
    %13 = arith.mulf %12, %9 : vector<16x18x128xf32>
    %14 = arith.select %11, %9, %13 : vector<16x18x128xi1>, vector<16x18x128xf32>
    %15 = tpu.iota {dimensions = array<i32: 1>} : vector<16x18x128xi32>
    %c0_i32 = arith.constant 0 : i32
    %16 = vector.broadcast %c0_i32 : i32 to vector<16x18x128xi32>
    %17 = arith.cmpi eq, %15, %16 : vector<16x18x128xi32>
    %c17_i32 = arith.constant 17 : i32
    %18 = vector.broadcast %c17_i32 : i32 to vector<16x18x128xi32>
    %19 = arith.cmpi eq, %15, %18 : vector<16x18x128xi32>
    %20 = arith.ori %17, %19 : vector<16x18x128xi1>
    %cst_8 = arith.constant 0.000000e+00 : f32
    %21 = vector.broadcast %cst_8 : f32 to vector<16x18x128xf32>
    %22 = arith.select %20, %21, %14 : vector<16x18x128xi1>, vector<16x18x128xf32>
    %cst_9 = arith.constant 0.000000e+00 : f32
    %23 = vector.broadcast %cst_9 : f32 to vector<1x18x128xf32>
    %24 = tpu.concatenate %23, %22, %23 in 0 : vector<1x18x128xf32>, vector<16x18x128xf32>, vector<1x18x128xf32> -> vector<18x18x128xf32>
    %cst_10 = arith.constant 0.000000e+00 : f32
    %25 = vector.broadcast %cst_10 : f32 to vector<256x128xf32>
    %26 = vector.extract_strided_slice %24 {offsets = [0, 0, 0], sizes = [16, 16, 128], strides = [1, 1, 1]} : vector<18x18x128xf32> to vector<16x16x128xf32>
    %27 = vector.shape_cast %26 : vector<16x16x128xf32> to vector<256x128xf32>
    %28 = arith.truncf %27 : vector<256x128xf32> to vector<256x128xbf16>
    %c0_11 = arith.constant 0 : index
    %c0_12 = arith.constant 0 : index
    %c0_13 = arith.constant 0 : index
    %29 = vector.load %arg4[%c0_11, %c0_12, %c0_13] : memref<9x128x128xbf16, #tpu.memory_space<vmem>>, vector<1x128x128xbf16>
    %30 = vector.shape_cast %29 : vector<1x128x128xbf16> to vector<128x128xbf16>
    %cst_14 = arith.constant dense<0.000000e+00> : vector<256x128xf32>
    %31 = tpu.matmul %28, %30, %cst_14 {dimension_numbers = #tpu.dot_dimension_numbers<[1], [0], [0], [1], [0, 0, 1, 1], [], []>} : vector<256x128xbf16>, vector<128x128xbf16>, vector<256x128xf32> -> vector<256x128xf32>
    %32 = arith.addf %25, %31 : vector<256x128xf32>
    %33 = vector.extract_strided_slice %24 {offsets = [0, 1, 0], sizes = [16, 16, 128], strides = [1, 1, 1]} : vector<18x18x128xf32> to vector<16x16x128xf32>
    %34 = vector.shape_cast %33 : vector<16x16x128xf32> to vector<256x128xf32>
    %35 = arith.truncf %34 : vector<256x128xf32> to vector<256x128xbf16>
    %c1 = arith.constant 1 : index
    %c0_15 = arith.constant 0 : index
    %c0_16 = arith.constant 0 : index
    %36 = vector.load %arg4[%c1, %c0_15, %c0_16] : memref<9x128x128xbf16, #tpu.memory_space<vmem>>, vector<1x128x128xbf16>
    %37 = vector.shape_cast %36 : vector<1x128x128xbf16> to vector<128x128xbf16>
    %cst_17 = arith.constant dense<0.000000e+00> : vector<256x128xf32>
    %38 = tpu.matmul %35, %37, %cst_17 {dimension_numbers = #tpu.dot_dimension_numbers<[1], [0], [0], [1], [0, 0, 1, 1], [], []>} : vector<256x128xbf16>, vector<128x128xbf16>, vector<256x128xf32> -> vector<256x128xf32>
    %39 = arith.addf %32, %38 : vector<256x128xf32>
    %40 = vector.extract_strided_slice %24 {offsets = [0, 2, 0], sizes = [16, 16, 128], strides = [1, 1, 1]} : vector<18x18x128xf32> to vector<16x16x128xf32>
    %41 = vector.shape_cast %40 : vector<16x16x128xf32> to vector<256x128xf32>
    %42 = arith.truncf %41 : vector<256x128xf32> to vector<256x128xbf16>
    %c2 = arith.constant 2 : index
    %c0_18 = arith.constant 0 : index
    %c0_19 = arith.constant 0 : index
    %43 = vector.load %arg4[%c2, %c0_18, %c0_19] : memref<9x128x128xbf16, #tpu.memory_space<vmem>>, vector<1x128x128xbf16>
    %44 = vector.shape_cast %43 : vector<1x128x128xbf16> to vector<128x128xbf16>
    %cst_20 = arith.constant dense<0.000000e+00> : vector<256x128xf32>
    %45 = tpu.matmul %42, %44, %cst_20 {dimension_numbers = #tpu.dot_dimension_numbers<[1], [0], [0], [1], [0, 0, 1, 1], [], []>} : vector<256x128xbf16>, vector<128x128xbf16>, vector<256x128xf32> -> vector<256x128xf32>
    %46 = arith.addf %39, %45 : vector<256x128xf32>
    %47 = vector.extract_strided_slice %24 {offsets = [1, 0, 0], sizes = [16, 16, 128], strides = [1, 1, 1]} : vector<18x18x128xf32> to vector<16x16x128xf32>
    %48 = vector.shape_cast %47 : vector<16x16x128xf32> to vector<256x128xf32>
    %49 = arith.truncf %48 : vector<256x128xf32> to vector<256x128xbf16>
    %c3 = arith.constant 3 : index
    %c0_21 = arith.constant 0 : index
    %c0_22 = arith.constant 0 : index
    %50 = vector.load %arg4[%c3, %c0_21, %c0_22] : memref<9x128x128xbf16, #tpu.memory_space<vmem>>, vector<1x128x128xbf16>
    %51 = vector.shape_cast %50 : vector<1x128x128xbf16> to vector<128x128xbf16>
    %cst_23 = arith.constant dense<0.000000e+00> : vector<256x128xf32>
    %52 = tpu.matmul %49, %51, %cst_23 {dimension_numbers = #tpu.dot_dimension_numbers<[1], [0], [0], [1], [0, 0, 1, 1], [], []>} : vector<256x128xbf16>, vector<128x128xbf16>, vector<256x128xf32> -> vector<256x128xf32>
    %53 = arith.addf %46, %52 : vector<256x128xf32>
    %54 = vector.extract_strided_slice %24 {offsets = [1, 1, 0], sizes = [16, 16, 128], strides = [1, 1, 1]} : vector<18x18x128xf32> to vector<16x16x128xf32>
    %55 = vector.shape_cast %54 : vector<16x16x128xf32> to vector<256x128xf32>
    %56 = arith.truncf %55 : vector<256x128xf32> to vector<256x128xbf16>
    %c4 = arith.constant 4 : index
    %c0_24 = arith.constant 0 : index
    %c0_25 = arith.constant 0 : index
    %57 = vector.load %arg4[%c4, %c0_24, %c0_25] : memref<9x128x128xbf16, #tpu.memory_space<vmem>>, vector<1x128x128xbf16>
    %58 = vector.shape_cast %57 : vector<1x128x128xbf16> to vector<128x128xbf16>
    %cst_26 = arith.constant dense<0.000000e+00> : vector<256x128xf32>
    %59 = tpu.matmul %56, %58, %cst_26 {dimension_numbers = #tpu.dot_dimension_numbers<[1], [0], [0], [1], [0, 0, 1, 1], [], []>} : vector<256x128xbf16>, vector<128x128xbf16>, vector<256x128xf32> -> vector<256x128xf32>
    %60 = arith.addf %53, %59 : vector<256x128xf32>
    %61 = vector.extract_strided_slice %24 {offsets = [1, 2, 0], sizes = [16, 16, 128], strides = [1, 1, 1]} : vector<18x18x128xf32> to vector<16x16x128xf32>
    %62 = vector.shape_cast %61 : vector<16x16x128xf32> to vector<256x128xf32>
    %63 = arith.truncf %62 : vector<256x128xf32> to vector<256x128xbf16>
    %c5 = arith.constant 5 : index
    %c0_27 = arith.constant 0 : index
    %c0_28 = arith.constant 0 : index
    %64 = vector.load %arg4[%c5, %c0_27, %c0_28] : memref<9x128x128xbf16, #tpu.memory_space<vmem>>, vector<1x128x128xbf16>
    %65 = vector.shape_cast %64 : vector<1x128x128xbf16> to vector<128x128xbf16>
    %cst_29 = arith.constant dense<0.000000e+00> : vector<256x128xf32>
    %66 = tpu.matmul %63, %65, %cst_29 {dimension_numbers = #tpu.dot_dimension_numbers<[1], [0], [0], [1], [0, 0, 1, 1], [], []>} : vector<256x128xbf16>, vector<128x128xbf16>, vector<256x128xf32> -> vector<256x128xf32>
    %67 = arith.addf %60, %66 : vector<256x128xf32>
    %68 = vector.extract_strided_slice %24 {offsets = [2, 0, 0], sizes = [16, 16, 128], strides = [1, 1, 1]} : vector<18x18x128xf32> to vector<16x16x128xf32>
    %69 = vector.shape_cast %68 : vector<16x16x128xf32> to vector<256x128xf32>
    %70 = arith.truncf %69 : vector<256x128xf32> to vector<256x128xbf16>
    %c6 = arith.constant 6 : index
    %c0_30 = arith.constant 0 : index
    %c0_31 = arith.constant 0 : index
    %71 = vector.load %arg4[%c6, %c0_30, %c0_31] : memref<9x128x128xbf16, #tpu.memory_space<vmem>>, vector<1x128x128xbf16>
    %72 = vector.shape_cast %71 : vector<1x128x128xbf16> to vector<128x128xbf16>
    %cst_32 = arith.constant dense<0.000000e+00> : vector<256x128xf32>
    %73 = tpu.matmul %70, %72, %cst_32 {dimension_numbers = #tpu.dot_dimension_numbers<[1], [0], [0], [1], [0, 0, 1, 1], [], []>} : vector<256x128xbf16>, vector<128x128xbf16>, vector<256x128xf32> -> vector<256x128xf32>
    %74 = arith.addf %67, %73 : vector<256x128xf32>
    %75 = vector.extract_strided_slice %24 {offsets = [2, 1, 0], sizes = [16, 16, 128], strides = [1, 1, 1]} : vector<18x18x128xf32> to vector<16x16x128xf32>
    %76 = vector.shape_cast %75 : vector<16x16x128xf32> to vector<256x128xf32>
    %77 = arith.truncf %76 : vector<256x128xf32> to vector<256x128xbf16>
    %c7 = arith.constant 7 : index
    %c0_33 = arith.constant 0 : index
    %c0_34 = arith.constant 0 : index
    %78 = vector.load %arg4[%c7, %c0_33, %c0_34] : memref<9x128x128xbf16, #tpu.memory_space<vmem>>, vector<1x128x128xbf16>
    %79 = vector.shape_cast %78 : vector<1x128x128xbf16> to vector<128x128xbf16>
    %cst_35 = arith.constant dense<0.000000e+00> : vector<256x128xf32>
    %80 = tpu.matmul %77, %79, %cst_35 {dimension_numbers = #tpu.dot_dimension_numbers<[1], [0], [0], [1], [0, 0, 1, 1], [], []>} : vector<256x128xbf16>, vector<128x128xbf16>, vector<256x128xf32> -> vector<256x128xf32>
    %81 = arith.addf %74, %80 : vector<256x128xf32>
    %82 = vector.extract_strided_slice %24 {offsets = [2, 2, 0], sizes = [16, 16, 128], strides = [1, 1, 1]} : vector<18x18x128xf32> to vector<16x16x128xf32>
    %83 = vector.shape_cast %82 : vector<16x16x128xf32> to vector<256x128xf32>
    %84 = arith.truncf %83 : vector<256x128xf32> to vector<256x128xbf16>
    %c8 = arith.constant 8 : index
    %c0_36 = arith.constant 0 : index
    %c0_37 = arith.constant 0 : index
    %85 = vector.load %arg4[%c8, %c0_36, %c0_37] : memref<9x128x128xbf16, #tpu.memory_space<vmem>>, vector<1x128x128xbf16>
    %86 = vector.shape_cast %85 : vector<1x128x128xbf16> to vector<128x128xbf16>
    %cst_38 = arith.constant dense<0.000000e+00> : vector<256x128xf32>
    %87 = tpu.matmul %84, %86, %cst_38 {dimension_numbers = #tpu.dot_dimension_numbers<[1], [0], [0], [1], [0, 0, 1, 1], [], []>} : vector<256x128xbf16>, vector<128x128xbf16>, vector<256x128xf32> -> vector<256x128xf32>
    %88 = arith.addf %81, %87 : vector<256x128xf32>
    %c0_39 = arith.constant 0 : index
    %c0_40 = arith.constant 0 : index
    %89 = vector.load %arg5[%c0_39, %c0_40] : memref<1x128xf32, #tpu.memory_space<vmem>>, vector<1x128xf32>
    %90 = vector.broadcast %89 : vector<1x128xf32> to vector<256x128xf32>
    %91 = arith.addf %88, %90 : vector<256x128xf32>
    %92 = math.tanh %91 : vector<256x128xf32>
    %c0_41 = arith.constant 0 : index
    %c0_42 = arith.constant 0 : index
    %c0_43 = arith.constant 0 : index
    %93 = vector.load %arg6[%c0_41, %c0_42, %c0_43] : memref<1x256x128xf32, #tpu.memory_space<vmem>>, vector<1x256x128xf32>
    %94 = vector.shape_cast %93 : vector<1x256x128xf32> to vector<256x128xf32>
    %95 = vector.shape_cast %92 : vector<256x128xf32> to vector<1x256x128xf32>
    tpu.vector_store %arg6[%c0_41, %c0_42, %c0_43], %95 {strides = array<i32>} : memref<1x256x128xf32, #tpu.memory_space<vmem>>, vector<1x256x128xf32>,
    return
  }
  func.func @transform_0(%arg0: i32) -> (i32, i32, i32, i32) {
    %c0_i32 = arith.constant 0 : i32
    %c0_i32_0 = arith.constant 0 : i32
    %c0_i32_1 = arith.constant 0 : i32
    %c0_i32_2 = arith.constant 0 : i32
    return %arg0, %c0_i32, %c0_i32_0, %c0_i32_1 : i32, i32, i32, i32
  }
  func.func @transform_1(%arg0: i32) -> (i32, i32) {
    %c0_i32 = arith.constant 0 : i32
    %c0_i32_0 = arith.constant 0 : i32
    %c0_i32_1 = arith.constant 0 : i32
    return %c0_i32, %c0_i32_0 : i32, i32
  }
  func.func @transform_2(%arg0: i32) -> (i32, i32) {
    %c0_i32 = arith.constant 0 : i32
    %c0_i32_0 = arith.constant 0 : i32
    %c0_i32_1 = arith.constant 0 : i32
    return %c0_i32, %c0_i32_0 : i32, i32
  }
  func.func @transform_3(%arg0: i32) -> (i32, i32, i32) {
    %c0_i32 = arith.constant 0 : i32
    %c0_i32_0 = arith.constant 0 : i32
    %c0_i32_1 = arith.constant 0 : i32
    %c0_i32_2 = arith.constant 0 : i32
    return %c0_i32, %c0_i32_0, %c0_i32_1 : i32, i32, i32
  }
  func.func @transform_4(%arg0: i32) -> (i32, i32) {
    %c0_i32 = arith.constant 0 : i32
    %c0_i32_0 = arith.constant 0 : i32
    %c0_i32_1 = arith.constant 0 : i32
    return %c0_i32, %c0_i32_0 : i32, i32
  }
  func.func @transform_5(%arg0: i32) -> (i32, i32, i32) {
    %c0_i32 = arith.constant 0 : i32
    %c0_i32_0 = arith.constant 0 : i32
    %c0_i32_1 = arith.constant 0 : i32
    return %arg0, %c0_i32, %c0_i32_0 : i32, i32, i32
  }
}

</mosaic_0001>

<llo_original>
// kernel: generator_forward.6
$region0: #{generator_forward.6}
  #allocation0 [shape = 'u32[]', space=smem, size = 0x4, offset = 0x4, fixed_abs, tag = 'smem constant byte address 0x4 - core index']
  #allocation1 [shape = 'u32[72,128]{1,0:T(1,128)}', space=vmem, size = 0x9000, scoped, tag = 'internal scratch']
  %s0 = inlined_call_operand.vmem [shape: f32[2,16,128], index: 0, kind: input, shape index: {}]
  %s1 = inlined_call_operand.vmem [shape: f32[2,2,128], index: 1, kind: output, shape index: {}]
  %s2 = sld [smem:[#allocation0]]
  $region37: #{generator_forward.6} parent=0
    _
  %s4 = ssub.s32 1, %s2
  %s5 = scalar_select 0, %s4, %s2
  loop: start=0, step=1, limit=4
  $region2: #{generator_forward.6} parent=0 // loop_pre_header
    _
  $region3: #{generator_forward.6} parent=0 // loop_header
    %s7 = sphi 0, %s11
    %p8 = scmp.ge.s32.totalorder %s7, 4
    %s17 = sphi 0, %s19
    %s20 = sphi 0, %s17
    %s21 = sphi 0, %s20
    %s37 = sphi 0, %s21
    %s43 = sphi 0, %s45
    %s46 = sphi 0, %s43
    %s47 = sphi 0, %s46
    %s63 = sphi 0, %s47
  $region4: #{generator_forward.6} parent=0 // loop_header_branch
    %10 = sbr.rel (%p8) target = $region8
  $region5: #{generator_forward.6} parent=0 // loop_body
    %s12 = ssub.s32 %s7, 1
    %s13 = ssub.s32 %s7, 2
    %s14 = sadd.s32 %s7, 1
    %s15 = ssub.s32 %s7, %s14
    %p16 = scmp.eq.s32.totalorder %s15, 0
    %s18 = sadd.s32 %s17, 1
    %s19 = scalar_select %p16, %s17, %s18
    %p22 = pneg %p16
    %p23 = scmp.eq.s32.totalorder %s7, 1
    %p24 = por %p22, %p23
    %p25 = scmp.ne.s32.totalorder %s17, %s20
    %p26 = scmp.eq.s32.totalorder %s7, 0
    %p27 = por %p25, %p26
    %p28 = scmp.ne.s32.totalorder %s17, %s20
    %p29 = scmp.eq.s32.totalorder %s12, 1
    %p30 = por %p28, %p29
    %p31 = scmp.ne.s32.totalorder %s20, %s21
    %p32 = scmp.eq.s32.totalorder %s12, 0
    %p33 = por %p31, %p32
    %p34 = scmp.ne.s32.totalorder %s20, %s21
    %p35 = scmp.eq.s32.totalorder %s13, 1
    %p36 = por %p34, %p35
    %p38 = scmp.ne.s32.totalorder %s21, %s37
    %p39 = scmp.eq.s32.totalorder %s13, 0
    %p40 = por %p38, %p39
    %s41 = ssub.s32 %s7, %s14
    %p42 = scmp.eq.s32.totalorder %s41, 0
    %s44 = sadd.s32 %s43, 1
    %s45 = scalar_select %p42, %s43, %s44
    %p48 = pneg %p42
    %p49 = scmp.eq.s32.totalorder %s7, 1
    %p50 = por %p48, %p49
    %p51 = scmp.ne.s32.totalorder %s43, %s46
    %p52 = scmp.eq.s32.totalorder %s7, 0
    %p53 = por %p51, %p52
    %p54 = scmp.ne.s32.totalorder %s43, %s46
    %p55 = scmp.eq.s32.totalorder %s12, 1
    %p56 = por %p54, %p55
    %p57 = scmp.ne.s32.totalorder %s46, %s47
    %p58 = scmp.eq.s32.totalorder %s12, 0
    %p59 = por %p57, %p58
    %p60 = scmp.ne.s32.totalorder %s46, %s47
    %p61 = scmp.eq.s32.totalorder %s13, 1
    %p62 = por %p60, %p61
    %p64 = scmp.ne.s32.totalorder %s47, %s63
    %p65 = scmp.eq.s32.totalorder %s13, 0
    %p66 = por %p64, %p65
    %p67 = scmp.le.s32.totalorder 1, %s7
    %p68 = scmp.lt.s32.totalorder %s7, 3
    %p69 = pnand %p67, %p68
    %p70 = pneg %p69
    // Predicated region
    $region9: #{generator_forward.6} parent=5 // pred_check
      _
    $region10: #{generator_forward.6} parent=5 // pred_check_branch
      %72 = sbr.rel (%p69) target = $region12
    $region11: #{generator_forward.6} parent=5 // pred_region
      %s73 = ssub.s32 %s7, 1
    $region12: #{generator_forward.6} parent=5 // pred_fallthru
      _
    %p74 = scmp.lt.s32.totalorder %s7, 2
    // Predicated region
    $region13: #{generator_forward.6} parent=5 // pred_check
      %p75 = pneg %p74
    $region14: #{generator_forward.6} parent=5 // pred_check_branch
      %77 = sbr.rel (%p75) target = $region16
    $region15: #{generator_forward.6} parent=5 // pred_region
      // Predicated region
      $region17: #{generator_forward.6} parent=15 // pred_check
        %p78 = pneg %p27
      $region18: #{generator_forward.6} parent=15 // pred_check_branch
        %80 = sbr.rel (%p78) target = $region20
      $region19: #{generator_forward.6} parent=15 // pred_region
        %p81 = scmp.lt.s32.totalorder %s7, 1
        %s82 = scalar_select %p81, %s7, 1
        %s83 = smul.addr %s82, 2
        %s84 = smul.addr %s83, 8
        %s85 = scalar_lea.vmem %s0, %s84
      $region20: #{generator_forward.6} parent=15 // pred_fallthru
        _
    $region16: #{generator_forward.6} parent=5 // pred_fallthru
      _
    %p86 = scmp.le.s32.totalorder 1, %s7
    %p87 = scmp.lt.s32.totalorder %s7, 3
    %p88 = pnand %p86, %p87
    %p89 = pneg %p88
    // Predicated region
    $region21: #{generator_forward.6} parent=5 // pred_check
      _
    $region22: #{generator_forward.6} parent=5 // pred_check_branch
      %91 = sbr.rel (%p88) target = $region24
    $region23: #{generator_forward.6} parent=5 // pred_region
      %s92 = ssub.s32 %s7, 1
      %p93 = scmp.lt.s32.totalorder %s12, 1
      %s94 = scalar_select %p93, %s12, 1
      %s95 = smul.addr %s94, 2
      %s96 = smul.addr %s95, 8
      %s97 = scalar_lea.vmem %s0, %s96
      %p98 = pneg %p33
      %p99 = pneg %p30
      %p100 = pneg %p59
      %p101 = pneg %p56
      %p102 = scmp.lt.s32.totalorder %s12, 1
      %s103 = scalar_select %p102, %s12, 1
      %s104 = smul.addr %s103, 2
      %s105 = scalar_lea.vmem %s1, %s104
      %p106 = scmp.lt.s32.totalorder %s12, 1
      %s107 = scalar_select %p106, %s12, 1
      %s108 = smul.addr %s107, 2
      %s109 = smul.addr %s108, 8
      %s110 = scalar_lea.vmem %s0, %s109
      %p111 = scmp.lt.s32.totalorder %s12, 1
      %s112 = scalar_select %p111, %s12, 1
      %s113 = smul.addr %s112, 2
      %s114 = scalar_lea.vmem %s1, %s113
      %v115 = vld [vmem:[%s110] sm:$0xff]
      %v116 = vld [vmem:[%s110 + $0x8] sm:$0xff]
      %v117 = vadd.f32 %v115, %v116
      %v118 = vrot.slane %v117, 4
      %v119 = vadd.f32 %v117, %v118
      %v120 = vrot.slane %v119, 2
      %v121 = vadd.f32 %v119, %v120
      %v122 = vrot.slane %v121, 1
      %v123 = vadd.f32 %v121, %v122
      %v124 = vmul.f32 %v115, %v115
      %v125 = vmul.f32 %v116, %v116
      %v126 = vadd.f32 %v124, %v125
      %v127 = vrot.slane %v126, 4
      %v128 = vadd.f32 %v126, %v127
      %v129 = vrot.slane %v128, 2
      %v130 = vadd.f32 %v128, %v129
      %v131 = vrot.slane %v130, 1
      %v132 = vadd.f32 %v130, %v131
      %vm133 = vcmask 1040384
      %v134 = vsel %vm133, %v123, %v132
      %135 = vst [vmem:[%s114] sm:$0x3] %v134
      %p136 = scmp.lt.s32.totalorder %s12, 1
      %s137 = scalar_select %p136, %s12, 1
      %s138 = smul.addr %s137, 2
      %s139 = scalar_lea.vmem %s1, %s138
      // Predicated region
      $region25: #{generator_forward.6} parent=23 // pred_check
        %p140 = pneg %p56
      $region26: #{generator_forward.6} parent=23 // pred_check_branch
        %142 = sbr.rel (%p140) target = $region28
      $region27: #{generator_forward.6} parent=23 // pred_region
        _
      $region28: #{generator_forward.6} parent=23 // pred_fallthru
        _
    $region24: #{generator_forward.6} parent=5 // pred_fallthru
      _
    %p143 = scmp.le.s32.totalorder 2, %s7
    // Predicated region
    $region29: #{generator_forward.6} parent=5 // pred_check
      %p144 = pneg %p143
    $region30: #{generator_forward.6} parent=5 // pred_check_branch
      %146 = sbr.rel (%p144) target = $region32
    $region31: #{generator_forward.6} parent=5 // pred_region
      %s147 = ssub.s32 %s7, 2
      // Predicated region
      $region33: #{generator_forward.6} parent=31 // pred_check
        %p148 = pneg %p62
      $region34: #{generator_forward.6} parent=31 // pred_check_branch
        %150 = sbr.rel (%p148) target = $region36
      $region35: #{generator_forward.6} parent=31 // pred_region
        %p151 = scmp.lt.s32.totalorder %s13, 1
        %s152 = scalar_select %p151, %s13, 1
        %s153 = smul.addr %s152, 2
        %s154 = scalar_lea.vmem %s1, %s153
      $region36: #{generator_forward.6} parent=31 // pred_fallthru
        _
    $region32: #{generator_forward.6} parent=5 // pred_fallthru
      _
  $region6: #{generator_forward.6} parent=0 // loop_footer
    %s11 = sadd.s32 1, %s7
  $region7: #{generator_forward.6} parent=0 // loop_footer_branch
    %6 = sbr.rel target = $region3
  $region8: #{generator_forward.6} parent=0 // loop_exit
    _

// kernel: generator_forward.5
$region0: #{generator_forward.5}
  #allocation0 [shape = 'u32[]', space=smem, size = 0x4, offset = 0x4, fixed_abs, tag = 'smem constant byte address 0x4 - core index']
  #allocation1 [shape = 'u32[72,128]{1,0:T(1,128)}', space=vmem, size = 0x9000, scoped, tag = 'internal scratch']
  %s0 = inlined_call_operand.vmem [shape: f32[2,32], index: 0, kind: input, shape index: {}]
  %s1 = inlined_call_operand.vmem [shape: f32[32,2048], index: 1, kind: input, shape index: {}]
  %s2 = inlined_call_operand.vmem [shape: f32[1,2048], index: 2, kind: input, shape index: {}]
  %s3 = inlined_call_operand.vmem [shape: f32[2,2048], index: 3, kind: output, shape index: {}]
  %s4 = sld [smem:[#allocation0]]
  $region22: #{generator_forward.5} parent=0
    _
  %s6 = ssub.s32 1, %s4
  %s7 = scalar_select 0, %s6, %s4
  // Predicated region
  $region2: #{generator_forward.5} parent=0 // pred_check
    _
  $region3: #{generator_forward.5} parent=0 // pred_check_branch
    %9 = sbr.rel (0) target = $region5
  $region4: #{generator_forward.5} parent=0 // pred_region
    _
  $region5: #{generator_forward.5} parent=0 // pred_fallthru
    _
  // Predicated region
  $region6: #{generator_forward.5} parent=0 // pred_check
    _
  $region7: #{generator_forward.5} parent=0 // pred_check_branch
    %11 = sbr.rel (0) target = $region9
  $region8: #{generator_forward.5} parent=0 // pred_region
    _
  $region9: #{generator_forward.5} parent=0 // pred_fallthru
    _
  // Predicated region
  $region10: #{generator_forward.5} parent=0 // pred_check
    _
  $region11: #{generator_forward.5} parent=0 // pred_check_branch
    %13 = sbr.rel (0) target = $region13
  $region12: #{generator_forward.5} parent=0 // pred_region
    _
  $region13: #{generator_forward.5} parent=0 // pred_fallthru
    _
  %v14 = vld [vmem:[%s0] sm:$0x3]
  %v15 = vld [vmem:[%s1] sm:$0xff]
  %v16 = vld [vmem:[%s1 + $0x8] sm:$0xff]
  %v17 = vld [vmem:[%s1 + $0x10] sm:$0xff]
  %v18 = vld [vmem:[%s1 + $0x18] sm:$0xff]
  %v19 = vld [vmem:[%s1 + $0x20] sm:$0xff]
  %v20 = vld [vmem:[%s1 + $0x28] sm:$0xff]
  %v21 = vld [vmem:[%s1 + $0x30] sm:$0xff]
  %v22 = vld [vmem:[%s1 + $0x38] sm:$0xff]
  %v23 = vld [vmem:[%s1 + $0x40] sm:$0xff]
  %v24 = vld [vmem:[%s1 + $0x48] sm:$0xff]
  %v25 = vld [vmem:[%s1 + $0x50] sm:$0xff]
  %v26 = vld [vmem:[%s1 + $0x58] sm:$0xff]
  %v27 = vld [vmem:[%s1 + $0x60] sm:$0xff]
  %v28 = vld [vmem:[%s1 + $0x68] sm:$0xff]
  %v29 = vld [vmem:[%s1 + $0x70] sm:$0xff]
  %v30 = vld [vmem:[%s1 + $0x78] sm:$0xff]
  %v31 = vld [vmem:[%s1 + $0x80] sm:$0xff]
  %v32 = vld [vmem:[%s1 + $0x88] sm:$0xff]
  %v33 = vld [vmem:[%s1 + $0x90] sm:$0xff]
  %v34 = vld [vmem:[%s1 + $0x98] sm:$0xff]
  %v35 = vld [vmem:[%s1 + $0xa0] sm:$0xff]
  %v36 = vld [vmem:[%s1 + $0xa8] sm:$0xff]
  %v37 = vld [vmem:[%s1 + $0xb0] sm:$0xff]
  %v38 = vld [vmem:[%s1 + $0xb8] sm:$0xff]
  %v39 = vld [vmem:[%s1 + $0xc0] sm:$0xff]
  %v40 = vld [vmem:[%s1 + $0xc8] sm:$0xff]
  %v41 = vld [vmem:[%s1 + $0xd0] sm:$0xff]
  %v42 = vld [vmem:[%s1 + $0xd8] sm:$0xff]
  %v43 = vld [vmem:[%s1 + $0xe0] sm:$0xff]
  %v44 = vld [vmem:[%s1 + $0xe8] sm:$0xff]
  %v45 = vld [vmem:[%s1 + $0xf0] sm:$0xff]
  %v46 = vld [vmem:[%s1 + $0xf8] sm:$0xff]
  %v47 = vld [vmem:[%s1 + $0x100] sm:$0xff]
  %v48 = vld [vmem:[%s1 + $0x108] sm:$0xff]
  %v49 = vld [vmem:[%s1 + $0x110] sm:$0xff]
  %v50 = vld [vmem:[%s1 + $0x118] sm:$0xff]
  %v51 = vld [vmem:[%s1 + $0x120] sm:$0xff]
  %v52 = vld [vmem:[%s1 + $0x128] sm:$0xff]
  %v53 = vld [vmem:[%s1 + $0x130] sm:$0xff]
  %v54 = vld [vmem:[%s1 + $0x138] sm:$0xff]
  %v55 = vld [vmem:[%s1 + $0x140] sm:$0xff]
  %v56 = vld [vmem:[%s1 + $0x148] sm:$0xff]
  %v57 = vld [vmem:[%s1 + $0x150] sm:$0xff]
  %v58 = vld [vmem:[%s1 + $0x158] sm:$0xff]
  %v59 = vld [vmem:[%s1 + $0x160] sm:$0xff]
  %v60 = vld [vmem:[%s1 + $0x168] sm:$0xff]
  %v61 = vld [vmem:[%s1 + $0x170] sm:$0xff]
  %v62 = vld [vmem:[%s1 + $0x178] sm:$0xff]
  %v63 = vld [vmem:[%s1 + $0x180] sm:$0xff]
  %v64 = vld [vmem:[%s1 + $0x188] sm:$0xff]
  %v65 = vld [vmem:[%s1 + $0x190] sm:$0xff]
  %v66 = vld [vmem:[%s1 + $0x198] sm:$0xff]
  %v67 = vld [vmem:[%s1 + $0x1a0] sm:$0xff]
  %v68 = vld [vmem:[%s1 + $0x1a8] sm:$0xff]
  %v69 = vld [vmem:[%s1 + $0x1b0] sm:$0xff]
  %v70 = vld [vmem:[%s1 + $0x1b8] sm:$0xff]
  %v71 = vld [vmem:[%s1 + $0x1c0] sm:$0xff]
  %v72 = vld [vmem:[%s1 + $0x1c8] sm:$0xff]
  %v73 = vld [vmem:[%s1 + $0x1d0] sm:$0xff]
  %v74 = vld [vmem:[%s1 + $0x1d8] sm:$0xff]
  %v75 = vld [vmem:[%s1 + $0x1e0] sm:$0xff]
  %v76 = vld [vmem:[%s1 + $0x1e8] sm:$0xff]
  %v77 = vld [vmem:[%s1 + $0x1f0] sm:$0xff]
  %v78 = vld [vmem:[%s1 + $0x1f8] sm:$0xff]
  %v79 = vld [vmem:[%s2] sm:$0xff]
  %v80 = vld [vmem:[%s2 + $0x8] sm:$0xff]
  %v83 = vperm.slane %v79, 0
  %v84 = vperm.slane %v79, 1
  %v85 = vperm.slane %v79, 2
  %v86 = vperm.slane %v79, 3
  %v87 = vperm.slane %v79, 4
  %v88 = vperm.slane %v79, 5
  %v89 = vperm.slane %v79, 6
  %v90 = vperm.slane %v79, 7
  %v91 = vperm.slane %v80, 0
  %v92 = vperm.slane %v80, 1
  %v93 = vperm.slane %v80, 2
  %v94 = vperm.slane %v80, 3
  %v95 = vperm.slane %v80, 4
  %v96 = vperm.slane %v80, 5
  %v97 = vperm.slane %v80, 6
  %v98 = vperm.slane %v80, 7
  %vm115 = vcmask 261120
  %v117 = vsel %vm115, %v14, 0
  %119 = vmatpush.msra.mxu0 0.0
  %120 = vmatpush.msra.mxu0 0.0
  %121 = vmatpush.msra.mxu0 0.0
  %122 = vmatpush.msra.mxu0 0.0
  %123 = vmatpush.msra.mxu0 0.0
  %124 = vmatpush.msra.mxu0 0.0
  %125 = vmatpush.msra.mxu0 0.0
  %126 = vmatpush.msra.mxu0 0.0
  %127 = vmatpush.msra.mxu0 0.0
  %128 = vmatpush.msra.mxu0 0.0
  %129 = vmatpush.msra.mxu0 0.0
  %130 = vmatpush.msra.mxu0 0.0
  %131 = vmatpush.msra.mxu0 %v63
  %132 = vmatpush.msra.mxu0 %v47
  %133 = vmatpush.msra.mxu0 %v31
  %134 = vmatpush.msra.mxu0 %v15
  %135 = vmatmul.f32.gmra.mxu0 %v117
  %v136 = vpop.f32.mrf.mxu0
  %v137 = vadd.f32 %v83, %v136
  %138 = vdwg.mxu0
  %139 = vmatpush.msra.mxu0 0.0
  %140 = vmatpush.msra.mxu0 0.0
  %141 = vmatpush.msra.mxu0 0.0
  %142 = vmatpush.msra.mxu0 0.0
  %143 = vmatpush.msra.mxu0 0.0
  %144 = vmatpush.msra.mxu0 0.0
  %145 = vmatpush.msra.mxu0 0.0
  %146 = vmatpush.msra.mxu0 0.0
  %147 = vmatpush.msra.mxu0 0.0
  %148 = vmatpush.msra.mxu0 0.0
  %149 = vmatpush.msra.mxu0 0.0
  %150 = vmatpush.msra.mxu0 0.0
  %151 = vmatpush.msra.mxu0 %v64
  %152 = vmatpush.msra.mxu0 %v48
  %153 = vmatpush.msra.mxu0 %v32
  %154 = vmatpush.msra.mxu0 %v16
  %155 = vmatmul.f32.gmra.mxu0 %v117
  %v156 = vpop.f32.mrf.mxu0
  %v157 = vadd.f32 %v84, %v156
  %158 = vdwg.mxu0
  %159 = vmatpush.msra.mxu0 0.0
  %160 = vmatpush.msra.mxu0 0.0
  %161 = vmatpush.msra.mxu0 0.0
  %162 = vmatpush.msra.mxu0 0.0
  %163 = vmatpush.msra.mxu0 0.0
  %164 = vmatpush.msra.mxu0 0.0
  %165 = vmatpush.msra.mxu0 0.0
  %166 = vmatpush.msra.mxu0 0.0
  %167 = vmatpush.msra.mxu0 0.0
  %168 = vmatpush.msra.mxu0 0.0
  %169 = vmatpush.msra.mxu0 0.0
  %170 = vmatpush.msra.mxu0 0.0
  %171 = vmatpush.msra.mxu0 %v65
  %172 = vmatpush.msra.mxu0 %v49
  %173 = vmatpush.msra.mxu0 %v33
  %174 = vmatpush.msra.mxu0 %v17
  %175 = vmatmul.f32.gmra.mxu0 %v117
  %v176 = vpop.f32.mrf.mxu0
  %v177 = vadd.f32 %v85, %v176
  %178 = vdwg.mxu0
  %179 = vmatpush.msra.mxu0 0.0
  %180 = vmatpush.msra.mxu0 0.0
  %181 = vmatpush.msra.mxu0 0.0
  %182 = vmatpush.msra.mxu0 0.0
  %183 = vmatpush.msra.mxu0 0.0
  %184 = vmatpush.msra.mxu0 0.0
  %185 = vmatpush.msra.mxu0 0.0
  %186 = vmatpush.msra.mxu0 0.0
  %187 = vmatpush.msra.mxu0 0.0
  %188 = vmatpush.msra.mxu0 0.0
  %189 = vmatpush.msra.mxu0 0.0
  %190 = vmatpush.msra.mxu0 0.0
  %191 = vmatpush.msra.mxu0 %v66
  %192 = vmatpush.msra.mxu0 %v50
  %193 = vmatpush.msra.mxu0 %v34
  %194 = vmatpush.msra.mxu0 %v18
  %195 = vmatmul.f32.gmra.mxu0 %v117
  %v196 = vpop.f32.mrf.mxu0
  %v197 = vadd.f32 %v86, %v196
  %198 = vdwg.mxu0
  %199 = vmatpush.msra.mxu0 0.0
  %200 = vmatpush.msra.mxu0 0.0
  %201 = vmatpush.msra.mxu0 0.0
  %202 = vmatpush.msra.mxu0 0.0
  %203 = vmatpush.msra.mxu0 0.0
  %204 = vmatpush.msra.mxu0 0.0
  %205 = vmatpush.msra.mxu0 0.0
  %206 = vmatpush.msra.mxu0 0.0
  %207 = vmatpush.msra.mxu0 0.0
  %208 = vmatpush.msra.mxu0 0.0
  %209 = vmatpush.msra.mxu0 0.0
  %210 = vmatpush.msra.mxu0 0.0
  %211 = vmatpush.msra.mxu0 %v67
  %212 = vmatpush.msra.mxu0 %v51
  %213 = vmatpush.msra.mxu0 %v35
  %214 = vmatpush.msra.mxu0 %v19
  %215 = vmatmul.f32.gmra.mxu0 %v117
  %v216 = vpop.f32.mrf.mxu0
  %v217 = vadd.f32 %v87, %v216
  %218 = vdwg.mxu0
  %219 = vmatpush.msra.mxu0 0.0
  %220 = vmatpush.msra.mxu0 0.0
  %221 = vmatpush.msra.mxu0 0.0
  %222 = vmatpush.msra.mxu0 0.0
  %223 = vmatpush.msra.mxu0 0.0
  %224 = vmatpush.msra.mxu0 0.0
  %225 = vmatpush.msra.mxu0 0.0
  %226 = vmatpush.msra.mxu0 0.0
  %227 = vmatpush.msra.mxu0 0.0
  %228 = vmatpush.msra.mxu0 0.0
  %229 = vmatpush.msra.mxu0 0.0
  %230 = vmatpush.msra.mxu0 0.0
  %231 = vmatpush.msra.mxu0 %v68
  %232 = vmatpush.msra.mxu0 %v52
  %233 = vmatpush.msra.mxu0 %v36
  %234 = vmatpush.msra.mxu0 %v20
  %235 = vmatmul.f32.gmra.mxu0 %v117
  %v236 = vpop.f32.mrf.mxu0
  %v237 = vadd.f32 %v88, %v236
  %238 = vdwg.mxu0
  %239 = vmatpush.msra.mxu0 0.0
  %240 = vmatpush.msra.mxu0 0.0
  %241 = vmatpush.msra.mxu0 0.0
  %242 = vmatpush.msra.mxu0 0.0
  %243 = vmatpush.msra.mxu0 0.0
  %244 = vmatpush.msra.mxu0 0.0
  %245 = vmatpush.msra.mxu0 0.0
  %246 = vmatpush.msra.mxu0 0.0
  %247 = vmatpush.msra.mxu0 0.0
  %248 = vmatpush.msra.mxu0 0.0
  %249 = vmatpush.msra.mxu0 0.0
  %250 = vmatpush.msra.mxu0 0.0
  %251 = vmatpush.msra.mxu0 %v69
  %252 = vmatpush.msra.mxu0 %v53
  %253 = vmatpush.msra.mxu0 %v37
  %254 = vmatpush.msra.mxu0 %v21
  %255 = vmatmul.f32.gmra.mxu0 %v117
  %v256 = vpop.f32.mrf.mxu0
  %v257 = vadd.f32 %v89, %v256
  %258 = vdwg.mxu0
  %259 = vmatpush.msra.mxu0 0.0
  %260 = vmatpush.msra.mxu0 0.0
  %261 = vmatpush.msra.mxu0 0.0
  %262 = vmatpush.msra.mxu0 0.0
  %263 = vmatpush.msra.mxu0 0.0
  %264 = vmatpush.msra.mxu0 0.0
  %265 = vmatpush.msra.mxu0 0.0
  %266 = vmatpush.msra.mxu0 0.0
  %267 = vmatpush.msra.mxu0 0.0
  %268 = vmatpush.msra.mxu0 0.0
  %269 = vmatpush.msra.mxu0 0.0
  %270 = vmatpush.msra.mxu0 0.0
  %271 = vmatpush.msra.mxu0 %v70
  %272 = vmatpush.msra.mxu0 %v54
  %273 = vmatpush.msra.mxu0 %v38
  %274 = vmatpush.msra.mxu0 %v22
  %275 = vmatmul.f32.gmra.mxu0 %v117
  %v276 = vpop.f32.mrf.mxu0
  %v277 = vadd.f32 %v90, %v276
  %278 = vdwg.mxu0
  %279 = vmatpush.msra.mxu0 0.0
  %280 = vmatpush.msra.mxu0 0.0
  %281 = vmatpush.msra.mxu0 0.0
  %282 = vmatpush.msra.mxu0 0.0
  %283 = vmatpush.msra.mxu0 0.0
  %284 = vmatpush.msra.mxu0 0.0
  %285 = vmatpush.msra.mxu0 0.0
  %286 = vmatpush.msra.mxu0 0.0
  %287 = vmatpush.msra.mxu0 0.0
  %288 = vmatpush.msra.mxu0 0.0
  %289 = vmatpush.msra.mxu0 0.0
  %290 = vmatpush.msra.mxu0 0.0
  %291 = vmatpush.msra.mxu0 %v71
  %292 = vmatpush.msra.mxu0 %v55
  %293 = vmatpush.msra.mxu0 %v39
  %294 = vmatpush.msra.mxu0 %v23
  %295 = vmatmul.f32.gmra.mxu0 %v117
  %v296 = vpop.f32.mrf.mxu0
  %v297 = vadd.f32 %v91, %v296
  %298 = vdwg.mxu0
  %299 = vmatpush.msra.mxu0 0.0
  %300 = vmatpush.msra.mxu0 0.0
  %301 = vmatpush.msra.mxu0 0.0
  %302 = vmatpush.msra.mxu0 0.0
  %303 = vmatpush.msra.mxu0 0.0
  %304 = vmatpush.msra.mxu0 0.0
  %305 = vmatpush.msra.mxu0 0.0
  %306 = vmatpush.msra.mxu0 0.0
  %307 = vmatpush.msra.mxu0 0.0
  %308 = vmatpush.msra.mxu0 0.0
  %309 = vmatpush.msra.mxu0 0.0
  %310 = vmatpush.msra.mxu0 0.0
  %311 = vmatpush.msra.mxu0 %v72
  %312 = vmatpush.msra.mxu0 %v56
  %313 = vmatpush.msra.mxu0 %v40
  %314 = vmatpush.msra.mxu0 %v24
  %315 = vmatmul.f32.gmra.mxu0 %v117
  %v316 = vpop.f32.mrf.mxu0
  %v317 = vadd.f32 %v92, %v316
  %318 = vdwg.mxu0
  %319 = vmatpush.msra.mxu0 0.0
  %320 = vmatpush.msra.mxu0 0.0
  %321 = vmatpush.msra.mxu0 0.0
  %322 = vmatpush.msra.mxu0 0.0
  %323 = vmatpush.msra.mxu0 0.0
  %324 = vmatpush.msra.mxu0 0.0
  %325 = vmatpush.msra.mxu0 0.0
  %326 = vmatpush.msra.mxu0 0.0
  %327 = vmatpush.msra.mxu0 0.0
  %328 = vmatpush.msra.mxu0 0.0
  %329 = vmatpush.msra.mxu0 0.0
  %330 = vmatpush.msra.mxu0 0.0
  %331 = vmatpush.msra.mxu0 %v73
  %332 = vmatpush.msra.mxu0 %v57
  %333 = vmatpush.msra.mxu0 %v41
  %334 = vmatpush.msra.mxu0 %v25
  %335 = vmatmul.f32.gmra.mxu0 %v117
  %v336 = vpop.f32.mrf.mxu0
  %v337 = vadd.f32 %v93, %v336
  %338 = vdwg.mxu0
  %339 = vmatpush.msra.mxu0 0.0
  %340 = vmatpush.msra.mxu0 0.0
  %341 = vmatpush.msra.mxu0 0.0
  %342 = vmatpush.msra.mxu0 0.0
  %343 = vmatpush.msra.mxu0 0.0
  %344 = vmatpush.msra.mxu0 0.0
  %345 = vmatpush.msra.mxu0 0.0
  %346 = vmatpush.msra.mxu0 0.0
  %347 = vmatpush.msra.mxu0 0.0
  %348 = vmatpush.msra.mxu0 0.0
  %349 = vmatpush.msra.mxu0 0.0
  %350 = vmatpush.msra.mxu0 0.0
  %351 = vmatpush.msra.mxu0 %v74
  %352 = vmatpush.msra.mxu0 %v58
  %353 = vmatpush.msra.mxu0 %v42
  %354 = vmatpush.msra.mxu0 %v26
  %355 = vmatmul.f32.gmra.mxu0 %v117
  %v356 = vpop.f32.mrf.mxu0
  %v357 = vadd.f32 %v94, %v356
  %358 = vdwg.mxu0
  %359 = vmatpush.msra.mxu0 0.0
  %360 = vmatpush.msra.mxu0 0.0
  %361 = vmatpush.msra.mxu0 0.0
  %362 = vmatpush.msra.mxu0 0.0
  %363 = vmatpush.msra.mxu0 0.0
  %364 = vmatpush.msra.mxu0 0.0
  %365 = vmatpush.msra.mxu0 0.0
  %366 = vmatpush.msra.mxu0 0.0
  %367 = vmatpush.msra.mxu0 0.0
  %368 = vmatpush.msra.mxu0 0.0
  %369 = vmatpush.msra.mxu0 0.0
  %370 = vmatpush.msra.mxu0 0.0
  %371 = vmatpush.msra.mxu0 %v75
  %372 = vmatpush.msra.mxu0 %v59
  %373 = vmatpush.msra.mxu0 %v43
  %374 = vmatpush.msra.mxu0 %v27
  %375 = vmatmul.f32.gmra.mxu0 %v117
  %v376 = vpop.f32.mrf.mxu0
  %v377 = vadd.f32 %v95, %v376
  %378 = vdwg.mxu0
  %379 = vmatpush.msra.mxu0 0.0
  %380 = vmatpush.msra.mxu0 0.0
  %381 = vmatpush.msra.mxu0 0.0
  %382 = vmatpush.msra.mxu0 0.0
  %383 = vmatpush.msra.mxu0 0.0
  %384 = vmatpush.msra.mxu0 0.0
  %385 = vmatpush.msra.mxu0 0.0
  %386 = vmatpush.msra.mxu0 0.0
  %387 = vmatpush.msra.mxu0 0.0
  %388 = vmatpush.msra.mxu0 0.0
  %389 = vmatpush.msra.mxu0 0.0
  %390 = vmatpush.msra.mxu0 0.0
  %391 = vmatpush.msra.mxu0 %v76
  %392 = vmatpush.msra.mxu0 %v60
  %393 = vmatpush.msra.mxu0 %v44
  %394 = vmatpush.msra.mxu0 %v28
  %395 = vmatmul.f32.gmra.mxu0 %v117
  %v396 = vpop.f32.mrf.mxu0
  %v397 = vadd.f32 %v96, %v396
  %398 = vdwg.mxu0
  %399 = vmatpush.msra.mxu0 0.0
  %400 = vmatpush.msra.mxu0 0.0
  %401 = vmatpush.msra.mxu0 0.0
  %402 = vmatpush.msra.mxu0 0.0
  %403 = vmatpush.msra.mxu0 0.0
  %404 = vmatpush.msra.mxu0 0.0
  %405 = vmatpush.msra.mxu0 0.0
  %406 = vmatpush.msra.mxu0 0.0
  %407 = vmatpush.msra.mxu0 0.0
  %408 = vmatpush.msra.mxu0 0.0
  %409 = vmatpush.msra.mxu0 0.0
  %410 = vmatpush.msra.mxu0 0.0
  %411 = vmatpush.msra.mxu0 %v77
  %412 = vmatpush.msra.mxu0 %v61
  %413 = vmatpush.msra.mxu0 %v45
  %414 = vmatpush.msra.mxu0 %v29
  %415 = vmatmul.f32.gmra.mxu0 %v117
  %v416 = vpop.f32.mrf.mxu0
  %v417 = vadd.f32 %v97, %v416
  %418 = vdwg.mxu0
  %419 = vmatpush.msra.mxu0 0.0
  %420 = vmatpush.msra.mxu0 0.0
  %421 = vmatpush.msra.mxu0 0.0
  %422 = vmatpush.msra.mxu0 0.0
  %423 = vmatpush.msra.mxu0 0.0
  %424 = vmatpush.msra.mxu0 0.0
  %425 = vmatpush.msra.mxu0 0.0
  %426 = vmatpush.msra.mxu0 0.0
  %427 = vmatpush.msra.mxu0 0.0
  %428 = vmatpush.msra.mxu0 0.0
  %429 = vmatpush.msra.mxu0 0.0
  %430 = vmatpush.msra.mxu0 0.0
  %431 = vmatpush.msra.mxu0 %v78
  %432 = vmatpush.msra.mxu0 %v62
  %433 = vmatpush.msra.mxu0 %v46
  %434 = vmatpush.msra.mxu0 %v30
  %435 = vmatmul.f32.gmra.mxu0 %v117
  %v436 = vpop.f32.mrf.mxu0
  %v437 = vadd.f32 %v98, %v436
  %438 = vdwg.mxu0
  %v455 = vrot.slane %v157, 6
  %v456 = vrot.slane %v177, 4
  %v457 = vrot.slane %v197, 2
  %v458 = vrot.slane %v237, 6
  %v459 = vrot.slane %v257, 4
  %v460 = vrot.slane %v277, 2
  %v461 = vrot.slane %v317, 6
  %v462 = vrot.slane %v337, 4
  %v463 = vrot.slane %v357, 2
  %v464 = vrot.slane %v397, 6
  %v465 = vrot.slane %v417, 4
  %v466 = vrot.slane %v437, 2
  %vm467 = vcmask 1041408
  %v468 = vsel %vm467, %v137, %v455
  %vm469 = vcmask 1045508
  %v470 = vsel %vm469, %v456, %v457
  %vm471 = vcmask 1043456
  %v472 = vsel %vm471, %v468, %v470
  %v473 = vsel %vm467, %v217, %v458
  %v474 = vsel %vm469, %v459, %v460
  %v475 = vsel %vm471, %v473, %v474
  %v476 = vsel %vm467, %v297, %v461
  %v477 = vsel %vm469, %v462, %v463
  %v478 = vsel %vm471, %v476, %v477
  %v479 = vsel %vm467, %v377, %v464
  %v480 = vsel %vm469, %v465, %v466
  %v481 = vsel %vm471, %v479, %v480
  %486 = vst [vmem:[%s3] sm:$0xff] %v472
  %487 = vst [vmem:[%s3 + $0x8] sm:$0xff] %v475
  %488 = vst [vmem:[%s3 + $0x10] sm:$0xff] %v478
  %489 = vst [vmem:[%s3 + $0x18] sm:$0xff] %v481
  // Predicated region
  $region14: #{generator_forward.5} parent=0 // pred_check
    _
  $region15: #{generator_forward.5} parent=0 // pred_check_branch
    %491 = sbr.rel (0) target = $region17
  $region16: #{generator_forward.5} parent=0 // pred_region
    _
  $region17: #{generator_forward.5} parent=0 // pred_fallthru
    _
  // Predicated region
  $region18: #{generator_forward.5} parent=0 // pred_check
    _
  $region19: #{generator_forward.5} parent=0 // pred_check_branch
    %493 = sbr.rel (0) target = $region21
  $region20: #{generator_forward.5} parent=0 // pred_region
    _
  $region21: #{generator_forward.5} parent=0 // pred_fallthru
    _

// kernel: generator_forward.7
$region0: #{generator_forward.7}
  #allocation0 [shape = 'u32[]', space=smem, size = 0x4, offset = 0x4, fixed_abs, tag = 'smem constant byte address 0x4 - core index']
  #allocation1 [shape = 'u32[72,128]{1,0:T(1,128)}', space=vmem, size = 0x9000, scoped, tag = 'internal scratch']
  %s0 = inlined_call_operand.vmem [shape: f32[2,4,10,128], index: 0, kind: input, shape index: {}]
  %s1 = inlined_call_operand.vmem [shape: f32[1,128], index: 1, kind: input, shape index: {}]
  %s2 = inlined_call_operand.vmem [shape: f32[1,128], index: 2, kind: input, shape index: {}]
  %s3 = inlined_call_operand.vmem [shape: bf16[9,128,128], index: 3, kind: input, shape index: {}]
  %s4 = inlined_call_operand.vmem [shape: f32[2,64,128], index: 4, kind: output, shape index: {0}]
  %s5 = inlined_call_operand.vmem [shape: f32[2,2,128], index: 5, kind: output, shape index: {1}]
  %6 = xla_tuple %s4, %s5
  %s7 = sld [smem:[#allocation0]]
  $region57: #{generator_forward.7} parent=0
    _
  %s9 = ssub.s32 1, %s7
  %s10 = scalar_select 0, %s9, %s7
  loop: start=0, step=1, limit=4
  $region2: #{generator_forward.7} parent=0 // loop_pre_header
    _
  $region3: #{generator_forward.7} parent=0 // loop_header
    %s12 = sphi 0, %s16
    %p13 = scmp.ge.s32.totalorder %s12, 4
    %s22 = sphi 0, %s24
    %s25 = sphi 0, %s22
    %s26 = sphi 0, %s25
    %s42 = sphi 0, %s26
    %s46 = sphi 0, %s46
    %s48 = sphi 0, %s46
    %s49 = sphi 0, %s48
    %s63 = sphi 0, %s49
    %s67 = sphi 0, %s67
    %s69 = sphi 0, %s67
    %s70 = sphi 0, %s69
    %s84 = sphi 0, %s70
    %s88 = sphi 0, %s88
    %s90 = sphi 0, %s88
    %s91 = sphi 0, %s90
    %s105 = sphi 0, %s91
    %s111 = sphi 0, %s113
    %s114 = sphi 0, %s111
    %s115 = sphi 0, %s114
    %s131 = sphi 0, %s115
    %s137 = sphi 0, %s139
    %s140 = sphi 0, %s137
    %s141 = sphi 0, %s140
    %s157 = sphi 0, %s141
  $region4: #{generator_forward.7} parent=0 // loop_header_branch
    %15 = sbr.rel (%p13) target = $region8
  $region5: #{generator_forward.7} parent=0 // loop_body
    %s17 = ssub.s32 %s12, 1
    %s18 = ssub.s32 %s12, 2
    %s19 = sadd.s32 %s12, 1
    %s20 = ssub.s32 %s12, %s19
    %p21 = scmp.eq.s32.totalorder %s20, 0
    %s23 = sadd.s32 %s22, 1
    %s24 = scalar_select %p21, %s22, %s23
    %p27 = pneg %p21
    %p28 = scmp.eq.s32.totalorder %s12, 1
    %p29 = por %p27, %p28
    %p30 = scmp.ne.s32.totalorder %s22, %s25
    %p31 = scmp.eq.s32.totalorder %s12, 0
    %p32 = por %p30, %p31
    %p33 = scmp.ne.s32.totalorder %s22, %s25
    %p34 = scmp.eq.s32.totalorder %s17, 1
    %p35 = por %p33, %p34
    %p36 = scmp.ne.s32.totalorder %s25, %s26
    %p37 = scmp.eq.s32.totalorder %s17, 0
    %p38 = por %p36, %p37
    %p39 = scmp.ne.s32.totalorder %s25, %s26
    %p40 = scmp.eq.s32.totalorder %s18, 1
    %p41 = por %p39, %p40
    %p43 = scmp.ne.s32.totalorder %s26, %s42
    %p44 = scmp.eq.s32.totalorder %s18, 0
    %p45 = por %p43, %p44
    %s47 = sadd.s32 %s46, 1
    %p50 = scmp.eq.s32.totalorder %s12, 1
    %p51 = scmp.ne.s32.totalorder %s46, %s48
    %p52 = scmp.eq.s32.totalorder %s12, 0
    %p53 = por %p51, %p52
    %p54 = scmp.ne.s32.totalorder %s46, %s48
    %p55 = scmp.eq.s32.totalorder %s17, 1
    %p56 = por %p54, %p55
    %p57 = scmp.ne.s32.totalorder %s48, %s49
    %p58 = scmp.eq.s32.totalorder %s17, 0
    %p59 = por %p57, %p58
    %p60 = scmp.ne.s32.totalorder %s48, %s49
    %p61 = scmp.eq.s32.totalorder %s18, 1
    %p62 = por %p60, %p61
    %p64 = scmp.ne.s32.totalorder %s49, %s63
    %p65 = scmp.eq.s32.totalorder %s18, 0
    %p66 = por %p64, %p65
    %s68 = sadd.s32 %s67, 1
    %p71 = scmp.eq.s32.totalorder %s12, 1
    %p72 = scmp.ne.s32.totalorder %s67, %s69
    %p73 = scmp.eq.s32.totalorder %s12, 0
    %p74 = por %p72, %p73
    %p75 = scmp.ne.s32.totalorder %s67, %s69
    %p76 = scmp.eq.s32.totalorder %s17, 1
    %p77 = por %p75, %p76
    %p78 = scmp.ne.s32.totalorder %s69, %s70
    %p79 = scmp.eq.s32.totalorder %s17, 0
    %p80 = por %p78, %p79
    %p81 = scmp.ne.s32.totalorder %s69, %s70
    %p82 = scmp.eq.s32.totalorder %s18, 1
    %p83 = por %p81, %p82
    %p85 = scmp.ne.s32.totalorder %s70, %s84
    %p86 = scmp.eq.s32.totalorder %s18, 0
    %p87 = por %p85, %p86
    %s89 = sadd.s32 %s88, 1
    %p92 = scmp.eq.s32.totalorder %s12, 1
    %p93 = scmp.ne.s32.totalorder %s88, %s90
    %p94 = scmp.eq.s32.totalorder %s12, 0
    %p95 = por %p93, %p94
    %p96 = scmp.ne.s32.totalorder %s88, %s90
    %p97 = scmp.eq.s32.totalorder %s17, 1
    %p98 = por %p96, %p97
    %p99 = scmp.ne.s32.totalorder %s90, %s91
    %p100 = scmp.eq.s32.totalorder %s17, 0
    %p101 = por %p99, %p100
    %p102 = scmp.ne.s32.totalorder %s90, %s91
    %p103 = scmp.eq.s32.totalorder %s18, 1
    %p104 = por %p102, %p103
    %p106 = scmp.ne.s32.totalorder %s91, %s105
    %p107 = scmp.eq.s32.totalorder %s18, 0
    %p108 = por %p106, %p107
    %s109 = ssub.s32 %s12, %s19
    %p110 = scmp.eq.s32.totalorder %s109, 0
    %s112 = sadd.s32 %s111, 1
    %s113 = scalar_select %p110, %s111, %s112
    %p116 = pneg %p110
    %p117 = scmp.eq.s32.totalorder %s12, 1
    %p118 = por %p116, %p117
    %p119 = scmp.ne.s32.totalorder %s111, %s114
    %p120 = scmp.eq.s32.totalorder %s12, 0
    %p121 = por %p119, %p120
    %p122 = scmp.ne.s32.totalorder %s111, %s114
    %p123 = scmp.eq.s32.totalorder %s17, 1
    %p124 = por %p122, %p123
    %p125 = scmp.ne.s32.totalorder %s114, %s115
    %p126 = scmp.eq.s32.totalorder %s17, 0
    %p127 = por %p125, %p126
    %p128 = scmp.ne.s32.totalorder %s114, %s115
    %p129 = scmp.eq.s32.totalorder %s18, 1
    %p130 = por %p128, %p129
    %p132 = scmp.ne.s32.totalorder %s115, %s131
    %p133 = scmp.eq.s32.totalorder %s18, 0
    %p134 = por %p132, %p133
    %s135 = ssub.s32 %s12, %s19
    %p136 = scmp.eq.s32.totalorder %s135, 0
    %s138 = sadd.s32 %s137, 1
    %s139 = scalar_select %p136, %s137, %s138
    %p142 = pneg %p136
    %p143 = scmp.eq.s32.totalorder %s12, 1
    %p144 = por %p142, %p143
    %p145 = scmp.ne.s32.totalorder %s137, %s140
    %p146 = scmp.eq.s32.totalorder %s12, 0
    %p147 = por %p145, %p146
    %p148 = scmp.ne.s32.totalorder %s137, %s140
    %p149 = scmp.eq.s32.totalorder %s17, 1
    %p150 = por %p148, %p149
    %p151 = scmp.ne.s32.totalorder %s140, %s141
    %p152 = scmp.eq.s32.totalorder %s17, 0
    %p153 = por %p151, %p152
    %p154 = scmp.ne.s32.totalorder %s140, %s141
    %p155 = scmp.eq.s32.totalorder %s18, 1
    %p156 = por %p154, %p155
    %p158 = scmp.ne.s32.totalorder %s141, %s157
    %p159 = scmp.eq.s32.totalorder %s18, 0
    %p160 = por %p158, %p159
    %p161 = scmp.le.s32.totalorder 1, %s12
    %p162 = scmp.lt.s32.totalorder %s12, 3
    %p163 = pnand %p161, %p162
    %p164 = pneg %p163
    // Predicated region
    $region9: #{generator_forward.7} parent=5 // pred_check
      _
    $region10: #{generator_forward.7} parent=5 // pred_check_branch
      %166 = sbr.rel (%p163) target = $region12
    $region11: #{generator_forward.7} parent=5 // pred_region
      %s167 = ssub.s32 %s12, 1
      // Predicated region
      $region13: #{generator_forward.7} parent=11 // pred_check
        %p168 = pneg %p59
      $region14: #{generator_forward.7} parent=11 // pred_check_branch
        %170 = sbr.rel (%p168) target = $region16
      $region15: #{generator_forward.7} parent=11 // pred_region
        _
      $region16: #{generator_forward.7} parent=11 // pred_fallthru
        _
      // Predicated region
      $region17: #{generator_forward.7} parent=11 // pred_check
        %p171 = pneg %p80
      $region18: #{generator_forward.7} parent=11 // pred_check_branch
        %173 = sbr.rel (%p171) target = $region20
      $region19: #{generator_forward.7} parent=11 // pred_region
        _
      $region20: #{generator_forward.7} parent=11 // pred_fallthru
        _
      // Predicated region
      $region21: #{generator_forward.7} parent=11 // pred_check
        %p174 = pneg %p101
      $region22: #{generator_forward.7} parent=11 // pred_check_branch
        %176 = sbr.rel (%p174) target = $region24
      $region23: #{generator_forward.7} parent=11 // pred_region
        _
      $region24: #{generator_forward.7} parent=11 // pred_fallthru
        _
    $region12: #{generator_forward.7} parent=5 // pred_fallthru
      _
    %p177 = scmp.lt.s32.totalorder %s12, 2
    // Predicated region
    $region25: #{generator_forward.7} parent=5 // pred_check
      %p178 = pneg %p177
    $region26: #{generator_forward.7} parent=5 // pred_check_branch
      %180 = sbr.rel (%p178) target = $region28
    $region27: #{generator_forward.7} parent=5 // pred_region
      // Predicated region
      $region29: #{generator_forward.7} parent=27 // pred_check
        %p181 = pneg %p32
      $region30: #{generator_forward.7} parent=27 // pred_check_branch
        %183 = sbr.rel (%p181) target = $region32
      $region31: #{generator_forward.7} parent=27 // pred_region
        %p184 = scmp.lt.s32.totalorder %s12, 1
        %s185 = scalar_select %p184, %s12, 1
        %s186 = smul.addr %s185, 8
        %s187 = smul.addr %s186, 8
        %s188 = scalar_lea.vmem %s0, %s187
      $region32: #{generator_forward.7} parent=27 // pred_fallthru
        _
    $region28: #{generator_forward.7} parent=5 // pred_fallthru
      _
    %p189 = scmp.le.s32.totalorder 1, %s12
    %p190 = scmp.lt.s32.totalorder %s12, 3
    %p191 = pnand %p189, %p190
    %p192 = pneg %p191
    // Predicated region
    $region33: #{generator_forward.7} parent=5 // pred_check
      _
    $region34: #{generator_forward.7} parent=5 // pred_check_branch
      %194 = sbr.rel (%p191) target = $region36
    $region35: #{generator_forward.7} parent=5 // pred_region
      %s195 = ssub.s32 %s12, 1
      %p196 = scmp.lt.s32.totalorder %s17, 1
      %s197 = scalar_select %p196, %s17, 1
      %s198 = smul.addr %s197, 8
      %s199 = smul.addr %s198, 8
      %s200 = scalar_lea.vmem %s0, %s199
      %p201 = pneg %p38
      %p202 = pneg %p35
      %p203 = pneg %p59
      %p204 = pneg %p56
      %p205 = pneg %p80
      %p206 = pneg %p77
      %p207 = pneg %p101
      %p208 = pneg %p98
      %p209 = pneg %p127
      %p210 = pneg %p124
      %p211 = scmp.lt.s32.totalorder %s17, 1
      %s212 = scalar_select %p211, %s17, 1
      %s213 = smul.addr %s212, 8
      %s214 = smul.addr %s213, 8
      %s215 = scalar_lea.vmem %s4, %s214
      %p216 = pneg %p153
      %p217 = pneg %p150
      %p218 = scmp.lt.s32.totalorder %s17, 1
      %s219 = scalar_select %p218, %s17, 1
      %s220 = smul.addr %s219, 2
      %s221 = scalar_lea.vmem %s5, %s220
      %p222 = scmp.lt.s32.totalorder %s17, 1
      %s223 = scalar_select %p222, %s17, 1
      %s224 = smul.addr %s223, 8
      %s225 = smul.addr %s224, 8
      %s226 = scalar_lea.vmem %s0, %s225
      %p227 = scmp.lt.s32.totalorder %s17, 1
      %s228 = scalar_select %p227, %s17, 1
      %s229 = smul.addr %s228, 8
      %s230 = smul.addr %s229, 8
      %s231 = scalar_lea.vmem %s4, %s230
      %p232 = scmp.lt.s32.totalorder %s17, 1
      %s233 = scalar_select %p232, %s17, 1
      %s234 = smul.addr %s233, 2
      %s235 = scalar_lea.vmem %s5, %s234
      %v236 = vld [vmem:[%s226] sm:$0xff]
      %v237 = vld [vmem:[%s226 + $0x8] sm:$0x3]
      %v238 = vld [vmem:[%s226 + $0x10] sm:$0xff]
      %v239 = vld [vmem:[%s226 + $0x18] sm:$0x3]
      %v240 = vld [vmem:[%s226 + $0x20] sm:$0xff]
      %v241 = vld [vmem:[%s226 + $0x28] sm:$0x3]
      %v242 = vld [vmem:[%s226 + $0x30] sm:$0xff]
      %v243 = vld [vmem:[%s226 + $0x38] sm:$0x3]
      %v244 = vld [vmem:[%s1] sm:$0x1]
      %v245 = vld [vmem:[%s2] sm:$0x1]
      %v247 = vperm.slane %v244, 0
      %v249 = vmul.f32 %v236, %v247
      %v250 = vmul.f32 %v237, %v247
      %v251 = vmul.f32 %v238, %v247
      %v252 = vmul.f32 %v239, %v247
      %v253 = vmul.f32 %v240, %v247
      %v254 = vmul.f32 %v241, %v247
      %v255 = vmul.f32 %v242, %v247
      %v256 = vmul.f32 %v243, %v247
      %v258 = vperm.slane %v245, 0
      %v260 = vadd.f32 %v249, %v258
      %v261 = vadd.f32 %v250, %v258
      %v262 = vadd.f32 %v251, %v258
      %v263 = vadd.f32 %v252, %v258
      %v264 = vadd.f32 %v253, %v258
      %v265 = vadd.f32 %v254, %v258
      %v266 = vadd.f32 %v255, %v258
      %v267 = vadd.f32 %v256, %v258
      %v268 = vlaneseq
      %v269 = vshrl.u32 %v268, 7
      %v270 = vadd.s32 %v269, 8
      %vm271 = vcmp.eq.s32.totalorder %v269, 0
      %vm272 = vcmp.eq.s32.totalorder %v270, 0
      %vm273 = vcmp.eq.s32.totalorder %v269, 9
      %vm274 = vcmp.eq.s32.totalorder %v270, 9
      %vm275 = vmor %vm271, %vm273
      %vm276 = vmor %vm272, %vm274
      %v277 = vsel %vm275, 0.0, %v260
      %v278 = vsel %vm276, 0.0, %v261
      %v279 = vsel %vm275, 0.0, %v262
      %v280 = vsel %vm276, 0.0, %v263
      %v281 = vsel %vm275, 0.0, %v264
      %v282 = vsel %vm276, 0.0, %v265
      %v283 = vsel %vm275, 0.0, %v266
      %v284 = vsel %vm276, 0.0, %v267
      %v285 = vpack.c.bf16 %v277, 0.0
      %v286 = vpack.c.bf16 %v279, %v277
      %v287 = vpack.c.bf16 %v281, %v279
      %v288 = vpack.c.bf16 %v283, %v281
      %v289 = vld [vmem:[%s3] sm:$0xf]
      %v290 = vld [vmem:[%s3 + $0x4] sm:$0xf]
      %v291 = vld [vmem:[%s3 + $0x8] sm:$0xf]
      %v292 = vld [vmem:[%s3 + $0xc] sm:$0xf]
      %v293 = vld [vmem:[%s3 + $0x10] sm:$0xf]
      %v294 = vld [vmem:[%s3 + $0x14] sm:$0xf]
      %v295 = vld [vmem:[%s3 + $0x18] sm:$0xf]
      %v296 = vld [vmem:[%s3 + $0x1c] sm:$0xf]
      %v297 = vld [vmem:[%s3 + $0x20] sm:$0xf]
      %v298 = vld [vmem:[%s3 + $0x24] sm:$0xf]
      %v299 = vld [vmem:[%s3 + $0x28] sm:$0xf]
      %v300 = vld [vmem:[%s3 + $0x2c] sm:$0xf]
      %v301 = vld [vmem:[%s3 + $0x30] sm:$0xf]
      %v302 = vld [vmem:[%s3 + $0x34] sm:$0xf]
      %v303 = vld [vmem:[%s3 + $0x38] sm:$0xf]
      %v304 = vld [vmem:[%s3 + $0x3c] sm:$0xf]
      %vm314 = vcmask 1046528
      %v315 = vrot.slane 0.0, 1
      %v316 = vsel %vm314, %v315, %v315
      %v317 = vrot.slane %v277, 1
      %v318 = vrot.slane %v278, 1
      %v319 = vsel %vm314, %v317, %v318
      %v320 = vrot.slane %v279, 1
      %v321 = vrot.slane %v280, 1
      %v322 = vsel %vm314, %v320, %v321
      %v323 = vrot.slane %v281, 1
      %v324 = vrot.slane %v282, 1
      %v325 = vsel %vm314, %v323, %v324
      %v326 = vrot.slane %v283, 1
      %v327 = vrot.slane %v284, 1
      %v328 = vsel %vm314, %v326, %v327
      %v334 = vpack.c.bf16 %v319, %v316
      %v335 = vpack.c.bf16 %v322, %v319
      %v336 = vpack.c.bf16 %v325, %v322
      %v337 = vpack.c.bf16 %v328, %v325
      %s338 = scalar_lea.vmem %s3, 64
      %v339 = vld [vmem:[%s338] sm:$0xf]
      %v340 = vld [vmem:[%s338 + $0x4] sm:$0xf]
      %v341 = vld [vmem:[%s338 + $0x8] sm:$0xf]
      %v342 = vld [vmem:[%s338 + $0xc] sm:$0xf]
      %v343 = vld [vmem:[%s338 + $0x10] sm:$0xf]
      %v344 = vld [vmem:[%s338 + $0x14] sm:$0xf]
      %v345 = vld [vmem:[%s338 + $0x18] sm:$0xf]
      %v346 = vld [vmem:[%s338 + $0x1c] sm:$0xf]
      %v347 = vld [vmem:[%s338 + $0x20] sm:$0xf]
      %v348 = vld [vmem:[%s338 + $0x24] sm:$0xf]
      %v349 = vld [vmem:[%s338 + $0x28] sm:$0xf]
      %v350 = vld [vmem:[%s338 + $0x2c] sm:$0xf]
      %v351 = vld [vmem:[%s338 + $0x30] sm:$0xf]
      %v352 = vld [vmem:[%s338 + $0x34] sm:$0xf]
      %v353 = vld [vmem:[%s338 + $0x38] sm:$0xf]
      %v354 = vld [vmem:[%s338 + $0x3c] sm:$0xf]
      %v371 = vunpack.c.l.b16 %v339
      %v372 = vunpack.c.l.b16 %v340
      %v373 = vunpack.c.l.b16 %v341
      %v374 = vunpack.c.l.b16 %v342
      %v375 = vunpack.c.l.b16 %v343
      %v376 = vunpack.c.l.b16 %v344
      %v377 = vunpack.c.l.b16 %v345
      %v378 = vunpack.c.l.b16 %v346
      %v379 = vunpack.c.l.b16 %v347
      %v380 = vunpack.c.l.b16 %v348
      %v381 = vunpack.c.l.b16 %v349
      %v382 = vunpack.c.l.b16 %v350
      %v383 = vunpack.c.l.b16 %v351
      %v384 = vunpack.c.l.b16 %v352
      %v385 = vunpack.c.l.b16 %v353
      %v386 = vunpack.c.l.b16 %v354
      %v387 = vpack.c.b16 %v372, %v371
      %v388 = vpack.c.b16 %v374, %v373
      %v389 = vpack.c.b16 %v376, %v375
      %v390 = vpack.c.b16 %v378, %v377
      %v391 = vpack.c.b16 %v380, %v379
      %v392 = vpack.c.b16 %v382, %v381
      %v393 = vpack.c.b16 %v384, %v383
      %v394 = vpack.c.b16 %v386, %v385
      %403 = vmatpush.bf16.msra.mxu0 %v394
      %404 = vmatpush.bf16.msra.mxu0 %v393
      %405 = vmatpush.bf16.msra.mxu0 %v392
      %406 = vmatpush.bf16.msra.mxu0 %v391
      %407 = vmatpush.bf16.msra.mxu0 %v390
      %408 = vmatpush.bf16.msra.mxu0 %v389
      %409 = vmatpush.bf16.msra.mxu0 %v388
      %410 = vmatpush.bf16.msra.mxu0 %v387
      %411 = vmatmul.bf16.gmra.mxu0 %v334
      %v412 = vpop.f32.mrf.mxu0
      %v413 = vadd.f32 0.0, %v412
      %v414 = vpop.f32.mrf.mxu0
      %v415 = vadd.f32 0.0, %v414
      %416 = vmatmul.bf16.gmra.mxu0 %v335
      %v417 = vpop.f32.mrf.mxu0
      %v418 = vadd.f32 0.0, %v417
      %v419 = vpop.f32.mrf.mxu0
      %v420 = vadd.f32 0.0, %v419
      %421 = vmatmul.bf16.gmra.mxu0 %v336
      %v422 = vpop.f32.mrf.mxu0
      %v423 = vadd.f32 0.0, %v422
      %v424 = vpop.f32.mrf.mxu0
      %v425 = vadd.f32 0.0, %v424
      %426 = vmatmul.bf16.gmra.mxu0 %v337
      %v427 = vpop.f32.mrf.mxu0
      %v428 = vadd.f32 0.0, %v427
      %v429 = vpop.f32.mrf.mxu0
      %v430 = vadd.f32 0.0, %v429
      %431 = vdwg.mxu0
      %v448 = vunpack.c.l.b16 %v289
      %v449 = vunpack.c.l.b16 %v290
      %v450 = vunpack.c.l.b16 %v291
      %v451 = vunpack.c.l.b16 %v292
      %v452 = vunpack.c.l.b16 %v293
      %v453 = vunpack.c.l.b16 %v294
      %v454 = vunpack.c.l.b16 %v295
      %v455 = vunpack.c.l.b16 %v296
      %v456 = vunpack.c.l.b16 %v297
      %v457 = vunpack.c.l.b16 %v298
      %v458 = vunpack.c.l.b16 %v299
      %v459 = vunpack.c.l.b16 %v300
      %v460 = vunpack.c.l.b16 %v301
      %v461 = vunpack.c.l.b16 %v302
      %v462 = vunpack.c.l.b16 %v303
      %v463 = vunpack.c.l.b16 %v304
      %v464 = vpack.c.b16 %v449, %v448
      %v465 = vpack.c.b16 %v451, %v450
      %v466 = vpack.c.b16 %v453, %v452
      %v467 = vpack.c.b16 %v455, %v454
      %v468 = vpack.c.b16 %v457, %v456
      %v469 = vpack.c.b16 %v459, %v458
      %v470 = vpack.c.b16 %v461, %v460
      %v471 = vpack.c.b16 %v463, %v462
      %480 = vmatpush.bf16.msra.mxu0 %v471
      %481 = vmatpush.bf16.msra.mxu0 %v470
      %482 = vmatpush.bf16.msra.mxu0 %v469
      %483 = vmatpush.bf16.msra.mxu0 %v468
      %484 = vmatpush.bf16.msra.mxu0 %v467
      %485 = vmatpush.bf16.msra.mxu0 %v466
      %486 = vmatpush.bf16.msra.mxu0 %v465
      %487 = vmatpush.bf16.msra.mxu0 %v464
      %488 = vmatmul.bf16.gmra.mxu0 %v285
      %v489 = vpop.f32.mrf.mxu0
      %v490 = vadd.f32 %v413, %v489
      %v491 = vpop.f32.mrf.mxu0
      %v492 = vadd.f32 %v415, %v491
      %493 = vmatmul.bf16.gmra.mxu0 %v286
      %v494 = vpop.f32.mrf.mxu0
      %v495 = vadd.f32 %v418, %v494
      %v496 = vpop.f32.mrf.mxu0
      %v497 = vadd.f32 %v420, %v496
      %498 = vmatmul.bf16.gmra.mxu0 %v287
      %v499 = vpop.f32.mrf.mxu0
      %v500 = vadd.f32 %v423, %v499
      %v501 = vpop.f32.mrf.mxu0
      %v502 = vadd.f32 %v425, %v501
      %503 = vmatmul.bf16.gmra.mxu0 %v288
      %v504 = vpop.f32.mrf.mxu0
      %v505 = vadd.f32 %v428, %v504
      %v506 = vpop.f32.mrf.mxu0
      %v507 = vadd.f32 %v430, %v506
      %508 = vdwg.mxu0
      %vm509 = vcmask 1045504
      %v510 = vrot.slane 0.0, 2
      %v511 = vsel %vm509, %v510, %v510
      %v512 = vrot.slane %v277, 2
      %v513 = vrot.slane %v278, 2
      %v514 = vsel %vm509, %v512, %v513
      %v515 = vrot.slane %v279, 2
      %v516 = vrot.slane %v280, 2
      %v517 = vsel %vm509, %v515, %v516
      %v518 = vrot.slane %v281, 2
      %v519 = vrot.slane %v282, 2
      %v520 = vsel %vm509, %v518, %v519
      %v521 = vrot.slane %v283, 2
      %v522 = vrot.slane %v284, 2
      %v523 = vsel %vm509, %v521, %v522
      %v529 = vpack.c.bf16 %v514, %v511
      %v530 = vpack.c.bf16 %v517, %v514
      %v531 = vpack.c.bf16 %v520, %v517
      %v532 = vpack.c.bf16 %v523, %v520
      %s533 = scalar_lea.vmem %s3, 128
      %v534 = vld [vmem:[%s533] sm:$0xf]
      %v535 = vld [vmem:[%s533 + $0x4] sm:$0xf]
      %v536 = vld [vmem:[%s533 + $0x8] sm:$0xf]
      %v537 = vld [vmem:[%s533 + $0xc] sm:$0xf]
      %v538 = vld [vmem:[%s533 + $0x10] sm:$0xf]
      %v539 = vld [vmem:[%s533 + $0x14] sm:$0xf]
      %v540 = vld [vmem:[%s533 + $0x18] sm:$0xf]
      %v541 = vld [vmem:[%s533 + $0x1c] sm:$0xf]
      %v542 = vld [vmem:[%s533 + $0x20] sm:$0xf]
      %v543 = vld [vmem:[%s533 + $0x24] sm:$0xf]
      %v544 = vld [vmem:[%s533 + $0x28] sm:$0xf]
      %v545 = vld [vmem:[%s533 + $0x2c] sm:$0xf]
      %v546 = vld [vmem:[%s533 + $0x30] sm:$0xf]
      %v547 = vld [vmem:[%s533 + $0x34] sm:$0xf]
      %v548 = vld [vmem:[%s533 + $0x38] sm:$0xf]
      %v549 = vld [vmem:[%s533 + $0x3c] sm:$0xf]
      %v566 = vunpack.c.l.b16 %v534
      %v567 = vunpack.c.l.b16 %v535
      %v568 = vunpack.c.l.b16 %v536
      %v569 = vunpack.c.l.b16 %v537
      %v570 = vunpack.c.l.b16 %v538
      %v571 = vunpack.c.l.b16 %v539
      %v572 = vunpack.c.l.b16 %v540
      %v573 = vunpack.c.l.b16 %v541
      %v574 = vunpack.c.l.b16 %v542
      %v575 = vunpack.c.l.b16 %v543
      %v576 = vunpack.c.l.b16 %v544
      %v577 = vunpack.c.l.b16 %v545
      %v578 = vunpack.c.l.b16 %v546
      %v579 = vunpack.c.l.b16 %v547
      %v580 = vunpack.c.l.b16 %v548
      %v581 = vunpack.c.l.b16 %v549
      %v582 = vpack.c.b16 %v567, %v566
      %v583 = vpack.c.b16 %v569, %v568
      %v584 = vpack.c.b16 %v571, %v570
      %v585 = vpack.c.b16 %v573, %v572
      %v586 = vpack.c.b16 %v575, %v574
      %v587 = vpack.c.b16 %v577, %v576
      %v588 = vpack.c.b16 %v579, %v578
      %v589 = vpack.c.b16 %v581, %v580
      %598 = vmatpush.bf16.msra.mxu0 %v589
      %599 = vmatpush.bf16.msra.mxu0 %v588
      %600 = vmatpush.bf16.msra.mxu0 %v587
      %601 = vmatpush.bf16.msra.mxu0 %v586
      %602 = vmatpush.bf16.msra.mxu0 %v585
      %603 = vmatpush.bf16.msra.mxu0 %v584
      %604 = vmatpush.bf16.msra.mxu0 %v583
      %605 = vmatpush.bf16.msra.mxu0 %v582
      %606 = vmatmul.bf16.gmra.mxu0 %v529
      %v607 = vpop.f32.mrf.mxu0
      %v608 = vadd.f32 0.0, %v607
      %v609 = vpop.f32.mrf.mxu0
      %v610 = vadd.f32 0.0, %v609
      %611 = vmatmul.bf16.gmra.mxu0 %v530
      %v612 = vpop.f32.mrf.mxu0
      %v613 = vadd.f32 0.0, %v612
      %v614 = vpop.f32.mrf.mxu0
      %v615 = vadd.f32 0.0, %v614
      %616 = vmatmul.bf16.gmra.mxu0 %v531
      %v617 = vpop.f32.mrf.mxu0
      %v618 = vadd.f32 0.0, %v617
      %v619 = vpop.f32.mrf.mxu0
      %v620 = vadd.f32 0.0, %v619
      %621 = vmatmul.bf16.gmra.mxu0 %v532
      %v622 = vpop.f32.mrf.mxu0
      %v623 = vadd.f32 0.0, %v622
      %v624 = vpop.f32.mrf.mxu0
      %v625 = vadd.f32 0.0, %v624
      %626 = vdwg.mxu0
      %v627 = vadd.f32 %v490, %v608
      %v628 = vadd.f32 %v492, %v610
      %v629 = vadd.f32 %v495, %v613
      %v630 = vadd.f32 %v497, %v615
      %v631 = vadd.f32 %v500, %v618
      %v632 = vadd.f32 %v502, %v620
      %v633 = vadd.f32 %v505, %v623
      %v634 = vadd.f32 %v507, %v625
      %v635 = vpack.c.bf16 %v277, %v277
      %v636 = vpack.c.bf16 %v279, %v279
      %v637 = vpack.c.bf16 %v281, %v281
      %v638 = vpack.c.bf16 %v283, %v283
      %s639 = scalar_lea.vmem %s3, 192
      %v640 = vld [vmem:[%s639] sm:$0xf]
      %v641 = vld [vmem:[%s639 + $0x4] sm:$0xf]
      %v642 = vld [vmem:[%s639 + $0x8] sm:$0xf]
      %v643 = vld [vmem:[%s639 + $0xc] sm:$0xf]
      %v644 = vld [vmem:[%s639 + $0x10] sm:$0xf]
      %v645 = vld [vmem:[%s639 + $0x14] sm:$0xf]
      %v646 = vld [vmem:[%s639 + $0x18] sm:$0xf]
      %v647 = vld [vmem:[%s639 + $0x1c] sm:$0xf]
      %v648 = vld [vmem:[%s639 + $0x20] sm:$0xf]
      %v649 = vld [vmem:[%s639 + $0x24] sm:$0xf]
      %v650 = vld [vmem:[%s639 + $0x28] sm:$0xf]
      %v651 = vld [vmem:[%s639 + $0x2c] sm:$0xf]
      %v652 = vld [vmem:[%s639 + $0x30] sm:$0xf]
      %v653 = vld [vmem:[%s639 + $0x34] sm:$0xf]
      %v654 = vld [vmem:[%s639 + $0x38] sm:$0xf]
      %v655 = vld [vmem:[%s639 + $0x3c] sm:$0xf]
      %v672 = vunpack.c.l.b16 %v640
      %v673 = vunpack.c.l.b16 %v641
      %v674 = vunpack.c.l.b16 %v642
      %v675 = vunpack.c.l.b16 %v643
      %v676 = vunpack.c.l.b16 %v644
      %v677 = vunpack.c.l.b16 %v645
      %v678 = vunpack.c.l.b16 %v646
      %v679 = vunpack.c.l.b16 %v647
      %v680 = vunpack.c.l.b16 %v648
      %v681 = vunpack.c.l.b16 %v649
      %v682 = vunpack.c.l.b16 %v650
      %v683 = vunpack.c.l.b16 %v651
      %v684 = vunpack.c.l.b16 %v652
      %v685 = vunpack.c.l.b16 %v653
      %v686 = vunpack.c.l.b16 %v654
      %v687 = vunpack.c.l.b16 %v655
      %v688 = vpack.c.b16 %v673, %v672
      %v689 = vpack.c.b16 %v675, %v674
      %v690 = vpack.c.b16 %v677, %v676
      %v691 = vpack.c.b16 %v679, %v678
      %v692 = vpack.c.b16 %v681, %v680
      %v693 = vpack.c.b16 %v683, %v682
      %v694 = vpack.c.b16 %v685, %v684
      %v695 = vpack.c.b16 %v687, %v686
      %704 = vmatpush.bf16.msra.mxu0 %v695
      %705 = vmatpush.bf16.msra.mxu0 %v694
      %706 = vmatpush.bf16.msra.mxu0 %v693
      %707 = vmatpush.bf16.msra.mxu0 %v692
      %708 = vmatpush.bf16.msra.mxu0 %v691
      %709 = vmatpush.bf16.msra.mxu0 %v690
      %710 = vmatpush.bf16.msra.mxu0 %v689
      %711 = vmatpush.bf16.msra.mxu0 %v688
      %712 = vmatmul.bf16.gmra.mxu0 %v635
      %v713 = vpop.f32.mrf.mxu0
      %v714 = vadd.f32 0.0, %v713
      %v715 = vpop.f32.mrf.mxu0
      %v716 = vadd.f32 0.0, %v715
      %717 = vmatmul.bf16.gmra.mxu0 %v636
      %v718 = vpop.f32.mrf.mxu0
      %v719 = vadd.f32 0.0, %v718
      %v720 = vpop.f32.mrf.mxu0
      %v721 = vadd.f32 0.0, %v720
      %722 = vmatmul.bf16.gmra.mxu0 %v637
      %v723 = vpop.f32.mrf.mxu0
      %v724 = vadd.f32 0.0, %v723
      %v725 = vpop.f32.mrf.mxu0
      %v726 = vadd.f32 0.0, %v725
      %727 = vmatmul.bf16.gmra.mxu0 %v638
      %v728 = vpop.f32.mrf.mxu0
      %v729 = vadd.f32 0.0, %v728
      %v730 = vpop.f32.mrf.mxu0
      %v731 = vadd.f32 0.0, %v730
      %732 = vdwg.mxu0
      %v733 = vadd.f32 %v627, %v714
      %v734 = vadd.f32 %v628, %v716
      %v735 = vadd.f32 %v629, %v719
      %v736 = vadd.f32 %v630, %v721
      %v737 = vadd.f32 %v631, %v724
      %v738 = vadd.f32 %v632, %v726
      %v739 = vadd.f32 %v633, %v729
      %v740 = vadd.f32 %v634, %v731
      %v741 = vpack.c.bf16 %v319, %v319
      %v742 = vpack.c.bf16 %v322, %v322
      %v743 = vpack.c.bf16 %v325, %v325
      %v744 = vpack.c.bf16 %v328, %v328
      %s745 = scalar_lea.vmem %s3, 256
      %v746 = vld [vmem:[%s745] sm:$0xf]
      %v747 = vld [vmem:[%s745 + $0x4] sm:$0xf]
      %v748 = vld [vmem:[%s745 + $0x8] sm:$0xf]
      %v749 = vld [vmem:[%s745 + $0xc] sm:$0xf]
      %v750 = vld [vmem:[%s745 + $0x10] sm:$0xf]
      %v751 = vld [vmem:[%s745 + $0x14] sm:$0xf]
      %v752 = vld [vmem:[%s745 + $0x18] sm:$0xf]
      %v753 = vld [vmem:[%s745 + $0x1c] sm:$0xf]
      %v754 = vld [vmem:[%s745 + $0x20] sm:$0xf]
      %v755 = vld [vmem:[%s745 + $0x24] sm:$0xf]
      %v756 = vld [vmem:[%s745 + $0x28] sm:$0xf]
      %v757 = vld [vmem:[%s745 + $0x2c] sm:$0xf]
      %v758 = vld [vmem:[%s745 + $0x30] sm:$0xf]
      %v759 = vld [vmem:[%s745 + $0x34] sm:$0xf]
      %v760 = vld [vmem:[%s745 + $0x38] sm:$0xf]
      %v761 = vld [vmem:[%s745 + $0x3c] sm:$0xf]
      %v778 = vunpack.c.l.b16 %v746
      %v779 = vunpack.c.l.b16 %v747
      %v780 = vunpack.c.l.b16 %v748
      %v781 = vunpack.c.l.b16 %v749
      %v782 = vunpack.c.l.b16 %v750
      %v783 = vunpack.c.l.b16 %v751
      %v784 = vunpack.c.l.b16 %v752
      %v785 = vunpack.c.l.b16 %v753
      %v786 = vunpack.c.l.b16 %v754
      %v787 = vunpack.c.l.b16 %v755
      %v788 = vunpack.c.l.b16 %v756
      %v789 = vunpack.c.l.b16 %v757
      %v790 = vunpack.c.l.b16 %v758
      %v791 = vunpack.c.l.b16 %v759
      %v792 = vunpack.c.l.b16 %v760
      %v793 = vunpack.c.l.b16 %v761
      %v794 = vpack.c.b16 %v779, %v778
      %v795 = vpack.c.b16 %v781, %v780
      %v796 = vpack.c.b16 %v783, %v782
      %v797 = vpack.c.b16 %v785, %v784
      %v798 = vpack.c.b16 %v787, %v786
      %v799 = vpack.c.b16 %v789, %v788
      %v800 = vpack.c.b16 %v791, %v790
      %v801 = vpack.c.b16 %v793, %v792
      %810 = vmatpush.bf16.msra.mxu0 %v801
      %811 = vmatpush.bf16.msra.mxu0 %v800
      %812 = vmatpush.bf16.msra.mxu0 %v799
      %813 = vmatpush.bf16.msra.mxu0 %v798
      %814 = vmatpush.bf16.msra.mxu0 %v797
      %815 = vmatpush.bf16.msra.mxu0 %v796
      %816 = vmatpush.bf16.msra.mxu0 %v795
      %817 = vmatpush.bf16.msra.mxu0 %v794
      %818 = vmatmul.bf16.gmra.mxu0 %v741
      %v819 = vpop.f32.mrf.mxu0
      %v820 = vadd.f32 0.0, %v819
      %v821 = vpop.f32.mrf.mxu0
      %v822 = vadd.f32 0.0, %v821
      %823 = vmatmul.bf16.gmra.mxu0 %v742
      %v824 = vpop.f32.mrf.mxu0
      %v825 = vadd.f32 0.0, %v824
      %v826 = vpop.f32.mrf.mxu0
      %v827 = vadd.f32 0.0, %v826
      %828 = vmatmul.bf16.gmra.mxu0 %v743
      %v829 = vpop.f32.mrf.mxu0
      %v830 = vadd.f32 0.0, %v829
      %v831 = vpop.f32.mrf.mxu0
      %v832 = vadd.f32 0.0, %v831
      %833 = vmatmul.bf16.gmra.mxu0 %v744
      %v834 = vpop.f32.mrf.mxu0
      %v835 = vadd.f32 0.0, %v834
      %v836 = vpop.f32.mrf.mxu0
      %v837 = vadd.f32 0.0, %v836
      %838 = vdwg.mxu0
      %v839 = vadd.f32 %v733, %v820
      %v840 = vadd.f32 %v734, %v822
      %v841 = vadd.f32 %v735, %v825
      %v842 = vadd.f32 %v736, %v827
      %v843 = vadd.f32 %v737, %v830
      %v844 = vadd.f32 %v738, %v832
      %v845 = vadd.f32 %v739, %v835
      %v846 = vadd.f32 %v740, %v837
      %v847 = vpack.c.bf16 %v514, %v514
      %v848 = vpack.c.bf16 %v517, %v517
      %v849 = vpack.c.bf16 %v520, %v520
      %v850 = vpack.c.bf16 %v523, %v523
      %s851 = scalar_lea.vmem %s3, 320
      %v852 = vld [vmem:[%s851] sm:$0xf]
      %v853 = vld [vmem:[%s851 + $0x4] sm:$0xf]
      %v854 = vld [vmem:[%s851 + $0x8] sm:$0xf]
      %v855 = vld [vmem:[%s851 + $0xc] sm:$0xf]
      %v856 = vld [vmem:[%s851 + $0x10] sm:$0xf]
      %v857 = vld [vmem:[%s851 + $0x14] sm:$0xf]
      %v858 = vld [vmem:[%s851 + $0x18] sm:$0xf]
      %v859 = vld [vmem:[%s851 + $0x1c] sm:$0xf]
      %v860 = vld [vmem:[%s851 + $0x20] sm:$0xf]
      %v861 = vld [vmem:[%s851 + $0x24] sm:$0xf]
      %v862 = vld [vmem:[%s851 + $0x28] sm:$0xf]
      %v863 = vld [vmem:[%s851 + $0x2c] sm:$0xf]
      %v864 = vld [vmem:[%s851 + $0x30] sm:$0xf]
      %v865 = vld [vmem:[%s851 + $0x34] sm:$0xf]
      %v866 = vld [vmem:[%s851 + $0x38] sm:$0xf]
      %v867 = vld [vmem:[%s851 + $0x3c] sm:$0xf]
      %v884 = vunpack.c.l.b16 %v852
      %v885 = vunpack.c.l.b16 %v853
      %v886 = vunpack.c.l.b16 %v854
      %v887 = vunpack.c.l.b16 %v855
      %v888 = vunpack.c.l.b16 %v856
      %v889 = vunpack.c.l.b16 %v857
      %v890 = vunpack.c.l.b16 %v858
      %v891 = vunpack.c.l.b16 %v859
      %v892 = vunpack.c.l.b16 %v860
      %v893 = vunpack.c.l.b16 %v861
      %v894 = vunpack.c.l.b16 %v862
      %v895 = vunpack.c.l.b16 %v863
      %v896 = vunpack.c.l.b16 %v864
      %v897 = vunpack.c.l.b16 %v865
      %v898 = vunpack.c.l.b16 %v866
      %v899 = vunpack.c.l.b16 %v867
      %v900 = vpack.c.b16 %v885, %v884
      %v901 = vpack.c.b16 %v887, %v886
      %v902 = vpack.c.b16 %v889, %v888
      %v903 = vpack.c.b16 %v891, %v890
      %v904 = vpack.c.b16 %v893, %v892
      %v905 = vpack.c.b16 %v895, %v894
      %v906 = vpack.c.b16 %v897, %v896
      %v907 = vpack.c.b16 %v899, %v898
      %916 = vmatpush.bf16.msra.mxu0 %v907
      %917 = vmatpush.bf16.msra.mxu0 %v906
      %918 = vmatpush.bf16.msra.mxu0 %v905
      %919 = vmatpush.bf16.msra.mxu0 %v904
      %920 = vmatpush.bf16.msra.mxu0 %v903
      %921 = vmatpush.bf16.msra.mxu0 %v902
      %922 = vmatpush.bf16.msra.mxu0 %v901
      %923 = vmatpush.bf16.msra.mxu0 %v900
      %924 = vmatmul.bf16.gmra.mxu0 %v847
      %v925 = vpop.f32.mrf.mxu0
      %v926 = vadd.f32 0.0, %v925
      %v927 = vpop.f32.mrf.mxu0
      %v928 = vadd.f32 0.0, %v927
      %929 = vmatmul.bf16.gmra.mxu0 %v848
      %v930 = vpop.f32.mrf.mxu0
      %v931 = vadd.f32 0.0, %v930
      %v932 = vpop.f32.mrf.mxu0
      %v933 = vadd.f32 0.0, %v932
      %934 = vmatmul.bf16.gmra.mxu0 %v849
      %v935 = vpop.f32.mrf.mxu0
      %v936 = vadd.f32 0.0, %v935
      %v937 = vpop.f32.mrf.mxu0
      %v938 = vadd.f32 0.0, %v937
      %939 = vmatmul.bf16.gmra.mxu0 %v850
      %v940 = vpop.f32.mrf.mxu0
      %v941 = vadd.f32 0.0, %v940
      %v942 = vpop.f32.mrf.mxu0
      %v943 = vadd.f32 0.0, %v942
      %944 = vdwg.mxu0
      %v945 = vadd.f32 %v839, %v926
      %v946 = vadd.f32 %v840, %v928
      %v947 = vadd.f32 %v841, %v931
      %v948 = vadd.f32 %v842, %v933
      %v949 = vadd.f32 %v843, %v936
      %v950 = vadd.f32 %v844, %v938
      %v951 = vadd.f32 %v845, %v941
      %v952 = vadd.f32 %v846, %v943
      %v953 = vpack.c.bf16 0.0, %v283
      %s954 = scalar_lea.vmem %s3, 384
      %v955 = vld [vmem:[%s954] sm:$0xf]
      %v956 = vld [vmem:[%s954 + $0x4] sm:$0xf]
      %v957 = vld [vmem:[%s954 + $0x8] sm:$0xf]
      %v958 = vld [vmem:[%s954 + $0xc] sm:$0xf]
      %v959 = vld [vmem:[%s954 + $0x10] sm:$0xf]
      %v960 = vld [vmem:[%s954 + $0x14] sm:$0xf]
      %v961 = vld [vmem:[%s954 + $0x18] sm:$0xf]
      %v962 = vld [vmem:[%s954 + $0x1c] sm:$0xf]
      %v963 = vld [vmem:[%s954 + $0x20] sm:$0xf]
      %v964 = vld [vmem:[%s954 + $0x24] sm:$0xf]
      %v965 = vld [vmem:[%s954 + $0x28] sm:$0xf]
      %v966 = vld [vmem:[%s954 + $0x2c] sm:$0xf]
      %v967 = vld [vmem:[%s954 + $0x30] sm:$0xf]
      %v968 = vld [vmem:[%s954 + $0x34] sm:$0xf]
      %v969 = vld [vmem:[%s954 + $0x38] sm:$0xf]
      %v970 = vld [vmem:[%s954 + $0x3c] sm:$0xf]
      %v987 = vunpack.c.l.b16 %v955
      %v988 = vunpack.c.l.b16 %v956
      %v989 = vunpack.c.l.b16 %v957
      %v990 = vunpack.c.l.b16 %v958
      %v991 = vunpack.c.l.b16 %v959
      %v992 = vunpack.c.l.b16 %v960
      %v993 = vunpack.c.l.b16 %v961
      %v994 = vunpack.c.l.b16 %v962
      %v995 = vunpack.c.l.b16 %v963
      %v996 = vunpack.c.l.b16 %v964
      %v997 = vunpack.c.l.b16 %v965
      %v998 = vunpack.c.l.b16 %v966
      %v999 = vunpack.c.l.b16 %v967
      %v1000 = vunpack.c.l.b16 %v968
      %v1001 = vunpack.c.l.b16 %v969
      %v1002 = vunpack.c.l.b16 %v970
      %v1003 = vpack.c.b16 %v988, %v987
      %v1004 = vpack.c.b16 %v990, %v989
      %v1005 = vpack.c.b16 %v992, %v991
      %v1006 = vpack.c.b16 %v994, %v993
      %v1007 = vpack.c.b16 %v996, %v995
      %v1008 = vpack.c.b16 %v998, %v997
      %v1009 = vpack.c.b16 %v1000, %v999
      %v1010 = vpack.c.b16 %v1002, %v1001
      %1019 = vmatpush.bf16.msra.mxu0 %v1010
      %1020 = vmatpush.bf16.msra.mxu0 %v1009
      %1021 = vmatpush.bf16.msra.mxu0 %v1008
      %1022 = vmatpush.bf16.msra.mxu0 %v1007
      %1023 = vmatpush.bf16.msra.mxu0 %v1006
      %1024 = vmatpush.bf16.msra.mxu0 %v1005
      %1025 = vmatpush.bf16.msra.mxu0 %v1004
      %1026 = vmatpush.bf16.msra.mxu0 %v1003
      %1027 = vmatmul.bf16.gmra.mxu0 %v286
      %v1028 = vpop.f32.mrf.mxu0
      %v1029 = vadd.f32 0.0, %v1028
      %v1030 = vpop.f32.mrf.mxu0
      %v1031 = vadd.f32 0.0, %v1030
      %1032 = vmatmul.bf16.gmra.mxu0 %v287
      %v1033 = vpop.f32.mrf.mxu0
      %v1034 = vadd.f32 0.0, %v1033
      %v1035 = vpop.f32.mrf.mxu0
      %v1036 = vadd.f32 0.0, %v1035
      %1037 = vmatmul.bf16.gmra.mxu0 %v288
      %v1038 = vpop.f32.mrf.mxu0
      %v1039 = vadd.f32 0.0, %v1038
      %v1040 = vpop.f32.mrf.mxu0
      %v1041 = vadd.f32 0.0, %v1040
      %1042 = vmatmul.bf16.gmra.mxu0 %v953
      %v1043 = vpop.f32.mrf.mxu0
      %v1044 = vadd.f32 0.0, %v1043
      %v1045 = vpop.f32.mrf.mxu0
      %v1046 = vadd.f32 0.0, %v1045
      %1047 = vdwg.mxu0
      %v1048 = vadd.f32 %v945, %v1029
      %v1049 = vadd.f32 %v946, %v1031
      %v1050 = vadd.f32 %v947, %v1034
      %v1051 = vadd.f32 %v948, %v1036
      %v1052 = vadd.f32 %v949, %v1039
      %v1053 = vadd.f32 %v950, %v1041
      %v1054 = vadd.f32 %v951, %v1044
      %v1055 = vadd.f32 %v952, %v1046
      %v1056 = vpack.c.bf16 %v316, %v328
      %s1057 = scalar_lea.vmem %s3, 448
      %v1058 = vld [vmem:[%s1057] sm:$0xf]
      %v1059 = vld [vmem:[%s1057 + $0x4] sm:$0xf]
      %v1060 = vld [vmem:[%s1057 + $0x8] sm:$0xf]
      %v1061 = vld [vmem:[%s1057 + $0xc] sm:$0xf]
      %v1062 = vld [vmem:[%s1057 + $0x10] sm:$0xf]
      %v1063 = vld [vmem:[%s1057 + $0x14] sm:$0xf]
      %v1064 = vld [vmem:[%s1057 + $0x18] sm:$0xf]
      %v1065 = vld [vmem:[%s1057 + $0x1c] sm:$0xf]
      %v1066 = vld [vmem:[%s1057 + $0x20] sm:$0xf]
      %v1067 = vld [vmem:[%s1057 + $0x24] sm:$0xf]
      %v1068 = vld [vmem:[%s1057 + $0x28] sm:$0xf]
      %v1069 = vld [vmem:[%s1057 + $0x2c] sm:$0xf]
      %v1070 = vld [vmem:[%s1057 + $0x30] sm:$0xf]
      %v1071 = vld [vmem:[%s1057 + $0x34] sm:$0xf]
      %v1072 = vld [vmem:[%s1057 + $0x38] sm:$0xf]
      %v1073 = vld [vmem:[%s1057 + $0x3c] sm:$0xf]
      %v1090 = vunpack.c.l.b16 %v1058
      %v1091 = vunpack.c.l.b16 %v1059
      %v1092 = vunpack.c.l.b16 %v1060
      %v1093 = vunpack.c.l.b16 %v1061
      %v1094 = vunpack.c.l.b16 %v1062
      %v1095 = vunpack.c.l.b16 %v1063
      %v1096 = vunpack.c.l.b16 %v1064
      %v1097 = vunpack.c.l.b16 %v1065
      %v1098 = vunpack.c.l.b16 %v1066
      %v1099 = vunpack.c.l.b16 %v1067
      %v1100 = vunpack.c.l.b16 %v1068
      %v1101 = vunpack.c.l.b16 %v1069
      %v1102 = vunpack.c.l.b16 %v1070
      %v1103 = vunpack.c.l.b16 %v1071
      %v1104 = vunpack.c.l.b16 %v1072
      %v1105 = vunpack.c.l.b16 %v1073
      %v1106 = vpack.c.b16 %v1091, %v1090
      %v1107 = vpack.c.b16 %v1093, %v1092
      %v1108 = vpack.c.b16 %v1095, %v1094
      %v1109 = vpack.c.b16 %v1097, %v1096
      %v1110 = vpack.c.b16 %v1099, %v1098
      %v1111 = vpack.c.b16 %v1101, %v1100
      %v1112 = vpack.c.b16 %v1103, %v1102
      %v1113 = vpack.c.b16 %v1105, %v1104
      %1122 = vmatpush.bf16.msra.mxu0 %v1113
      %1123 = vmatpush.bf16.msra.mxu0 %v1112
      %1124 = vmatpush.bf16.msra.mxu0 %v1111
      %1125 = vmatpush.bf16.msra.mxu0 %v1110
      %1126 = vmatpush.bf16.msra.mxu0 %v1109
      %1127 = vmatpush.bf16.msra.mxu0 %v1108
      %1128 = vmatpush.bf16.msra.mxu0 %v1107
      %1129 = vmatpush.bf16.msra.mxu0 %v1106
      %1130 = vmatmul.bf16.gmra.mxu0 %v335
      %v1131 = vpop.f32.mrf.mxu0
      %v1132 = vadd.f32 0.0, %v1131
      %v1133 = vpop.f32.mrf.mxu0
      %v1134 = vadd.f32 0.0, %v1133
      %1135 = vmatmul.bf16.gmra.mxu0 %v336
      %v1136 = vpop.f32.mrf.mxu0
      %v1137 = vadd.f32 0.0, %v1136
      %v1138 = vpop.f32.mrf.mxu0
      %v1139 = vadd.f32 0.0, %v1138
      %1140 = vmatmul.bf16.gmra.mxu0 %v337
      %v1141 = vpop.f32.mrf.mxu0
      %v1142 = vadd.f32 0.0, %v1141
      %v1143 = vpop.f32.mrf.mxu0
      %v1144 = vadd.f32 0.0, %v1143
      %1145 = vmatmul.bf16.gmra.mxu0 %v1056
      %v1146 = vpop.f32.mrf.mxu0
      %v1147 = vadd.f32 0.0, %v1146
      %v1148 = vpop.f32.mrf.mxu0
      %v1149 = vadd.f32 0.0, %v1148
      %1150 = vdwg.mxu0
      %v1151 = vadd.f32 %v1048, %v1132
      %v1152 = vadd.f32 %v1049, %v1134
      %v1153 = vadd.f32 %v1050, %v1137
      %v1154 = vadd.f32 %v1051, %v1139
      %v1155 = vadd.f32 %v1052, %v1142
      %v1156 = vadd.f32 %v1053, %v1144
      %v1157 = vadd.f32 %v1054, %v1147
      %v1158 = vadd.f32 %v1055, %v1149
      %v1159 = vpack.c.bf16 %v511, %v523
      %s1160 = scalar_lea.vmem %s3, 512
      %v1161 = vld [vmem:[%s1160] sm:$0xf]
      %v1162 = vld [vmem:[%s1160 + $0x4] sm:$0xf]
      %v1163 = vld [vmem:[%s1160 + $0x8] sm:$0xf]
      %v1164 = vld [vmem:[%s1160 + $0xc] sm:$0xf]
      %v1165 = vld [vmem:[%s1160 + $0x10] sm:$0xf]
      %v1166 = vld [vmem:[%s1160 + $0x14] sm:$0xf]
      %v1167 = vld [vmem:[%s1160 + $0x18] sm:$0xf]
      %v1168 = vld [vmem:[%s1160 + $0x1c] sm:$0xf]
      %v1169 = vld [vmem:[%s1160 + $0x20] sm:$0xf]
      %v1170 = vld [vmem:[%s1160 + $0x24] sm:$0xf]
      %v1171 = vld [vmem:[%s1160 + $0x28] sm:$0xf]
      %v1172 = vld [vmem:[%s1160 + $0x2c] sm:$0xf]
      %v1173 = vld [vmem:[%s1160 + $0x30] sm:$0xf]
      %v1174 = vld [vmem:[%s1160 + $0x34] sm:$0xf]
      %v1175 = vld [vmem:[%s1160 + $0x38] sm:$0xf]
      %v1176 = vld [vmem:[%s1160 + $0x3c] sm:$0xf]
      %v1193 = vunpack.c.l.b16 %v1161
      %v1194 = vunpack.c.l.b16 %v1162
      %v1195 = vunpack.c.l.b16 %v1163
      %v1196 = vunpack.c.l.b16 %v1164
      %v1197 = vunpack.c.l.b16 %v1165
      %v1198 = vunpack.c.l.b16 %v1166
      %v1199 = vunpack.c.l.b16 %v1167
      %v1200 = vunpack.c.l.b16 %v1168
      %v1201 = vunpack.c.l.b16 %v1169
      %v1202 = vunpack.c.l.b16 %v1170
      %v1203 = vunpack.c.l.b16 %v1171
      %v1204 = vunpack.c.l.b16 %v1172
      %v1205 = vunpack.c.l.b16 %v1173
      %v1206 = vunpack.c.l.b16 %v1174
      %v1207 = vunpack.c.l.b16 %v1175
      %v1208 = vunpack.c.l.b16 %v1176
      %v1209 = vpack.c.b16 %v1194, %v1193
      %v1210 = vpack.c.b16 %v1196, %v1195
      %v1211 = vpack.c.b16 %v1198, %v1197
      %v1212 = vpack.c.b16 %v1200, %v1199
      %v1213 = vpack.c.b16 %v1202, %v1201
      %v1214 = vpack.c.b16 %v1204, %v1203
      %v1215 = vpack.c.b16 %v1206, %v1205
      %v1216 = vpack.c.b16 %v1208, %v1207
      %1225 = vmatpush.bf16.msra.mxu0 %v1216
      %1226 = vmatpush.bf16.msra.mxu0 %v1215
      %1227 = vmatpush.bf16.msra.mxu0 %v1214
      %1228 = vmatpush.bf16.msra.mxu0 %v1213
      %1229 = vmatpush.bf16.msra.mxu0 %v1212
      %1230 = vmatpush.bf16.msra.mxu0 %v1211
      %1231 = vmatpush.bf16.msra.mxu0 %v1210
      %1232 = vmatpush.bf16.msra.mxu0 %v1209
      %1233 = vmatmul.bf16.gmra.mxu0 %v530
      %v1234 = vpop.f32.mrf.mxu0
      %v1235 = vadd.f32 0.0, %v1234
      %v1236 = vpop.f32.mrf.mxu0
      %v1237 = vadd.f32 0.0, %v1236
      %1238 = vmatmul.bf16.gmra.mxu0 %v531
      %v1239 = vpop.f32.mrf.mxu0
      %v1240 = vadd.f32 0.0, %v1239
      %v1241 = vpop.f32.mrf.mxu0
      %v1242 = vadd.f32 0.0, %v1241
      %1243 = vmatmul.bf16.gmra.mxu0 %v532
      %v1244 = vpop.f32.mrf.mxu0
      %v1245 = vadd.f32 0.0, %v1244
      %v1246 = vpop.f32.mrf.mxu0
      %v1247 = vadd.f32 0.0, %v1246
      %1248 = vmatmul.bf16.gmra.mxu0 %v1159
      %v1249 = vpop.f32.mrf.mxu0
      %v1250 = vadd.f32 0.0, %v1249
      %v1251 = vpop.f32.mrf.mxu0
      %v1252 = vadd.f32 0.0, %v1251
      %1253 = vdwg.mxu0
      %v1254 = vadd.f32 %v1151, %v1235
      %v1255 = vadd.f32 %v1152, %v1237
      %v1256 = vadd.f32 %v1153, %v1240
      %v1257 = vadd.f32 %v1154, %v1242
      %v1258 = vadd.f32 %v1155, %v1245
      %v1259 = vadd.f32 %v1156, %v1247
      %v1260 = vadd.f32 %v1157, %v1250
      %v1261 = vadd.f32 %v1158, %v1252
      %1262 = vst [vmem:[%s231] sm:$0xff] %v1254
      %1263 = vst [vmem:[%s231 + $0x8] sm:$0xff] %v1255
      %1264 = vst [vmem:[%s231 + $0x10] sm:$0xff] %v1256
      %1265 = vst [vmem:[%s231 + $0x18] sm:$0xff] %v1257
      %1266 = vst [vmem:[%s231 + $0x20] sm:$0xff] %v1258
      %1267 = vst [vmem:[%s231 + $0x28] sm:$0xff] %v1259
      %1268 = vst [vmem:[%s231 + $0x30] sm:$0xff] %v1260
      %1269 = vst [vmem:[%s231 + $0x38] sm:$0xff] %v1261
      %v1270 = vadd.f32 %v1254, %v1255
      %v1271 = vadd.f32 %v1270, %v1256
      %v1272 = vadd.f32 %v1271, %v1257
      %v1273 = vadd.f32 %v1272, %v1258
      %v1274 = vadd.f32 %v1273, %v1259
      %v1275 = vadd.f32 %v1274, %v1260
      %v1276 = vadd.f32 %v1275, %v1261
      %v1277 = vrot.slane %v1276, 4
      %v1278 = vadd.f32 %v1276, %v1277
      %v1279 = vrot.slane %v1278, 2
      %v1280 = vadd.f32 %v1278, %v1279
      %v1281 = vrot.slane %v1280, 1
      %v1282 = vadd.f32 %v1280, %v1281
      %v1283 = vmul.f32 %v1254, %v1254
      %v1284 = vmul.f32 %v1255, %v1255
      %v1285 = vmul.f32 %v1256, %v1256
      %v1286 = vmul.f32 %v1257, %v1257
      %v1287 = vmul.f32 %v1258, %v1258
      %v1288 = vmul.f32 %v1259, %v1259
      %v1289 = vmul.f32 %v1260, %v1260
      %v1290 = vmul.f32 %v1261, %v1261
      %v1291 = vadd.f32 %v1283, %v1284
      %v1292 = vadd.f32 %v1291, %v1285
      %v1293 = vadd.f32 %v1292, %v1286
      %v1294 = vadd.f32 %v1293, %v1287
      %v1295 = vadd.f32 %v1294, %v1288
      %v1296 = vadd.f32 %v1295, %v1289
      %v1297 = vadd.f32 %v1296, %v1290
      %v1298 = vrot.slane %v1297, 4
      %v1299 = vadd.f32 %v1297, %v1298
      %v1300 = vrot.slane %v1299, 2
      %v1301 = vadd.f32 %v1299, %v1300
      %v1302 = vrot.slane %v1301, 1
      %v1303 = vadd.f32 %v1301, %v1302
      %vm1304 = vcmask 1040384
      %v1305 = vsel %vm1304, %v1282, %v1303
      %1306 = vst [vmem:[%s235] sm:$0x3] %v1305
      %p1307 = scmp.lt.s32.totalorder %s17, 1
      %s1308 = scalar_select %p1307, %s17, 1
      %s1309 = smul.addr %s1308, 8
      %s1310 = smul.addr %s1309, 8
      %s1311 = scalar_lea.vmem %s4, %s1310
      %p1312 = scmp.lt.s32.totalorder %s17, 1
      %s1313 = scalar_select %p1312, %s17, 1
      %s1314 = smul.addr %s1313, 2
      %s1315 = scalar_lea.vmem %s5, %s1314
      // Predicated region
      $region37: #{generator_forward.7} parent=35 // pred_check
        %p1316 = pneg %p124
      $region38: #{generator_forward.7} parent=35 // pred_check_branch
        %1318 = sbr.rel (%p1316) target = $region40
      $region39: #{generator_forward.7} parent=35 // pred_region
        _
      $region40: #{generator_forward.7} parent=35 // pred_fallthru
        _
      // Predicated region
      $region41: #{generator_forward.7} parent=35 // pred_check
        %p1319 = pneg %p150
      $region42: #{generator_forward.7} parent=35 // pred_check_branch
        %1321 = sbr.rel (%p1319) target = $region44
      $region43: #{generator_forward.7} parent=35 // pred_region
        _
      $region44: #{generator_forward.7} parent=35 // pred_fallthru
        _
    $region36: #{generator_forward.7} parent=5 // pred_fallthru
      _
    %p1322 = scmp.le.s32.totalorder 2, %s12
    // Predicated region
    $region45: #{generator_forward.7} parent=5 // pred_check
      %p1323 = pneg %p1322
    $region46: #{generator_forward.7} parent=5 // pred_check_branch
      %1325 = sbr.rel (%p1323) target = $region48
    $region47: #{generator_forward.7} parent=5 // pred_region
      %s1326 = ssub.s32 %s12, 2
      // Predicated region
      $region49: #{generator_forward.7} parent=47 // pred_check
        %p1327 = pneg %p130
      $region50: #{generator_forward.7} parent=47 // pred_check_branch
        %1329 = sbr.rel (%p1327) target = $region52
      $region51: #{generator_forward.7} parent=47 // pred_region
        %p1330 = scmp.lt.s32.totalorder %s18, 1
        %s1331 = scalar_select %p1330, %s18, 1
        %s1332 = smul.addr %s1331, 8
        %s1333 = smul.addr %s1332, 8
        %s1334 = scalar_lea.vmem %s4, %s1333
      $region52: #{generator_forward.7} parent=47 // pred_fallthru
        _
      // Predicated region
      $region53: #{generator_forward.7} parent=47 // pred_check
        %p1335 = pneg %p156
      $region54: #{generator_forward.7} parent=47 // pred_check_branch
        %1337 = sbr.rel (%p1335) target = $region56
      $region55: #{generator_forward.7} parent=47 // pred_region
        %p1338 = scmp.lt.s32.totalorder %s18, 1
        %s1339 = scalar_select %p1338, %s18, 1
        %s1340 = smul.addr %s1339, 2
        %s1341 = scalar_lea.vmem %s5, %s1340
      $region56: #{generator_forward.7} parent=47 // pred_fallthru
        _
    $region48: #{generator_forward.7} parent=5 // pred_fallthru
      _
  $region6: #{generator_forward.7} parent=0 // loop_footer
    %s16 = sadd.s32 1, %s12
  $region7: #{generator_forward.7} parent=0 // loop_footer_branch
    %11 = sbr.rel target = $region3
  $region8: #{generator_forward.7} parent=0 // loop_exit
    _

// kernel: generator_forward.8
$region0: #{generator_forward.8}
  #allocation0 [shape = 'u32[]', space=smem, size = 0x4, offset = 0x4, fixed_abs, tag = 'smem constant byte address 0x4 - core index']
  #allocation1 [shape = 'u32[72,128]{1,0:T(1,128)}', space=vmem, size = 0x9000, scoped, tag = 'internal scratch']
  %s0 = inlined_call_operand.vmem [shape: f32[2,8,18,128], index: 0, kind: input, shape index: {}]
  %s1 = inlined_call_operand.vmem [shape: f32[1,128], index: 1, kind: input, shape index: {}]
  %s2 = inlined_call_operand.vmem [shape: f32[1,128], index: 2, kind: input, shape index: {}]
  %s3 = inlined_call_operand.vmem [shape: bf16[9,128,128], index: 3, kind: input, shape index: {}]
  %s4 = inlined_call_operand.vmem [shape: f32[2,256,128], index: 4, kind: output, shape index: {0}]
  %s5 = inlined_call_operand.vmem [shape: f32[2,2,128], index: 5, kind: output, shape index: {1}]
  %6 = xla_tuple %s4, %s5
  %s7 = sld [smem:[#allocation0]]
  $region57: #{generator_forward.8} parent=0
    _
  %s9 = ssub.s32 1, %s7
  %s10 = scalar_select 0, %s9, %s7
  loop: start=0, step=1, limit=4
  $region2: #{generator_forward.8} parent=0 // loop_pre_header
    _
  $region3: #{generator_forward.8} parent=0 // loop_header
    %s12 = sphi 0, %s16
    %p13 = scmp.ge.s32.totalorder %s12, 4
    %s22 = sphi 0, %s24
    %s25 = sphi 0, %s22
    %s26 = sphi 0, %s25
    %s42 = sphi 0, %s26
    %s46 = sphi 0, %s46
    %s48 = sphi 0, %s46
    %s49 = sphi 0, %s48
    %s63 = sphi 0, %s49
    %s67 = sphi 0, %s67
    %s69 = sphi 0, %s67
    %s70 = sphi 0, %s69
    %s84 = sphi 0, %s70
    %s88 = sphi 0, %s88
    %s90 = sphi 0, %s88
    %s91 = sphi 0, %s90
    %s105 = sphi 0, %s91
    %s111 = sphi 0, %s113
    %s114 = sphi 0, %s111
    %s115 = sphi 0, %s114
    %s131 = sphi 0, %s115
    %s137 = sphi 0, %s139
    %s140 = sphi 0, %s137
    %s141 = sphi 0, %s140
    %s157 = sphi 0, %s141
  $region4: #{generator_forward.8} parent=0 // loop_header_branch
    %15 = sbr.rel (%p13) target = $region8
  $region5: #{generator_forward.8} parent=0 // loop_body
    %s17 = ssub.s32 %s12, 1
    %s18 = ssub.s32 %s12, 2
    %s19 = sadd.s32 %s12, 1
    %s20 = ssub.s32 %s12, %s19
    %p21 = scmp.eq.s32.totalorder %s20, 0
    %s23 = sadd.s32 %s22, 1
    %s24 = scalar_select %p21, %s22, %s23
    %p27 = pneg %p21
    %p28 = scmp.eq.s32.totalorder %s12, 1
    %p29 = por %p27, %p28
    %p30 = scmp.ne.s32.totalorder %s22, %s25
    %p31 = scmp.eq.s32.totalorder %s12, 0
    %p32 = por %p30, %p31
    %p33 = scmp.ne.s32.totalorder %s22, %s25
    %p34 = scmp.eq.s32.totalorder %s17, 1
    %p35 = por %p33, %p34
    %p36 = scmp.ne.s32.totalorder %s25, %s26
    %p37 = scmp.eq.s32.totalorder %s17, 0
    %p38 = por %p36, %p37
    %p39 = scmp.ne.s32.totalorder %s25, %s26
    %p40 = scmp.eq.s32.totalorder %s18, 1
    %p41 = por %p39, %p40
    %p43 = scmp.ne.s32.totalorder %s26, %s42
    %p44 = scmp.eq.s32.totalorder %s18, 0
    %p45 = por %p43, %p44
    %s47 = sadd.s32 %s46, 1
    %p50 = scmp.eq.s32.totalorder %s12, 1
    %p51 = scmp.ne.s32.totalorder %s46, %s48
    %p52 = scmp.eq.s32.totalorder %s12, 0
    %p53 = por %p51, %p52
    %p54 = scmp.ne.s32.totalorder %s46, %s48
    %p55 = scmp.eq.s32.totalorder %s17, 1
    %p56 = por %p54, %p55
    %p57 = scmp.ne.s32.totalorder %s48, %s49
    %p58 = scmp.eq.s32.totalorder %s17, 0
    %p59 = por %p57, %p58
    %p60 = scmp.ne.s32.totalorder %s48, %s49
    %p61 = scmp.eq.s32.totalorder %s18, 1
    %p62 = por %p60, %p61
    %p64 = scmp.ne.s32.totalorder %s49, %s63
    %p65 = scmp.eq.s32.totalorder %s18, 0
    %p66 = por %p64, %p65
    %s68 = sadd.s32 %s67, 1
    %p71 = scmp.eq.s32.totalorder %s12, 1
    %p72 = scmp.ne.s32.totalorder %s67, %s69
    %p73 = scmp.eq.s32.totalorder %s12, 0
    %p74 = por %p72, %p73
    %p75 = scmp.ne.s32.totalorder %s67, %s69
    %p76 = scmp.eq.s32.totalorder %s17, 1
    %p77 = por %p75, %p76
    %p78 = scmp.ne.s32.totalorder %s69, %s70
    %p79 = scmp.eq.s32.totalorder %s17, 0
    %p80 = por %p78, %p79
    %p81 = scmp.ne.s32.totalorder %s69, %s70
    %p82 = scmp.eq.s32.totalorder %s18, 1
    %p83 = por %p81, %p82
    %p85 = scmp.ne.s32.totalorder %s70, %s84
    %p86 = scmp.eq.s32.totalorder %s18, 0
    %p87 = por %p85, %p86
    %s89 = sadd.s32 %s88, 1
    %p92 = scmp.eq.s32.totalorder %s12, 1
    %p93 = scmp.ne.s32.totalorder %s88, %s90
    %p94 = scmp.eq.s32.totalorder %s12, 0
    %p95 = por %p93, %p94
    %p96 = scmp.ne.s32.totalorder %s88, %s90
    %p97 = scmp.eq.s32.totalorder %s17, 1
    %p98 = por %p96, %p97
    %p99 = scmp.ne.s32.totalorder %s90, %s91
    %p100 = scmp.eq.s32.totalorder %s17, 0
    %p101 = por %p99, %p100
    %p102 = scmp.ne.s32.totalorder %s90, %s91
    %p103 = scmp.eq.s32.totalorder %s18, 1
    %p104 = por %p102, %p103
    %p106 = scmp.ne.s32.totalorder %s91, %s105
    %p107 = scmp.eq.s32.totalorder %s18, 0
    %p108 = por %p106, %p107
    %s109 = ssub.s32 %s12, %s19
    %p110 = scmp.eq.s32.totalorder %s109, 0
    %s112 = sadd.s32 %s111, 1
    %s113 = scalar_select %p110, %s111, %s112
    %p116 = pneg %p110
    %p117 = scmp.eq.s32.totalorder %s12, 1
    %p118 = por %p116, %p117
    %p119 = scmp.ne.s32.totalorder %s111, %s114
    %p120 = scmp.eq.s32.totalorder %s12, 0
    %p121 = por %p119, %p120
    %p122 = scmp.ne.s32.totalorder %s111, %s114
    %p123 = scmp.eq.s32.totalorder %s17, 1
    %p124 = por %p122, %p123
    %p125 = scmp.ne.s32.totalorder %s114, %s115
    %p126 = scmp.eq.s32.totalorder %s17, 0
    %p127 = por %p125, %p126
    %p128 = scmp.ne.s32.totalorder %s114, %s115
    %p129 = scmp.eq.s32.totalorder %s18, 1
    %p130 = por %p128, %p129
    %p132 = scmp.ne.s32.totalorder %s115, %s131
    %p133 = scmp.eq.s32.totalorder %s18, 0
    %p134 = por %p132, %p133
    %s135 = ssub.s32 %s12, %s19
    %p136 = scmp.eq.s32.totalorder %s135, 0
    %s138 = sadd.s32 %s137, 1
    %s139 = scalar_select %p136, %s137, %s138
    %p142 = pneg %p136
    %p143 = scmp.eq.s32.totalorder %s12, 1
    %p144 = por %p142, %p143
    %p145 = scmp.ne.s32.totalorder %s137, %s140
    %p146 = scmp.eq.s32.totalorder %s12, 0
    %p147 = por %p145, %p146
    %p148 = scmp.ne.s32.totalorder %s137, %s140
    %p149 = scmp.eq.s32.totalorder %s17, 1
    %p150 = por %p148, %p149
    %p151 = scmp.ne.s32.totalorder %s140, %s141
    %p152 = scmp.eq.s32.totalorder %s17, 0
    %p153 = por %p151, %p152
    %p154 = scmp.ne.s32.totalorder %s140, %s141
    %p155 = scmp.eq.s32.totalorder %s18, 1
    %p156 = por %p154, %p155
    %p158 = scmp.ne.s32.totalorder %s141, %s157
    %p159 = scmp.eq.s32.totalorder %s18, 0
    %p160 = por %p158, %p159
    %p161 = scmp.le.s32.totalorder 1, %s12
    %p162 = scmp.lt.s32.totalorder %s12, 3
    %p163 = pnand %p161, %p162
    %p164 = pneg %p163
    // Predicated region
    $region9: #{generator_forward.8} parent=5 // pred_check
      _
    $region10: #{generator_forward.8} parent=5 // pred_check_branch
      %166 = sbr.rel (%p163) target = $region12
    $region11: #{generator_forward.8} parent=5 // pred_region
      %s167 = ssub.s32 %s12, 1
      // Predicated region
      $region13: #{generator_forward.8} parent=11 // pred_check
        %p168 = pneg %p59
      $region14: #{generator_forward.8} parent=11 // pred_check_branch
        %170 = sbr.rel (%p168) target = $region16
      $region15: #{generator_forward.8} parent=11 // pred_region
        _
      $region16: #{generator_forward.8} parent=11 // pred_fallthru
        _
      // Predicated region
      $region17: #{generator_forward.8} parent=11 // pred_check
        %p171 = pneg %p80
      $region18: #{generator_forward.8} parent=11 // pred_check_branch
        %173 = sbr.rel (%p171) target = $region20
      $region19: #{generator_forward.8} parent=11 // pred_region
        _
      $region20: #{generator_forward.8} parent=11 // pred_fallthru
        _
      // Predicated region
      $region21: #{generator_forward.8} parent=11 // pred_check
        %p174 = pneg %p101
      $region22: #{generator_forward.8} parent=11 // pred_check_branch
        %176 = sbr.rel (%p174) target = $region24
      $region23: #{generator_forward.8} parent=11 // pred_region
        _
      $region24: #{generator_forward.8} parent=11 // pred_fallthru
        _
    $region12: #{generator_forward.8} parent=5 // pred_fallthru
      _
    %p177 = scmp.lt.s32.totalorder %s12, 2
    // Predicated region
    $region25: #{generator_forward.8} parent=5 // pred_check
      %p178 = pneg %p177
    $region26: #{generator_forward.8} parent=5 // pred_check_branch
      %180 = sbr.rel (%p178) target = $region28
    $region27: #{generator_forward.8} parent=5 // pred_region
      // Predicated region
      $region29: #{generator_forward.8} parent=27 // pred_check
        %p181 = pneg %p32
      $region30: #{generator_forward.8} parent=27 // pred_check_branch
        %183 = sbr.rel (%p181) target = $region32
      $region31: #{generator_forward.8} parent=27 // pred_region
        %p184 = scmp.lt.s32.totalorder %s12, 1
        %s185 = scalar_select %p184, %s12, 1
        %s186 = smul.addr %s185, 24
        %s187 = smul.addr %s186, 8
        %s188 = scalar_lea.vmem %s0, %s187
      $region32: #{generator_forward.8} parent=27 // pred_fallthru
        _
    $region28: #{generator_forward.8} parent=5 // pred_fallthru
      _
    %p189 = scmp.le.s32.totalorder 1, %s12
    %p190 = scmp.lt.s32.totalorder %s12, 3
    %p191 = pnand %p189, %p190
    %p192 = pneg %p191
    // Predicated region
    $region33: #{generator_forward.8} parent=5 // pred_check
      _
    $region34: #{generator_forward.8} parent=5 // pred_check_branch
      %194 = sbr.rel (%p191) target = $region36
    $region35: #{generator_forward.8} parent=5 // pred_region
      %s195 = ssub.s32 %s12, 1
      %p196 = scmp.lt.s32.totalorder %s17, 1
      %s197 = scalar_select %p196, %s17, 1
      %s198 = smul.addr %s197, 24
      %s199 = smul.addr %s198, 8
      %s200 = scalar_lea.vmem %s0, %s199
      %p201 = pneg %p38
      %p202 = pneg %p35
      %p203 = pneg %p59
      %p204 = pneg %p56
      %p205 = pneg %p80
      %p206 = pneg %p77
      %p207 = pneg %p101
      %p208 = pneg %p98
      %p209 = pneg %p127
      %p210 = pneg %p124
      %p211 = scmp.lt.s32.totalorder %s17, 1
      %s212 = scalar_select %p211, %s17, 1
      %s213 = smul.addr %s212, 32
      %s214 = smul.addr %s213, 8
      %s215 = scalar_lea.vmem %s4, %s214
      %p216 = pneg %p153
      %p217 = pneg %p150
      %p218 = scmp.lt.s32.totalorder %s17, 1
      %s219 = scalar_select %p218, %s17, 1
      %s220 = smul.addr %s219, 2
      %s221 = scalar_lea.vmem %s5, %s220
      %p222 = scmp.lt.s32.totalorder %s17, 1
      %s223 = scalar_select %p222, %s17, 1
      %s224 = smul.addr %s223, 24
      %s225 = smul.addr %s224, 8
      %s226 = scalar_lea.vmem %s0, %s225
      %p227 = scmp.lt.s32.totalorder %s17, 1
      %s228 = scalar_select %p227, %s17, 1
      %s229 = smul.addr %s228, 32
      %s230 = smul.addr %s229, 8
      %s231 = scalar_lea.vmem %s4, %s230
      %p232 = scmp.lt.s32.totalorder %s17, 1
      %s233 = scalar_select %p232, %s17, 1
      %s234 = smul.addr %s233, 2
      %s235 = scalar_lea.vmem %s5, %s234
      %v236 = vld [vmem:[%s226] sm:$0xff]
      %v237 = vld [vmem:[%s226 + $0x8] sm:$0xff]
      %v238 = vld [vmem:[%s226 + $0x10] sm:$0x3]
      %v239 = vld [vmem:[%s226 + $0x18] sm:$0xff]
      %v240 = vld [vmem:[%s226 + $0x20] sm:$0xff]
      %v241 = vld [vmem:[%s226 + $0x28] sm:$0x3]
      %v242 = vld [vmem:[%s226 + $0x30] sm:$0xff]
      %v243 = vld [vmem:[%s226 + $0x38] sm:$0xff]
      %v244 = vld [vmem:[%s226 + $0x40] sm:$0x3]
      %v245 = vld [vmem:[%s226 + $0x48] sm:$0xff]
      %v246 = vld [vmem:[%s226 + $0x50] sm:$0xff]
      %v247 = vld [vmem:[%s226 + $0x58] sm:$0x3]
      %v248 = vld [vmem:[%s226 + $0x60] sm:$0xff]
      %v249 = vld [vmem:[%s226 + $0x68] sm:$0xff]
      %v250 = vld [vmem:[%s226 + $0x70] sm:$0x3]
      %v251 = vld [vmem:[%s226 + $0x78] sm:$0xff]
      %v252 = vld [vmem:[%s226 + $0x80] sm:$0xff]
      %v253 = vld [vmem:[%s226 + $0x88] sm:$0x3]
      %v254 = vld [vmem:[%s226 + $0x90] sm:$0xff]
      %v255 = vld [vmem:[%s226 + $0x98] sm:$0xff]
      %v256 = vld [vmem:[%s226 + $0xa0] sm:$0x3]
      %v257 = vld [vmem:[%s226 + $0xa8] sm:$0xff]
      %v258 = vld [vmem:[%s226 + $0xb0] sm:$0xff]
      %v259 = vld [vmem:[%s226 + $0xb8] sm:$0x3]
      %v260 = vld [vmem:[%s1] sm:$0x1]
      %v261 = vld [vmem:[%s2] sm:$0x1]
      %v263 = vperm.slane %v260, 0
      %v265 = vmul.f32 %v236, %v263
      %v266 = vmul.f32 %v237, %v263
      %v267 = vmul.f32 %v238, %v263
      %v268 = vmul.f32 %v239, %v263
      %v269 = vmul.f32 %v240, %v263
      %v270 = vmul.f32 %v241, %v263
      %v271 = vmul.f32 %v242, %v263
      %v272 = vmul.f32 %v243, %v263
      %v273 = vmul.f32 %v244, %v263
      %v274 = vmul.f32 %v245, %v263
      %v275 = vmul.f32 %v246, %v263
      %v276 = vmul.f32 %v247, %v263
      %v277 = vmul.f32 %v248, %v263
      %v278 = vmul.f32 %v249, %v263
      %v279 = vmul.f32 %v250, %v263
      %v280 = vmul.f32 %v251, %v263
      %v281 = vmul.f32 %v252, %v263
      %v282 = vmul.f32 %v253, %v263
      %v283 = vmul.f32 %v254, %v263
      %v284 = vmul.f32 %v255, %v263
      %v285 = vmul.f32 %v256, %v263
      %v286 = vmul.f32 %v257, %v263
      %v287 = vmul.f32 %v258, %v263
      %v288 = vmul.f32 %v259, %v263
      %v290 = vperm.slane %v261, 0
      %v292 = vadd.f32 %v265, %v290
      %v293 = vadd.f32 %v266, %v290
      %v294 = vadd.f32 %v267, %v290
      %v295 = vadd.f32 %v268, %v290
      %v296 = vadd.f32 %v269, %v290
      %v297 = vadd.f32 %v270, %v290
      %v298 = vadd.f32 %v271, %v290
      %v299 = vadd.f32 %v272, %v290
      %v300 = vadd.f32 %v273, %v290
      %v301 = vadd.f32 %v274, %v290
      %v302 = vadd.f32 %v275, %v290
      %v303 = vadd.f32 %v276, %v290
      %v304 = vadd.f32 %v277, %v290
      %v305 = vadd.f32 %v278, %v290
      %v306 = vadd.f32 %v279, %v290
      %v307 = vadd.f32 %v280, %v290
      %v308 = vadd.f32 %v281, %v290
      %v309 = vadd.f32 %v282, %v290
      %v310 = vadd.f32 %v283, %v290
      %v311 = vadd.f32 %v284, %v290
      %v312 = vadd.f32 %v285, %v290
      %v313 = vadd.f32 %v286, %v290
      %v314 = vadd.f32 %v287, %v290
      %v315 = vadd.f32 %v288, %v290
      %vm316 = vcmp.ge.f32.partialorder %v292, 0.0
      %vm317 = vcmp.ge.f32.partialorder %v293, 0.0
      %vm318 = vcmp.ge.f32.partialorder %v294, 0.0
      %vm319 = vcmp.ge.f32.partialorder %v295, 0.0
      %vm320 = vcmp.ge.f32.partialorder %v296, 0.0
      %vm321 = vcmp.ge.f32.partialorder %v297, 0.0
      %vm322 = vcmp.ge.f32.partialorder %v298, 0.0
      %vm323 = vcmp.ge.f32.partialorder %v299, 0.0
      %vm324 = vcmp.ge.f32.partialorder %v300, 0.0
      %vm325 = vcmp.ge.f32.partialorder %v301, 0.0
      %vm326 = vcmp.ge.f32.partialorder %v302, 0.0
      %vm327 = vcmp.ge.f32.partialorder %v303, 0.0
      %vm328 = vcmp.ge.f32.partialorder %v304, 0.0
      %vm329 = vcmp.ge.f32.partialorder %v305, 0.0
      %vm330 = vcmp.ge.f32.partialorder %v306, 0.0
      %vm331 = vcmp.ge.f32.partialorder %v307, 0.0
      %vm332 = vcmp.ge.f32.partialorder %v308, 0.0
      %vm333 = vcmp.ge.f32.partialorder %v309, 0.0
      %vm334 = vcmp.ge.f32.partialorder %v310, 0.0
      %vm335 = vcmp.ge.f32.partialorder %v311, 0.0
      %vm336 = vcmp.ge.f32.partialorder %v312, 0.0
      %vm337 = vcmp.ge.f32.partialorder %v313, 0.0
      %vm338 = vcmp.ge.f32.partialorder %v314, 0.0
      %vm339 = vcmp.ge.f32.partialorder %v315, 0.0
      %v340 = vmul.f32 %v292, 0.2
      %v341 = vmul.f32 %v293, 0.2
      %v342 = vmul.f32 %v294, 0.2
      %v343 = vmul.f32 %v295, 0.2
      %v344 = vmul.f32 %v296, 0.2
      %v345 = vmul.f32 %v297, 0.2
      %v346 = vmul.f32 %v298, 0.2
      %v347 = vmul.f32 %v299, 0.2
      %v348 = vmul.f32 %v300, 0.2
      %v349 = vmul.f32 %v301, 0.2
      %v350 = vmul.f32 %v302, 0.2
      %v351 = vmul.f32 %v303, 0.2
      %v352 = vmul.f32 %v304, 0.2
      %v353 = vmul.f32 %v305, 0.2
      %v354 = vmul.f32 %v306, 0.2
      %v355 = vmul.f32 %v307, 0.2
      %v356 = vmul.f32 %v308, 0.2
      %v357 = vmul.f32 %v309, 0.2
      %v358 = vmul.f32 %v310, 0.2
      %v359 = vmul.f32 %v311, 0.2
      %v360 = vmul.f32 %v312, 0.2
      %v361 = vmul.f32 %v313, 0.2
      %v362 = vmul.f32 %v314, 0.2
      %v363 = vmul.f32 %v315, 0.2
      %v364 = vsel %vm316, %v292, %v340
      %v365 = vsel %vm317, %v293, %v341
      %v366 = vsel %vm318, %v294, %v342
      %v367 = vsel %vm319, %v295, %v343
      %v368 = vsel %vm320, %v296, %v344
      %v369 = vsel %vm321, %v297, %v345
      %v370 = vsel %vm322, %v298, %v346
      %v371 = vsel %vm323, %v299, %v347
      %v372 = vsel %vm324, %v300, %v348
      %v373 = vsel %vm325, %v301, %v349
      %v374 = vsel %vm326, %v302, %v350
      %v375 = vsel %vm327, %v303, %v351
      %v376 = vsel %vm328, %v304, %v352
      %v377 = vsel %vm329, %v305, %v353
      %v378 = vsel %vm330, %v306, %v354
      %v379 = vsel %vm331, %v307, %v355
      %v380 = vsel %vm332, %v308, %v356
      %v381 = vsel %vm333, %v309, %v357
      %v382 = vsel %vm334, %v310, %v358
      %v383 = vsel %vm335, %v311, %v359
      %v384 = vsel %vm336, %v312, %v360
      %v385 = vsel %vm337, %v313, %v361
      %v386 = vsel %vm338, %v314, %v362
      %v387 = vsel %vm339, %v315, %v363
      %v388 = vlaneseq
      %v389 = vshrl.u32 %v388, 7
      %v390 = vadd.s32 %v389, 8
      %v391 = vadd.s32 %v389, 16
      %vm392 = vcmp.eq.s32.totalorder %v389, 0
      %vm393 = vcmp.eq.s32.totalorder %v390, 0
      %vm394 = vcmp.eq.s32.totalorder %v391, 0
      %vm395 = vcmp.eq.s32.totalorder %v389, 17
      %vm396 = vcmp.eq.s32.totalorder %v390, 17
      %vm397 = vcmp.eq.s32.totalorder %v391, 17
      %vm398 = vmor %vm392, %vm395
      %vm399 = vmor %vm393, %vm396
      %vm400 = vmor %vm394, %vm397
      %v401 = vsel %vm398, 0.0, %v364
      %v402 = vsel %vm399, 0.0, %v365
      %v403 = vsel %vm400, 0.0, %v366
      %v404 = vsel %vm398, 0.0, %v367
      %v405 = vsel %vm399, 0.0, %v368
      %v406 = vsel %vm400, 0.0, %v369
      %v407 = vsel %vm398, 0.0, %v370
      %v408 = vsel %vm399, 0.0, %v371
      %v409 = vsel %vm400, 0.0, %v372
      %v410 = vsel %vm398, 0.0, %v373
      %v411 = vsel %vm399, 0.0, %v374
      %v412 = vsel %vm400, 0.0, %v375
      %v413 = vsel %vm398, 0.0, %v376
      %v414 = vsel %vm399, 0.0, %v377
      %v415 = vsel %vm400, 0.0, %v378
      %v416 = vsel %vm398, 0.0, %v379
      %v417 = vsel %vm399, 0.0, %v380
      %v418 = vsel %vm400, 0.0, %v381
      %v419 = vsel %vm398, 0.0, %v382
      %v420 = vsel %vm399, 0.0, %v383
      %v421 = vsel %vm400, 0.0, %v384
      %v422 = vsel %vm398, 0.0, %v385
      %v423 = vsel %vm399, 0.0, %v386
      %v424 = vsel %vm400, 0.0, %v387
      %v425 = vpack.c.bf16 0.0, 0.0
      %v426 = vpack.c.bf16 %v402, %v401
      %v427 = vpack.c.bf16 %v405, %v404
      %v428 = vpack.c.bf16 %v408, %v407
      %v429 = vpack.c.bf16 %v411, %v410
      %v430 = vpack.c.bf16 %v414, %v413
      %v431 = vpack.c.bf16 %v417, %v416
      %v432 = vpack.c.bf16 %v420, %v419
      %v433 = vpack.c.bf16 %v423, %v422
      %v434 = vld [vmem:[%s3] sm:$0xf]
      %v435 = vld [vmem:[%s3 + $0x4] sm:$0xf]
      %v436 = vld [vmem:[%s3 + $0x8] sm:$0xf]
      %v437 = vld [vmem:[%s3 + $0xc] sm:$0xf]
      %v438 = vld [vmem:[%s3 + $0x10] sm:$0xf]
      %v439 = vld [vmem:[%s3 + $0x14] sm:$0xf]
      %v440 = vld [vmem:[%s3 + $0x18] sm:$0xf]
      %v441 = vld [vmem:[%s3 + $0x1c] sm:$0xf]
      %v442 = vld [vmem:[%s3 + $0x20] sm:$0xf]
      %v443 = vld [vmem:[%s3 + $0x24] sm:$0xf]
      %v444 = vld [vmem:[%s3 + $0x28] sm:$0xf]
      %v445 = vld [vmem:[%s3 + $0x2c] sm:$0xf]
      %v446 = vld [vmem:[%s3 + $0x30] sm:$0xf]
      %v447 = vld [vmem:[%s3 + $0x34] sm:$0xf]
      %v448 = vld [vmem:[%s3 + $0x38] sm:$0xf]
      %v449 = vld [vmem:[%s3 + $0x3c] sm:$0xf]
      %vm475 = vcmask 1046528
      %v476 = vrot.slane 0.0, 1
      %v477 = vsel %vm475, %v476, %v476
      %v478 = vrot.slane %v401, 1
      %v479 = vrot.slane %v402, 1
      %v480 = vsel %vm475, %v478, %v479
      %v481 = vrot.slane %v403, 1
      %v482 = vsel %vm475, %v479, %v481
      %v483 = vrot.slane %v404, 1
      %v484 = vrot.slane %v405, 1
      %v485 = vsel %vm475, %v483, %v484
      %v486 = vrot.slane %v406, 1
      %v487 = vsel %vm475, %v484, %v486
      %v488 = vrot.slane %v407, 1
      %v489 = vrot.slane %v408, 1
      %v490 = vsel %vm475, %v488, %v489
      %v491 = vrot.slane %v409, 1
      %v492 = vsel %vm475, %v489, %v491
      %v493 = vrot.slane %v410, 1
      %v494 = vrot.slane %v411, 1
      %v495 = vsel %vm475, %v493, %v494
      %v496 = vrot.slane %v412, 1
      %v497 = vsel %vm475, %v494, %v496
      %v498 = vrot.slane %v413, 1
      %v499 = vrot.slane %v414, 1
      %v500 = vsel %vm475, %v498, %v499
      %v501 = vrot.slane %v415, 1
      %v502 = vsel %vm475, %v499, %v501
      %v503 = vrot.slane %v416, 1
      %v504 = vrot.slane %v417, 1
      %v505 = vsel %vm475, %v503, %v504
      %v506 = vrot.slane %v418, 1
      %v507 = vsel %vm475, %v504, %v506
      %v508 = vrot.slane %v419, 1
      %v509 = vrot.slane %v420, 1
      %v510 = vsel %vm475, %v508, %v509
      %v511 = vrot.slane %v421, 1
      %v512 = vsel %vm475, %v509, %v511
      %v513 = vrot.slane %v422, 1
      %v514 = vrot.slane %v423, 1
      %v515 = vsel %vm475, %v513, %v514
      %v516 = vrot.slane %v424, 1
      %v517 = vsel %vm475, %v514, %v516
      %v535 = vpack.c.bf16 %v477, %v477
      %v536 = vpack.c.bf16 %v482, %v480
      %v537 = vpack.c.bf16 %v487, %v485
      %v538 = vpack.c.bf16 %v492, %v490
      %v539 = vpack.c.bf16 %v497, %v495
      %v540 = vpack.c.bf16 %v502, %v500
      %v541 = vpack.c.bf16 %v507, %v505
      %v542 = vpack.c.bf16 %v512, %v510
      %v543 = vpack.c.bf16 %v517, %v515
      %s544 = scalar_lea.vmem %s3, 64
      %v545 = vld [vmem:[%s544] sm:$0xf]
      %v546 = vld [vmem:[%s544 + $0x4] sm:$0xf]
      %v547 = vld [vmem:[%s544 + $0x8] sm:$0xf]
      %v548 = vld [vmem:[%s544 + $0xc] sm:$0xf]
      %v549 = vld [vmem:[%s544 + $0x10] sm:$0xf]
      %v550 = vld [vmem:[%s544 + $0x14] sm:$0xf]
      %v551 = vld [vmem:[%s544 + $0x18] sm:$0xf]
      %v552 = vld [vmem:[%s544 + $0x1c] sm:$0xf]
      %v553 = vld [vmem:[%s544 + $0x20] sm:$0xf]
      %v554 = vld [vmem:[%s544 + $0x24] sm:$0xf]
      %v555 = vld [vmem:[%s544 + $0x28] sm:$0xf]
      %v556 = vld [vmem:[%s544 + $0x2c] sm:$0xf]
      %v557 = vld [vmem:[%s544 + $0x30] sm:$0xf]
      %v558 = vld [vmem:[%s544 + $0x34] sm:$0xf]
      %v559 = vld [vmem:[%s544 + $0x38] sm:$0xf]
      %v560 = vld [vmem:[%s544 + $0x3c] sm:$0xf]
      %v577 = vunpack.c.l.b16 %v545
      %v578 = vunpack.c.l.b16 %v546
      %v579 = vunpack.c.l.b16 %v547
      %v580 = vunpack.c.l.b16 %v548
      %v581 = vunpack.c.l.b16 %v549
      %v582 = vunpack.c.l.b16 %v550
      %v583 = vunpack.c.l.b16 %v551
      %v584 = vunpack.c.l.b16 %v552
      %v585 = vunpack.c.l.b16 %v553
      %v586 = vunpack.c.l.b16 %v554
      %v587 = vunpack.c.l.b16 %v555
      %v588 = vunpack.c.l.b16 %v556
      %v589 = vunpack.c.l.b16 %v557
      %v590 = vunpack.c.l.b16 %v558
      %v591 = vunpack.c.l.b16 %v559
      %v592 = vunpack.c.l.b16 %v560
      %v593 = vpack.c.b16 %v578, %v577
      %v594 = vpack.c.b16 %v580, %v579
      %v595 = vpack.c.b16 %v582, %v581
      %v596 = vpack.c.b16 %v584, %v583
      %v597 = vpack.c.b16 %v586, %v585
      %v598 = vpack.c.b16 %v588, %v587
      %v599 = vpack.c.b16 %v590, %v589
      %v600 = vpack.c.b16 %v592, %v591
      %609 = vmatpush.bf16.msra.mxu0 %v600
      %610 = vmatpush.bf16.msra.mxu0 %v599
      %611 = vmatpush.bf16.msra.mxu0 %v598
      %612 = vmatpush.bf16.msra.mxu0 %v597
      %613 = vmatpush.bf16.msra.mxu0 %v596
      %614 = vmatpush.bf16.msra.mxu0 %v595
      %615 = vmatpush.bf16.msra.mxu0 %v594
      %616 = vmatpush.bf16.msra.mxu0 %v593
      %617 = vmatmul.bf16.gmra.mxu0 %v535
      %v618 = vpop.f32.mrf.mxu0
      %v619 = vadd.f32 0.0, %v618
      %v620 = vpop.f32.mrf.mxu0
      %v621 = vadd.f32 0.0, %v620
      %622 = vmatmul.bf16.gmra.mxu0 %v536
      %v623 = vpop.f32.mrf.mxu0
      %v624 = vadd.f32 0.0, %v623
      %v625 = vpop.f32.mrf.mxu0
      %v626 = vadd.f32 0.0, %v625
      %627 = vmatmul.bf16.gmra.mxu0 %v536
      %v628 = vpop.f32.mrf.mxu0
      %v629 = vadd.f32 0.0, %v628
      %v630 = vpop.f32.mrf.mxu0
      %v631 = vadd.f32 0.0, %v630
      %632 = vmatmul.bf16.gmra.mxu0 %v537
      %v633 = vpop.f32.mrf.mxu0
      %v634 = vadd.f32 0.0, %v633
      %v635 = vpop.f32.mrf.mxu0
      %v636 = vadd.f32 0.0, %v635
      %637 = vmatmul.bf16.gmra.mxu0 %v537
      %v638 = vpop.f32.mrf.mxu0
      %v639 = vadd.f32 0.0, %v638
      %v640 = vpop.f32.mrf.mxu0
      %v641 = vadd.f32 0.0, %v640
      %642 = vmatmul.bf16.gmra.mxu0 %v538
      %v643 = vpop.f32.mrf.mxu0
      %v644 = vadd.f32 0.0, %v643
      %v645 = vpop.f32.mrf.mxu0
      %v646 = vadd.f32 0.0, %v645
      %647 = vmatmul.bf16.gmra.mxu0 %v538
      %v648 = vpop.f32.mrf.mxu0
      %v649 = vadd.f32 0.0, %v648
      %v650 = vpop.f32.mrf.mxu0
      %v651 = vadd.f32 0.0, %v650
      %652 = vmatmul.bf16.gmra.mxu0 %v539
      %v653 = vpop.f32.mrf.mxu0
      %v654 = vadd.f32 0.0, %v653
      %v655 = vpop.f32.mrf.mxu0
      %v656 = vadd.f32 0.0, %v655
      %657 = vmatmul.bf16.gmra.mxu0 %v539
      %v658 = vpop.f32.mrf.mxu0
      %v659 = vadd.f32 0.0, %v658
      %v660 = vpop.f32.mrf.mxu0
      %v661 = vadd.f32 0.0, %v660
      %662 = vmatmul.bf16.gmra.mxu0 %v540
      %v663 = vpop.f32.mrf.mxu0
      %v664 = vadd.f32 0.0, %v663
      %v665 = vpop.f32.mrf.mxu0
      %v666 = vadd.f32 0.0, %v665
      %667 = vmatmul.bf16.gmra.mxu0 %v540
      %v668 = vpop.f32.mrf.mxu0
      %v669 = vadd.f32 0.0, %v668
      %v670 = vpop.f32.mrf.mxu0
      %v671 = vadd.f32 0.0, %v670
      %672 = vmatmul.bf16.gmra.mxu0 %v541
      %v673 = vpop.f32.mrf.mxu0
      %v674 = vadd.f32 0.0, %v673
      %v675 = vpop.f32.mrf.mxu0
      %v676 = vadd.f32 0.0, %v675
      %677 = vmatmul.bf16.gmra.mxu0 %v541
      %v678 = vpop.f32.mrf.mxu0
      %v679 = vadd.f32 0.0, %v678
      %v680 = vpop.f32.mrf.mxu0
      %v681 = vadd.f32 0.0, %v680
      %682 = vmatmul.bf16.gmra.mxu0 %v542
      %v683 = vpop.f32.mrf.mxu0
      %v684 = vadd.f32 0.0, %v683
      %v685 = vpop.f32.mrf.mxu0
      %v686 = vadd.f32 0.0, %v685
      %687 = vmatmul.bf16.gmra.mxu0 %v542
      %v688 = vpop.f32.mrf.mxu0
      %v689 = vadd.f32 0.0, %v688
      %v690 = vpop.f32.mrf.mxu0
      %v691 = vadd.f32 0.0, %v690
      %692 = vmatmul.bf16.gmra.mxu0 %v543
      %v693 = vpop.f32.mrf.mxu0
      %v694 = vadd.f32 0.0, %v693
      %v695 = vpop.f32.mrf.mxu0
      %v696 = vadd.f32 0.0, %v695
      %697 = vdwg.mxu0
      %v714 = vunpack.c.l.b16 %v434
      %v715 = vunpack.c.l.b16 %v435
      %v716 = vunpack.c.l.b16 %v436
      %v717 = vunpack.c.l.b16 %v437
      %v718 = vunpack.c.l.b16 %v438
      %v719 = vunpack.c.l.b16 %v439
      %v720 = vunpack.c.l.b16 %v440
      %v721 = vunpack.c.l.b16 %v441
      %v722 = vunpack.c.l.b16 %v442
      %v723 = vunpack.c.l.b16 %v443
      %v724 = vunpack.c.l.b16 %v444
      %v725 = vunpack.c.l.b16 %v445
      %v726 = vunpack.c.l.b16 %v446
      %v727 = vunpack.c.l.b16 %v447
      %v728 = vunpack.c.l.b16 %v448
      %v729 = vunpack.c.l.b16 %v449
      %v730 = vpack.c.b16 %v715, %v714
      %v731 = vpack.c.b16 %v717, %v716
      %v732 = vpack.c.b16 %v719, %v718
      %v733 = vpack.c.b16 %v721, %v720
      %v734 = vpack.c.b16 %v723, %v722
      %v735 = vpack.c.b16 %v725, %v724
      %v736 = vpack.c.b16 %v727, %v726
      %v737 = vpack.c.b16 %v729, %v728
      %746 = vmatpush.bf16.msra.mxu0 %v737
      %747 = vmatpush.bf16.msra.mxu0 %v736
      %748 = vmatpush.bf16.msra.mxu0 %v735
      %749 = vmatpush.bf16.msra.mxu0 %v734
      %750 = vmatpush.bf16.msra.mxu0 %v733
      %751 = vmatpush.bf16.msra.mxu0 %v732
      %752 = vmatpush.bf16.msra.mxu0 %v731
      %753 = vmatpush.bf16.msra.mxu0 %v730
      %754 = vmatmul.bf16.gmra.mxu0 %v425
      %v755 = vpop.f32.mrf.mxu0
      %v756 = vadd.f32 %v619, %v755
      %v757 = vpop.f32.mrf.mxu0
      %v758 = vadd.f32 %v621, %v757
      %759 = vmatmul.bf16.gmra.mxu0 %v426
      %v760 = vpop.f32.mrf.mxu0
      %v761 = vadd.f32 %v624, %v760
      %v762 = vpop.f32.mrf.mxu0
      %v763 = vadd.f32 %v626, %v762
      %764 = vmatmul.bf16.gmra.mxu0 %v426
      %v765 = vpop.f32.mrf.mxu0
      %v766 = vadd.f32 %v629, %v765
      %v767 = vpop.f32.mrf.mxu0
      %v768 = vadd.f32 %v631, %v767
      %769 = vmatmul.bf16.gmra.mxu0 %v427
      %v770 = vpop.f32.mrf.mxu0
      %v771 = vadd.f32 %v634, %v770
      %v772 = vpop.f32.mrf.mxu0
      %v773 = vadd.f32 %v636, %v772
      %774 = vmatmul.bf16.gmra.mxu0 %v427
      %v775 = vpop.f32.mrf.mxu0
      %v776 = vadd.f32 %v639, %v775
      %v777 = vpop.f32.mrf.mxu0
      %v778 = vadd.f32 %v641, %v777
      %779 = vmatmul.bf16.gmra.mxu0 %v428
      %v780 = vpop.f32.mrf.mxu0
      %v781 = vadd.f32 %v644, %v780
      %v782 = vpop.f32.mrf.mxu0
      %v783 = vadd.f32 %v646, %v782
      %784 = vmatmul.bf16.gmra.mxu0 %v428
      %v785 = vpop.f32.mrf.mxu0
      %v786 = vadd.f32 %v649, %v785
      %v787 = vpop.f32.mrf.mxu0
      %v788 = vadd.f32 %v651, %v787
      %789 = vmatmul.bf16.gmra.mxu0 %v429
      %v790 = vpop.f32.mrf.mxu0
      %v791 = vadd.f32 %v654, %v790
      %v792 = vpop.f32.mrf.mxu0
      %v793 = vadd.f32 %v656, %v792
      %794 = vmatmul.bf16.gmra.mxu0 %v429
      %v795 = vpop.f32.mrf.mxu0
      %v796 = vadd.f32 %v659, %v795
      %v797 = vpop.f32.mrf.mxu0
      %v798 = vadd.f32 %v661, %v797
      %799 = vmatmul.bf16.gmra.mxu0 %v430
      %v800 = vpop.f32.mrf.mxu0
      %v801 = vadd.f32 %v664, %v800
      %v802 = vpop.f32.mrf.mxu0
      %v803 = vadd.f32 %v666, %v802
      %804 = vmatmul.bf16.gmra.mxu0 %v430
      %v805 = vpop.f32.mrf.mxu0
      %v806 = vadd.f32 %v669, %v805
      %v807 = vpop.f32.mrf.mxu0
      %v808 = vadd.f32 %v671, %v807
      %809 = vmatmul.bf16.gmra.mxu0 %v431
      %v810 = vpop.f32.mrf.mxu0
      %v811 = vadd.f32 %v674, %v810
      %v812 = vpop.f32.mrf.mxu0
      %v813 = vadd.f32 %v676, %v812
      %814 = vmatmul.bf16.gmra.mxu0 %v431
      %v815 = vpop.f32.mrf.mxu0
      %v816 = vadd.f32 %v679, %v815
      %v817 = vpop.f32.mrf.mxu0
      %v818 = vadd.f32 %v681, %v817
      %819 = vmatmul.bf16.gmra.mxu0 %v432
      %v820 = vpop.f32.mrf.mxu0
      %v821 = vadd.f32 %v684, %v820
      %v822 = vpop.f32.mrf.mxu0
      %v823 = vadd.f32 %v686, %v822
      %824 = vmatmul.bf16.gmra.mxu0 %v432
      %v825 = vpop.f32.mrf.mxu0
      %v826 = vadd.f32 %v689, %v825
      %v827 = vpop.f32.mrf.mxu0
      %v828 = vadd.f32 %v691, %v827
      %829 = vmatmul.bf16.gmra.mxu0 %v433
      %v830 = vpop.f32.mrf.mxu0
      %v831 = vadd.f32 %v694, %v830
      %v832 = vpop.f32.mrf.mxu0
      %v833 = vadd.f32 %v696, %v832
      %834 = vdwg.mxu0
      %vm835 = vcmask 1045504
      %v836 = vrot.slane 0.0, 2
      %v837 = vsel %vm835, %v836, %v836
      %v838 = vrot.slane %v401, 2
      %v839 = vrot.slane %v402, 2
      %v840 = vsel %vm835, %v838, %v839
      %v841 = vrot.slane %v403, 2
      %v842 = vsel %vm835, %v839, %v841
      %v843 = vrot.slane %v404, 2
      %v844 = vrot.slane %v405, 2
      %v845 = vsel %vm835, %v843, %v844
      %v846 = vrot.slane %v406, 2
      %v847 = vsel %vm835, %v844, %v846
      %v848 = vrot.slane %v407, 2
      %v849 = vrot.slane %v408, 2
      %v850 = vsel %vm835, %v848, %v849
      %v851 = vrot.slane %v409, 2
      %v852 = vsel %vm835, %v849, %v851
      %v853 = vrot.slane %v410, 2
      %v854 = vrot.slane %v411, 2
      %v855 = vsel %vm835, %v853, %v854
      %v856 = vrot.slane %v412, 2
      %v857 = vsel %vm835, %v854, %v856
      %v858 = vrot.slane %v413, 2
      %v859 = vrot.slane %v414, 2
      %v860 = vsel %vm835, %v858, %v859
      %v861 = vrot.slane %v415, 2
      %v862 = vsel %vm835, %v859, %v861
      %v863 = vrot.slane %v416, 2
      %v864 = vrot.slane %v417, 2
      %v865 = vsel %vm835, %v863, %v864
      %v866 = vrot.slane %v418, 2
      %v867 = vsel %vm835, %v864, %v866
      %v868 = vrot.slane %v419, 2
      %v869 = vrot.slane %v420, 2
      %v870 = vsel %vm835, %v868, %v869
      %v871 = vrot.slane %v421, 2
      %v872 = vsel %vm835, %v869, %v871
      %v873 = vrot.slane %v422, 2
      %v874 = vrot.slane %v423, 2
      %v875 = vsel %vm835, %v873, %v874
      %v876 = vrot.slane %v424, 2
      %v877 = vsel %vm835, %v874, %v876
      %v895 = vpack.c.bf16 %v837, %v837
      %v896 = vpack.c.bf16 %v842, %v840
      %v897 = vpack.c.bf16 %v847, %v845
      %v898 = vpack.c.bf16 %v852, %v850
      %v899 = vpack.c.bf16 %v857, %v855
      %v900 = vpack.c.bf16 %v862, %v860
      %v901 = vpack.c.bf16 %v867, %v865
      %v902 = vpack.c.bf16 %v872, %v870
      %v903 = vpack.c.bf16 %v877, %v875
      %s904 = scalar_lea.vmem %s3, 128
      %v905 = vld [vmem:[%s904] sm:$0xf]
      %v906 = vld [vmem:[%s904 + $0x4] sm:$0xf]
      %v907 = vld [vmem:[%s904 + $0x8] sm:$0xf]
      %v908 = vld [vmem:[%s904 + $0xc] sm:$0xf]
      %v909 = vld [vmem:[%s904 + $0x10] sm:$0xf]
      %v910 = vld [vmem:[%s904 + $0x14] sm:$0xf]
      %v911 = vld [vmem:[%s904 + $0x18] sm:$0xf]
      %v912 = vld [vmem:[%s904 + $0x1c] sm:$0xf]
      %v913 = vld [vmem:[%s904 + $0x20] sm:$0xf]
      %v914 = vld [vmem:[%s904 + $0x24] sm:$0xf]
      %v915 = vld [vmem:[%s904 + $0x28] sm:$0xf]
      %v916 = vld [vmem:[%s904 + $0x2c] sm:$0xf]
      %v917 = vld [vmem:[%s904 + $0x30] sm:$0xf]
      %v918 = vld [vmem:[%s904 + $0x34] sm:$0xf]
      %v919 = vld [vmem:[%s904 + $0x38] sm:$0xf]
      %v920 = vld [vmem:[%s904 + $0x3c] sm:$0xf]
      %v937 = vunpack.c.l.b16 %v905
      %v938 = vunpack.c.l.b16 %v906
      %v939 = vunpack.c.l.b16 %v907
      %v940 = vunpack.c.l.b16 %v908
      %v941 = vunpack.c.l.b16 %v909
      %v942 = vunpack.c.l.b16 %v910
      %v943 = vunpack.c.l.b16 %v911
      %v944 = vunpack.c.l.b16 %v912
      %v945 = vunpack.c.l.b16 %v913
      %v946 = vunpack.c.l.b16 %v914
      %v947 = vunpack.c.l.b16 %v915
      %v948 = vunpack.c.l.b16 %v916
      %v949 = vunpack.c.l.b16 %v917
      %v950 = vunpack.c.l.b16 %v918
      %v951 = vunpack.c.l.b16 %v919
      %v952 = vunpack.c.l.b16 %v920
      %v953 = vpack.c.b16 %v938, %v937
      %v954 = vpack.c.b16 %v940, %v939
      %v955 = vpack.c.b16 %v942, %v941
      %v956 = vpack.c.b16 %v944, %v943
      %v957 = vpack.c.b16 %v946, %v945
      %v958 = vpack.c.b16 %v948, %v947
      %v959 = vpack.c.b16 %v950, %v949
      %v960 = vpack.c.b16 %v952, %v951
      %969 = vmatpush.bf16.msra.mxu0 %v960
      %970 = vmatpush.bf16.msra.mxu0 %v959
      %971 = vmatpush.bf16.msra.mxu0 %v958
      %972 = vmatpush.bf16.msra.mxu0 %v957
      %973 = vmatpush.bf16.msra.mxu0 %v956
      %974 = vmatpush.bf16.msra.mxu0 %v955
      %975 = vmatpush.bf16.msra.mxu0 %v954
      %976 = vmatpush.bf16.msra.mxu0 %v953
      %977 = vmatmul.bf16.gmra.mxu0 %v895
      %v978 = vpop.f32.mrf.mxu0
      %v979 = vadd.f32 0.0, %v978
      %v980 = vpop.f32.mrf.mxu0
      %v981 = vadd.f32 0.0, %v980
      %982 = vmatmul.bf16.gmra.mxu0 %v896
      %v983 = vpop.f32.mrf.mxu0
      %v984 = vadd.f32 0.0, %v983
      %v985 = vpop.f32.mrf.mxu0
      %v986 = vadd.f32 0.0, %v985
      %987 = vmatmul.bf16.gmra.mxu0 %v896
      %v988 = vpop.f32.mrf.mxu0
      %v989 = vadd.f32 0.0, %v988
      %v990 = vpop.f32.mrf.mxu0
      %v991 = vadd.f32 0.0, %v990
      %992 = vmatmul.bf16.gmra.mxu0 %v897
      %v993 = vpop.f32.mrf.mxu0
      %v994 = vadd.f32 0.0, %v993
      %v995 = vpop.f32.mrf.mxu0
      %v996 = vadd.f32 0.0, %v995
      %997 = vmatmul.bf16.gmra.mxu0 %v897
      %v998 = vpop.f32.mrf.mxu0
      %v999 = vadd.f32 0.0, %v998
      %v1000 = vpop.f32.mrf.mxu0
      %v1001 = vadd.f32 0.0, %v1000
      %1002 = vmatmul.bf16.gmra.mxu0 %v898
      %v1003 = vpop.f32.mrf.mxu0
      %v1004 = vadd.f32 0.0, %v1003
      %v1005 = vpop.f32.mrf.mxu0
      %v1006 = vadd.f32 0.0, %v1005
      %1007 = vmatmul.bf16.gmra.mxu0 %v898
      %v1008 = vpop.f32.mrf.mxu0
      %v1009 = vadd.f32 0.0, %v1008
      %v1010 = vpop.f32.mrf.mxu0
      %v1011 = vadd.f32 0.0, %v1010
      %1012 = vmatmul.bf16.gmra.mxu0 %v899
      %v1013 = vpop.f32.mrf.mxu0
      %v1014 = vadd.f32 0.0, %v1013
      %v1015 = vpop.f32.mrf.mxu0
      %v1016 = vadd.f32 0.0, %v1015
      %1017 = vmatmul.bf16.gmra.mxu0 %v899
      %v1018 = vpop.f32.mrf.mxu0
      %v1019 = vadd.f32 0.0, %v1018
      %v1020 = vpop.f32.mrf.mxu0
      %v1021 = vadd.f32 0.0, %v1020
      %1022 = vmatmul.bf16.gmra.mxu0 %v900
      %v1023 = vpop.f32.mrf.mxu0
      %v1024 = vadd.f32 0.0, %v1023
      %v1025 = vpop.f32.mrf.mxu0
      %v1026 = vadd.f32 0.0, %v1025
      %1027 = vmatmul.bf16.gmra.mxu0 %v900
      %v1028 = vpop.f32.mrf.mxu0
      %v1029 = vadd.f32 0.0, %v1028
      %v1030 = vpop.f32.mrf.mxu0
      %v1031 = vadd.f32 0.0, %v1030
      %1032 = vmatmul.bf16.gmra.mxu0 %v901
      %v1033 = vpop.f32.mrf.mxu0
      %v1034 = vadd.f32 0.0, %v1033
      %v1035 = vpop.f32.mrf.mxu0
      %v1036 = vadd.f32 0.0, %v1035
      %1037 = vmatmul.bf16.gmra.mxu0 %v901
      %v1038 = vpop.f32.mrf.mxu0
      %v1039 = vadd.f32 0.0, %v1038
      %v1040 = vpop.f32.mrf.mxu0
      %v1041 = vadd.f32 0.0, %v1040
      %1042 = vmatmul.bf16.gmra.mxu0 %v902
      %v1043 = vpop.f32.mrf.mxu0
      %v1044 = vadd.f32 0.0, %v1043
      %v1045 = vpop.f32.mrf.mxu0
      %v1046 = vadd.f32 0.0, %v1045
      %1047 = vmatmul.bf16.gmra.mxu0 %v902
      %v1048 = vpop.f32.mrf.mxu0
      %v1049 = vadd.f32 0.0, %v1048
      %v1050 = vpop.f32.mrf.mxu0
      %v1051 = vadd.f32 0.0, %v1050
      %1052 = vmatmul.bf16.gmra.mxu0 %v903
      %v1053 = vpop.f32.mrf.mxu0
      %v1054 = vadd.f32 0.0, %v1053
      %v1055 = vpop.f32.mrf.mxu0
      %v1056 = vadd.f32 0.0, %v1055
      %1057 = vdwg.mxu0
      %v1058 = vadd.f32 %v756, %v979
      %v1059 = vadd.f32 %v758, %v981
      %v1060 = vadd.f32 %v761, %v984
      %v1061 = vadd.f32 %v763, %v986
      %v1062 = vadd.f32 %v766, %v989
      %v1063 = vadd.f32 %v768, %v991
      %v1064 = vadd.f32 %v771, %v994
      %v1065 = vadd.f32 %v773, %v996
      %v1066 = vadd.f32 %v776, %v999
      %v1067 = vadd.f32 %v778, %v1001
      %v1068 = vadd.f32 %v781, %v1004
      %v1069 = vadd.f32 %v783, %v1006
      %v1070 = vadd.f32 %v786, %v1009
      %v1071 = vadd.f32 %v788, %v1011
      %v1072 = vadd.f32 %v791, %v1014
      %v1073 = vadd.f32 %v793, %v1016
      %v1074 = vadd.f32 %v796, %v1019
      %v1075 = vadd.f32 %v798, %v1021
      %v1076 = vadd.f32 %v801, %v1024
      %v1077 = vadd.f32 %v803, %v1026
      %v1078 = vadd.f32 %v806, %v1029
      %v1079 = vadd.f32 %v808, %v1031
      %v1080 = vadd.f32 %v811, %v1034
      %v1081 = vadd.f32 %v813, %v1036
      %v1082 = vadd.f32 %v816, %v1039
      %v1083 = vadd.f32 %v818, %v1041
      %v1084 = vadd.f32 %v821, %v1044
      %v1085 = vadd.f32 %v823, %v1046
      %v1086 = vadd.f32 %v826, %v1049
      %v1087 = vadd.f32 %v828, %v1051
      %v1088 = vadd.f32 %v831, %v1054
      %v1089 = vadd.f32 %v833, %v1056
      %s1090 = scalar_lea.vmem %s3, 192
      %v1091 = vld [vmem:[%s1090] sm:$0xf]
      %v1092 = vld [vmem:[%s1090 + $0x4] sm:$0xf]
      %v1093 = vld [vmem:[%s1090 + $0x8] sm:$0xf]
      %v1094 = vld [vmem:[%s1090 + $0xc] sm:$0xf]
      %v1095 = vld [vmem:[%s1090 + $0x10] sm:$0xf]
      %v1096 = vld [vmem:[%s1090 + $0x14] sm:$0xf]
      %v1097 = vld [vmem:[%s1090 + $0x18] sm:$0xf]
      %v1098 = vld [vmem:[%s1090 + $0x1c] sm:$0xf]
      %v1099 = vld [vmem:[%s1090 + $0x20] sm:$0xf]
      %v1100 = vld [vmem:[%s1090 + $0x24] sm:$0xf]
      %v1101 = vld [vmem:[%s1090 + $0x28] sm:$0xf]
      %v1102 = vld [vmem:[%s1090 + $0x2c] sm:$0xf]
      %v1103 = vld [vmem:[%s1090 + $0x30] sm:$0xf]
      %v1104 = vld [vmem:[%s1090 + $0x34] sm:$0xf]
      %v1105 = vld [vmem:[%s1090 + $0x38] sm:$0xf]
      %v1106 = vld [vmem:[%s1090 + $0x3c] sm:$0xf]
      %v1123 = vunpack.c.l.b16 %v1091
      %v1124 = vunpack.c.l.b16 %v1092
      %v1125 = vunpack.c.l.b16 %v1093
      %v1126 = vunpack.c.l.b16 %v1094
      %v1127 = vunpack.c.l.b16 %v1095
      %v1128 = vunpack.c.l.b16 %v1096
      %v1129 = vunpack.c.l.b16 %v1097
      %v1130 = vunpack.c.l.b16 %v1098
      %v1131 = vunpack.c.l.b16 %v1099
      %v1132 = vunpack.c.l.b16 %v1100
      %v1133 = vunpack.c.l.b16 %v1101
      %v1134 = vunpack.c.l.b16 %v1102
      %v1135 = vunpack.c.l.b16 %v1103
      %v1136 = vunpack.c.l.b16 %v1104
      %v1137 = vunpack.c.l.b16 %v1105
      %v1138 = vunpack.c.l.b16 %v1106
      %v1139 = vpack.c.b16 %v1124, %v1123
      %v1140 = vpack.c.b16 %v1126, %v1125
      %v1141 = vpack.c.b16 %v1128, %v1127
      %v1142 = vpack.c.b16 %v1130, %v1129
      %v1143 = vpack.c.b16 %v1132, %v1131
      %v1144 = vpack.c.b16 %v1134, %v1133
      %v1145 = vpack.c.b16 %v1136, %v1135
      %v1146 = vpack.c.b16 %v1138, %v1137
      %1155 = vmatpush.bf16.msra.mxu0 %v1146
      %1156 = vmatpush.bf16.msra.mxu0 %v1145
      %1157 = vmatpush.bf16.msra.mxu0 %v1144
      %1158 = vmatpush.bf16.msra.mxu0 %v1143
      %1159 = vmatpush.bf16.msra.mxu0 %v1142
      %1160 = vmatpush.bf16.msra.mxu0 %v1141
      %1161 = vmatpush.bf16.msra.mxu0 %v1140
      %1162 = vmatpush.bf16.msra.mxu0 %v1139
      %1163 = vmatmul.bf16.gmra.mxu0 %v426
      %v1164 = vpop.f32.mrf.mxu0
      %v1165 = vadd.f32 0.0, %v1164
      %v1166 = vpop.f32.mrf.mxu0
      %v1167 = vadd.f32 0.0, %v1166
      %1168 = vmatmul.bf16.gmra.mxu0 %v426
      %v1169 = vpop.f32.mrf.mxu0
      %v1170 = vadd.f32 0.0, %v1169
      %v1171 = vpop.f32.mrf.mxu0
      %v1172 = vadd.f32 0.0, %v1171
      %1173 = vmatmul.bf16.gmra.mxu0 %v427
      %v1174 = vpop.f32.mrf.mxu0
      %v1175 = vadd.f32 0.0, %v1174
      %v1176 = vpop.f32.mrf.mxu0
      %v1177 = vadd.f32 0.0, %v1176
      %1178 = vmatmul.bf16.gmra.mxu0 %v427
      %v1179 = vpop.f32.mrf.mxu0
      %v1180 = vadd.f32 0.0, %v1179
      %v1181 = vpop.f32.mrf.mxu0
      %v1182 = vadd.f32 0.0, %v1181
      %1183 = vmatmul.bf16.gmra.mxu0 %v428
      %v1184 = vpop.f32.mrf.mxu0
      %v1185 = vadd.f32 0.0, %v1184
      %v1186 = vpop.f32.mrf.mxu0
      %v1187 = vadd.f32 0.0, %v1186
      %1188 = vmatmul.bf16.gmra.mxu0 %v428
      %v1189 = vpop.f32.mrf.mxu0
      %v1190 = vadd.f32 0.0, %v1189
      %v1191 = vpop.f32.mrf.mxu0
      %v1192 = vadd.f32 0.0, %v1191
      %1193 = vmatmul.bf16.gmra.mxu0 %v429
      %v1194 = vpop.f32.mrf.mxu0
      %v1195 = vadd.f32 0.0, %v1194
      %v1196 = vpop.f32.mrf.mxu0
      %v1197 = vadd.f32 0.0, %v1196
      %1198 = vmatmul.bf16.gmra.mxu0 %v429
      %v1199 = vpop.f32.mrf.mxu0
      %v1200 = vadd.f32 0.0, %v1199
      %v1201 = vpop.f32.mrf.mxu0
      %v1202 = vadd.f32 0.0, %v1201
      %1203 = vmatmul.bf16.gmra.mxu0 %v430
      %v1204 = vpop.f32.mrf.mxu0
      %v1205 = vadd.f32 0.0, %v1204
      %v1206 = vpop.f32.mrf.mxu0
      %v1207 = vadd.f32 0.0, %v1206
      %1208 = vmatmul.bf16.gmra.mxu0 %v430
      %v1209 = vpop.f32.mrf.mxu0
      %v1210 = vadd.f32 0.0, %v1209
      %v1211 = vpop.f32.mrf.mxu0
      %v1212 = vadd.f32 0.0, %v1211
      %1213 = vmatmul.bf16.gmra.mxu0 %v431
      %v1214 = vpop.f32.mrf.mxu0
      %v1215 = vadd.f32 0.0, %v1214
      %v1216 = vpop.f32.mrf.mxu0
      %v1217 = vadd.f32 0.0, %v1216
      %1218 = vmatmul.bf16.gmra.mxu0 %v431
      %v1219 = vpop.f32.mrf.mxu0
      %v1220 = vadd.f32 0.0, %v1219
      %v1221 = vpop.f32.mrf.mxu0
      %v1222 = vadd.f32 0.0, %v1221
      %1223 = vmatmul.bf16.gmra.mxu0 %v432
      %v1224 = vpop.f32.mrf.mxu0
      %v1225 = vadd.f32 0.0, %v1224
      %v1226 = vpop.f32.mrf.mxu0
      %v1227 = vadd.f32 0.0, %v1226
      %1228 = vmatmul.bf16.gmra.mxu0 %v432
      %v1229 = vpop.f32.mrf.mxu0
      %v1230 = vadd.f32 0.0, %v1229
      %v1231 = vpop.f32.mrf.mxu0
      %v1232 = vadd.f32 0.0, %v1231
      %1233 = vmatmul.bf16.gmra.mxu0 %v433
      %v1234 = vpop.f32.mrf.mxu0
      %v1235 = vadd.f32 0.0, %v1234
      %v1236 = vpop.f32.mrf.mxu0
      %v1237 = vadd.f32 0.0, %v1236
      %1238 = vmatmul.bf16.gmra.mxu0 %v433
      %v1239 = vpop.f32.mrf.mxu0
      %v1240 = vadd.f32 0.0, %v1239
      %v1241 = vpop.f32.mrf.mxu0
      %v1242 = vadd.f32 0.0, %v1241
      %1243 = vdwg.mxu0
      %v1244 = vadd.f32 %v1058, %v1165
      %v1245 = vadd.f32 %v1059, %v1167
      %v1246 = vadd.f32 %v1060, %v1170
      %v1247 = vadd.f32 %v1061, %v1172
      %v1248 = vadd.f32 %v1062, %v1175
      %v1249 = vadd.f32 %v1063, %v1177
      %v1250 = vadd.f32 %v1064, %v1180
      %v1251 = vadd.f32 %v1065, %v1182
      %v1252 = vadd.f32 %v1066, %v1185
      %v1253 = vadd.f32 %v1067, %v1187
      %v1254 = vadd.f32 %v1068, %v1190
      %v1255 = vadd.f32 %v1069, %v1192
      %v1256 = vadd.f32 %v1070, %v1195
      %v1257 = vadd.f32 %v1071, %v1197
      %v1258 = vadd.f32 %v1072, %v1200
      %v1259 = vadd.f32 %v1073, %v1202
      %v1260 = vadd.f32 %v1074, %v1205
      %v1261 = vadd.f32 %v1075, %v1207
      %v1262 = vadd.f32 %v1076, %v1210
      %v1263 = vadd.f32 %v1077, %v1212
      %v1264 = vadd.f32 %v1078, %v1215
      %v1265 = vadd.f32 %v1079, %v1217
      %v1266 = vadd.f32 %v1080, %v1220
      %v1267 = vadd.f32 %v1081, %v1222
      %v1268 = vadd.f32 %v1082, %v1225
      %v1269 = vadd.f32 %v1083, %v1227
      %v1270 = vadd.f32 %v1084, %v1230
      %v1271 = vadd.f32 %v1085, %v1232
      %v1272 = vadd.f32 %v1086, %v1235
      %v1273 = vadd.f32 %v1087, %v1237
      %v1274 = vadd.f32 %v1088, %v1240
      %v1275 = vadd.f32 %v1089, %v1242
      %s1276 = scalar_lea.vmem %s3, 256
      %v1277 = vld [vmem:[%s1276] sm:$0xf]
      %v1278 = vld [vmem:[%s1276 + $0x4] sm:$0xf]
      %v1279 = vld [vmem:[%s1276 + $0x8] sm:$0xf]
      %v1280 = vld [vmem:[%s1276 + $0xc] sm:$0xf]
      %v1281 = vld [vmem:[%s1276 + $0x10] sm:$0xf]
      %v1282 = vld [vmem:[%s1276 + $0x14] sm:$0xf]
      %v1283 = vld [vmem:[%s1276 + $0x18] sm:$0xf]
      %v1284 = vld [vmem:[%s1276 + $0x1c] sm:$0xf]
      %v1285 = vld [vmem:[%s1276 + $0x20] sm:$0xf]
      %v1286 = vld [vmem:[%s1276 + $0x24] sm:$0xf]
      %v1287 = vld [vmem:[%s1276 + $0x28] sm:$0xf]
      %v1288 = vld [vmem:[%s1276 + $0x2c] sm:$0xf]
      %v1289 = vld [vmem:[%s1276 + $0x30] sm:$0xf]
      %v1290 = vld [vmem:[%s1276 + $0x34] sm:$0xf]
      %v1291 = vld [vmem:[%s1276 + $0x38] sm:$0xf]
      %v1292 = vld [vmem:[%s1276 + $0x3c] sm:$0xf]
      %v1309 = vunpack.c.l.b16 %v1277
      %v1310 = vunpack.c.l.b16 %v1278
      %v1311 = vunpack.c.l.b16 %v1279
      %v1312 = vunpack.c.l.b16 %v1280
      %v1313 = vunpack.c.l.b16 %v1281
      %v1314 = vunpack.c.l.b16 %v1282
      %v1315 = vunpack.c.l.b16 %v1283
      %v1316 = vunpack.c.l.b16 %v1284
      %v1317 = vunpack.c.l.b16 %v1285
      %v1318 = vunpack.c.l.b16 %v1286
      %v1319 = vunpack.c.l.b16 %v1287
      %v1320 = vunpack.c.l.b16 %v1288
      %v1321 = vunpack.c.l.b16 %v1289
      %v1322 = vunpack.c.l.b16 %v1290
      %v1323 = vunpack.c.l.b16 %v1291
      %v1324 = vunpack.c.l.b16 %v1292
      %v1325 = vpack.c.b16 %v1310, %v1309
      %v1326 = vpack.c.b16 %v1312, %v1311
      %v1327 = vpack.c.b16 %v1314, %v1313
      %v1328 = vpack.c.b16 %v1316, %v1315
      %v1329 = vpack.c.b16 %v1318, %v1317
      %v1330 = vpack.c.b16 %v1320, %v1319
      %v1331 = vpack.c.b16 %v1322, %v1321
      %v1332 = vpack.c.b16 %v1324, %v1323
      %1341 = vmatpush.bf16.msra.mxu0 %v1332
      %1342 = vmatpush.bf16.msra.mxu0 %v1331
      %1343 = vmatpush.bf16.msra.mxu0 %v1330
      %1344 = vmatpush.bf16.msra.mxu0 %v1329
      %1345 = vmatpush.bf16.msra.mxu0 %v1328
      %1346 = vmatpush.bf16.msra.mxu0 %v1327
      %1347 = vmatpush.bf16.msra.mxu0 %v1326
      %1348 = vmatpush.bf16.msra.mxu0 %v1325
      %1349 = vmatmul.bf16.gmra.mxu0 %v536
      %v1350 = vpop.f32.mrf.mxu0
      %v1351 = vadd.f32 0.0, %v1350
      %v1352 = vpop.f32.mrf.mxu0
      %v1353 = vadd.f32 0.0, %v1352
      %1354 = vmatmul.bf16.gmra.mxu0 %v536
      %v1355 = vpop.f32.mrf.mxu0
      %v1356 = vadd.f32 0.0, %v1355
      %v1357 = vpop.f32.mrf.mxu0
      %v1358 = vadd.f32 0.0, %v1357
      %1359 = vmatmul.bf16.gmra.mxu0 %v537
      %v1360 = vpop.f32.mrf.mxu0
      %v1361 = vadd.f32 0.0, %v1360
      %v1362 = vpop.f32.mrf.mxu0
      %v1363 = vadd.f32 0.0, %v1362
      %1364 = vmatmul.bf16.gmra.mxu0 %v537
      %v1365 = vpop.f32.mrf.mxu0
      %v1366 = vadd.f32 0.0, %v1365
      %v1367 = vpop.f32.mrf.mxu0
      %v1368 = vadd.f32 0.0, %v1367
      %1369 = vmatmul.bf16.gmra.mxu0 %v538
      %v1370 = vpop.f32.mrf.mxu0
      %v1371 = vadd.f32 0.0, %v1370
      %v1372 = vpop.f32.mrf.mxu0
      %v1373 = vadd.f32 0.0, %v1372
      %1374 = vmatmul.bf16.gmra.mxu0 %v538
      %v1375 = vpop.f32.mrf.mxu0
      %v1376 = vadd.f32 0.0, %v1375
      %v1377 = vpop.f32.mrf.mxu0
      %v1378 = vadd.f32 0.0, %v1377
      %1379 = vmatmul.bf16.gmra.mxu0 %v539
      %v1380 = vpop.f32.mrf.mxu0
      %v1381 = vadd.f32 0.0, %v1380
      %v1382 = vpop.f32.mrf.mxu0
      %v1383 = vadd.f32 0.0, %v1382
      %1384 = vmatmul.bf16.gmra.mxu0 %v539
      %v1385 = vpop.f32.mrf.mxu0
      %v1386 = vadd.f32 0.0, %v1385
      %v1387 = vpop.f32.mrf.mxu0
      %v1388 = vadd.f32 0.0, %v1387
      %1389 = vmatmul.bf16.gmra.mxu0 %v540
      %v1390 = vpop.f32.mrf.mxu0
      %v1391 = vadd.f32 0.0, %v1390
      %v1392 = vpop.f32.mrf.mxu0
      %v1393 = vadd.f32 0.0, %v1392
      %1394 = vmatmul.bf16.gmra.mxu0 %v540
      %v1395 = vpop.f32.mrf.mxu0
      %v1396 = vadd.f32 0.0, %v1395
      %v1397 = vpop.f32.mrf.mxu0
      %v1398 = vadd.f32 0.0, %v1397
      %1399 = vmatmul.bf16.gmra.mxu0 %v541
      %v1400 = vpop.f32.mrf.mxu0
      %v1401 = vadd.f32 0.0, %v1400
      %v1402 = vpop.f32.mrf.mxu0
      %v1403 = vadd.f32 0.0, %v1402
      %1404 = vmatmul.bf16.gmra.mxu0 %v541
      %v1405 = vpop.f32.mrf.mxu0
      %v1406 = vadd.f32 0.0, %v1405
      %v1407 = vpop.f32.mrf.mxu0
      %v1408 = vadd.f32 0.0, %v1407
      %1409 = vmatmul.bf16.gmra.mxu0 %v542
      %v1410 = vpop.f32.mrf.mxu0
      %v1411 = vadd.f32 0.0, %v1410
      %v1412 = vpop.f32.mrf.mxu0
      %v1413 = vadd.f32 0.0, %v1412
      %1414 = vmatmul.bf16.gmra.mxu0 %v542
      %v1415 = vpop.f32.mrf.mxu0
      %v1416 = vadd.f32 0.0, %v1415
      %v1417 = vpop.f32.mrf.mxu0
      %v1418 = vadd.f32 0.0, %v1417
      %1419 = vmatmul.bf16.gmra.mxu0 %v543
      %v1420 = vpop.f32.mrf.mxu0
      %v1421 = vadd.f32 0.0, %v1420
      %v1422 = vpop.f32.mrf.mxu0
      %v1423 = vadd.f32 0.0, %v1422
      %1424 = vmatmul.bf16.gmra.mxu0 %v543
      %v1425 = vpop.f32.mrf.mxu0
      %v1426 = vadd.f32 0.0, %v1425
      %v1427 = vpop.f32.mrf.mxu0
      %v1428 = vadd.f32 0.0, %v1427
      %1429 = vdwg.mxu0
      %v1430 = vadd.f32 %v1244, %v1351
      %v1431 = vadd.f32 %v1245, %v1353
      %v1432 = vadd.f32 %v1246, %v1356
      %v1433 = vadd.f32 %v1247, %v1358
      %v1434 = vadd.f32 %v1248, %v1361
      %v1435 = vadd.f32 %v1249, %v1363
      %v1436 = vadd.f32 %v1250, %v1366
      %v1437 = vadd.f32 %v1251, %v1368
      %v1438 = vadd.f32 %v1252, %v1371
      %v1439 = vadd.f32 %v1253, %v1373
      %v1440 = vadd.f32 %v1254, %v1376
      %v1441 = vadd.f32 %v1255, %v1378
      %v1442 = vadd.f32 %v1256, %v1381
      %v1443 = vadd.f32 %v1257, %v1383
      %v1444 = vadd.f32 %v1258, %v1386
      %v1445 = vadd.f32 %v1259, %v1388
      %v1446 = vadd.f32 %v1260, %v1391
      %v1447 = vadd.f32 %v1261, %v1393
      %v1448 = vadd.f32 %v1262, %v1396
      %v1449 = vadd.f32 %v1263, %v1398
      %v1450 = vadd.f32 %v1264, %v1401
      %v1451 = vadd.f32 %v1265, %v1403
      %v1452 = vadd.f32 %v1266, %v1406
      %v1453 = vadd.f32 %v1267, %v1408
      %v1454 = vadd.f32 %v1268, %v1411
      %v1455 = vadd.f32 %v1269, %v1413
      %v1456 = vadd.f32 %v1270, %v1416
      %v1457 = vadd.f32 %v1271, %v1418
      %v1458 = vadd.f32 %v1272, %v1421
      %v1459 = vadd.f32 %v1273, %v1423
      %v1460 = vadd.f32 %v1274, %v1426
      %v1461 = vadd.f32 %v1275, %v1428
      %s1462 = scalar_lea.vmem %s3, 320
      %v1463 = vld [vmem:[%s1462] sm:$0xf]
      %v1464 = vld [vmem:[%s1462 + $0x4] sm:$0xf]
      %v1465 = vld [vmem:[%s1462 + $0x8] sm:$0xf]
      %v1466 = vld [vmem:[%s1462 + $0xc] sm:$0xf]
      %v1467 = vld [vmem:[%s1462 + $0x10] sm:$0xf]
      %v1468 = vld [vmem:[%s1462 + $0x14] sm:$0xf]
      %v1469 = vld [vmem:[%s1462 + $0x18] sm:$0xf]
      %v1470 = vld [vmem:[%s1462 + $0x1c] sm:$0xf]
      %v1471 = vld [vmem:[%s1462 + $0x20] sm:$0xf]
      %v1472 = vld [vmem:[%s1462 + $0x24] sm:$0xf]
      %v1473 = vld [vmem:[%s1462 + $0x28] sm:$0xf]
      %v1474 = vld [vmem:[%s1462 + $0x2c] sm:$0xf]
      %v1475 = vld [vmem:[%s1462 + $0x30] sm:$0xf]
      %v1476 = vld [vmem:[%s1462 + $0x34] sm:$0xf]
      %v1477 = vld [vmem:[%s1462 + $0x38] sm:$0xf]
      %v1478 = vld [vmem:[%s1462 + $0x3c] sm:$0xf]
      %v1495 = vunpack.c.l.b16 %v1463
      %v1496 = vunpack.c.l.b16 %v1464
      %v1497 = vunpack.c.l.b16 %v1465
      %v1498 = vunpack.c.l.b16 %v1466
      %v1499 = vunpack.c.l.b16 %v1467
      %v1500 = vunpack.c.l.b16 %v1468
      %v1501 = vunpack.c.l.b16 %v1469
      %v1502 = vunpack.c.l.b16 %v1470
      %v1503 = vunpack.c.l.b16 %v1471
      %v1504 = vunpack.c.l.b16 %v1472
      %v1505 = vunpack.c.l.b16 %v1473
      %v1506 = vunpack.c.l.b16 %v1474
      %v1507 = vunpack.c.l.b16 %v1475
      %v1508 = vunpack.c.l.b16 %v1476
      %v1509 = vunpack.c.l.b16 %v1477
      %v1510 = vunpack.c.l.b16 %v1478
      %v1511 = vpack.c.b16 %v1496, %v1495
      %v1512 = vpack.c.b16 %v1498, %v1497
      %v1513 = vpack.c.b16 %v1500, %v1499
      %v1514 = vpack.c.b16 %v1502, %v1501
      %v1515 = vpack.c.b16 %v1504, %v1503
      %v1516 = vpack.c.b16 %v1506, %v1505
      %v1517 = vpack.c.b16 %v1508, %v1507
      %v1518 = vpack.c.b16 %v1510, %v1509
      %1527 = vmatpush.bf16.msra.mxu0 %v1518
      %1528 = vmatpush.bf16.msra.mxu0 %v1517
      %1529 = vmatpush.bf16.msra.mxu0 %v1516
      %1530 = vmatpush.bf16.msra.mxu0 %v1515
      %1531 = vmatpush.bf16.msra.mxu0 %v1514
      %1532 = vmatpush.bf16.msra.mxu0 %v1513
      %1533 = vmatpush.bf16.msra.mxu0 %v1512
      %1534 = vmatpush.bf16.msra.mxu0 %v1511
      %1535 = vmatmul.bf16.gmra.mxu0 %v896
      %v1536 = vpop.f32.mrf.mxu0
      %v1537 = vadd.f32 0.0, %v1536
      %v1538 = vpop.f32.mrf.mxu0
      %v1539 = vadd.f32 0.0, %v1538
      %1540 = vmatmul.bf16.gmra.mxu0 %v896
      %v1541 = vpop.f32.mrf.mxu0
      %v1542 = vadd.f32 0.0, %v1541
      %v1543 = vpop.f32.mrf.mxu0
      %v1544 = vadd.f32 0.0, %v1543
      %1545 = vmatmul.bf16.gmra.mxu0 %v897
      %v1546 = vpop.f32.mrf.mxu0
      %v1547 = vadd.f32 0.0, %v1546
      %v1548 = vpop.f32.mrf.mxu0
      %v1549 = vadd.f32 0.0, %v1548
      %1550 = vmatmul.bf16.gmra.mxu0 %v897
      %v1551 = vpop.f32.mrf.mxu0
      %v1552 = vadd.f32 0.0, %v1551
      %v1553 = vpop.f32.mrf.mxu0
      %v1554 = vadd.f32 0.0, %v1553
      %1555 = vmatmul.bf16.gmra.mxu0 %v898
      %v1556 = vpop.f32.mrf.mxu0
      %v1557 = vadd.f32 0.0, %v1556
      %v1558 = vpop.f32.mrf.mxu0
      %v1559 = vadd.f32 0.0, %v1558
      %1560 = vmatmul.bf16.gmra.mxu0 %v898
      %v1561 = vpop.f32.mrf.mxu0
      %v1562 = vadd.f32 0.0, %v1561
      %v1563 = vpop.f32.mrf.mxu0
      %v1564 = vadd.f32 0.0, %v1563
      %1565 = vmatmul.bf16.gmra.mxu0 %v899
      %v1566 = vpop.f32.mrf.mxu0
      %v1567 = vadd.f32 0.0, %v1566
      %v1568 = vpop.f32.mrf.mxu0
      %v1569 = vadd.f32 0.0, %v1568
      %1570 = vmatmul.bf16.gmra.mxu0 %v899
      %v1571 = vpop.f32.mrf.mxu0
      %v1572 = vadd.f32 0.0, %v1571
      %v1573 = vpop.f32.mrf.mxu0
      %v1574 = vadd.f32 0.0, %v1573
      %1575 = vmatmul.bf16.gmra.mxu0 %v900
      %v1576 = vpop.f32.mrf.mxu0
      %v1577 = vadd.f32 0.0, %v1576
      %v1578 = vpop.f32.mrf.mxu0
      %v1579 = vadd.f32 0.0, %v1578
      %1580 = vmatmul.bf16.gmra.mxu0 %v900
      %v1581 = vpop.f32.mrf.mxu0
      %v1582 = vadd.f32 0.0, %v1581
      %v1583 = vpop.f32.mrf.mxu0
      %v1584 = vadd.f32 0.0, %v1583
      %1585 = vmatmul.bf16.gmra.mxu0 %v901
      %v1586 = vpop.f32.mrf.mxu0
      %v1587 = vadd.f32 0.0, %v1586
      %v1588 = vpop.f32.mrf.mxu0
      %v1589 = vadd.f32 0.0, %v1588
      %1590 = vmatmul.bf16.gmra.mxu0 %v901
      %v1591 = vpop.f32.mrf.mxu0
      %v1592 = vadd.f32 0.0, %v1591
      %v1593 = vpop.f32.mrf.mxu0
      %v1594 = vadd.f32 0.0, %v1593
      %1595 = vmatmul.bf16.gmra.mxu0 %v902
      %v1596 = vpop.f32.mrf.mxu0
      %v1597 = vadd.f32 0.0, %v1596
      %v1598 = vpop.f32.mrf.mxu0
      %v1599 = vadd.f32 0.0, %v1598
      %1600 = vmatmul.bf16.gmra.mxu0 %v902
      %v1601 = vpop.f32.mrf.mxu0
      %v1602 = vadd.f32 0.0, %v1601
      %v1603 = vpop.f32.mrf.mxu0
      %v1604 = vadd.f32 0.0, %v1603
      %1605 = vmatmul.bf16.gmra.mxu0 %v903
      %v1606 = vpop.f32.mrf.mxu0
      %v1607 = vadd.f32 0.0, %v1606
      %v1608 = vpop.f32.mrf.mxu0
      %v1609 = vadd.f32 0.0, %v1608
      %1610 = vmatmul.bf16.gmra.mxu0 %v903
      %v1611 = vpop.f32.mrf.mxu0
      %v1612 = vadd.f32 0.0, %v1611
      %v1613 = vpop.f32.mrf.mxu0
      %v1614 = vadd.f32 0.0, %v1613
      %1615 = vdwg.mxu0
      %v1616 = vadd.f32 %v1430, %v1537
      %v1617 = vadd.f32 %v1431, %v1539
      %v1618 = vadd.f32 %v1432, %v1542
      %v1619 = vadd.f32 %v1433, %v1544
      %v1620 = vadd.f32 %v1434, %v1547
      %v1621 = vadd.f32 %v1435, %v1549
      %v1622 = vadd.f32 %v1436, %v1552
      %v1623 = vadd.f32 %v1437, %v1554
      %v1624 = vadd.f32 %v1438, %v1557
      %v1625 = vadd.f32 %v1439, %v1559
      %v1626 = vadd.f32 %v1440, %v1562
      %v1627 = vadd.f32 %v1441, %v1564
      %v1628 = vadd.f32 %v1442, %v1567
      %v1629 = vadd.f32 %v1443, %v1569
      %v1630 = vadd.f32 %v1444, %v1572
      %v1631 = vadd.f32 %v1445, %v1574
      %v1632 = vadd.f32 %v1446, %v1577
      %v1633 = vadd.f32 %v1447, %v1579
      %v1634 = vadd.f32 %v1448, %v1582
      %v1635 = vadd.f32 %v1449, %v1584
      %v1636 = vadd.f32 %v1450, %v1587
      %v1637 = vadd.f32 %v1451, %v1589
      %v1638 = vadd.f32 %v1452, %v1592
      %v1639 = vadd.f32 %v1453, %v1594
      %v1640 = vadd.f32 %v1454, %v1597
      %v1641 = vadd.f32 %v1455, %v1599
      %v1642 = vadd.f32 %v1456, %v1602
      %v1643 = vadd.f32 %v1457, %v1604
      %v1644 = vadd.f32 %v1458, %v1607
      %v1645 = vadd.f32 %v1459, %v1609
      %v1646 = vadd.f32 %v1460, %v1612
      %v1647 = vadd.f32 %v1461, %v1614
      %s1648 = scalar_lea.vmem %s3, 384
      %v1649 = vld [vmem:[%s1648] sm:$0xf]
      %v1650 = vld [vmem:[%s1648 + $0x4] sm:$0xf]
      %v1651 = vld [vmem:[%s1648 + $0x8] sm:$0xf]
      %v1652 = vld [vmem:[%s1648 + $0xc] sm:$0xf]
      %v1653 = vld [vmem:[%s1648 + $0x10] sm:$0xf]
      %v1654 = vld [vmem:[%s1648 + $0x14] sm:$0xf]
      %v1655 = vld [vmem:[%s1648 + $0x18] sm:$0xf]
      %v1656 = vld [vmem:[%s1648 + $0x1c] sm:$0xf]
      %v1657 = vld [vmem:[%s1648 + $0x20] sm:$0xf]
      %v1658 = vld [vmem:[%s1648 + $0x24] sm:$0xf]
      %v1659 = vld [vmem:[%s1648 + $0x28] sm:$0xf]
      %v1660 = vld [vmem:[%s1648 + $0x2c] sm:$0xf]
      %v1661 = vld [vmem:[%s1648 + $0x30] sm:$0xf]
      %v1662 = vld [vmem:[%s1648 + $0x34] sm:$0xf]
      %v1663 = vld [vmem:[%s1648 + $0x38] sm:$0xf]
      %v1664 = vld [vmem:[%s1648 + $0x3c] sm:$0xf]
      %v1681 = vunpack.c.l.b16 %v1649
      %v1682 = vunpack.c.l.b16 %v1650
      %v1683 = vunpack.c.l.b16 %v1651
      %v1684 = vunpack.c.l.b16 %v1652
      %v1685 = vunpack.c.l.b16 %v1653
      %v1686 = vunpack.c.l.b16 %v1654
      %v1687 = vunpack.c.l.b16 %v1655
      %v1688 = vunpack.c.l.b16 %v1656
      %v1689 = vunpack.c.l.b16 %v1657
      %v1690 = vunpack.c.l.b16 %v1658
      %v1691 = vunpack.c.l.b16 %v1659
      %v1692 = vunpack.c.l.b16 %v1660
      %v1693 = vunpack.c.l.b16 %v1661
      %v1694 = vunpack.c.l.b16 %v1662
      %v1695 = vunpack.c.l.b16 %v1663
      %v1696 = vunpack.c.l.b16 %v1664
      %v1697 = vpack.c.b16 %v1682, %v1681
      %v1698 = vpack.c.b16 %v1684, %v1683
      %v1699 = vpack.c.b16 %v1686, %v1685
      %v1700 = vpack.c.b16 %v1688, %v1687
      %v1701 = vpack.c.b16 %v1690, %v1689
      %v1702 = vpack.c.b16 %v1692, %v1691
      %v1703 = vpack.c.b16 %v1694, %v1693
      %v1704 = vpack.c.b16 %v1696, %v1695
      %1713 = vmatpush.bf16.msra.mxu0 %v1704
      %1714 = vmatpush.bf16.msra.mxu0 %v1703
      %1715 = vmatpush.bf16.msra.mxu0 %v1702
      %1716 = vmatpush.bf16.msra.mxu0 %v1701
      %1717 = vmatpush.bf16.msra.mxu0 %v1700
      %1718 = vmatpush.bf16.msra.mxu0 %v1699
      %1719 = vmatpush.bf16.msra.mxu0 %v1698
      %1720 = vmatpush.bf16.msra.mxu0 %v1697
      %1721 = vmatmul.bf16.gmra.mxu0 %v426
      %v1722 = vpop.f32.mrf.mxu0
      %v1723 = vadd.f32 0.0, %v1722
      %v1724 = vpop.f32.mrf.mxu0
      %v1725 = vadd.f32 0.0, %v1724
      %1726 = vmatmul.bf16.gmra.mxu0 %v427
      %v1727 = vpop.f32.mrf.mxu0
      %v1728 = vadd.f32 0.0, %v1727
      %v1729 = vpop.f32.mrf.mxu0
      %v1730 = vadd.f32 0.0, %v1729
      %1731 = vmatmul.bf16.gmra.mxu0 %v427
      %v1732 = vpop.f32.mrf.mxu0
      %v1733 = vadd.f32 0.0, %v1732
      %v1734 = vpop.f32.mrf.mxu0
      %v1735 = vadd.f32 0.0, %v1734
      %1736 = vmatmul.bf16.gmra.mxu0 %v428
      %v1737 = vpop.f32.mrf.mxu0
      %v1738 = vadd.f32 0.0, %v1737
      %v1739 = vpop.f32.mrf.mxu0
      %v1740 = vadd.f32 0.0, %v1739
      %1741 = vmatmul.bf16.gmra.mxu0 %v428
      %v1742 = vpop.f32.mrf.mxu0
      %v1743 = vadd.f32 0.0, %v1742
      %v1744 = vpop.f32.mrf.mxu0
      %v1745 = vadd.f32 0.0, %v1744
      %1746 = vmatmul.bf16.gmra.mxu0 %v429
      %v1747 = vpop.f32.mrf.mxu0
      %v1748 = vadd.f32 0.0, %v1747
      %v1749 = vpop.f32.mrf.mxu0
      %v1750 = vadd.f32 0.0, %v1749
      %1751 = vmatmul.bf16.gmra.mxu0 %v429
      %v1752 = vpop.f32.mrf.mxu0
      %v1753 = vadd.f32 0.0, %v1752
      %v1754 = vpop.f32.mrf.mxu0
      %v1755 = vadd.f32 0.0, %v1754
      %1756 = vmatmul.bf16.gmra.mxu0 %v430
      %v1757 = vpop.f32.mrf.mxu0
      %v1758 = vadd.f32 0.0, %v1757
      %v1759 = vpop.f32.mrf.mxu0
      %v1760 = vadd.f32 0.0, %v1759
      %1761 = vmatmul.bf16.gmra.mxu0 %v430
      %v1762 = vpop.f32.mrf.mxu0
      %v1763 = vadd.f32 0.0, %v1762
      %v1764 = vpop.f32.mrf.mxu0
      %v1765 = vadd.f32 0.0, %v1764
      %1766 = vmatmul.bf16.gmra.mxu0 %v431
      %v1767 = vpop.f32.mrf.mxu0
      %v1768 = vadd.f32 0.0, %v1767
      %v1769 = vpop.f32.mrf.mxu0
      %v1770 = vadd.f32 0.0, %v1769
      %1771 = vmatmul.bf16.gmra.mxu0 %v431
      %v1772 = vpop.f32.mrf.mxu0
      %v1773 = vadd.f32 0.0, %v1772
      %v1774 = vpop.f32.mrf.mxu0
      %v1775 = vadd.f32 0.0, %v1774
      %1776 = vmatmul.bf16.gmra.mxu0 %v432
      %v1777 = vpop.f32.mrf.mxu0
      %v1778 = vadd.f32 0.0, %v1777
      %v1779 = vpop.f32.mrf.mxu0
      %v1780 = vadd.f32 0.0, %v1779
      %1781 = vmatmul.bf16.gmra.mxu0 %v432
      %v1782 = vpop.f32.mrf.mxu0
      %v1783 = vadd.f32 0.0, %v1782
      %v1784 = vpop.f32.mrf.mxu0
      %v1785 = vadd.f32 0.0, %v1784
      %1786 = vmatmul.bf16.gmra.mxu0 %v433
      %v1787 = vpop.f32.mrf.mxu0
      %v1788 = vadd.f32 0.0, %v1787
      %v1789 = vpop.f32.mrf.mxu0
      %v1790 = vadd.f32 0.0, %v1789
      %1791 = vmatmul.bf16.gmra.mxu0 %v433
      %v1792 = vpop.f32.mrf.mxu0
      %v1793 = vadd.f32 0.0, %v1792
      %v1794 = vpop.f32.mrf.mxu0
      %v1795 = vadd.f32 0.0, %v1794
      %1796 = vmatmul.bf16.gmra.mxu0 %v425
      %v1797 = vpop.f32.mrf.mxu0
      %v1798 = vadd.f32 0.0, %v1797
      %v1799 = vpop.f32.mrf.mxu0
      %v1800 = vadd.f32 0.0, %v1799
      %1801 = vdwg.mxu0
      %v1802 = vadd.f32 %v1616, %v1723
      %v1803 = vadd.f32 %v1617, %v1725
      %v1804 = vadd.f32 %v1618, %v1728
      %v1805 = vadd.f32 %v1619, %v1730
      %v1806 = vadd.f32 %v1620, %v1733
      %v1807 = vadd.f32 %v1621, %v1735
      %v1808 = vadd.f32 %v1622, %v1738
      %v1809 = vadd.f32 %v1623, %v1740
      %v1810 = vadd.f32 %v1624, %v1743
      %v1811 = vadd.f32 %v1625, %v1745
      %v1812 = vadd.f32 %v1626, %v1748
      %v1813 = vadd.f32 %v1627, %v1750
      %v1814 = vadd.f32 %v1628, %v1753
      %v1815 = vadd.f32 %v1629, %v1755
      %v1816 = vadd.f32 %v1630, %v1758
      %v1817 = vadd.f32 %v1631, %v1760
      %v1818 = vadd.f32 %v1632, %v1763
      %v1819 = vadd.f32 %v1633, %v1765
      %v1820 = vadd.f32 %v1634, %v1768
      %v1821 = vadd.f32 %v1635, %v1770
      %v1822 = vadd.f32 %v1636, %v1773
      %v1823 = vadd.f32 %v1637, %v1775
      %v1824 = vadd.f32 %v1638, %v1778
      %v1825 = vadd.f32 %v1639, %v1780
      %v1826 = vadd.f32 %v1640, %v1783
      %v1827 = vadd.f32 %v1641, %v1785
      %v1828 = vadd.f32 %v1642, %v1788
      %v1829 = vadd.f32 %v1643, %v1790
      %v1830 = vadd.f32 %v1644, %v1793
      %v1831 = vadd.f32 %v1645, %v1795
      %v1832 = vadd.f32 %v1646, %v1798
      %v1833 = vadd.f32 %v1647, %v1800
      %s1834 = scalar_lea.vmem %s3, 448
      %v1835 = vld [vmem:[%s1834] sm:$0xf]
      %v1836 = vld [vmem:[%s1834 + $0x4] sm:$0xf]
      %v1837 = vld [vmem:[%s1834 + $0x8] sm:$0xf]
      %v1838 = vld [vmem:[%s1834 + $0xc] sm:$0xf]
      %v1839 = vld [vmem:[%s1834 + $0x10] sm:$0xf]
      %v1840 = vld [vmem:[%s1834 + $0x14] sm:$0xf]
      %v1841 = vld [vmem:[%s1834 + $0x18] sm:$0xf]
      %v1842 = vld [vmem:[%s1834 + $0x1c] sm:$0xf]
      %v1843 = vld [vmem:[%s1834 + $0x20] sm:$0xf]
      %v1844 = vld [vmem:[%s1834 + $0x24] sm:$0xf]
      %v1845 = vld [vmem:[%s1834 + $0x28] sm:$0xf]
      %v1846 = vld [vmem:[%s1834 + $0x2c] sm:$0xf]
      %v1847 = vld [vmem:[%s1834 + $0x30] sm:$0xf]
      %v1848 = vld [vmem:[%s1834 + $0x34] sm:$0xf]
      %v1849 = vld [vmem:[%s1834 + $0x38] sm:$0xf]
      %v1850 = vld [vmem:[%s1834 + $0x3c] sm:$0xf]
      %v1867 = vunpack.c.l.b16 %v1835
      %v1868 = vunpack.c.l.b16 %v1836
      %v1869 = vunpack.c.l.b16 %v1837
      %v1870 = vunpack.c.l.b16 %v1838
      %v1871 = vunpack.c.l.b16 %v1839
      %v1872 = vunpack.c.l.b16 %v1840
      %v1873 = vunpack.c.l.b16 %v1841
      %v1874 = vunpack.c.l.b16 %v1842
      %v1875 = vunpack.c.l.b16 %v1843
      %v1876 = vunpack.c.l.b16 %v1844
      %v1877 = vunpack.c.l.b16 %v1845
      %v1878 = vunpack.c.l.b16 %v1846
      %v1879 = vunpack.c.l.b16 %v1847
      %v1880 = vunpack.c.l.b16 %v1848
      %v1881 = vunpack.c.l.b16 %v1849
      %v1882 = vunpack.c.l.b16 %v1850
      %v1883 = vpack.c.b16 %v1868, %v1867
      %v1884 = vpack.c.b16 %v1870, %v1869
      %v1885 = vpack.c.b16 %v1872, %v1871
      %v1886 = vpack.c.b16 %v1874, %v1873
      %v1887 = vpack.c.b16 %v1876, %v1875
      %v1888 = vpack.c.b16 %v1878, %v1877
      %v1889 = vpack.c.b16 %v1880, %v1879
      %v1890 = vpack.c.b16 %v1882, %v1881
      %1899 = vmatpush.bf16.msra.mxu0 %v1890
      %1900 = vmatpush.bf16.msra.mxu0 %v1889
      %1901 = vmatpush.bf16.msra.mxu0 %v1888
      %1902 = vmatpush.bf16.msra.mxu0 %v1887
      %1903 = vmatpush.bf16.msra.mxu0 %v1886
      %1904 = vmatpush.bf16.msra.mxu0 %v1885
      %1905 = vmatpush.bf16.msra.mxu0 %v1884
      %1906 = vmatpush.bf16.msra.mxu0 %v1883
      %1907 = vmatmul.bf16.gmra.mxu0 %v536
      %v1908 = vpop.f32.mrf.mxu0
      %v1909 = vadd.f32 0.0, %v1908
      %v1910 = vpop.f32.mrf.mxu0
      %v1911 = vadd.f32 0.0, %v1910
      %1912 = vmatmul.bf16.gmra.mxu0 %v537
      %v1913 = vpop.f32.mrf.mxu0
      %v1914 = vadd.f32 0.0, %v1913
      %v1915 = vpop.f32.mrf.mxu0
      %v1916 = vadd.f32 0.0, %v1915
      %1917 = vmatmul.bf16.gmra.mxu0 %v537
      %v1918 = vpop.f32.mrf.mxu0
      %v1919 = vadd.f32 0.0, %v1918
      %v1920 = vpop.f32.mrf.mxu0
      %v1921 = vadd.f32 0.0, %v1920
      %1922 = vmatmul.bf16.gmra.mxu0 %v538
      %v1923 = vpop.f32.mrf.mxu0
      %v1924 = vadd.f32 0.0, %v1923
      %v1925 = vpop.f32.mrf.mxu0
      %v1926 = vadd.f32 0.0, %v1925
      %1927 = vmatmul.bf16.gmra.mxu0 %v538
      %v1928 = vpop.f32.mrf.mxu0
      %v1929 = vadd.f32 0.0, %v1928
      %v1930 = vpop.f32.mrf.mxu0
      %v1931 = vadd.f32 0.0, %v1930
      %1932 = vmatmul.bf16.gmra.mxu0 %v539
      %v1933 = vpop.f32.mrf.mxu0
      %v1934 = vadd.f32 0.0, %v1933
      %v1935 = vpop.f32.mrf.mxu0
      %v1936 = vadd.f32 0.0, %v1935
      %1937 = vmatmul.bf16.gmra.mxu0 %v539
      %v1938 = vpop.f32.mrf.mxu0
      %v1939 = vadd.f32 0.0, %v1938
      %v1940 = vpop.f32.mrf.mxu0
      %v1941 = vadd.f32 0.0, %v1940
      %1942 = vmatmul.bf16.gmra.mxu0 %v540
      %v1943 = vpop.f32.mrf.mxu0
      %v1944 = vadd.f32 0.0, %v1943
      %v1945 = vpop.f32.mrf.mxu0
      %v1946 = vadd.f32 0.0, %v1945
      %1947 = vmatmul.bf16.gmra.mxu0 %v540
      %v1948 = vpop.f32.mrf.mxu0
      %v1949 = vadd.f32 0.0, %v1948
      %v1950 = vpop.f32.mrf.mxu0
      %v1951 = vadd.f32 0.0, %v1950
      %1952 = vmatmul.bf16.gmra.mxu0 %v541
      %v1953 = vpop.f32.mrf.mxu0
      %v1954 = vadd.f32 0.0, %v1953
      %v1955 = vpop.f32.mrf.mxu0
      %v1956 = vadd.f32 0.0, %v1955
      %1957 = vmatmul.bf16.gmra.mxu0 %v541
      %v1958 = vpop.f32.mrf.mxu0
      %v1959 = vadd.f32 0.0, %v1958
      %v1960 = vpop.f32.mrf.mxu0
      %v1961 = vadd.f32 0.0, %v1960
      %1962 = vmatmul.bf16.gmra.mxu0 %v542
      %v1963 = vpop.f32.mrf.mxu0
      %v1964 = vadd.f32 0.0, %v1963
      %v1965 = vpop.f32.mrf.mxu0
      %v1966 = vadd.f32 0.0, %v1965
      %1967 = vmatmul.bf16.gmra.mxu0 %v542
      %v1968 = vpop.f32.mrf.mxu0
      %v1969 = vadd.f32 0.0, %v1968
      %v1970 = vpop.f32.mrf.mxu0
      %v1971 = vadd.f32 0.0, %v1970
      %1972 = vmatmul.bf16.gmra.mxu0 %v543
      %v1973 = vpop.f32.mrf.mxu0
      %v1974 = vadd.f32 0.0, %v1973
      %v1975 = vpop.f32.mrf.mxu0
      %v1976 = vadd.f32 0.0, %v1975
      %1977 = vmatmul.bf16.gmra.mxu0 %v543
      %v1978 = vpop.f32.mrf.mxu0
      %v1979 = vadd.f32 0.0, %v1978
      %v1980 = vpop.f32.mrf.mxu0
      %v1981 = vadd.f32 0.0, %v1980
      %1982 = vmatmul.bf16.gmra.mxu0 %v535
      %v1983 = vpop.f32.mrf.mxu0
      %v1984 = vadd.f32 0.0, %v1983
      %v1985 = vpop.f32.mrf.mxu0
      %v1986 = vadd.f32 0.0, %v1985
      %1987 = vdwg.mxu0
      %v1988 = vadd.f32 %v1802, %v1909
      %v1989 = vadd.f32 %v1803, %v1911
      %v1990 = vadd.f32 %v1804, %v1914
      %v1991 = vadd.f32 %v1805, %v1916
      %v1992 = vadd.f32 %v1806, %v1919
      %v1993 = vadd.f32 %v1807, %v1921
      %v1994 = vadd.f32 %v1808, %v1924
      %v1995 = vadd.f32 %v1809, %v1926
      %v1996 = vadd.f32 %v1810, %v1929
      %v1997 = vadd.f32 %v1811, %v1931
      %v1998 = vadd.f32 %v1812, %v1934
      %v1999 = vadd.f32 %v1813, %v1936
      %v2000 = vadd.f32 %v1814, %v1939
      %v2001 = vadd.f32 %v1815, %v1941
      %v2002 = vadd.f32 %v1816, %v1944
      %v2003 = vadd.f32 %v1817, %v1946
      %v2004 = vadd.f32 %v1818, %v1949
      %v2005 = vadd.f32 %v1819, %v1951
      %v2006 = vadd.f32 %v1820, %v1954
      %v2007 = vadd.f32 %v1821, %v1956
      %v2008 = vadd.f32 %v1822, %v1959
      %v2009 = vadd.f32 %v1823, %v1961
      %v2010 = vadd.f32 %v1824, %v1964
      %v2011 = vadd.f32 %v1825, %v1966
      %v2012 = vadd.f32 %v1826, %v1969
      %v2013 = vadd.f32 %v1827, %v1971
      %v2014 = vadd.f32 %v1828, %v1974
      %v2015 = vadd.f32 %v1829, %v1976
      %v2016 = vadd.f32 %v1830, %v1979
      %v2017 = vadd.f32 %v1831, %v1981
      %v2018 = vadd.f32 %v1832, %v1984
      %v2019 = vadd.f32 %v1833, %v1986
      %s2020 = scalar_lea.vmem %s3, 512
      %v2021 = vld [vmem:[%s2020] sm:$0xf]
      %v2022 = vld [vmem:[%s2020 + $0x4] sm:$0xf]
      %v2023 = vld [vmem:[%s2020 + $0x8] sm:$0xf]
      %v2024 = vld [vmem:[%s2020 + $0xc] sm:$0xf]
      %v2025 = vld [vmem:[%s2020 + $0x10] sm:$0xf]
      %v2026 = vld [vmem:[%s2020 + $0x14] sm:$0xf]
      %v2027 = vld [vmem:[%s2020 + $0x18] sm:$0xf]
      %v2028 = vld [vmem:[%s2020 + $0x1c] sm:$0xf]
      %v2029 = vld [vmem:[%s2020 + $0x20] sm:$0xf]
      %v2030 = vld [vmem:[%s2020 + $0x24] sm:$0xf]
      %v2031 = vld [vmem:[%s2020 + $0x28] sm:$0xf]
      %v2032 = vld [vmem:[%s2020 + $0x2c] sm:$0xf]
      %v2033 = vld [vmem:[%s2020 + $0x30] sm:$0xf]
      %v2034 = vld [vmem:[%s2020 + $0x34] sm:$0xf]
      %v2035 = vld [vmem:[%s2020 + $0x38] sm:$0xf]
      %v2036 = vld [vmem:[%s2020 + $0x3c] sm:$0xf]
      %v2053 = vunpack.c.l.b16 %v2021
      %v2054 = vunpack.c.l.b16 %v2022
      %v2055 = vunpack.c.l.b16 %v2023
      %v2056 = vunpack.c.l.b16 %v2024
      %v2057 = vunpack.c.l.b16 %v2025
      %v2058 = vunpack.c.l.b16 %v2026
      %v2059 = vunpack.c.l.b16 %v2027
      %v2060 = vunpack.c.l.b16 %v2028
      %v2061 = vunpack.c.l.b16 %v2029
      %v2062 = vunpack.c.l.b16 %v2030
      %v2063 = vunpack.c.l.b16 %v2031
      %v2064 = vunpack.c.l.b16 %v2032
      %v2065 = vunpack.c.l.b16 %v2033
      %v2066 = vunpack.c.l.b16 %v2034
      %v2067 = vunpack.c.l.b16 %v2035
      %v2068 = vunpack.c.l.b16 %v2036
      %v2069 = vpack.c.b16 %v2054, %v2053
      %v2070 = vpack.c.b16 %v2056, %v2055
      %v2071 = vpack.c.b16 %v2058, %v2057
      %v2072 = vpack.c.b16 %v2060, %v2059
      %v2073 = vpack.c.b16 %v2062, %v2061
      %v2074 = vpack.c.b16 %v2064, %v2063
      %v2075 = vpack.c.b16 %v2066, %v2065
      %v2076 = vpack.c.b16 %v2068, %v2067
      %2085 = vmatpush.bf16.msra.mxu0 %v2076
      %2086 = vmatpush.bf16.msra.mxu0 %v2075
      %2087 = vmatpush.bf16.msra.mxu0 %v2074
      %2088 = vmatpush.bf16.msra.mxu0 %v2073
      %2089 = vmatpush.bf16.msra.mxu0 %v2072
      %2090 = vmatpush.bf16.msra.mxu0 %v2071
      %2091 = vmatpush.bf16.msra.mxu0 %v2070
      %2092 = vmatpush.bf16.msra.mxu0 %v2069
      %2093 = vmatmul.bf16.gmra.mxu0 %v896
      %v2094 = vpop.f32.mrf.mxu0
      %v2095 = vadd.f32 0.0, %v2094
      %v2096 = vpop.f32.mrf.mxu0
      %v2097 = vadd.f32 0.0, %v2096
      %2098 = vmatmul.bf16.gmra.mxu0 %v897
      %v2099 = vpop.f32.mrf.mxu0
      %v2100 = vadd.f32 0.0, %v2099
      %v2101 = vpop.f32.mrf.mxu0
      %v2102 = vadd.f32 0.0, %v2101
      %2103 = vmatmul.bf16.gmra.mxu0 %v897
      %v2104 = vpop.f32.mrf.mxu0
      %v2105 = vadd.f32 0.0, %v2104
      %v2106 = vpop.f32.mrf.mxu0
      %v2107 = vadd.f32 0.0, %v2106
      %2108 = vmatmul.bf16.gmra.mxu0 %v898
      %v2109 = vpop.f32.mrf.mxu0
      %v2110 = vadd.f32 0.0, %v2109
      %v2111 = vpop.f32.mrf.mxu0
      %v2112 = vadd.f32 0.0, %v2111
      %2113 = vmatmul.bf16.gmra.mxu0 %v898
      %v2114 = vpop.f32.mrf.mxu0
      %v2115 = vadd.f32 0.0, %v2114
      %v2116 = vpop.f32.mrf.mxu0
      %v2117 = vadd.f32 0.0, %v2116
      %2118 = vmatmul.bf16.gmra.mxu0 %v899
      %v2119 = vpop.f32.mrf.mxu0
      %v2120 = vadd.f32 0.0, %v2119
      %v2121 = vpop.f32.mrf.mxu0
      %v2122 = vadd.f32 0.0, %v2121
      %2123 = vmatmul.bf16.gmra.mxu0 %v899
      %v2124 = vpop.f32.mrf.mxu0
      %v2125 = vadd.f32 0.0, %v2124
      %v2126 = vpop.f32.mrf.mxu0
      %v2127 = vadd.f32 0.0, %v2126
      %2128 = vmatmul.bf16.gmra.mxu0 %v900
      %v2129 = vpop.f32.mrf.mxu0
      %v2130 = vadd.f32 0.0, %v2129
      %v2131 = vpop.f32.mrf.mxu0
      %v2132 = vadd.f32 0.0, %v2131
      %2133 = vmatmul.bf16.gmra.mxu0 %v900
      %v2134 = vpop.f32.mrf.mxu0
      %v2135 = vadd.f32 0.0, %v2134
      %v2136 = vpop.f32.mrf.mxu0
      %v2137 = vadd.f32 0.0, %v2136
      %2138 = vmatmul.bf16.gmra.mxu0 %v901
      %v2139 = vpop.f32.mrf.mxu0
      %v2140 = vadd.f32 0.0, %v2139
      %v2141 = vpop.f32.mrf.mxu0
      %v2142 = vadd.f32 0.0, %v2141
      %2143 = vmatmul.bf16.gmra.mxu0 %v901
      %v2144 = vpop.f32.mrf.mxu0
      %v2145 = vadd.f32 0.0, %v2144
      %v2146 = vpop.f32.mrf.mxu0
      %v2147 = vadd.f32 0.0, %v2146
      %2148 = vmatmul.bf16.gmra.mxu0 %v902
      %v2149 = vpop.f32.mrf.mxu0
      %v2150 = vadd.f32 0.0, %v2149
      %v2151 = vpop.f32.mrf.mxu0
      %v2152 = vadd.f32 0.0, %v2151
      %2153 = vmatmul.bf16.gmra.mxu0 %v902
      %v2154 = vpop.f32.mrf.mxu0
      %v2155 = vadd.f32 0.0, %v2154
      %v2156 = vpop.f32.mrf.mxu0
      %v2157 = vadd.f32 0.0, %v2156
      %2158 = vmatmul.bf16.gmra.mxu0 %v903
      %v2159 = vpop.f32.mrf.mxu0
      %v2160 = vadd.f32 0.0, %v2159
      %v2161 = vpop.f32.mrf.mxu0
      %v2162 = vadd.f32 0.0, %v2161
      %2163 = vmatmul.bf16.gmra.mxu0 %v903
      %v2164 = vpop.f32.mrf.mxu0
      %v2165 = vadd.f32 0.0, %v2164
      %v2166 = vpop.f32.mrf.mxu0
      %v2167 = vadd.f32 0.0, %v2166
      %2168 = vmatmul.bf16.gmra.mxu0 %v895
      %v2169 = vpop.f32.mrf.mxu0
      %v2170 = vadd.f32 0.0, %v2169
      %v2171 = vpop.f32.mrf.mxu0
      %v2172 = vadd.f32 0.0, %v2171
      %2173 = vdwg.mxu0
      %v2174 = vadd.f32 %v1988, %v2095
      %v2175 = vadd.f32 %v1989, %v2097
      %v2176 = vadd.f32 %v1990, %v2100
      %v2177 = vadd.f32 %v1991, %v2102
      %v2178 = vadd.f32 %v1992, %v2105
      %v2179 = vadd.f32 %v1993, %v2107
      %v2180 = vadd.f32 %v1994, %v2110
      %v2181 = vadd.f32 %v1995, %v2112
      %v2182 = vadd.f32 %v1996, %v2115
      %v2183 = vadd.f32 %v1997, %v2117
      %v2184 = vadd.f32 %v1998, %v2120
      %v2185 = vadd.f32 %v1999, %v2122
      %v2186 = vadd.f32 %v2000, %v2125
      %v2187 = vadd.f32 %v2001, %v2127
      %v2188 = vadd.f32 %v2002, %v2130
      %v2189 = vadd.f32 %v2003, %v2132
      %v2190 = vadd.f32 %v2004, %v2135
      %v2191 = vadd.f32 %v2005, %v2137
      %v2192 = vadd.f32 %v2006, %v2140
      %v2193 = vadd.f32 %v2007, %v2142
      %v2194 = vadd.f32 %v2008, %v2145
      %v2195 = vadd.f32 %v2009, %v2147
      %v2196 = vadd.f32 %v2010, %v2150
      %v2197 = vadd.f32 %v2011, %v2152
      %v2198 = vadd.f32 %v2012, %v2155
      %v2199 = vadd.f32 %v2013, %v2157
      %v2200 = vadd.f32 %v2014, %v2160
      %v2201 = vadd.f32 %v2015, %v2162
      %v2202 = vadd.f32 %v2016, %v2165
      %v2203 = vadd.f32 %v2017, %v2167
      %v2204 = vadd.f32 %v2018, %v2170
      %v2205 = vadd.f32 %v2019, %v2172
      %2206 = vst [vmem:[%s231] sm:$0xff] %v2174
      %2207 = vst [vmem:[%s231 + $0x8] sm:$0xff] %v2175
      %2208 = vst [vmem:[%s231 + $0x10] sm:$0xff] %v2176
      %2209 = vst [vmem:[%s231 + $0x18] sm:$0xff] %v2177
      %2210 = vst [vmem:[%s231 + $0x20] sm:$0xff] %v2178
      %2211 = vst [vmem:[%s231 + $0x28] sm:$0xff] %v2179
      %2212 = vst [vmem:[%s231 + $0x30] sm:$0xff] %v2180
      %2213 = vst [vmem:[%s231 + $0x38] sm:$0xff] %v2181
      %2214 = vst [vmem:[%s231 + $0x40] sm:$0xff] %v2182
      %2215 = vst [vmem:[%s231 + $0x48] sm:$0xff] %v2183
      %2216 = vst [vmem:[%s231 + $0x50] sm:$0xff] %v2184
      %2217 = vst [vmem:[%s231 + $0x58] sm:$0xff] %v2185
      %2218 = vst [vmem:[%s231 + $0x60] sm:$0xff] %v2186
      %2219 = vst [vmem:[%s231 + $0x68] sm:$0xff] %v2187
      %2220 = vst [vmem:[%s231 + $0x70] sm:$0xff] %v2188
      %2221 = vst [vmem:[%s231 + $0x78] sm:$0xff] %v2189
      %2222 = vst [vmem:[%s231 + $0x80] sm:$0xff] %v2190
      %2223 = vst [vmem:[%s231 + $0x88] sm:$0xff] %v2191
      %2224 = vst [vmem:[%s231 + $0x90] sm:$0xff] %v2192
      %2225 = vst [vmem:[%s231 + $0x98] sm:$0xff] %v2193
      %2226 = vst [vmem:[%s231 + $0xa0] sm:$0xff] %v2194
      %2227 = vst [vmem:[%s231 + $0xa8] sm:$0xff] %v2195
      %2228 = vst [vmem:[%s231 + $0xb0] sm:$0xff] %v2196
      %2229 = vst [vmem:[%s231 + $0xb8] sm:$0xff] %v2197
      %2230 = vst [vmem:[%s231 + $0xc0] sm:$0xff] %v2198
      %2231 = vst [vmem:[%s231 + $0xc8] sm:$0xff] %v2199
      %2232 = vst [vmem:[%s231 + $0xd0] sm:$0xff] %v2200
      %2233 = vst [vmem:[%s231 + $0xd8] sm:$0xff] %v2201
      %2234 = vst [vmem:[%s231 + $0xe0] sm:$0xff] %v2202
      %2235 = vst [vmem:[%s231 + $0xe8] sm:$0xff] %v2203
      %2236 = vst [vmem:[%s231 + $0xf0] sm:$0xff] %v2204
      %2237 = vst [vmem:[%s231 + $0xf8] sm:$0xff] %v2205
      %v2238 = vadd.f32 %v2174, %v2175
      %v2239 = vadd.f32 %v2238, %v2176
      %v2240 = vadd.f32 %v2239, %v2177
      %v2241 = vadd.f32 %v2240, %v2178
      %v2242 = vadd.f32 %v2241, %v2179
      %v2243 = vadd.f32 %v2242, %v2180
      %v2244 = vadd.f32 %v2243, %v2181
      %v2245 = vadd.f32 %v2244, %v2182
      %v2246 = vadd.f32 %v2245, %v2183
      %v2247 = vadd.f32 %v2246, %v2184
      %v2248 = vadd.f32 %v2247, %v2185
      %v2249 = vadd.f32 %v2248, %v2186
      %v2250 = vadd.f32 %v2249, %v2187
      %v2251 = vadd.f32 %v2250, %v2188
      %v2252 = vadd.f32 %v2251, %v2189
      %v2253 = vadd.f32 %v2252, %v2190
      %v2254 = vadd.f32 %v2253, %v2191
      %v2255 = vadd.f32 %v2254, %v2192
      %v2256 = vadd.f32 %v2255, %v2193
      %v2257 = vadd.f32 %v2256, %v2194
      %v2258 = vadd.f32 %v2257, %v2195
      %v2259 = vadd.f32 %v2258, %v2196
      %v2260 = vadd.f32 %v2259, %v2197
      %v2261 = vadd.f32 %v2260, %v2198
      %v2262 = vadd.f32 %v2261, %v2199
      %v2263 = vadd.f32 %v2262, %v2200
      %v2264 = vadd.f32 %v2263, %v2201
      %v2265 = vadd.f32 %v2264, %v2202
      %v2266 = vadd.f32 %v2265, %v2203
      %v2267 = vadd.f32 %v2266, %v2204
      %v2268 = vadd.f32 %v2267, %v2205
      %v2269 = vrot.slane %v2268, 4
      %v2270 = vadd.f32 %v2268, %v2269
      %v2271 = vrot.slane %v2270, 2
      %v2272 = vadd.f32 %v2270, %v2271
      %v2273 = vrot.slane %v2272, 1
      %v2274 = vadd.f32 %v2272, %v2273
      %v2275 = vmul.f32 %v2174, %v2174
      %v2276 = vmul.f32 %v2175, %v2175
      %v2277 = vmul.f32 %v2176, %v2176
      %v2278 = vmul.f32 %v2177, %v2177
      %v2279 = vmul.f32 %v2178, %v2178
      %v2280 = vmul.f32 %v2179, %v2179
      %v2281 = vmul.f32 %v2180, %v2180
      %v2282 = vmul.f32 %v2181, %v2181
      %v2283 = vmul.f32 %v2182, %v2182
      %v2284 = vmul.f32 %v2183, %v2183
      %v2285 = vmul.f32 %v2184, %v2184
      %v2286 = vmul.f32 %v2185, %v2185
      %v2287 = vmul.f32 %v2186, %v2186
      %v2288 = vmul.f32 %v2187, %v2187
      %v2289 = vmul.f32 %v2188, %v2188
      %v2290 = vmul.f32 %v2189, %v2189
      %v2291 = vmul.f32 %v2190, %v2190
      %v2292 = vmul.f32 %v2191, %v2191
      %v2293 = vmul.f32 %v2192, %v2192
      %v2294 = vmul.f32 %v2193, %v2193
      %v2295 = vmul.f32 %v2194, %v2194
      %v2296 = vmul.f32 %v2195, %v2195
      %v2297 = vmul.f32 %v2196, %v2196
      %v2298 = vmul.f32 %v2197, %v2197
      %v2299 = vmul.f32 %v2198, %v2198
      %v2300 = vmul.f32 %v2199, %v2199
      %v2301 = vmul.f32 %v2200, %v2200
      %v2302 = vmul.f32 %v2201, %v2201
      %v2303 = vmul.f32 %v2202, %v2202
      %v2304 = vmul.f32 %v2203, %v2203
      %v2305 = vmul.f32 %v2204, %v2204
      %v2306 = vmul.f32 %v2205, %v2205
      %v2307 = vadd.f32 %v2275, %v2276
      %v2308 = vadd.f32 %v2307, %v2277
      %v2309 = vadd.f32 %v2308, %v2278
      %v2310 = vadd.f32 %v2309, %v2279
      %v2311 = vadd.f32 %v2310, %v2280
      %v2312 = vadd.f32 %v2311, %v2281
      %v2313 = vadd.f32 %v2312, %v2282
      %v2314 = vadd.f32 %v2313, %v2283
      %v2315 = vadd.f32 %v2314, %v2284
      %v2316 = vadd.f32 %v2315, %v2285
      %v2317 = vadd.f32 %v2316, %v2286
      %v2318 = vadd.f32 %v2317, %v2287
      %v2319 = vadd.f32 %v2318, %v2288
      %v2320 = vadd.f32 %v2319, %v2289
      %v2321 = vadd.f32 %v2320, %v2290
      %v2322 = vadd.f32 %v2321, %v2291
      %v2323 = vadd.f32 %v2322, %v2292
      %v2324 = vadd.f32 %v2323, %v2293
      %v2325 = vadd.f32 %v2324, %v2294
      %v2326 = vadd.f32 %v2325, %v2295
      %v2327 = vadd.f32 %v2326, %v2296
      %v2328 = vadd.f32 %v2327, %v2297
      %v2329 = vadd.f32 %v2328, %v2298
      %v2330 = vadd.f32 %v2329, %v2299
      %v2331 = vadd.f32 %v2330, %v2300
      %v2332 = vadd.f32 %v2331, %v2301
      %v2333 = vadd.f32 %v2332, %v2302
      %v2334 = vadd.f32 %v2333, %v2303
      %v2335 = vadd.f32 %v2334, %v2304
      %v2336 = vadd.f32 %v2335, %v2305
      %v2337 = vadd.f32 %v2336, %v2306
      %v2338 = vrot.slane %v2337, 4
      %v2339 = vadd.f32 %v2337, %v2338
      %v2340 = vrot.slane %v2339, 2
      %v2341 = vadd.f32 %v2339, %v2340
      %v2342 = vrot.slane %v2341, 1
      %v2343 = vadd.f32 %v2341, %v2342
      %vm2344 = vcmask 1040384
      %v2345 = vsel %vm2344, %v2274, %v2343
      %2346 = vst [vmem:[%s235] sm:$0x3] %v2345
      %p2347 = scmp.lt.s32.totalorder %s17, 1
      %s2348 = scalar_select %p2347, %s17, 1
      %s2349 = smul.addr %s2348, 32
      %s2350 = smul.addr %s2349, 8
      %s2351 = scalar_lea.vmem %s4, %s2350
      %p2352 = scmp.lt.s32.totalorder %s17, 1
      %s2353 = scalar_select %p2352, %s17, 1
      %s2354 = smul.addr %s2353, 2
      %s2355 = scalar_lea.vmem %s5, %s2354
      // Predicated region
      $region37: #{generator_forward.8} parent=35 // pred_check
        %p2356 = pneg %p124
      $region38: #{generator_forward.8} parent=35 // pred_check_branch
        %2358 = sbr.rel (%p2356) target = $region40
      $region39: #{generator_forward.8} parent=35 // pred_region
        _
      $region40: #{generator_forward.8} parent=35 // pred_fallthru
        _
      // Predicated region
      $region41: #{generator_forward.8} parent=35 // pred_check
        %p2359 = pneg %p150
      $region42: #{generator_forward.8} parent=35 // pred_check_branch
        %2361 = sbr.rel (%p2359) target = $region44
      $region43: #{generator_forward.8} parent=35 // pred_region
        _
      $region44: #{generator_forward.8} parent=35 // pred_fallthru
        _
    $region36: #{generator_forward.8} parent=5 // pred_fallthru
      _
    %p2362 = scmp.le.s32.totalorder 2, %s12
    // Predicated region
    $region45: #{generator_forward.8} parent=5 // pred_check
      %p2363 = pneg %p2362
    $region46: #{generator_forward.8} parent=5 // pred_check_branch
      %2365 = sbr.rel (%p2363) target = $region48
    $region47: #{generator_forward.8} parent=5 // pred_region
      %s2366 = ssub.s32 %s12, 2
      // Predicated region
      $region49: #{generator_forward.8} parent=47 // pred_check
        %p2367 = pneg %p130
      $region50: #{generator_forward.8} parent=47 // pred_check_branch
        %2369 = sbr.rel (%p2367) target = $region52
      $region51: #{generator_forward.8} parent=47 // pred_region
        %p2370 = scmp.lt.s32.totalorder %s18, 1
        %s2371 = scalar_select %p2370, %s18, 1
        %s2372 = smul.addr %s2371, 32
        %s2373 = smul.addr %s2372, 8
        %s2374 = scalar_lea.vmem %s4, %s2373
      $region52: #{generator_forward.8} parent=47 // pred_fallthru
        _
      // Predicated region
      $region53: #{generator_forward.8} parent=47 // pred_check
        %p2375 = pneg %p156
      $region54: #{generator_forward.8} parent=47 // pred_check_branch
        %2377 = sbr.rel (%p2375) target = $region56
      $region55: #{generator_forward.8} parent=47 // pred_region
        %p2378 = scmp.lt.s32.totalorder %s18, 1
        %s2379 = scalar_select %p2378, %s18, 1
        %s2380 = smul.addr %s2379, 2
        %s2381 = scalar_lea.vmem %s5, %s2380
      $region56: #{generator_forward.8} parent=47 // pred_fallthru
        _
    $region48: #{generator_forward.8} parent=5 // pred_fallthru
      _
  $region6: #{generator_forward.8} parent=0 // loop_footer
    %s16 = sadd.s32 1, %s12
  $region7: #{generator_forward.8} parent=0 // loop_footer_branch
    %11 = sbr.rel target = $region3
  $region8: #{generator_forward.8} parent=0 // loop_exit
    _

// kernel: generator_forward.9
$region0: #{generator_forward.9}
  #allocation0 [shape = 'u32[]', space=smem, size = 0x4, offset = 0x4, fixed_abs, tag = 'smem constant byte address 0x4 - core index']
  #allocation1 [shape = 'u32[72,128]{1,0:T(1,128)}', space=vmem, size = 0x9000, scoped, tag = 'internal scratch']
  %s0 = inlined_call_operand.vmem [shape: f32[2,16,18,128], index: 0, kind: input, shape index: {}]
  %s1 = inlined_call_operand.vmem [shape: f32[1,128], index: 1, kind: input, shape index: {}]
  %s2 = inlined_call_operand.vmem [shape: f32[1,128], index: 2, kind: input, shape index: {}]
  %s3 = inlined_call_operand.vmem [shape: bf16[9,128,128], index: 3, kind: input, shape index: {}]
  %s4 = inlined_call_operand.vmem [shape: f32[1,128], index: 4, kind: input, shape index: {}]
  %s5 = inlined_call_operand.vmem [shape: f32[2,256,128], index: 5, kind: output, shape index: {}]
  %s6 = sld [smem:[#allocation0]]
  $region53: #{generator_forward.9} parent=0
    _
  %s8 = ssub.s32 1, %s6
  %s9 = scalar_select 0, %s8, %s6
  loop: start=0, step=1, limit=4
  $region2: #{generator_forward.9} parent=0 // loop_pre_header
    _
  $region3: #{generator_forward.9} parent=0 // loop_header
    %s11 = sphi 0, %s15
    %p12 = scmp.ge.s32.totalorder %s11, 4
    %s21 = sphi 0, %s23
    %s24 = sphi 0, %s21
    %s25 = sphi 0, %s24
    %s41 = sphi 0, %s25
    %s45 = sphi 0, %s45
    %s47 = sphi 0, %s45
    %s48 = sphi 0, %s47
    %s62 = sphi 0, %s48
    %s66 = sphi 0, %s66
    %s68 = sphi 0, %s66
    %s69 = sphi 0, %s68
    %s83 = sphi 0, %s69
    %s87 = sphi 0, %s87
    %s89 = sphi 0, %s87
    %s90 = sphi 0, %s89
    %s104 = sphi 0, %s90
    %s108 = sphi 0, %s108
    %s110 = sphi 0, %s108
    %s111 = sphi 0, %s110
    %s125 = sphi 0, %s111
    %s131 = sphi 0, %s133
    %s134 = sphi 0, %s131
    %s135 = sphi 0, %s134
    %s151 = sphi 0, %s135
  $region4: #{generator_forward.9} parent=0 // loop_header_branch
    %14 = sbr.rel (%p12) target = $region8
  $region5: #{generator_forward.9} parent=0 // loop_body
    %s16 = ssub.s32 %s11, 1
    %s17 = ssub.s32 %s11, 2
    %s18 = sadd.s32 %s11, 1
    %s19 = ssub.s32 %s11, %s18
    %p20 = scmp.eq.s32.totalorder %s19, 0
    %s22 = sadd.s32 %s21, 1
    %s23 = scalar_select %p20, %s21, %s22
    %p26 = pneg %p20
    %p27 = scmp.eq.s32.totalorder %s11, 1
    %p28 = por %p26, %p27
    %p29 = scmp.ne.s32.totalorder %s21, %s24
    %p30 = scmp.eq.s32.totalorder %s11, 0
    %p31 = por %p29, %p30
    %p32 = scmp.ne.s32.totalorder %s21, %s24
    %p33 = scmp.eq.s32.totalorder %s16, 1
    %p34 = por %p32, %p33
    %p35 = scmp.ne.s32.totalorder %s24, %s25
    %p36 = scmp.eq.s32.totalorder %s16, 0
    %p37 = por %p35, %p36
    %p38 = scmp.ne.s32.totalorder %s24, %s25
    %p39 = scmp.eq.s32.totalorder %s17, 1
    %p40 = por %p38, %p39
    %p42 = scmp.ne.s32.totalorder %s25, %s41
    %p43 = scmp.eq.s32.totalorder %s17, 0
    %p44 = por %p42, %p43
    %s46 = sadd.s32 %s45, 1
    %p49 = scmp.eq.s32.totalorder %s11, 1
    %p50 = scmp.ne.s32.totalorder %s45, %s47
    %p51 = scmp.eq.s32.totalorder %s11, 0
    %p52 = por %p50, %p51
    %p53 = scmp.ne.s32.totalorder %s45, %s47
    %p54 = scmp.eq.s32.totalorder %s16, 1
    %p55 = por %p53, %p54
    %p56 = scmp.ne.s32.totalorder %s47, %s48
    %p57 = scmp.eq.s32.totalorder %s16, 0
    %p58 = por %p56, %p57
    %p59 = scmp.ne.s32.totalorder %s47, %s48
    %p60 = scmp.eq.s32.totalorder %s17, 1
    %p61 = por %p59, %p60
    %p63 = scmp.ne.s32.totalorder %s48, %s62
    %p64 = scmp.eq.s32.totalorder %s17, 0
    %p65 = por %p63, %p64
    %s67 = sadd.s32 %s66, 1
    %p70 = scmp.eq.s32.totalorder %s11, 1
    %p71 = scmp.ne.s32.totalorder %s66, %s68
    %p72 = scmp.eq.s32.totalorder %s11, 0
    %p73 = por %p71, %p72
    %p74 = scmp.ne.s32.totalorder %s66, %s68
    %p75 = scmp.eq.s32.totalorder %s16, 1
    %p76 = por %p74, %p75
    %p77 = scmp.ne.s32.totalorder %s68, %s69
    %p78 = scmp.eq.s32.totalorder %s16, 0
    %p79 = por %p77, %p78
    %p80 = scmp.ne.s32.totalorder %s68, %s69
    %p81 = scmp.eq.s32.totalorder %s17, 1
    %p82 = por %p80, %p81
    %p84 = scmp.ne.s32.totalorder %s69, %s83
    %p85 = scmp.eq.s32.totalorder %s17, 0
    %p86 = por %p84, %p85
    %s88 = sadd.s32 %s87, 1
    %p91 = scmp.eq.s32.totalorder %s11, 1
    %p92 = scmp.ne.s32.totalorder %s87, %s89
    %p93 = scmp.eq.s32.totalorder %s11, 0
    %p94 = por %p92, %p93
    %p95 = scmp.ne.s32.totalorder %s87, %s89
    %p96 = scmp.eq.s32.totalorder %s16, 1
    %p97 = por %p95, %p96
    %p98 = scmp.ne.s32.totalorder %s89, %s90
    %p99 = scmp.eq.s32.totalorder %s16, 0
    %p100 = por %p98, %p99
    %p101 = scmp.ne.s32.totalorder %s89, %s90
    %p102 = scmp.eq.s32.totalorder %s17, 1
    %p103 = por %p101, %p102
    %p105 = scmp.ne.s32.totalorder %s90, %s104
    %p106 = scmp.eq.s32.totalorder %s17, 0
    %p107 = por %p105, %p106
    %s109 = sadd.s32 %s108, 1
    %p112 = scmp.eq.s32.totalorder %s11, 1
    %p113 = scmp.ne.s32.totalorder %s108, %s110
    %p114 = scmp.eq.s32.totalorder %s11, 0
    %p115 = por %p113, %p114
    %p116 = scmp.ne.s32.totalorder %s108, %s110
    %p117 = scmp.eq.s32.totalorder %s16, 1
    %p118 = por %p116, %p117
    %p119 = scmp.ne.s32.totalorder %s110, %s111
    %p120 = scmp.eq.s32.totalorder %s16, 0
    %p121 = por %p119, %p120
    %p122 = scmp.ne.s32.totalorder %s110, %s111
    %p123 = scmp.eq.s32.totalorder %s17, 1
    %p124 = por %p122, %p123
    %p126 = scmp.ne.s32.totalorder %s111, %s125
    %p127 = scmp.eq.s32.totalorder %s17, 0
    %p128 = por %p126, %p127
    %s129 = ssub.s32 %s11, %s18
    %p130 = scmp.eq.s32.totalorder %s129, 0
    %s132 = sadd.s32 %s131, 1
    %s133 = scalar_select %p130, %s131, %s132
    %p136 = pneg %p130
    %p137 = scmp.eq.s32.totalorder %s11, 1
    %p138 = por %p136, %p137
    %p139 = scmp.ne.s32.totalorder %s131, %s134
    %p140 = scmp.eq.s32.totalorder %s11, 0
    %p141 = por %p139, %p140
    %p142 = scmp.ne.s32.totalorder %s131, %s134
    %p143 = scmp.eq.s32.totalorder %s16, 1
    %p144 = por %p142, %p143
    %p145 = scmp.ne.s32.totalorder %s134, %s135
    %p146 = scmp.eq.s32.totalorder %s16, 0
    %p147 = por %p145, %p146
    %p148 = scmp.ne.s32.totalorder %s134, %s135
    %p149 = scmp.eq.s32.totalorder %s17, 1
    %p150 = por %p148, %p149
    %p152 = scmp.ne.s32.totalorder %s135, %s151
    %p153 = scmp.eq.s32.totalorder %s17, 0
    %p154 = por %p152, %p153
    %p155 = scmp.le.s32.totalorder 1, %s11
    %p156 = scmp.lt.s32.totalorder %s11, 3
    %p157 = pnand %p155, %p156
    %p158 = pneg %p157
    // Predicated region
    $region9: #{generator_forward.9} parent=5 // pred_check
      _
    $region10: #{generator_forward.9} parent=5 // pred_check_branch
      %160 = sbr.rel (%p157) target = $region12
    $region11: #{generator_forward.9} parent=5 // pred_region
      %s161 = ssub.s32 %s11, 1
      // Predicated region
      $region13: #{generator_forward.9} parent=11 // pred_check
        %p162 = pneg %p58
      $region14: #{generator_forward.9} parent=11 // pred_check_branch
        %164 = sbr.rel (%p162) target = $region16
      $region15: #{generator_forward.9} parent=11 // pred_region
        _
      $region16: #{generator_forward.9} parent=11 // pred_fallthru
        _
      // Predicated region
      $region17: #{generator_forward.9} parent=11 // pred_check
        %p165 = pneg %p79
      $region18: #{generator_forward.9} parent=11 // pred_check_branch
        %167 = sbr.rel (%p165) target = $region20
      $region19: #{generator_forward.9} parent=11 // pred_region
        _
      $region20: #{generator_forward.9} parent=11 // pred_fallthru
        _
      // Predicated region
      $region21: #{generator_forward.9} parent=11 // pred_check
        %p168 = pneg %p100
      $region22: #{generator_forward.9} parent=11 // pred_check_branch
        %170 = sbr.rel (%p168) target = $region24
      $region23: #{generator_forward.9} parent=11 // pred_region
        _
      $region24: #{generator_forward.9} parent=11 // pred_fallthru
        _
      // Predicated region
      $region25: #{generator_forward.9} parent=11 // pred_check
        %p171 = pneg %p121
      $region26: #{generator_forward.9} parent=11 // pred_check_branch
        %173 = sbr.rel (%p171) target = $region28
      $region27: #{generator_forward.9} parent=11 // pred_region
        _
      $region28: #{generator_forward.9} parent=11 // pred_fallthru
        _
    $region12: #{generator_forward.9} parent=5 // pred_fallthru
      _
    %p174 = scmp.lt.s32.totalorder %s11, 2
    // Predicated region
    $region29: #{generator_forward.9} parent=5 // pred_check
      %p175 = pneg %p174
    $region30: #{generator_forward.9} parent=5 // pred_check_branch
      %177 = sbr.rel (%p175) target = $region32
    $region31: #{generator_forward.9} parent=5 // pred_region
      // Predicated region
      $region33: #{generator_forward.9} parent=31 // pred_check
        %p178 = pneg %p31
      $region34: #{generator_forward.9} parent=31 // pred_check_branch
        %180 = sbr.rel (%p178) target = $region36
      $region35: #{generator_forward.9} parent=31 // pred_region
        %p181 = scmp.lt.s32.totalorder %s11, 1
        %s182 = scalar_select %p181, %s11, 1
        %s183 = smul.addr %s182, 48
        %s184 = smul.addr %s183, 8
        %s185 = scalar_lea.vmem %s0, %s184
      $region36: #{generator_forward.9} parent=31 // pred_fallthru
        _
    $region32: #{generator_forward.9} parent=5 // pred_fallthru
      _
    %p186 = scmp.le.s32.totalorder 1, %s11
    %p187 = scmp.lt.s32.totalorder %s11, 3
    %p188 = pnand %p186, %p187
    %p189 = pneg %p188
    // Predicated region
    $region37: #{generator_forward.9} parent=5 // pred_check
      _
    $region38: #{generator_forward.9} parent=5 // pred_check_branch
      %191 = sbr.rel (%p188) target = $region40
    $region39: #{generator_forward.9} parent=5 // pred_region
      %s192 = ssub.s32 %s11, 1
      %p193 = scmp.lt.s32.totalorder %s16, 1
      %s194 = scalar_select %p193, %s16, 1
      %s195 = smul.addr %s194, 48
      %s196 = smul.addr %s195, 8
      %s197 = scalar_lea.vmem %s0, %s196
      %p198 = pneg %p37
      %p199 = pneg %p34
      %p200 = pneg %p58
      %p201 = pneg %p55
      %p202 = pneg %p79
      %p203 = pneg %p76
      %p204 = pneg %p100
      %p205 = pneg %p97
      %p206 = pneg %p121
      %p207 = pneg %p118
      %p208 = pneg %p147
      %p209 = pneg %p144
      %p210 = scmp.lt.s32.totalorder %s16, 1
      %s211 = scalar_select %p210, %s16, 1
      %s212 = smul.addr %s211, 32
      %s213 = smul.addr %s212, 8
      %s214 = scalar_lea.vmem %s5, %s213
      %p215 = scmp.lt.s32.totalorder %s16, 1
      %s216 = scalar_select %p215, %s16, 1
      %s217 = smul.addr %s216, 48
      %s218 = smul.addr %s217, 8
      %s219 = scalar_lea.vmem %s0, %s218
      %p220 = scmp.lt.s32.totalorder %s16, 1
      %s221 = scalar_select %p220, %s16, 1
      %s222 = smul.addr %s221, 32
      %s223 = smul.addr %s222, 8
      %s224 = scalar_lea.vmem %s5, %s223
      %v225 = vld [vmem:[%s219] sm:$0xff]
      %v226 = vld [vmem:[%s219 + $0x8] sm:$0xff]
      %v227 = vld [vmem:[%s219 + $0x10] sm:$0x3]
      %v228 = vld [vmem:[%s219 + $0x18] sm:$0xff]
      %v229 = vld [vmem:[%s219 + $0x20] sm:$0xff]
      %v230 = vld [vmem:[%s219 + $0x28] sm:$0x3]
      %v231 = vld [vmem:[%s219 + $0x30] sm:$0xff]
      %v232 = vld [vmem:[%s219 + $0x38] sm:$0xff]
      %v233 = vld [vmem:[%s219 + $0x40] sm:$0x3]
      %v234 = vld [vmem:[%s219 + $0x48] sm:$0xff]
      %v235 = vld [vmem:[%s219 + $0x50] sm:$0xff]
      %v236 = vld [vmem:[%s219 + $0x58] sm:$0x3]
      %v237 = vld [vmem:[%s219 + $0x60] sm:$0xff]
      %v238 = vld [vmem:[%s219 + $0x68] sm:$0xff]
      %v239 = vld [vmem:[%s219 + $0x70] sm:$0x3]
      %v240 = vld [vmem:[%s219 + $0x78] sm:$0xff]
      %v241 = vld [vmem:[%s219 + $0x80] sm:$0xff]
      %v242 = vld [vmem:[%s219 + $0x88] sm:$0x3]
      %v243 = vld [vmem:[%s219 + $0x90] sm:$0xff]
      %v244 = vld [vmem:[%s219 + $0x98] sm:$0xff]
      %v245 = vld [vmem:[%s219 + $0xa0] sm:$0x3]
      %v246 = vld [vmem:[%s219 + $0xa8] sm:$0xff]
      %v247 = vld [vmem:[%s219 + $0xb0] sm:$0xff]
      %v248 = vld [vmem:[%s219 + $0xb8] sm:$0x3]
      %v249 = vld [vmem:[%s219 + $0xc0] sm:$0xff]
      %v250 = vld [vmem:[%s219 + $0xc8] sm:$0xff]
      %v251 = vld [vmem:[%s219 + $0xd0] sm:$0x3]
      %v252 = vld [vmem:[%s219 + $0xd8] sm:$0xff]
      %v253 = vld [vmem:[%s219 + $0xe0] sm:$0xff]
      %v254 = vld [vmem:[%s219 + $0xe8] sm:$0x3]
      %v255 = vld [vmem:[%s219 + $0xf0] sm:$0xff]
      %v256 = vld [vmem:[%s219 + $0xf8] sm:$0xff]
      %v257 = vld [vmem:[%s219 + $0x100] sm:$0x3]
      %v258 = vld [vmem:[%s219 + $0x108] sm:$0xff]
      %v259 = vld [vmem:[%s219 + $0x110] sm:$0xff]
      %v260 = vld [vmem:[%s219 + $0x118] sm:$0x3]
      %v261 = vld [vmem:[%s219 + $0x120] sm:$0xff]
      %v262 = vld [vmem:[%s219 + $0x128] sm:$0xff]
      %v263 = vld [vmem:[%s219 + $0x130] sm:$0x3]
      %v264 = vld [vmem:[%s219 + $0x138] sm:$0xff]
      %v265 = vld [vmem:[%s219 + $0x140] sm:$0xff]
      %v266 = vld [vmem:[%s219 + $0x148] sm:$0x3]
      %v267 = vld [vmem:[%s219 + $0x150] sm:$0xff]
      %v268 = vld [vmem:[%s219 + $0x158] sm:$0xff]
      %v269 = vld [vmem:[%s219 + $0x160] sm:$0x3]
      %v270 = vld [vmem:[%s219 + $0x168] sm:$0xff]
      %v271 = vld [vmem:[%s219 + $0x170] sm:$0xff]
      %v272 = vld [vmem:[%s219 + $0x178] sm:$0x3]
      %v273 = vld [vmem:[%s1] sm:$0x1]
      %v274 = vld [vmem:[%s2] sm:$0x1]
      %v276 = vperm.slane %v273, 0
      %v278 = vmul.f32 %v225, %v276
      %v279 = vmul.f32 %v226, %v276
      %v280 = vmul.f32 %v227, %v276
      %v281 = vmul.f32 %v228, %v276
      %v282 = vmul.f32 %v229, %v276
      %v283 = vmul.f32 %v230, %v276
      %v284 = vmul.f32 %v231, %v276
      %v285 = vmul.f32 %v232, %v276
      %v286 = vmul.f32 %v233, %v276
      %v287 = vmul.f32 %v234, %v276
      %v288 = vmul.f32 %v235, %v276
      %v289 = vmul.f32 %v236, %v276
      %v290 = vmul.f32 %v237, %v276
      %v291 = vmul.f32 %v238, %v276
      %v292 = vmul.f32 %v239, %v276
      %v293 = vmul.f32 %v240, %v276
      %v294 = vmul.f32 %v241, %v276
      %v295 = vmul.f32 %v242, %v276
      %v296 = vmul.f32 %v243, %v276
      %v297 = vmul.f32 %v244, %v276
      %v298 = vmul.f32 %v245, %v276
      %v299 = vmul.f32 %v246, %v276
      %v300 = vmul.f32 %v247, %v276
      %v301 = vmul.f32 %v248, %v276
      %v302 = vmul.f32 %v249, %v276
      %v303 = vmul.f32 %v250, %v276
      %v304 = vmul.f32 %v251, %v276
      %v305 = vmul.f32 %v252, %v276
      %v306 = vmul.f32 %v253, %v276
      %v307 = vmul.f32 %v254, %v276
      %v308 = vmul.f32 %v255, %v276
      %v309 = vmul.f32 %v256, %v276
      %v310 = vmul.f32 %v257, %v276
      %v311 = vmul.f32 %v258, %v276
      %v312 = vmul.f32 %v259, %v276
      %v313 = vmul.f32 %v260, %v276
      %v314 = vmul.f32 %v261, %v276
      %v315 = vmul.f32 %v262, %v276
      %v316 = vmul.f32 %v263, %v276
      %v317 = vmul.f32 %v264, %v276
      %v318 = vmul.f32 %v265, %v276
      %v319 = vmul.f32 %v266, %v276
      %v320 = vmul.f32 %v267, %v276
      %v321 = vmul.f32 %v268, %v276
      %v322 = vmul.f32 %v269, %v276
      %v323 = vmul.f32 %v270, %v276
      %v324 = vmul.f32 %v271, %v276
      %v325 = vmul.f32 %v272, %v276
      %v327 = vperm.slane %v274, 0
      %v329 = vadd.f32 %v278, %v327
      %v330 = vadd.f32 %v279, %v327
      %v331 = vadd.f32 %v280, %v327
      %v332 = vadd.f32 %v281, %v327
      %v333 = vadd.f32 %v282, %v327
      %v334 = vadd.f32 %v283, %v327
      %v335 = vadd.f32 %v284, %v327
      %v336 = vadd.f32 %v285, %v327
      %v337 = vadd.f32 %v286, %v327
      %v338 = vadd.f32 %v287, %v327
      %v339 = vadd.f32 %v288, %v327
      %v340 = vadd.f32 %v289, %v327
      %v341 = vadd.f32 %v290, %v327
      %v342 = vadd.f32 %v291, %v327
      %v343 = vadd.f32 %v292, %v327
      %v344 = vadd.f32 %v293, %v327
      %v345 = vadd.f32 %v294, %v327
      %v346 = vadd.f32 %v295, %v327
      %v347 = vadd.f32 %v296, %v327
      %v348 = vadd.f32 %v297, %v327
      %v349 = vadd.f32 %v298, %v327
      %v350 = vadd.f32 %v299, %v327
      %v351 = vadd.f32 %v300, %v327
      %v352 = vadd.f32 %v301, %v327
      %v353 = vadd.f32 %v302, %v327
      %v354 = vadd.f32 %v303, %v327
      %v355 = vadd.f32 %v304, %v327
      %v356 = vadd.f32 %v305, %v327
      %v357 = vadd.f32 %v306, %v327
      %v358 = vadd.f32 %v307, %v327
      %v359 = vadd.f32 %v308, %v327
      %v360 = vadd.f32 %v309, %v327
      %v361 = vadd.f32 %v310, %v327
      %v362 = vadd.f32 %v311, %v327
      %v363 = vadd.f32 %v312, %v327
      %v364 = vadd.f32 %v313, %v327
      %v365 = vadd.f32 %v314, %v327
      %v366 = vadd.f32 %v315, %v327
      %v367 = vadd.f32 %v316, %v327
      %v368 = vadd.f32 %v317, %v327
      %v369 = vadd.f32 %v318, %v327
      %v370 = vadd.f32 %v319, %v327
      %v371 = vadd.f32 %v320, %v327
      %v372 = vadd.f32 %v321, %v327
      %v373 = vadd.f32 %v322, %v327
      %v374 = vadd.f32 %v323, %v327
      %v375 = vadd.f32 %v324, %v327
      %v376 = vadd.f32 %v325, %v327
      %vm377 = vcmp.ge.f32.partialorder %v329, 0.0
      %vm378 = vcmp.ge.f32.partialorder %v330, 0.0
      %vm379 = vcmp.ge.f32.partialorder %v331, 0.0
      %vm380 = vcmp.ge.f32.partialorder %v332, 0.0
      %vm381 = vcmp.ge.f32.partialorder %v333, 0.0
      %vm382 = vcmp.ge.f32.partialorder %v334, 0.0
      %vm383 = vcmp.ge.f32.partialorder %v335, 0.0
      %vm384 = vcmp.ge.f32.partialorder %v336, 0.0
      %vm385 = vcmp.ge.f32.partialorder %v337, 0.0
      %vm386 = vcmp.ge.f32.partialorder %v338, 0.0
      %vm387 = vcmp.ge.f32.partialorder %v339, 0.0
      %vm388 = vcmp.ge.f32.partialorder %v340, 0.0
      %vm389 = vcmp.ge.f32.partialorder %v341, 0.0
      %vm390 = vcmp.ge.f32.partialorder %v342, 0.0
      %vm391 = vcmp.ge.f32.partialorder %v343, 0.0
      %vm392 = vcmp.ge.f32.partialorder %v344, 0.0
      %vm393 = vcmp.ge.f32.partialorder %v345, 0.0
      %vm394 = vcmp.ge.f32.partialorder %v346, 0.0
      %vm395 = vcmp.ge.f32.partialorder %v347, 0.0
      %vm396 = vcmp.ge.f32.partialorder %v348, 0.0
      %vm397 = vcmp.ge.f32.partialorder %v349, 0.0
      %vm398 = vcmp.ge.f32.partialorder %v350, 0.0
      %vm399 = vcmp.ge.f32.partialorder %v351, 0.0
      %vm400 = vcmp.ge.f32.partialorder %v352, 0.0
      %vm401 = vcmp.ge.f32.partialorder %v353, 0.0
      %vm402 = vcmp.ge.f32.partialorder %v354, 0.0
      %vm403 = vcmp.ge.f32.partialorder %v355, 0.0
      %vm404 = vcmp.ge.f32.partialorder %v356, 0.0
      %vm405 = vcmp.ge.f32.partialorder %v357, 0.0
      %vm406 = vcmp.ge.f32.partialorder %v358, 0.0
      %vm407 = vcmp.ge.f32.partialorder %v359, 0.0
      %vm408 = vcmp.ge.f32.partialorder %v360, 0.0
      %vm409 = vcmp.ge.f32.partialorder %v361, 0.0
      %vm410 = vcmp.ge.f32.partialorder %v362, 0.0
      %vm411 = vcmp.ge.f32.partialorder %v363, 0.0
      %vm412 = vcmp.ge.f32.partialorder %v364, 0.0
      %vm413 = vcmp.ge.f32.partialorder %v365, 0.0
      %vm414 = vcmp.ge.f32.partialorder %v366, 0.0
      %vm415 = vcmp.ge.f32.partialorder %v367, 0.0
      %vm416 = vcmp.ge.f32.partialorder %v368, 0.0
      %vm417 = vcmp.ge.f32.partialorder %v369, 0.0
      %vm418 = vcmp.ge.f32.partialorder %v370, 0.0
      %vm419 = vcmp.ge.f32.partialorder %v371, 0.0
      %vm420 = vcmp.ge.f32.partialorder %v372, 0.0
      %vm421 = vcmp.ge.f32.partialorder %v373, 0.0
      %vm422 = vcmp.ge.f32.partialorder %v374, 0.0
      %vm423 = vcmp.ge.f32.partialorder %v375, 0.0
      %vm424 = vcmp.ge.f32.partialorder %v376, 0.0
      %v425 = vmul.f32 %v329, 0.2
      %v426 = vmul.f32 %v330, 0.2
      %v427 = vmul.f32 %v331, 0.2
      %v428 = vmul.f32 %v332, 0.2
      %v429 = vmul.f32 %v333, 0.2
      %v430 = vmul.f32 %v334, 0.2
      %v431 = vmul.f32 %v335, 0.2
      %v432 = vmul.f32 %v336, 0.2
      %v433 = vmul.f32 %v337, 0.2
      %v434 = vmul.f32 %v338, 0.2
      %v435 = vmul.f32 %v339, 0.2
      %v436 = vmul.f32 %v340, 0.2
      %v437 = vmul.f32 %v341, 0.2
      %v438 = vmul.f32 %v342, 0.2
      %v439 = vmul.f32 %v343, 0.2
      %v440 = vmul.f32 %v344, 0.2
      %v441 = vmul.f32 %v345, 0.2
      %v442 = vmul.f32 %v346, 0.2
      %v443 = vmul.f32 %v347, 0.2
      %v444 = vmul.f32 %v348, 0.2
      %v445 = vmul.f32 %v349, 0.2
      %v446 = vmul.f32 %v350, 0.2
      %v447 = vmul.f32 %v351, 0.2
      %v448 = vmul.f32 %v352, 0.2
      %v449 = vmul.f32 %v353, 0.2
      %v450 = vmul.f32 %v354, 0.2
      %v451 = vmul.f32 %v355, 0.2
      %v452 = vmul.f32 %v356, 0.2
      %v453 = vmul.f32 %v357, 0.2
      %v454 = vmul.f32 %v358, 0.2
      %v455 = vmul.f32 %v359, 0.2
      %v456 = vmul.f32 %v360, 0.2
      %v457 = vmul.f32 %v361, 0.2
      %v458 = vmul.f32 %v362, 0.2
      %v459 = vmul.f32 %v363, 0.2
      %v460 = vmul.f32 %v364, 0.2
      %v461 = vmul.f32 %v365, 0.2
      %v462 = vmul.f32 %v366, 0.2
      %v463 = vmul.f32 %v367, 0.2
      %v464 = vmul.f32 %v368, 0.2
      %v465 = vmul.f32 %v369, 0.2
      %v466 = vmul.f32 %v370, 0.2
      %v467 = vmul.f32 %v371, 0.2
      %v468 = vmul.f32 %v372, 0.2
      %v469 = vmul.f32 %v373, 0.2
      %v470 = vmul.f32 %v374, 0.2
      %v471 = vmul.f32 %v375, 0.2
      %v472 = vmul.f32 %v376, 0.2
      %v473 = vsel %vm377, %v329, %v425
      %v474 = vsel %vm378, %v330, %v426
      %v475 = vsel %vm379, %v331, %v427
      %v476 = vsel %vm380, %v332, %v428
      %v477 = vsel %vm381, %v333, %v429
      %v478 = vsel %vm382, %v334, %v430
      %v479 = vsel %vm383, %v335, %v431
      %v480 = vsel %vm384, %v336, %v432
      %v481 = vsel %vm385, %v337, %v433
      %v482 = vsel %vm386, %v338, %v434
      %v483 = vsel %vm387, %v339, %v435
      %v484 = vsel %vm388, %v340, %v436
      %v485 = vsel %vm389, %v341, %v437
      %v486 = vsel %vm390, %v342, %v438
      %v487 = vsel %vm391, %v343, %v439
      %v488 = vsel %vm392, %v344, %v440
      %v489 = vsel %vm393, %v345, %v441
      %v490 = vsel %vm394, %v346, %v442
      %v491 = vsel %vm395, %v347, %v443
      %v492 = vsel %vm396, %v348, %v444
      %v493 = vsel %vm397, %v349, %v445
      %v494 = vsel %vm398, %v350, %v446
      %v495 = vsel %vm399, %v351, %v447
      %v496 = vsel %vm400, %v352, %v448
      %v497 = vsel %vm401, %v353, %v449
      %v498 = vsel %vm402, %v354, %v450
      %v499 = vsel %vm403, %v355, %v451
      %v500 = vsel %vm404, %v356, %v452
      %v501 = vsel %vm405, %v357, %v453
      %v502 = vsel %vm406, %v358, %v454
      %v503 = vsel %vm407, %v359, %v455
      %v504 = vsel %vm408, %v360, %v456
      %v505 = vsel %vm409, %v361, %v457
      %v506 = vsel %vm410, %v362, %v458
      %v507 = vsel %vm411, %v363, %v459
      %v508 = vsel %vm412, %v364, %v460
      %v509 = vsel %vm413, %v365, %v461
      %v510 = vsel %vm414, %v366, %v462
      %v511 = vsel %vm415, %v367, %v463
      %v512 = vsel %vm416, %v368, %v464
      %v513 = vsel %vm417, %v369, %v465
      %v514 = vsel %vm418, %v370, %v466
      %v515 = vsel %vm419, %v371, %v467
      %v516 = vsel %vm420, %v372, %v468
      %v517 = vsel %vm421, %v373, %v469
      %v518 = vsel %vm422, %v374, %v470
      %v519 = vsel %vm423, %v375, %v471
      %v520 = vsel %vm424, %v376, %v472
      %v521 = vlaneseq
      %v522 = vshrl.u32 %v521, 7
      %v523 = vadd.s32 %v522, 8
      %v524 = vadd.s32 %v522, 16
      %vm525 = vcmp.eq.s32.totalorder %v522, 0
      %vm526 = vcmp.eq.s32.totalorder %v523, 0
      %vm527 = vcmp.eq.s32.totalorder %v524, 0
      %vm528 = vcmp.eq.s32.totalorder %v522, 17
      %vm529 = vcmp.eq.s32.totalorder %v523, 17
      %vm530 = vcmp.eq.s32.totalorder %v524, 17
      %vm531 = vmor %vm525, %vm528
      %vm532 = vmor %vm526, %vm529
      %vm533 = vmor %vm527, %vm530
      %v534 = vsel %vm531, 0.0, %v473
      %v535 = vsel %vm532, 0.0, %v474
      %v536 = vsel %vm533, 0.0, %v475
      %v537 = vsel %vm531, 0.0, %v476
      %v538 = vsel %vm532, 0.0, %v477
      %v539 = vsel %vm533, 0.0, %v478
      %v540 = vsel %vm531, 0.0, %v479
      %v541 = vsel %vm532, 0.0, %v480
      %v542 = vsel %vm533, 0.0, %v481
      %v543 = vsel %vm531, 0.0, %v482
      %v544 = vsel %vm532, 0.0, %v483
      %v545 = vsel %vm533, 0.0, %v484
      %v546 = vsel %vm531, 0.0, %v485
      %v547 = vsel %vm532, 0.0, %v486
      %v548 = vsel %vm533, 0.0, %v487
      %v549 = vsel %vm531, 0.0, %v488
      %v550 = vsel %vm532, 0.0, %v489
      %v551 = vsel %vm533, 0.0, %v490
      %v552 = vsel %vm531, 0.0, %v491
      %v553 = vsel %vm532, 0.0, %v492
      %v554 = vsel %vm533, 0.0, %v493
      %v555 = vsel %vm531, 0.0, %v494
      %v556 = vsel %vm532, 0.0, %v495
      %v557 = vsel %vm533, 0.0, %v496
      %v558 = vsel %vm531, 0.0, %v497
      %v559 = vsel %vm532, 0.0, %v498
      %v560 = vsel %vm533, 0.0, %v499
      %v561 = vsel %vm531, 0.0, %v500
      %v562 = vsel %vm532, 0.0, %v501
      %v563 = vsel %vm533, 0.0, %v502
      %v564 = vsel %vm531, 0.0, %v503
      %v565 = vsel %vm532, 0.0, %v504
      %v566 = vsel %vm533, 0.0, %v505
      %v567 = vsel %vm531, 0.0, %v506
      %v568 = vsel %vm532, 0.0, %v507
      %v569 = vsel %vm533, 0.0, %v508
      %v570 = vsel %vm531, 0.0, %v509
      %v571 = vsel %vm532, 0.0, %v510
      %v572 = vsel %vm533, 0.0, %v511
      %v573 = vsel %vm531, 0.0, %v512
      %v574 = vsel %vm532, 0.0, %v513
      %v575 = vsel %vm533, 0.0, %v514
      %v576 = vsel %vm531, 0.0, %v515
      %v577 = vsel %vm532, 0.0, %v516
      %v578 = vsel %vm533, 0.0, %v517
      %v579 = vsel %vm531, 0.0, %v518
      %v580 = vsel %vm532, 0.0, %v519
      %v581 = vsel %vm533, 0.0, %v520
      %v582 = vpack.c.bf16 0.0, 0.0
      %v583 = vpack.c.bf16 %v535, %v534
      %v584 = vpack.c.bf16 %v538, %v537
      %v585 = vpack.c.bf16 %v541, %v540
      %v586 = vpack.c.bf16 %v544, %v543
      %v587 = vpack.c.bf16 %v547, %v546
      %v588 = vpack.c.bf16 %v550, %v549
      %v589 = vpack.c.bf16 %v553, %v552
      %v590 = vpack.c.bf16 %v556, %v555
      %v591 = vpack.c.bf16 %v559, %v558
      %v592 = vpack.c.bf16 %v562, %v561
      %v593 = vpack.c.bf16 %v565, %v564
      %v594 = vpack.c.bf16 %v568, %v567
      %v595 = vpack.c.bf16 %v571, %v570
      %v596 = vpack.c.bf16 %v574, %v573
      %v597 = vpack.c.bf16 %v577, %v576
      %v598 = vld [vmem:[%s3] sm:$0xf]
      %v599 = vld [vmem:[%s3 + $0x4] sm:$0xf]
      %v600 = vld [vmem:[%s3 + $0x8] sm:$0xf]
      %v601 = vld [vmem:[%s3 + $0xc] sm:$0xf]
      %v602 = vld [vmem:[%s3 + $0x10] sm:$0xf]
      %v603 = vld [vmem:[%s3 + $0x14] sm:$0xf]
      %v604 = vld [vmem:[%s3 + $0x18] sm:$0xf]
      %v605 = vld [vmem:[%s3 + $0x1c] sm:$0xf]
      %v606 = vld [vmem:[%s3 + $0x20] sm:$0xf]
      %v607 = vld [vmem:[%s3 + $0x24] sm:$0xf]
      %v608 = vld [vmem:[%s3 + $0x28] sm:$0xf]
      %v609 = vld [vmem:[%s3 + $0x2c] sm:$0xf]
      %v610 = vld [vmem:[%s3 + $0x30] sm:$0xf]
      %v611 = vld [vmem:[%s3 + $0x34] sm:$0xf]
      %v612 = vld [vmem:[%s3 + $0x38] sm:$0xf]
      %v613 = vld [vmem:[%s3 + $0x3c] sm:$0xf]
      %vm660 = vcmask 1046528
      %v661 = vrot.slane 0.0, 1
      %v662 = vsel %vm660, %v661, %v661
      %v663 = vrot.slane %v534, 1
      %v664 = vrot.slane %v535, 1
      %v665 = vsel %vm660, %v663, %v664
      %v666 = vrot.slane %v536, 1
      %v667 = vsel %vm660, %v664, %v666
      %v668 = vrot.slane %v537, 1
      %v669 = vrot.slane %v538, 1
      %v670 = vsel %vm660, %v668, %v669
      %v671 = vrot.slane %v539, 1
      %v672 = vsel %vm660, %v669, %v671
      %v673 = vrot.slane %v540, 1
      %v674 = vrot.slane %v541, 1
      %v675 = vsel %vm660, %v673, %v674
      %v676 = vrot.slane %v542, 1
      %v677 = vsel %vm660, %v674, %v676
      %v678 = vrot.slane %v543, 1
      %v679 = vrot.slane %v544, 1
      %v680 = vsel %vm660, %v678, %v679
      %v681 = vrot.slane %v545, 1
      %v682 = vsel %vm660, %v679, %v681
      %v683 = vrot.slane %v546, 1
      %v684 = vrot.slane %v547, 1
      %v685 = vsel %vm660, %v683, %v684
      %v686 = vrot.slane %v548, 1
      %v687 = vsel %vm660, %v684, %v686
      %v688 = vrot.slane %v549, 1
      %v689 = vrot.slane %v550, 1
      %v690 = vsel %vm660, %v688, %v689
      %v691 = vrot.slane %v551, 1
      %v692 = vsel %vm660, %v689, %v691
      %v693 = vrot.slane %v552, 1
      %v694 = vrot.slane %v553, 1
      %v695 = vsel %vm660, %v693, %v694
      %v696 = vrot.slane %v554, 1
      %v697 = vsel %vm660, %v694, %v696
      %v698 = vrot.slane %v555, 1
      %v699 = vrot.slane %v556, 1
      %v700 = vsel %vm660, %v698, %v699
      %v701 = vrot.slane %v557, 1
      %v702 = vsel %vm660, %v699, %v701
      %v703 = vrot.slane %v558, 1
      %v704 = vrot.slane %v559, 1
      %v705 = vsel %vm660, %v703, %v704
      %v706 = vrot.slane %v560, 1
      %v707 = vsel %vm660, %v704, %v706
      %v708 = vrot.slane %v561, 1
      %v709 = vrot.slane %v562, 1
      %v710 = vsel %vm660, %v708, %v709
      %v711 = vrot.slane %v563, 1
      %v712 = vsel %vm660, %v709, %v711
      %v713 = vrot.slane %v564, 1
      %v714 = vrot.slane %v565, 1
      %v715 = vsel %vm660, %v713, %v714
      %v716 = vrot.slane %v566, 1
      %v717 = vsel %vm660, %v714, %v716
      %v718 = vrot.slane %v567, 1
      %v719 = vrot.slane %v568, 1
      %v720 = vsel %vm660, %v718, %v719
      %v721 = vrot.slane %v569, 1
      %v722 = vsel %vm660, %v719, %v721
      %v723 = vrot.slane %v570, 1
      %v724 = vrot.slane %v571, 1
      %v725 = vsel %vm660, %v723, %v724
      %v726 = vrot.slane %v572, 1
      %v727 = vsel %vm660, %v724, %v726
      %v728 = vrot.slane %v573, 1
      %v729 = vrot.slane %v574, 1
      %v730 = vsel %vm660, %v728, %v729
      %v731 = vrot.slane %v575, 1
      %v732 = vsel %vm660, %v729, %v731
      %v733 = vrot.slane %v576, 1
      %v734 = vrot.slane %v577, 1
      %v735 = vsel %vm660, %v733, %v734
      %v736 = vrot.slane %v578, 1
      %v737 = vsel %vm660, %v734, %v736
      %v769 = vpack.c.bf16 %v662, %v662
      %v770 = vpack.c.bf16 %v667, %v665
      %v771 = vpack.c.bf16 %v672, %v670
      %v772 = vpack.c.bf16 %v677, %v675
      %v773 = vpack.c.bf16 %v682, %v680
      %v774 = vpack.c.bf16 %v687, %v685
      %v775 = vpack.c.bf16 %v692, %v690
      %v776 = vpack.c.bf16 %v697, %v695
      %v777 = vpack.c.bf16 %v702, %v700
      %v778 = vpack.c.bf16 %v707, %v705
      %v779 = vpack.c.bf16 %v712, %v710
      %v780 = vpack.c.bf16 %v717, %v715
      %v781 = vpack.c.bf16 %v722, %v720
      %v782 = vpack.c.bf16 %v727, %v725
      %v783 = vpack.c.bf16 %v732, %v730
      %v784 = vpack.c.bf16 %v737, %v735
      %s785 = scalar_lea.vmem %s3, 64
      %v786 = vld [vmem:[%s785] sm:$0xf]
      %v787 = vld [vmem:[%s785 + $0x4] sm:$0xf]
      %v788 = vld [vmem:[%s785 + $0x8] sm:$0xf]
      %v789 = vld [vmem:[%s785 + $0xc] sm:$0xf]
      %v790 = vld [vmem:[%s785 + $0x10] sm:$0xf]
      %v791 = vld [vmem:[%s785 + $0x14] sm:$0xf]
      %v792 = vld [vmem:[%s785 + $0x18] sm:$0xf]
      %v793 = vld [vmem:[%s785 + $0x1c] sm:$0xf]
      %v794 = vld [vmem:[%s785 + $0x20] sm:$0xf]
      %v795 = vld [vmem:[%s785 + $0x24] sm:$0xf]
      %v796 = vld [vmem:[%s785 + $0x28] sm:$0xf]
      %v797 = vld [vmem:[%s785 + $0x2c] sm:$0xf]
      %v798 = vld [vmem:[%s785 + $0x30] sm:$0xf]
      %v799 = vld [vmem:[%s785 + $0x34] sm:$0xf]
      %v800 = vld [vmem:[%s785 + $0x38] sm:$0xf]
      %v801 = vld [vmem:[%s785 + $0x3c] sm:$0xf]
      %v818 = vunpack.c.l.b16 %v786
      %v819 = vunpack.c.l.b16 %v787
      %v820 = vunpack.c.l.b16 %v788
      %v821 = vunpack.c.l.b16 %v789
      %v822 = vunpack.c.l.b16 %v790
      %v823 = vunpack.c.l.b16 %v791
      %v824 = vunpack.c.l.b16 %v792
      %v825 = vunpack.c.l.b16 %v793
      %v826 = vunpack.c.l.b16 %v794
      %v827 = vunpack.c.l.b16 %v795
      %v828 = vunpack.c.l.b16 %v796
      %v829 = vunpack.c.l.b16 %v797
      %v830 = vunpack.c.l.b16 %v798
      %v831 = vunpack.c.l.b16 %v799
      %v832 = vunpack.c.l.b16 %v800
      %v833 = vunpack.c.l.b16 %v801
      %v834 = vpack.c.b16 %v819, %v818
      %v835 = vpack.c.b16 %v821, %v820
      %v836 = vpack.c.b16 %v823, %v822
      %v837 = vpack.c.b16 %v825, %v824
      %v838 = vpack.c.b16 %v827, %v826
      %v839 = vpack.c.b16 %v829, %v828
      %v840 = vpack.c.b16 %v831, %v830
      %v841 = vpack.c.b16 %v833, %v832
      %850 = vmatpush.bf16.msra.mxu0 %v841
      %851 = vmatpush.bf16.msra.mxu0 %v840
      %852 = vmatpush.bf16.msra.mxu0 %v839
      %853 = vmatpush.bf16.msra.mxu0 %v838
      %854 = vmatpush.bf16.msra.mxu0 %v837
      %855 = vmatpush.bf16.msra.mxu0 %v836
      %856 = vmatpush.bf16.msra.mxu0 %v835
      %857 = vmatpush.bf16.msra.mxu0 %v834
      %858 = vmatmul.bf16.gmra.mxu0 %v769
      %v859 = vpop.f32.mrf.mxu0
      %v860 = vadd.f32 0.0, %v859
      %v861 = vpop.f32.mrf.mxu0
      %v862 = vadd.f32 0.0, %v861
      %863 = vmatmul.bf16.gmra.mxu0 %v770
      %v864 = vpop.f32.mrf.mxu0
      %v865 = vadd.f32 0.0, %v864
      %v866 = vpop.f32.mrf.mxu0
      %v867 = vadd.f32 0.0, %v866
      %868 = vmatmul.bf16.gmra.mxu0 %v771
      %v869 = vpop.f32.mrf.mxu0
      %v870 = vadd.f32 0.0, %v869
      %v871 = vpop.f32.mrf.mxu0
      %v872 = vadd.f32 0.0, %v871
      %873 = vmatmul.bf16.gmra.mxu0 %v772
      %v874 = vpop.f32.mrf.mxu0
      %v875 = vadd.f32 0.0, %v874
      %v876 = vpop.f32.mrf.mxu0
      %v877 = vadd.f32 0.0, %v876
      %878 = vmatmul.bf16.gmra.mxu0 %v773
      %v879 = vpop.f32.mrf.mxu0
      %v880 = vadd.f32 0.0, %v879
      %v881 = vpop.f32.mrf.mxu0
      %v882 = vadd.f32 0.0, %v881
      %883 = vmatmul.bf16.gmra.mxu0 %v774
      %v884 = vpop.f32.mrf.mxu0
      %v885 = vadd.f32 0.0, %v884
      %v886 = vpop.f32.mrf.mxu0
      %v887 = vadd.f32 0.0, %v886
      %888 = vmatmul.bf16.gmra.mxu0 %v775
      %v889 = vpop.f32.mrf.mxu0
      %v890 = vadd.f32 0.0, %v889
      %v891 = vpop.f32.mrf.mxu0
      %v892 = vadd.f32 0.0, %v891
      %893 = vmatmul.bf16.gmra.mxu0 %v776
      %v894 = vpop.f32.mrf.mxu0
      %v895 = vadd.f32 0.0, %v894
      %v896 = vpop.f32.mrf.mxu0
      %v897 = vadd.f32 0.0, %v896
      %898 = vmatmul.bf16.gmra.mxu0 %v777
      %v899 = vpop.f32.mrf.mxu0
      %v900 = vadd.f32 0.0, %v899
      %v901 = vpop.f32.mrf.mxu0
      %v902 = vadd.f32 0.0, %v901
      %903 = vmatmul.bf16.gmra.mxu0 %v778
      %v904 = vpop.f32.mrf.mxu0
      %v905 = vadd.f32 0.0, %v904
      %v906 = vpop.f32.mrf.mxu0
      %v907 = vadd.f32 0.0, %v906
      %908 = vmatmul.bf16.gmra.mxu0 %v779
      %v909 = vpop.f32.mrf.mxu0
      %v910 = vadd.f32 0.0, %v909
      %v911 = vpop.f32.mrf.mxu0
      %v912 = vadd.f32 0.0, %v911
      %913 = vmatmul.bf16.gmra.mxu0 %v780
      %v914 = vpop.f32.mrf.mxu0
      %v915 = vadd.f32 0.0, %v914
      %v916 = vpop.f32.mrf.mxu0
      %v917 = vadd.f32 0.0, %v916
      %918 = vmatmul.bf16.gmra.mxu0 %v781
      %v919 = vpop.f32.mrf.mxu0
      %v920 = vadd.f32 0.0, %v919
      %v921 = vpop.f32.mrf.mxu0
      %v922 = vadd.f32 0.0, %v921
      %923 = vmatmul.bf16.gmra.mxu0 %v782
      %v924 = vpop.f32.mrf.mxu0
      %v925 = vadd.f32 0.0, %v924
      %v926 = vpop.f32.mrf.mxu0
      %v927 = vadd.f32 0.0, %v926
      %928 = vmatmul.bf16.gmra.mxu0 %v783
      %v929 = vpop.f32.mrf.mxu0
      %v930 = vadd.f32 0.0, %v929
      %v931 = vpop.f32.mrf.mxu0
      %v932 = vadd.f32 0.0, %v931
      %933 = vmatmul.bf16.gmra.mxu0 %v784
      %v934 = vpop.f32.mrf.mxu0
      %v935 = vadd.f32 0.0, %v934
      %v936 = vpop.f32.mrf.mxu0
      %v937 = vadd.f32 0.0, %v936
      %938 = vdwg.mxu0
      %v955 = vunpack.c.l.b16 %v598
      %v956 = vunpack.c.l.b16 %v599
      %v957 = vunpack.c.l.b16 %v600
      %v958 = vunpack.c.l.b16 %v601
      %v959 = vunpack.c.l.b16 %v602
      %v960 = vunpack.c.l.b16 %v603
      %v961 = vunpack.c.l.b16 %v604
      %v962 = vunpack.c.l.b16 %v605
      %v963 = vunpack.c.l.b16 %v606
      %v964 = vunpack.c.l.b16 %v607
      %v965 = vunpack.c.l.b16 %v608
      %v966 = vunpack.c.l.b16 %v609
      %v967 = vunpack.c.l.b16 %v610
      %v968 = vunpack.c.l.b16 %v611
      %v969 = vunpack.c.l.b16 %v612
      %v970 = vunpack.c.l.b16 %v613
      %v971 = vpack.c.b16 %v956, %v955
      %v972 = vpack.c.b16 %v958, %v957
      %v973 = vpack.c.b16 %v960, %v959
      %v974 = vpack.c.b16 %v962, %v961
      %v975 = vpack.c.b16 %v964, %v963
      %v976 = vpack.c.b16 %v966, %v965
      %v977 = vpack.c.b16 %v968, %v967
      %v978 = vpack.c.b16 %v970, %v969
      %987 = vmatpush.bf16.msra.mxu0 %v978
      %988 = vmatpush.bf16.msra.mxu0 %v977
      %989 = vmatpush.bf16.msra.mxu0 %v976
      %990 = vmatpush.bf16.msra.mxu0 %v975
      %991 = vmatpush.bf16.msra.mxu0 %v974
      %992 = vmatpush.bf16.msra.mxu0 %v973
      %993 = vmatpush.bf16.msra.mxu0 %v972
      %994 = vmatpush.bf16.msra.mxu0 %v971
      %995 = vmatmul.bf16.gmra.mxu0 %v582
      %v996 = vpop.f32.mrf.mxu0
      %v997 = vadd.f32 %v860, %v996
      %v998 = vpop.f32.mrf.mxu0
      %v999 = vadd.f32 %v862, %v998
      %1000 = vmatmul.bf16.gmra.mxu0 %v583
      %v1001 = vpop.f32.mrf.mxu0
      %v1002 = vadd.f32 %v865, %v1001
      %v1003 = vpop.f32.mrf.mxu0
      %v1004 = vadd.f32 %v867, %v1003
      %1005 = vmatmul.bf16.gmra.mxu0 %v584
      %v1006 = vpop.f32.mrf.mxu0
      %v1007 = vadd.f32 %v870, %v1006
      %v1008 = vpop.f32.mrf.mxu0
      %v1009 = vadd.f32 %v872, %v1008
      %1010 = vmatmul.bf16.gmra.mxu0 %v585
      %v1011 = vpop.f32.mrf.mxu0
      %v1012 = vadd.f32 %v875, %v1011
      %v1013 = vpop.f32.mrf.mxu0
      %v1014 = vadd.f32 %v877, %v1013
      %1015 = vmatmul.bf16.gmra.mxu0 %v586
      %v1016 = vpop.f32.mrf.mxu0
      %v1017 = vadd.f32 %v880, %v1016
      %v1018 = vpop.f32.mrf.mxu0
      %v1019 = vadd.f32 %v882, %v1018
      %1020 = vmatmul.bf16.gmra.mxu0 %v587
      %v1021 = vpop.f32.mrf.mxu0
      %v1022 = vadd.f32 %v885, %v1021
      %v1023 = vpop.f32.mrf.mxu0
      %v1024 = vadd.f32 %v887, %v1023
      %1025 = vmatmul.bf16.gmra.mxu0 %v588
      %v1026 = vpop.f32.mrf.mxu0
      %v1027 = vadd.f32 %v890, %v1026
      %v1028 = vpop.f32.mrf.mxu0
      %v1029 = vadd.f32 %v892, %v1028
      %1030 = vmatmul.bf16.gmra.mxu0 %v589
      %v1031 = vpop.f32.mrf.mxu0
      %v1032 = vadd.f32 %v895, %v1031
      %v1033 = vpop.f32.mrf.mxu0
      %v1034 = vadd.f32 %v897, %v1033
      %1035 = vmatmul.bf16.gmra.mxu0 %v590
      %v1036 = vpop.f32.mrf.mxu0
      %v1037 = vadd.f32 %v900, %v1036
      %v1038 = vpop.f32.mrf.mxu0
      %v1039 = vadd.f32 %v902, %v1038
      %1040 = vmatmul.bf16.gmra.mxu0 %v591
      %v1041 = vpop.f32.mrf.mxu0
      %v1042 = vadd.f32 %v905, %v1041
      %v1043 = vpop.f32.mrf.mxu0
      %v1044 = vadd.f32 %v907, %v1043
      %1045 = vmatmul.bf16.gmra.mxu0 %v592
      %v1046 = vpop.f32.mrf.mxu0
      %v1047 = vadd.f32 %v910, %v1046
      %v1048 = vpop.f32.mrf.mxu0
      %v1049 = vadd.f32 %v912, %v1048
      %1050 = vmatmul.bf16.gmra.mxu0 %v593
      %v1051 = vpop.f32.mrf.mxu0
      %v1052 = vadd.f32 %v915, %v1051
      %v1053 = vpop.f32.mrf.mxu0
      %v1054 = vadd.f32 %v917, %v1053
      %1055 = vmatmul.bf16.gmra.mxu0 %v594
      %v1056 = vpop.f32.mrf.mxu0
      %v1057 = vadd.f32 %v920, %v1056
      %v1058 = vpop.f32.mrf.mxu0
      %v1059 = vadd.f32 %v922, %v1058
      %1060 = vmatmul.bf16.gmra.mxu0 %v595
      %v1061 = vpop.f32.mrf.mxu0
      %v1062 = vadd.f32 %v925, %v1061
      %v1063 = vpop.f32.mrf.mxu0
      %v1064 = vadd.f32 %v927, %v1063
      %1065 = vmatmul.bf16.gmra.mxu0 %v596
      %v1066 = vpop.f32.mrf.mxu0
      %v1067 = vadd.f32 %v930, %v1066
      %v1068 = vpop.f32.mrf.mxu0
      %v1069 = vadd.f32 %v932, %v1068
      %1070 = vmatmul.bf16.gmra.mxu0 %v597
      %v1071 = vpop.f32.mrf.mxu0
      %v1072 = vadd.f32 %v935, %v1071
      %v1073 = vpop.f32.mrf.mxu0
      %v1074 = vadd.f32 %v937, %v1073
      %1075 = vdwg.mxu0
      %vm1076 = vcmask 1045504
      %v1077 = vrot.slane 0.0, 2
      %v1078 = vsel %vm1076, %v1077, %v1077
      %v1079 = vrot.slane %v534, 2
      %v1080 = vrot.slane %v535, 2
      %v1081 = vsel %vm1076, %v1079, %v1080
      %v1082 = vrot.slane %v536, 2
      %v1083 = vsel %vm1076, %v1080, %v1082
      %v1084 = vrot.slane %v537, 2
      %v1085 = vrot.slane %v538, 2
      %v1086 = vsel %vm1076, %v1084, %v1085
      %v1087 = vrot.slane %v539, 2
      %v1088 = vsel %vm1076, %v1085, %v1087
      %v1089 = vrot.slane %v540, 2
      %v1090 = vrot.slane %v541, 2
      %v1091 = vsel %vm1076, %v1089, %v1090
      %v1092 = vrot.slane %v542, 2
      %v1093 = vsel %vm1076, %v1090, %v1092
      %v1094 = vrot.slane %v543, 2
      %v1095 = vrot.slane %v544, 2
      %v1096 = vsel %vm1076, %v1094, %v1095
      %v1097 = vrot.slane %v545, 2
      %v1098 = vsel %vm1076, %v1095, %v1097
      %v1099 = vrot.slane %v546, 2
      %v1100 = vrot.slane %v547, 2
      %v1101 = vsel %vm1076, %v1099, %v1100
      %v1102 = vrot.slane %v548, 2
      %v1103 = vsel %vm1076, %v1100, %v1102
      %v1104 = vrot.slane %v549, 2
      %v1105 = vrot.slane %v550, 2
      %v1106 = vsel %vm1076, %v1104, %v1105
      %v1107 = vrot.slane %v551, 2
      %v1108 = vsel %vm1076, %v1105, %v1107
      %v1109 = vrot.slane %v552, 2
      %v1110 = vrot.slane %v553, 2
      %v1111 = vsel %vm1076, %v1109, %v1110
      %v1112 = vrot.slane %v554, 2
      %v1113 = vsel %vm1076, %v1110, %v1112
      %v1114 = vrot.slane %v555, 2
      %v1115 = vrot.slane %v556, 2
      %v1116 = vsel %vm1076, %v1114, %v1115
      %v1117 = vrot.slane %v557, 2
      %v1118 = vsel %vm1076, %v1115, %v1117
      %v1119 = vrot.slane %v558, 2
      %v1120 = vrot.slane %v559, 2
      %v1121 = vsel %vm1076, %v1119, %v1120
      %v1122 = vrot.slane %v560, 2
      %v1123 = vsel %vm1076, %v1120, %v1122
      %v1124 = vrot.slane %v561, 2
      %v1125 = vrot.slane %v562, 2
      %v1126 = vsel %vm1076, %v1124, %v1125
      %v1127 = vrot.slane %v563, 2
      %v1128 = vsel %vm1076, %v1125, %v1127
      %v1129 = vrot.slane %v564, 2
      %v1130 = vrot.slane %v565, 2
      %v1131 = vsel %vm1076, %v1129, %v1130
      %v1132 = vrot.slane %v566, 2
      %v1133 = vsel %vm1076, %v1130, %v1132
      %v1134 = vrot.slane %v567, 2
      %v1135 = vrot.slane %v568, 2
      %v1136 = vsel %vm1076, %v1134, %v1135
      %v1137 = vrot.slane %v569, 2
      %v1138 = vsel %vm1076, %v1135, %v1137
      %v1139 = vrot.slane %v570, 2
      %v1140 = vrot.slane %v571, 2
      %v1141 = vsel %vm1076, %v1139, %v1140
      %v1142 = vrot.slane %v572, 2
      %v1143 = vsel %vm1076, %v1140, %v1142
      %v1144 = vrot.slane %v573, 2
      %v1145 = vrot.slane %v574, 2
      %v1146 = vsel %vm1076, %v1144, %v1145
      %v1147 = vrot.slane %v575, 2
      %v1148 = vsel %vm1076, %v1145, %v1147
      %v1149 = vrot.slane %v576, 2
      %v1150 = vrot.slane %v577, 2
      %v1151 = vsel %vm1076, %v1149, %v1150
      %v1152 = vrot.slane %v578, 2
      %v1153 = vsel %vm1076, %v1150, %v1152
      %v1185 = vpack.c.bf16 %v1078, %v1078
      %v1186 = vpack.c.bf16 %v1083, %v1081
      %v1187 = vpack.c.bf16 %v1088, %v1086
      %v1188 = vpack.c.bf16 %v1093, %v1091
      %v1189 = vpack.c.bf16 %v1098, %v1096
      %v1190 = vpack.c.bf16 %v1103, %v1101
      %v1191 = vpack.c.bf16 %v1108, %v1106
      %v1192 = vpack.c.bf16 %v1113, %v1111
      %v1193 = vpack.c.bf16 %v1118, %v1116
      %v1194 = vpack.c.bf16 %v1123, %v1121
      %v1195 = vpack.c.bf16 %v1128, %v1126
      %v1196 = vpack.c.bf16 %v1133, %v1131
      %v1197 = vpack.c.bf16 %v1138, %v1136
      %v1198 = vpack.c.bf16 %v1143, %v1141
      %v1199 = vpack.c.bf16 %v1148, %v1146
      %v1200 = vpack.c.bf16 %v1153, %v1151
      %s1201 = scalar_lea.vmem %s3, 128
      %v1202 = vld [vmem:[%s1201] sm:$0xf]
      %v1203 = vld [vmem:[%s1201 + $0x4] sm:$0xf]
      %v1204 = vld [vmem:[%s1201 + $0x8] sm:$0xf]
      %v1205 = vld [vmem:[%s1201 + $0xc] sm:$0xf]
      %v1206 = vld [vmem:[%s1201 + $0x10] sm:$0xf]
      %v1207 = vld [vmem:[%s1201 + $0x14] sm:$0xf]
      %v1208 = vld [vmem:[%s1201 + $0x18] sm:$0xf]
      %v1209 = vld [vmem:[%s1201 + $0x1c] sm:$0xf]
      %v1210 = vld [vmem:[%s1201 + $0x20] sm:$0xf]
      %v1211 = vld [vmem:[%s1201 + $0x24] sm:$0xf]
      %v1212 = vld [vmem:[%s1201 + $0x28] sm:$0xf]
      %v1213 = vld [vmem:[%s1201 + $0x2c] sm:$0xf]
      %v1214 = vld [vmem:[%s1201 + $0x30] sm:$0xf]
      %v1215 = vld [vmem:[%s1201 + $0x34] sm:$0xf]
      %v1216 = vld [vmem:[%s1201 + $0x38] sm:$0xf]
      %v1217 = vld [vmem:[%s1201 + $0x3c] sm:$0xf]
      %v1234 = vunpack.c.l.b16 %v1202
      %v1235 = vunpack.c.l.b16 %v1203
      %v1236 = vunpack.c.l.b16 %v1204
      %v1237 = vunpack.c.l.b16 %v1205
      %v1238 = vunpack.c.l.b16 %v1206
      %v1239 = vunpack.c.l.b16 %v1207
      %v1240 = vunpack.c.l.b16 %v1208
      %v1241 = vunpack.c.l.b16 %v1209
      %v1242 = vunpack.c.l.b16 %v1210
      %v1243 = vunpack.c.l.b16 %v1211
      %v1244 = vunpack.c.l.b16 %v1212
      %v1245 = vunpack.c.l.b16 %v1213
      %v1246 = vunpack.c.l.b16 %v1214
      %v1247 = vunpack.c.l.b16 %v1215
      %v1248 = vunpack.c.l.b16 %v1216
      %v1249 = vunpack.c.l.b16 %v1217
      %v1250 = vpack.c.b16 %v1235, %v1234
      %v1251 = vpack.c.b16 %v1237, %v1236
      %v1252 = vpack.c.b16 %v1239, %v1238
      %v1253 = vpack.c.b16 %v1241, %v1240
      %v1254 = vpack.c.b16 %v1243, %v1242
      %v1255 = vpack.c.b16 %v1245, %v1244
      %v1256 = vpack.c.b16 %v1247, %v1246
      %v1257 = vpack.c.b16 %v1249, %v1248
      %1266 = vmatpush.bf16.msra.mxu0 %v1257
      %1267 = vmatpush.bf16.msra.mxu0 %v1256
      %1268 = vmatpush.bf16.msra.mxu0 %v1255
      %1269 = vmatpush.bf16.msra.mxu0 %v1254
      %1270 = vmatpush.bf16.msra.mxu0 %v1253
      %1271 = vmatpush.bf16.msra.mxu0 %v1252
      %1272 = vmatpush.bf16.msra.mxu0 %v1251
      %1273 = vmatpush.bf16.msra.mxu0 %v1250
      %1274 = vmatmul.bf16.gmra.mxu0 %v1185
      %v1275 = vpop.f32.mrf.mxu0
      %v1276 = vadd.f32 0.0, %v1275
      %v1277 = vpop.f32.mrf.mxu0
      %v1278 = vadd.f32 0.0, %v1277
      %1279 = vmatmul.bf16.gmra.mxu0 %v1186
      %v1280 = vpop.f32.mrf.mxu0
      %v1281 = vadd.f32 0.0, %v1280
      %v1282 = vpop.f32.mrf.mxu0
      %v1283 = vadd.f32 0.0, %v1282
      %1284 = vmatmul.bf16.gmra.mxu0 %v1187
      %v1285 = vpop.f32.mrf.mxu0
      %v1286 = vadd.f32 0.0, %v1285
      %v1287 = vpop.f32.mrf.mxu0
      %v1288 = vadd.f32 0.0, %v1287
      %1289 = vmatmul.bf16.gmra.mxu0 %v1188
      %v1290 = vpop.f32.mrf.mxu0
      %v1291 = vadd.f32 0.0, %v1290
      %v1292 = vpop.f32.mrf.mxu0
      %v1293 = vadd.f32 0.0, %v1292
      %1294 = vmatmul.bf16.gmra.mxu0 %v1189
      %v1295 = vpop.f32.mrf.mxu0
      %v1296 = vadd.f32 0.0, %v1295
      %v1297 = vpop.f32.mrf.mxu0
      %v1298 = vadd.f32 0.0, %v1297
      %1299 = vmatmul.bf16.gmra.mxu0 %v1190
      %v1300 = vpop.f32.mrf.mxu0
      %v1301 = vadd.f32 0.0, %v1300
      %v1302 = vpop.f32.mrf.mxu0
      %v1303 = vadd.f32 0.0, %v1302
      %1304 = vmatmul.bf16.gmra.mxu0 %v1191
      %v1305 = vpop.f32.mrf.mxu0
      %v1306 = vadd.f32 0.0, %v1305
      %v1307 = vpop.f32.mrf.mxu0
      %v1308 = vadd.f32 0.0, %v1307
      %1309 = vmatmul.bf16.gmra.mxu0 %v1192
      %v1310 = vpop.f32.mrf.mxu0
      %v1311 = vadd.f32 0.0, %v1310
      %v1312 = vpop.f32.mrf.mxu0
      %v1313 = vadd.f32 0.0, %v1312
      %1314 = vmatmul.bf16.gmra.mxu0 %v1193
      %v1315 = vpop.f32.mrf.mxu0
      %v1316 = vadd.f32 0.0, %v1315
      %v1317 = vpop.f32.mrf.mxu0
      %v1318 = vadd.f32 0.0, %v1317
      %1319 = vmatmul.bf16.gmra.mxu0 %v1194
      %v1320 = vpop.f32.mrf.mxu0
      %v1321 = vadd.f32 0.0, %v1320
      %v1322 = vpop.f32.mrf.mxu0
      %v1323 = vadd.f32 0.0, %v1322
      %1324 = vmatmul.bf16.gmra.mxu0 %v1195
      %v1325 = vpop.f32.mrf.mxu0
      %v1326 = vadd.f32 0.0, %v1325
      %v1327 = vpop.f32.mrf.mxu0
      %v1328 = vadd.f32 0.0, %v1327
      %1329 = vmatmul.bf16.gmra.mxu0 %v1196
      %v1330 = vpop.f32.mrf.mxu0
      %v1331 = vadd.f32 0.0, %v1330
      %v1332 = vpop.f32.mrf.mxu0
      %v1333 = vadd.f32 0.0, %v1332
      %1334 = vmatmul.bf16.gmra.mxu0 %v1197
      %v1335 = vpop.f32.mrf.mxu0
      %v1336 = vadd.f32 0.0, %v1335
      %v1337 = vpop.f32.mrf.mxu0
      %v1338 = vadd.f32 0.0, %v1337
      %1339 = vmatmul.bf16.gmra.mxu0 %v1198
      %v1340 = vpop.f32.mrf.mxu0
      %v1341 = vadd.f32 0.0, %v1340
      %v1342 = vpop.f32.mrf.mxu0
      %v1343 = vadd.f32 0.0, %v1342
      %1344 = vmatmul.bf16.gmra.mxu0 %v1199
      %v1345 = vpop.f32.mrf.mxu0
      %v1346 = vadd.f32 0.0, %v1345
      %v1347 = vpop.f32.mrf.mxu0
      %v1348 = vadd.f32 0.0, %v1347
      %1349 = vmatmul.bf16.gmra.mxu0 %v1200
      %v1350 = vpop.f32.mrf.mxu0
      %v1351 = vadd.f32 0.0, %v1350
      %v1352 = vpop.f32.mrf.mxu0
      %v1353 = vadd.f32 0.0, %v1352
      %1354 = vdwg.mxu0
      %v1355 = vadd.f32 %v997, %v1276
      %v1356 = vadd.f32 %v999, %v1278
      %v1357 = vadd.f32 %v1002, %v1281
      %v1358 = vadd.f32 %v1004, %v1283
      %v1359 = vadd.f32 %v1007, %v1286
      %v1360 = vadd.f32 %v1009, %v1288
      %v1361 = vadd.f32 %v1012, %v1291
      %v1362 = vadd.f32 %v1014, %v1293
      %v1363 = vadd.f32 %v1017, %v1296
      %v1364 = vadd.f32 %v1019, %v1298
      %v1365 = vadd.f32 %v1022, %v1301
      %v1366 = vadd.f32 %v1024, %v1303
      %v1367 = vadd.f32 %v1027, %v1306
      %v1368 = vadd.f32 %v1029, %v1308
      %v1369 = vadd.f32 %v1032, %v1311
      %v1370 = vadd.f32 %v1034, %v1313
      %v1371 = vadd.f32 %v1037, %v1316
      %v1372 = vadd.f32 %v1039, %v1318
      %v1373 = vadd.f32 %v1042, %v1321
      %v1374 = vadd.f32 %v1044, %v1323
      %v1375 = vadd.f32 %v1047, %v1326
      %v1376 = vadd.f32 %v1049, %v1328
      %v1377 = vadd.f32 %v1052, %v1331
      %v1378 = vadd.f32 %v1054, %v1333
      %v1379 = vadd.f32 %v1057, %v1336
      %v1380 = vadd.f32 %v1059, %v1338
      %v1381 = vadd.f32 %v1062, %v1341
      %v1382 = vadd.f32 %v1064, %v1343
      %v1383 = vadd.f32 %v1067, %v1346
      %v1384 = vadd.f32 %v1069, %v1348
      %v1385 = vadd.f32 %v1072, %v1351
      %v1386 = vadd.f32 %v1074, %v1353
      %v1387 = vpack.c.bf16 %v580, %v579
      %s1388 = scalar_lea.vmem %s3, 192
      %v1389 = vld [vmem:[%s1388] sm:$0xf]
      %v1390 = vld [vmem:[%s1388 + $0x4] sm:$0xf]
      %v1391 = vld [vmem:[%s1388 + $0x8] sm:$0xf]
      %v1392 = vld [vmem:[%s1388 + $0xc] sm:$0xf]
      %v1393 = vld [vmem:[%s1388 + $0x10] sm:$0xf]
      %v1394 = vld [vmem:[%s1388 + $0x14] sm:$0xf]
      %v1395 = vld [vmem:[%s1388 + $0x18] sm:$0xf]
      %v1396 = vld [vmem:[%s1388 + $0x1c] sm:$0xf]
      %v1397 = vld [vmem:[%s1388 + $0x20] sm:$0xf]
      %v1398 = vld [vmem:[%s1388 + $0x24] sm:$0xf]
      %v1399 = vld [vmem:[%s1388 + $0x28] sm:$0xf]
      %v1400 = vld [vmem:[%s1388 + $0x2c] sm:$0xf]
      %v1401 = vld [vmem:[%s1388 + $0x30] sm:$0xf]
      %v1402 = vld [vmem:[%s1388 + $0x34] sm:$0xf]
      %v1403 = vld [vmem:[%s1388 + $0x38] sm:$0xf]
      %v1404 = vld [vmem:[%s1388 + $0x3c] sm:$0xf]
      %v1421 = vunpack.c.l.b16 %v1389
      %v1422 = vunpack.c.l.b16 %v1390
      %v1423 = vunpack.c.l.b16 %v1391
      %v1424 = vunpack.c.l.b16 %v1392
      %v1425 = vunpack.c.l.b16 %v1393
      %v1426 = vunpack.c.l.b16 %v1394
      %v1427 = vunpack.c.l.b16 %v1395
      %v1428 = vunpack.c.l.b16 %v1396
      %v1429 = vunpack.c.l.b16 %v1397
      %v1430 = vunpack.c.l.b16 %v1398
      %v1431 = vunpack.c.l.b16 %v1399
      %v1432 = vunpack.c.l.b16 %v1400
      %v1433 = vunpack.c.l.b16 %v1401
      %v1434 = vunpack.c.l.b16 %v1402
      %v1435 = vunpack.c.l.b16 %v1403
      %v1436 = vunpack.c.l.b16 %v1404
      %v1437 = vpack.c.b16 %v1422, %v1421
      %v1438 = vpack.c.b16 %v1424, %v1423
      %v1439 = vpack.c.b16 %v1426, %v1425
      %v1440 = vpack.c.b16 %v1428, %v1427
      %v1441 = vpack.c.b16 %v1430, %v1429
      %v1442 = vpack.c.b16 %v1432, %v1431
      %v1443 = vpack.c.b16 %v1434, %v1433
      %v1444 = vpack.c.b16 %v1436, %v1435
      %1453 = vmatpush.bf16.msra.mxu0 %v1444
      %1454 = vmatpush.bf16.msra.mxu0 %v1443
      %1455 = vmatpush.bf16.msra.mxu0 %v1442
      %1456 = vmatpush.bf16.msra.mxu0 %v1441
      %1457 = vmatpush.bf16.msra.mxu0 %v1440
      %1458 = vmatpush.bf16.msra.mxu0 %v1439
      %1459 = vmatpush.bf16.msra.mxu0 %v1438
      %1460 = vmatpush.bf16.msra.mxu0 %v1437
      %1461 = vmatmul.bf16.gmra.mxu0 %v583
      %v1462 = vpop.f32.mrf.mxu0
      %v1463 = vadd.f32 0.0, %v1462
      %v1464 = vpop.f32.mrf.mxu0
      %v1465 = vadd.f32 0.0, %v1464
      %1466 = vmatmul.bf16.gmra.mxu0 %v584
      %v1467 = vpop.f32.mrf.mxu0
      %v1468 = vadd.f32 0.0, %v1467
      %v1469 = vpop.f32.mrf.mxu0
      %v1470 = vadd.f32 0.0, %v1469
      %1471 = vmatmul.bf16.gmra.mxu0 %v585
      %v1472 = vpop.f32.mrf.mxu0
      %v1473 = vadd.f32 0.0, %v1472
      %v1474 = vpop.f32.mrf.mxu0
      %v1475 = vadd.f32 0.0, %v1474
      %1476 = vmatmul.bf16.gmra.mxu0 %v586
      %v1477 = vpop.f32.mrf.mxu0
      %v1478 = vadd.f32 0.0, %v1477
      %v1479 = vpop.f32.mrf.mxu0
      %v1480 = vadd.f32 0.0, %v1479
      %1481 = vmatmul.bf16.gmra.mxu0 %v587
      %v1482 = vpop.f32.mrf.mxu0
      %v1483 = vadd.f32 0.0, %v1482
      %v1484 = vpop.f32.mrf.mxu0
      %v1485 = vadd.f32 0.0, %v1484
      %1486 = vmatmul.bf16.gmra.mxu0 %v588
      %v1487 = vpop.f32.mrf.mxu0
      %v1488 = vadd.f32 0.0, %v1487
      %v1489 = vpop.f32.mrf.mxu0
      %v1490 = vadd.f32 0.0, %v1489
      %1491 = vmatmul.bf16.gmra.mxu0 %v589
      %v1492 = vpop.f32.mrf.mxu0
      %v1493 = vadd.f32 0.0, %v1492
      %v1494 = vpop.f32.mrf.mxu0
      %v1495 = vadd.f32 0.0, %v1494
      %1496 = vmatmul.bf16.gmra.mxu0 %v590
      %v1497 = vpop.f32.mrf.mxu0
      %v1498 = vadd.f32 0.0, %v1497
      %v1499 = vpop.f32.mrf.mxu0
      %v1500 = vadd.f32 0.0, %v1499
      %1501 = vmatmul.bf16.gmra.mxu0 %v591
      %v1502 = vpop.f32.mrf.mxu0
      %v1503 = vadd.f32 0.0, %v1502
      %v1504 = vpop.f32.mrf.mxu0
      %v1505 = vadd.f32 0.0, %v1504
      %1506 = vmatmul.bf16.gmra.mxu0 %v592
      %v1507 = vpop.f32.mrf.mxu0
      %v1508 = vadd.f32 0.0, %v1507
      %v1509 = vpop.f32.mrf.mxu0
      %v1510 = vadd.f32 0.0, %v1509
      %1511 = vmatmul.bf16.gmra.mxu0 %v593
      %v1512 = vpop.f32.mrf.mxu0
      %v1513 = vadd.f32 0.0, %v1512
      %v1514 = vpop.f32.mrf.mxu0
      %v1515 = vadd.f32 0.0, %v1514
      %1516 = vmatmul.bf16.gmra.mxu0 %v594
      %v1517 = vpop.f32.mrf.mxu0
      %v1518 = vadd.f32 0.0, %v1517
      %v1519 = vpop.f32.mrf.mxu0
      %v1520 = vadd.f32 0.0, %v1519
      %1521 = vmatmul.bf16.gmra.mxu0 %v595
      %v1522 = vpop.f32.mrf.mxu0
      %v1523 = vadd.f32 0.0, %v1522
      %v1524 = vpop.f32.mrf.mxu0
      %v1525 = vadd.f32 0.0, %v1524
      %1526 = vmatmul.bf16.gmra.mxu0 %v596
      %v1527 = vpop.f32.mrf.mxu0
      %v1528 = vadd.f32 0.0, %v1527
      %v1529 = vpop.f32.mrf.mxu0
      %v1530 = vadd.f32 0.0, %v1529
      %1531 = vmatmul.bf16.gmra.mxu0 %v597
      %v1532 = vpop.f32.mrf.mxu0
      %v1533 = vadd.f32 0.0, %v1532
      %v1534 = vpop.f32.mrf.mxu0
      %v1535 = vadd.f32 0.0, %v1534
      %1536 = vmatmul.bf16.gmra.mxu0 %v1387
      %v1537 = vpop.f32.mrf.mxu0
      %v1538 = vadd.f32 0.0, %v1537
      %v1539 = vpop.f32.mrf.mxu0
      %v1540 = vadd.f32 0.0, %v1539
      %1541 = vdwg.mxu0
      %v1542 = vadd.f32 %v1355, %v1463
      %v1543 = vadd.f32 %v1356, %v1465
      %v1544 = vadd.f32 %v1357, %v1468
      %v1545 = vadd.f32 %v1358, %v1470
      %v1546 = vadd.f32 %v1359, %v1473
      %v1547 = vadd.f32 %v1360, %v1475
      %v1548 = vadd.f32 %v1361, %v1478
      %v1549 = vadd.f32 %v1362, %v1480
      %v1550 = vadd.f32 %v1363, %v1483
      %v1551 = vadd.f32 %v1364, %v1485
      %v1552 = vadd.f32 %v1365, %v1488
      %v1553 = vadd.f32 %v1366, %v1490
      %v1554 = vadd.f32 %v1367, %v1493
      %v1555 = vadd.f32 %v1368, %v1495
      %v1556 = vadd.f32 %v1369, %v1498
      %v1557 = vadd.f32 %v1370, %v1500
      %v1558 = vadd.f32 %v1371, %v1503
      %v1559 = vadd.f32 %v1372, %v1505
      %v1560 = vadd.f32 %v1373, %v1508
      %v1561 = vadd.f32 %v1374, %v1510
      %v1562 = vadd.f32 %v1375, %v1513
      %v1563 = vadd.f32 %v1376, %v1515
      %v1564 = vadd.f32 %v1377, %v1518
      %v1565 = vadd.f32 %v1378, %v1520
      %v1566 = vadd.f32 %v1379, %v1523
      %v1567 = vadd.f32 %v1380, %v1525
      %v1568 = vadd.f32 %v1381, %v1528
      %v1569 = vadd.f32 %v1382, %v1530
      %v1570 = vadd.f32 %v1383, %v1533
      %v1571 = vadd.f32 %v1384, %v1535
      %v1572 = vadd.f32 %v1385, %v1538
      %v1573 = vadd.f32 %v1386, %v1540
      %v1577 = vrot.slane %v579, 1
      %v1578 = vrot.slane %v580, 1
      %v1579 = vsel %vm660, %v1577, %v1578
      %v1580 = vrot.slane %v581, 1
      %v1581 = vsel %vm660, %v1578, %v1580
      %v1584 = vpack.c.bf16 %v1581, %v1579
      %s1585 = scalar_lea.vmem %s3, 256
      %v1586 = vld [vmem:[%s1585] sm:$0xf]
      %v1587 = vld [vmem:[%s1585 + $0x4] sm:$0xf]
      %v1588 = vld [vmem:[%s1585 + $0x8] sm:$0xf]
      %v1589 = vld [vmem:[%s1585 + $0xc] sm:$0xf]
      %v1590 = vld [vmem:[%s1585 + $0x10] sm:$0xf]
      %v1591 = vld [vmem:[%s1585 + $0x14] sm:$0xf]
      %v1592 = vld [vmem:[%s1585 + $0x18] sm:$0xf]
      %v1593 = vld [vmem:[%s1585 + $0x1c] sm:$0xf]
      %v1594 = vld [vmem:[%s1585 + $0x20] sm:$0xf]
      %v1595 = vld [vmem:[%s1585 + $0x24] sm:$0xf]
      %v1596 = vld [vmem:[%s1585 + $0x28] sm:$0xf]
      %v1597 = vld [vmem:[%s1585 + $0x2c] sm:$0xf]
      %v1598 = vld [vmem:[%s1585 + $0x30] sm:$0xf]
      %v1599 = vld [vmem:[%s1585 + $0x34] sm:$0xf]
      %v1600 = vld [vmem:[%s1585 + $0x38] sm:$0xf]
      %v1601 = vld [vmem:[%s1585 + $0x3c] sm:$0xf]
      %v1618 = vunpack.c.l.b16 %v1586
      %v1619 = vunpack.c.l.b16 %v1587
      %v1620 = vunpack.c.l.b16 %v1588
      %v1621 = vunpack.c.l.b16 %v1589
      %v1622 = vunpack.c.l.b16 %v1590
      %v1623 = vunpack.c.l.b16 %v1591
      %v1624 = vunpack.c.l.b16 %v1592
      %v1625 = vunpack.c.l.b16 %v1593
      %v1626 = vunpack.c.l.b16 %v1594
      %v1627 = vunpack.c.l.b16 %v1595
      %v1628 = vunpack.c.l.b16 %v1596
      %v1629 = vunpack.c.l.b16 %v1597
      %v1630 = vunpack.c.l.b16 %v1598
      %v1631 = vunpack.c.l.b16 %v1599
      %v1632 = vunpack.c.l.b16 %v1600
      %v1633 = vunpack.c.l.b16 %v1601
      %v1634 = vpack.c.b16 %v1619, %v1618
      %v1635 = vpack.c.b16 %v1621, %v1620
      %v1636 = vpack.c.b16 %v1623, %v1622
      %v1637 = vpack.c.b16 %v1625, %v1624
      %v1638 = vpack.c.b16 %v1627, %v1626
      %v1639 = vpack.c.b16 %v1629, %v1628
      %v1640 = vpack.c.b16 %v1631, %v1630
      %v1641 = vpack.c.b16 %v1633, %v1632
      %1650 = vmatpush.bf16.msra.mxu0 %v1641
      %1651 = vmatpush.bf16.msra.mxu0 %v1640
      %1652 = vmatpush.bf16.msra.mxu0 %v1639
      %1653 = vmatpush.bf16.msra.mxu0 %v1638
      %1654 = vmatpush.bf16.msra.mxu0 %v1637
      %1655 = vmatpush.bf16.msra.mxu0 %v1636
      %1656 = vmatpush.bf16.msra.mxu0 %v1635
      %1657 = vmatpush.bf16.msra.mxu0 %v1634
      %1658 = vmatmul.bf16.gmra.mxu0 %v770
      %v1659 = vpop.f32.mrf.mxu0
      %v1660 = vadd.f32 0.0, %v1659
      %v1661 = vpop.f32.mrf.mxu0
      %v1662 = vadd.f32 0.0, %v1661
      %1663 = vmatmul.bf16.gmra.mxu0 %v771
      %v1664 = vpop.f32.mrf.mxu0
      %v1665 = vadd.f32 0.0, %v1664
      %v1666 = vpop.f32.mrf.mxu0
      %v1667 = vadd.f32 0.0, %v1666
      %1668 = vmatmul.bf16.gmra.mxu0 %v772
      %v1669 = vpop.f32.mrf.mxu0
      %v1670 = vadd.f32 0.0, %v1669
      %v1671 = vpop.f32.mrf.mxu0
      %v1672 = vadd.f32 0.0, %v1671
      %1673 = vmatmul.bf16.gmra.mxu0 %v773
      %v1674 = vpop.f32.mrf.mxu0
      %v1675 = vadd.f32 0.0, %v1674
      %v1676 = vpop.f32.mrf.mxu0
      %v1677 = vadd.f32 0.0, %v1676
      %1678 = vmatmul.bf16.gmra.mxu0 %v774
      %v1679 = vpop.f32.mrf.mxu0
      %v1680 = vadd.f32 0.0, %v1679
      %v1681 = vpop.f32.mrf.mxu0
      %v1682 = vadd.f32 0.0, %v1681
      %1683 = vmatmul.bf16.gmra.mxu0 %v775
      %v1684 = vpop.f32.mrf.mxu0
      %v1685 = vadd.f32 0.0, %v1684
      %v1686 = vpop.f32.mrf.mxu0
      %v1687 = vadd.f32 0.0, %v1686
      %1688 = vmatmul.bf16.gmra.mxu0 %v776
      %v1689 = vpop.f32.mrf.mxu0
      %v1690 = vadd.f32 0.0, %v1689
      %v1691 = vpop.f32.mrf.mxu0
      %v1692 = vadd.f32 0.0, %v1691
      %1693 = vmatmul.bf16.gmra.mxu0 %v777
      %v1694 = vpop.f32.mrf.mxu0
      %v1695 = vadd.f32 0.0, %v1694
      %v1696 = vpop.f32.mrf.mxu0
      %v1697 = vadd.f32 0.0, %v1696
      %1698 = vmatmul.bf16.gmra.mxu0 %v778
      %v1699 = vpop.f32.mrf.mxu0
      %v1700 = vadd.f32 0.0, %v1699
      %v1701 = vpop.f32.mrf.mxu0
      %v1702 = vadd.f32 0.0, %v1701
      %1703 = vmatmul.bf16.gmra.mxu0 %v779
      %v1704 = vpop.f32.mrf.mxu0
      %v1705 = vadd.f32 0.0, %v1704
      %v1706 = vpop.f32.mrf.mxu0
      %v1707 = vadd.f32 0.0, %v1706
      %1708 = vmatmul.bf16.gmra.mxu0 %v780
      %v1709 = vpop.f32.mrf.mxu0
      %v1710 = vadd.f32 0.0, %v1709
      %v1711 = vpop.f32.mrf.mxu0
      %v1712 = vadd.f32 0.0, %v1711
      %1713 = vmatmul.bf16.gmra.mxu0 %v781
      %v1714 = vpop.f32.mrf.mxu0
      %v1715 = vadd.f32 0.0, %v1714
      %v1716 = vpop.f32.mrf.mxu0
      %v1717 = vadd.f32 0.0, %v1716
      %1718 = vmatmul.bf16.gmra.mxu0 %v782
      %v1719 = vpop.f32.mrf.mxu0
      %v1720 = vadd.f32 0.0, %v1719
      %v1721 = vpop.f32.mrf.mxu0
      %v1722 = vadd.f32 0.0, %v1721
      %1723 = vmatmul.bf16.gmra.mxu0 %v783
      %v1724 = vpop.f32.mrf.mxu0
      %v1725 = vadd.f32 0.0, %v1724
      %v1726 = vpop.f32.mrf.mxu0
      %v1727 = vadd.f32 0.0, %v1726
      %1728 = vmatmul.bf16.gmra.mxu0 %v784
      %v1729 = vpop.f32.mrf.mxu0
      %v1730 = vadd.f32 0.0, %v1729
      %v1731 = vpop.f32.mrf.mxu0
      %v1732 = vadd.f32 0.0, %v1731
      %1733 = vmatmul.bf16.gmra.mxu0 %v1584
      %v1734 = vpop.f32.mrf.mxu0
      %v1735 = vadd.f32 0.0, %v1734
      %v1736 = vpop.f32.mrf.mxu0
      %v1737 = vadd.f32 0.0, %v1736
      %1738 = vdwg.mxu0
      %v1739 = vadd.f32 %v1542, %v1660
      %v1740 = vadd.f32 %v1543, %v1662
      %v1741 = vadd.f32 %v1544, %v1665
      %v1742 = vadd.f32 %v1545, %v1667
      %v1743 = vadd.f32 %v1546, %v1670
      %v1744 = vadd.f32 %v1547, %v1672
      %v1745 = vadd.f32 %v1548, %v1675
      %v1746 = vadd.f32 %v1549, %v1677
      %v1747 = vadd.f32 %v1550, %v1680
      %v1748 = vadd.f32 %v1551, %v1682
      %v1749 = vadd.f32 %v1552, %v1685
      %v1750 = vadd.f32 %v1553, %v1687
      %v1751 = vadd.f32 %v1554, %v1690
      %v1752 = vadd.f32 %v1555, %v1692
      %v1753 = vadd.f32 %v1556, %v1695
      %v1754 = vadd.f32 %v1557, %v1697
      %v1755 = vadd.f32 %v1558, %v1700
      %v1756 = vadd.f32 %v1559, %v1702
      %v1757 = vadd.f32 %v1560, %v1705
      %v1758 = vadd.f32 %v1561, %v1707
      %v1759 = vadd.f32 %v1562, %v1710
      %v1760 = vadd.f32 %v1563, %v1712
      %v1761 = vadd.f32 %v1564, %v1715
      %v1762 = vadd.f32 %v1565, %v1717
      %v1763 = vadd.f32 %v1566, %v1720
      %v1764 = vadd.f32 %v1567, %v1722
      %v1765 = vadd.f32 %v1568, %v1725
      %v1766 = vadd.f32 %v1569, %v1727
      %v1767 = vadd.f32 %v1570, %v1730
      %v1768 = vadd.f32 %v1571, %v1732
      %v1769 = vadd.f32 %v1572, %v1735
      %v1770 = vadd.f32 %v1573, %v1737
      %v1771 = vrot.slane %v579, 2
      %v1772 = vrot.slane %v580, 2
      %v1773 = vsel %vm1076, %v1771, %v1772
      %v1774 = vrot.slane %v581, 2
      %v1775 = vsel %vm1076, %v1772, %v1774
      %v1778 = vpack.c.bf16 %v1775, %v1773
      %s1779 = scalar_lea.vmem %s3, 320
      %v1780 = vld [vmem:[%s1779] sm:$0xf]
      %v1781 = vld [vmem:[%s1779 + $0x4] sm:$0xf]
      %v1782 = vld [vmem:[%s1779 + $0x8] sm:$0xf]
      %v1783 = vld [vmem:[%s1779 + $0xc] sm:$0xf]
      %v1784 = vld [vmem:[%s1779 + $0x10] sm:$0xf]
      %v1785 = vld [vmem:[%s1779 + $0x14] sm:$0xf]
      %v1786 = vld [vmem:[%s1779 + $0x18] sm:$0xf]
      %v1787 = vld [vmem:[%s1779 + $0x1c] sm:$0xf]
      %v1788 = vld [vmem:[%s1779 + $0x20] sm:$0xf]
      %v1789 = vld [vmem:[%s1779 + $0x24] sm:$0xf]
      %v1790 = vld [vmem:[%s1779 + $0x28] sm:$0xf]
      %v1791 = vld [vmem:[%s1779 + $0x2c] sm:$0xf]
      %v1792 = vld [vmem:[%s1779 + $0x30] sm:$0xf]
      %v1793 = vld [vmem:[%s1779 + $0x34] sm:$0xf]
      %v1794 = vld [vmem:[%s1779 + $0x38] sm:$0xf]
      %v1795 = vld [vmem:[%s1779 + $0x3c] sm:$0xf]
      %v1812 = vunpack.c.l.b16 %v1780
      %v1813 = vunpack.c.l.b16 %v1781
      %v1814 = vunpack.c.l.b16 %v1782
      %v1815 = vunpack.c.l.b16 %v1783
      %v1816 = vunpack.c.l.b16 %v1784
      %v1817 = vunpack.c.l.b16 %v1785
      %v1818 = vunpack.c.l.b16 %v1786
      %v1819 = vunpack.c.l.b16 %v1787
      %v1820 = vunpack.c.l.b16 %v1788
      %v1821 = vunpack.c.l.b16 %v1789
      %v1822 = vunpack.c.l.b16 %v1790
      %v1823 = vunpack.c.l.b16 %v1791
      %v1824 = vunpack.c.l.b16 %v1792
      %v1825 = vunpack.c.l.b16 %v1793
      %v1826 = vunpack.c.l.b16 %v1794
      %v1827 = vunpack.c.l.b16 %v1795
      %v1828 = vpack.c.b16 %v1813, %v1812
      %v1829 = vpack.c.b16 %v1815, %v1814
      %v1830 = vpack.c.b16 %v1817, %v1816
      %v1831 = vpack.c.b16 %v1819, %v1818
      %v1832 = vpack.c.b16 %v1821, %v1820
      %v1833 = vpack.c.b16 %v1823, %v1822
      %v1834 = vpack.c.b16 %v1825, %v1824
      %v1835 = vpack.c.b16 %v1827, %v1826
      %1844 = vmatpush.bf16.msra.mxu0 %v1835
      %1845 = vmatpush.bf16.msra.mxu0 %v1834
      %1846 = vmatpush.bf16.msra.mxu0 %v1833
      %1847 = vmatpush.bf16.msra.mxu0 %v1832
      %1848 = vmatpush.bf16.msra.mxu0 %v1831
      %1849 = vmatpush.bf16.msra.mxu0 %v1830
      %1850 = vmatpush.bf16.msra.mxu0 %v1829
      %1851 = vmatpush.bf16.msra.mxu0 %v1828
      %1852 = vmatmul.bf16.gmra.mxu0 %v1186
      %v1853 = vpop.f32.mrf.mxu0
      %v1854 = vadd.f32 0.0, %v1853
      %v1855 = vpop.f32.mrf.mxu0
      %v1856 = vadd.f32 0.0, %v1855
      %1857 = vmatmul.bf16.gmra.mxu0 %v1187
      %v1858 = vpop.f32.mrf.mxu0
      %v1859 = vadd.f32 0.0, %v1858
      %v1860 = vpop.f32.mrf.mxu0
      %v1861 = vadd.f32 0.0, %v1860
      %1862 = vmatmul.bf16.gmra.mxu0 %v1188
      %v1863 = vpop.f32.mrf.mxu0
      %v1864 = vadd.f32 0.0, %v1863
      %v1865 = vpop.f32.mrf.mxu0
      %v1866 = vadd.f32 0.0, %v1865
      %1867 = vmatmul.bf16.gmra.mxu0 %v1189
      %v1868 = vpop.f32.mrf.mxu0
      %v1869 = vadd.f32 0.0, %v1868
      %v1870 = vpop.f32.mrf.mxu0
      %v1871 = vadd.f32 0.0, %v1870
      %1872 = vmatmul.bf16.gmra.mxu0 %v1190
      %v1873 = vpop.f32.mrf.mxu0
      %v1874 = vadd.f32 0.0, %v1873
      %v1875 = vpop.f32.mrf.mxu0
      %v1876 = vadd.f32 0.0, %v1875
      %1877 = vmatmul.bf16.gmra.mxu0 %v1191
      %v1878 = vpop.f32.mrf.mxu0
      %v1879 = vadd.f32 0.0, %v1878
      %v1880 = vpop.f32.mrf.mxu0
      %v1881 = vadd.f32 0.0, %v1880
      %1882 = vmatmul.bf16.gmra.mxu0 %v1192
      %v1883 = vpop.f32.mrf.mxu0
      %v1884 = vadd.f32 0.0, %v1883
      %v1885 = vpop.f32.mrf.mxu0
      %v1886 = vadd.f32 0.0, %v1885
      %1887 = vmatmul.bf16.gmra.mxu0 %v1193
      %v1888 = vpop.f32.mrf.mxu0
      %v1889 = vadd.f32 0.0, %v1888
      %v1890 = vpop.f32.mrf.mxu0
      %v1891 = vadd.f32 0.0, %v1890
      %1892 = vmatmul.bf16.gmra.mxu0 %v1194
      %v1893 = vpop.f32.mrf.mxu0
      %v1894 = vadd.f32 0.0, %v1893
      %v1895 = vpop.f32.mrf.mxu0
      %v1896 = vadd.f32 0.0, %v1895
      %1897 = vmatmul.bf16.gmra.mxu0 %v1195
      %v1898 = vpop.f32.mrf.mxu0
      %v1899 = vadd.f32 0.0, %v1898
      %v1900 = vpop.f32.mrf.mxu0
      %v1901 = vadd.f32 0.0, %v1900
      %1902 = vmatmul.bf16.gmra.mxu0 %v1196
      %v1903 = vpop.f32.mrf.mxu0
      %v1904 = vadd.f32 0.0, %v1903
      %v1905 = vpop.f32.mrf.mxu0
      %v1906 = vadd.f32 0.0, %v1905
      %1907 = vmatmul.bf16.gmra.mxu0 %v1197
      %v1908 = vpop.f32.mrf.mxu0
      %v1909 = vadd.f32 0.0, %v1908
      %v1910 = vpop.f32.mrf.mxu0
      %v1911 = vadd.f32 0.0, %v1910
      %1912 = vmatmul.bf16.gmra.mxu0 %v1198
      %v1913 = vpop.f32.mrf.mxu0
      %v1914 = vadd.f32 0.0, %v1913
      %v1915 = vpop.f32.mrf.mxu0
      %v1916 = vadd.f32 0.0, %v1915
      %1917 = vmatmul.bf16.gmra.mxu0 %v1199
      %v1918 = vpop.f32.mrf.mxu0
      %v1919 = vadd.f32 0.0, %v1918
      %v1920 = vpop.f32.mrf.mxu0
      %v1921 = vadd.f32 0.0, %v1920
      %1922 = vmatmul.bf16.gmra.mxu0 %v1200
      %v1923 = vpop.f32.mrf.mxu0
      %v1924 = vadd.f32 0.0, %v1923
      %v1925 = vpop.f32.mrf.mxu0
      %v1926 = vadd.f32 0.0, %v1925
      %1927 = vmatmul.bf16.gmra.mxu0 %v1778
      %v1928 = vpop.f32.mrf.mxu0
      %v1929 = vadd.f32 0.0, %v1928
      %v1930 = vpop.f32.mrf.mxu0
      %v1931 = vadd.f32 0.0, %v1930
      %1932 = vdwg.mxu0
      %v1933 = vadd.f32 %v1739, %v1854
      %v1934 = vadd.f32 %v1740, %v1856
      %v1935 = vadd.f32 %v1741, %v1859
      %v1936 = vadd.f32 %v1742, %v1861
      %v1937 = vadd.f32 %v1743, %v1864
      %v1938 = vadd.f32 %v1744, %v1866
      %v1939 = vadd.f32 %v1745, %v1869
      %v1940 = vadd.f32 %v1746, %v1871
      %v1941 = vadd.f32 %v1747, %v1874
      %v1942 = vadd.f32 %v1748, %v1876
      %v1943 = vadd.f32 %v1749, %v1879
      %v1944 = vadd.f32 %v1750, %v1881
      %v1945 = vadd.f32 %v1751, %v1884
      %v1946 = vadd.f32 %v1752, %v1886
      %v1947 = vadd.f32 %v1753, %v1889
      %v1948 = vadd.f32 %v1754, %v1891
      %v1949 = vadd.f32 %v1755, %v1894
      %v1950 = vadd.f32 %v1756, %v1896
      %v1951 = vadd.f32 %v1757, %v1899
      %v1952 = vadd.f32 %v1758, %v1901
      %v1953 = vadd.f32 %v1759, %v1904
      %v1954 = vadd.f32 %v1760, %v1906
      %v1955 = vadd.f32 %v1761, %v1909
      %v1956 = vadd.f32 %v1762, %v1911
      %v1957 = vadd.f32 %v1763, %v1914
      %v1958 = vadd.f32 %v1764, %v1916
      %v1959 = vadd.f32 %v1765, %v1919
      %v1960 = vadd.f32 %v1766, %v1921
      %v1961 = vadd.f32 %v1767, %v1924
      %v1962 = vadd.f32 %v1768, %v1926
      %v1963 = vadd.f32 %v1769, %v1929
      %v1964 = vadd.f32 %v1770, %v1931
      %s1965 = scalar_lea.vmem %s3, 384
      %v1966 = vld [vmem:[%s1965] sm:$0xf]
      %v1967 = vld [vmem:[%s1965 + $0x4] sm:$0xf]
      %v1968 = vld [vmem:[%s1965 + $0x8] sm:$0xf]
      %v1969 = vld [vmem:[%s1965 + $0xc] sm:$0xf]
      %v1970 = vld [vmem:[%s1965 + $0x10] sm:$0xf]
      %v1971 = vld [vmem:[%s1965 + $0x14] sm:$0xf]
      %v1972 = vld [vmem:[%s1965 + $0x18] sm:$0xf]
      %v1973 = vld [vmem:[%s1965 + $0x1c] sm:$0xf]
      %v1974 = vld [vmem:[%s1965 + $0x20] sm:$0xf]
      %v1975 = vld [vmem:[%s1965 + $0x24] sm:$0xf]
      %v1976 = vld [vmem:[%s1965 + $0x28] sm:$0xf]
      %v1977 = vld [vmem:[%s1965 + $0x2c] sm:$0xf]
      %v1978 = vld [vmem:[%s1965 + $0x30] sm:$0xf]
      %v1979 = vld [vmem:[%s1965 + $0x34] sm:$0xf]
      %v1980 = vld [vmem:[%s1965 + $0x38] sm:$0xf]
      %v1981 = vld [vmem:[%s1965 + $0x3c] sm:$0xf]
      %v1998 = vunpack.c.l.b16 %v1966
      %v1999 = vunpack.c.l.b16 %v1967
      %v2000 = vunpack.c.l.b16 %v1968
      %v2001 = vunpack.c.l.b16 %v1969
      %v2002 = vunpack.c.l.b16 %v1970
      %v2003 = vunpack.c.l.b16 %v1971
      %v2004 = vunpack.c.l.b16 %v1972
      %v2005 = vunpack.c.l.b16 %v1973
      %v2006 = vunpack.c.l.b16 %v1974
      %v2007 = vunpack.c.l.b16 %v1975
      %v2008 = vunpack.c.l.b16 %v1976
      %v2009 = vunpack.c.l.b16 %v1977
      %v2010 = vunpack.c.l.b16 %v1978
      %v2011 = vunpack.c.l.b16 %v1979
      %v2012 = vunpack.c.l.b16 %v1980
      %v2013 = vunpack.c.l.b16 %v1981
      %v2014 = vpack.c.b16 %v1999, %v1998
      %v2015 = vpack.c.b16 %v2001, %v2000
      %v2016 = vpack.c.b16 %v2003, %v2002
      %v2017 = vpack.c.b16 %v2005, %v2004
      %v2018 = vpack.c.b16 %v2007, %v2006
      %v2019 = vpack.c.b16 %v2009, %v2008
      %v2020 = vpack.c.b16 %v2011, %v2010
      %v2021 = vpack.c.b16 %v2013, %v2012
      %2030 = vmatpush.bf16.msra.mxu0 %v2021
      %2031 = vmatpush.bf16.msra.mxu0 %v2020
      %2032 = vmatpush.bf16.msra.mxu0 %v2019
      %2033 = vmatpush.bf16.msra.mxu0 %v2018
      %2034 = vmatpush.bf16.msra.mxu0 %v2017
      %2035 = vmatpush.bf16.msra.mxu0 %v2016
      %2036 = vmatpush.bf16.msra.mxu0 %v2015
      %2037 = vmatpush.bf16.msra.mxu0 %v2014
      %2038 = vmatmul.bf16.gmra.mxu0 %v584
      %v2039 = vpop.f32.mrf.mxu0
      %v2040 = vadd.f32 0.0, %v2039
      %v2041 = vpop.f32.mrf.mxu0
      %v2042 = vadd.f32 0.0, %v2041
      %2043 = vmatmul.bf16.gmra.mxu0 %v585
      %v2044 = vpop.f32.mrf.mxu0
      %v2045 = vadd.f32 0.0, %v2044
      %v2046 = vpop.f32.mrf.mxu0
      %v2047 = vadd.f32 0.0, %v2046
      %2048 = vmatmul.bf16.gmra.mxu0 %v586
      %v2049 = vpop.f32.mrf.mxu0
      %v2050 = vadd.f32 0.0, %v2049
      %v2051 = vpop.f32.mrf.mxu0
      %v2052 = vadd.f32 0.0, %v2051
      %2053 = vmatmul.bf16.gmra.mxu0 %v587
      %v2054 = vpop.f32.mrf.mxu0
      %v2055 = vadd.f32 0.0, %v2054
      %v2056 = vpop.f32.mrf.mxu0
      %v2057 = vadd.f32 0.0, %v2056
      %2058 = vmatmul.bf16.gmra.mxu0 %v588
      %v2059 = vpop.f32.mrf.mxu0
      %v2060 = vadd.f32 0.0, %v2059
      %v2061 = vpop.f32.mrf.mxu0
      %v2062 = vadd.f32 0.0, %v2061
      %2063 = vmatmul.bf16.gmra.mxu0 %v589
      %v2064 = vpop.f32.mrf.mxu0
      %v2065 = vadd.f32 0.0, %v2064
      %v2066 = vpop.f32.mrf.mxu0
      %v2067 = vadd.f32 0.0, %v2066
      %2068 = vmatmul.bf16.gmra.mxu0 %v590
      %v2069 = vpop.f32.mrf.mxu0
      %v2070 = vadd.f32 0.0, %v2069
      %v2071 = vpop.f32.mrf.mxu0
      %v2072 = vadd.f32 0.0, %v2071
      %2073 = vmatmul.bf16.gmra.mxu0 %v591
      %v2074 = vpop.f32.mrf.mxu0
      %v2075 = vadd.f32 0.0, %v2074
      %v2076 = vpop.f32.mrf.mxu0
      %v2077 = vadd.f32 0.0, %v2076
      %2078 = vmatmul.bf16.gmra.mxu0 %v592
      %v2079 = vpop.f32.mrf.mxu0
      %v2080 = vadd.f32 0.0, %v2079
      %v2081 = vpop.f32.mrf.mxu0
      %v2082 = vadd.f32 0.0, %v2081
      %2083 = vmatmul.bf16.gmra.mxu0 %v593
      %v2084 = vpop.f32.mrf.mxu0
      %v2085 = vadd.f32 0.0, %v2084
      %v2086 = vpop.f32.mrf.mxu0
      %v2087 = vadd.f32 0.0, %v2086
      %2088 = vmatmul.bf16.gmra.mxu0 %v594
      %v2089 = vpop.f32.mrf.mxu0
      %v2090 = vadd.f32 0.0, %v2089
      %v2091 = vpop.f32.mrf.mxu0
      %v2092 = vadd.f32 0.0, %v2091
      %2093 = vmatmul.bf16.gmra.mxu0 %v595
      %v2094 = vpop.f32.mrf.mxu0
      %v2095 = vadd.f32 0.0, %v2094
      %v2096 = vpop.f32.mrf.mxu0
      %v2097 = vadd.f32 0.0, %v2096
      %2098 = vmatmul.bf16.gmra.mxu0 %v596
      %v2099 = vpop.f32.mrf.mxu0
      %v2100 = vadd.f32 0.0, %v2099
      %v2101 = vpop.f32.mrf.mxu0
      %v2102 = vadd.f32 0.0, %v2101
      %2103 = vmatmul.bf16.gmra.mxu0 %v597
      %v2104 = vpop.f32.mrf.mxu0
      %v2105 = vadd.f32 0.0, %v2104
      %v2106 = vpop.f32.mrf.mxu0
      %v2107 = vadd.f32 0.0, %v2106
      %2108 = vmatmul.bf16.gmra.mxu0 %v1387
      %v2109 = vpop.f32.mrf.mxu0
      %v2110 = vadd.f32 0.0, %v2109
      %v2111 = vpop.f32.mrf.mxu0
      %v2112 = vadd.f32 0.0, %v2111
      %2113 = vmatmul.bf16.gmra.mxu0 %v582
      %v2114 = vpop.f32.mrf.mxu0
      %v2115 = vadd.f32 0.0, %v2114
      %v2116 = vpop.f32.mrf.mxu0
      %v2117 = vadd.f32 0.0, %v2116
      %2118 = vdwg.mxu0
      %v2119 = vadd.f32 %v1933, %v2040
      %v2120 = vadd.f32 %v1934, %v2042
      %v2121 = vadd.f32 %v1935, %v2045
      %v2122 = vadd.f32 %v1936, %v2047
      %v2123 = vadd.f32 %v1937, %v2050
      %v2124 = vadd.f32 %v1938, %v2052
      %v2125 = vadd.f32 %v1939, %v2055
      %v2126 = vadd.f32 %v1940, %v2057
      %v2127 = vadd.f32 %v1941, %v2060
      %v2128 = vadd.f32 %v1942, %v2062
      %v2129 = vadd.f32 %v1943, %v2065
      %v2130 = vadd.f32 %v1944, %v2067
      %v2131 = vadd.f32 %v1945, %v2070
      %v2132 = vadd.f32 %v1946, %v2072
      %v2133 = vadd.f32 %v1947, %v2075
      %v2134 = vadd.f32 %v1948, %v2077
      %v2135 = vadd.f32 %v1949, %v2080
      %v2136 = vadd.f32 %v1950, %v2082
      %v2137 = vadd.f32 %v1951, %v2085
      %v2138 = vadd.f32 %v1952, %v2087
      %v2139 = vadd.f32 %v1953, %v2090
      %v2140 = vadd.f32 %v1954, %v2092
      %v2141 = vadd.f32 %v1955, %v2095
      %v2142 = vadd.f32 %v1956, %v2097
      %v2143 = vadd.f32 %v1957, %v2100
      %v2144 = vadd.f32 %v1958, %v2102
      %v2145 = vadd.f32 %v1959, %v2105
      %v2146 = vadd.f32 %v1960, %v2107
      %v2147 = vadd.f32 %v1961, %v2110
      %v2148 = vadd.f32 %v1962, %v2112
      %v2149 = vadd.f32 %v1963, %v2115
      %v2150 = vadd.f32 %v1964, %v2117
      %s2151 = scalar_lea.vmem %s3, 448
      %v2152 = vld [vmem:[%s2151] sm:$0xf]
      %v2153 = vld [vmem:[%s2151 + $0x4] sm:$0xf]
      %v2154 = vld [vmem:[%s2151 + $0x8] sm:$0xf]
      %v2155 = vld [vmem:[%s2151 + $0xc] sm:$0xf]
      %v2156 = vld [vmem:[%s2151 + $0x10] sm:$0xf]
      %v2157 = vld [vmem:[%s2151 + $0x14] sm:$0xf]
      %v2158 = vld [vmem:[%s2151 + $0x18] sm:$0xf]
      %v2159 = vld [vmem:[%s2151 + $0x1c] sm:$0xf]
      %v2160 = vld [vmem:[%s2151 + $0x20] sm:$0xf]
      %v2161 = vld [vmem:[%s2151 + $0x24] sm:$0xf]
      %v2162 = vld [vmem:[%s2151 + $0x28] sm:$0xf]
      %v2163 = vld [vmem:[%s2151 + $0x2c] sm:$0xf]
      %v2164 = vld [vmem:[%s2151 + $0x30] sm:$0xf]
      %v2165 = vld [vmem:[%s2151 + $0x34] sm:$0xf]
      %v2166 = vld [vmem:[%s2151 + $0x38] sm:$0xf]
      %v2167 = vld [vmem:[%s2151 + $0x3c] sm:$0xf]
      %v2184 = vunpack.c.l.b16 %v2152
      %v2185 = vunpack.c.l.b16 %v2153
      %v2186 = vunpack.c.l.b16 %v2154
      %v2187 = vunpack.c.l.b16 %v2155
      %v2188 = vunpack.c.l.b16 %v2156
      %v2189 = vunpack.c.l.b16 %v2157
      %v2190 = vunpack.c.l.b16 %v2158
      %v2191 = vunpack.c.l.b16 %v2159
      %v2192 = vunpack.c.l.b16 %v2160
      %v2193 = vunpack.c.l.b16 %v2161
      %v2194 = vunpack.c.l.b16 %v2162
      %v2195 = vunpack.c.l.b16 %v2163
      %v2196 = vunpack.c.l.b16 %v2164
      %v2197 = vunpack.c.l.b16 %v2165
      %v2198 = vunpack.c.l.b16 %v2166
      %v2199 = vunpack.c.l.b16 %v2167
      %v2200 = vpack.c.b16 %v2185, %v2184
      %v2201 = vpack.c.b16 %v2187, %v2186
      %v2202 = vpack.c.b16 %v2189, %v2188
      %v2203 = vpack.c.b16 %v2191, %v2190
      %v2204 = vpack.c.b16 %v2193, %v2192
      %v2205 = vpack.c.b16 %v2195, %v2194
      %v2206 = vpack.c.b16 %v2197, %v2196
      %v2207 = vpack.c.b16 %v2199, %v2198
      %2216 = vmatpush.bf16.msra.mxu0 %v2207
      %2217 = vmatpush.bf16.msra.mxu0 %v2206
      %2218 = vmatpush.bf16.msra.mxu0 %v2205
      %2219 = vmatpush.bf16.msra.mxu0 %v2204
      %2220 = vmatpush.bf16.msra.mxu0 %v2203
      %2221 = vmatpush.bf16.msra.mxu0 %v2202
      %2222 = vmatpush.bf16.msra.mxu0 %v2201
      %2223 = vmatpush.bf16.msra.mxu0 %v2200
      %2224 = vmatmul.bf16.gmra.mxu0 %v771
      %v2225 = vpop.f32.mrf.mxu0
      %v2226 = vadd.f32 0.0, %v2225
      %v2227 = vpop.f32.mrf.mxu0
      %v2228 = vadd.f32 0.0, %v2227
      %2229 = vmatmul.bf16.gmra.mxu0 %v772
      %v2230 = vpop.f32.mrf.mxu0
      %v2231 = vadd.f32 0.0, %v2230
      %v2232 = vpop.f32.mrf.mxu0
      %v2233 = vadd.f32 0.0, %v2232
      %2234 = vmatmul.bf16.gmra.mxu0 %v773
      %v2235 = vpop.f32.mrf.mxu0
      %v2236 = vadd.f32 0.0, %v2235
      %v2237 = vpop.f32.mrf.mxu0
      %v2238 = vadd.f32 0.0, %v2237
      %2239 = vmatmul.bf16.gmra.mxu0 %v774
      %v2240 = vpop.f32.mrf.mxu0
      %v2241 = vadd.f32 0.0, %v2240
      %v2242 = vpop.f32.mrf.mxu0
      %v2243 = vadd.f32 0.0, %v2242
      %2244 = vmatmul.bf16.gmra.mxu0 %v775
      %v2245 = vpop.f32.mrf.mxu0
      %v2246 = vadd.f32 0.0, %v2245
      %v2247 = vpop.f32.mrf.mxu0
      %v2248 = vadd.f32 0.0, %v2247
      %2249 = vmatmul.bf16.gmra.mxu0 %v776
      %v2250 = vpop.f32.mrf.mxu0
      %v2251 = vadd.f32 0.0, %v2250
      %v2252 = vpop.f32.mrf.mxu0
      %v2253 = vadd.f32 0.0, %v2252
      %2254 = vmatmul.bf16.gmra.mxu0 %v777
      %v2255 = vpop.f32.mrf.mxu0
      %v2256 = vadd.f32 0.0, %v2255
      %v2257 = vpop.f32.mrf.mxu0
      %v2258 = vadd.f32 0.0, %v2257
      %2259 = vmatmul.bf16.gmra.mxu0 %v778
      %v2260 = vpop.f32.mrf.mxu0
      %v2261 = vadd.f32 0.0, %v2260
      %v2262 = vpop.f32.mrf.mxu0
      %v2263 = vadd.f32 0.0, %v2262
      %2264 = vmatmul.bf16.gmra.mxu0 %v779
      %v2265 = vpop.f32.mrf.mxu0
      %v2266 = vadd.f32 0.0, %v2265
      %v2267 = vpop.f32.mrf.mxu0
      %v2268 = vadd.f32 0.0, %v2267
      %2269 = vmatmul.bf16.gmra.mxu0 %v780
      %v2270 = vpop.f32.mrf.mxu0
      %v2271 = vadd.f32 0.0, %v2270
      %v2272 = vpop.f32.mrf.mxu0
      %v2273 = vadd.f32 0.0, %v2272
      %2274 = vmatmul.bf16.gmra.mxu0 %v781
      %v2275 = vpop.f32.mrf.mxu0
      %v2276 = vadd.f32 0.0, %v2275
      %v2277 = vpop.f32.mrf.mxu0
      %v2278 = vadd.f32 0.0, %v2277
      %2279 = vmatmul.bf16.gmra.mxu0 %v782
      %v2280 = vpop.f32.mrf.mxu0
      %v2281 = vadd.f32 0.0, %v2280
      %v2282 = vpop.f32.mrf.mxu0
      %v2283 = vadd.f32 0.0, %v2282
      %2284 = vmatmul.bf16.gmra.mxu0 %v783
      %v2285 = vpop.f32.mrf.mxu0
      %v2286 = vadd.f32 0.0, %v2285
      %v2287 = vpop.f32.mrf.mxu0
      %v2288 = vadd.f32 0.0, %v2287
      %2289 = vmatmul.bf16.gmra.mxu0 %v784
      %v2290 = vpop.f32.mrf.mxu0
      %v2291 = vadd.f32 0.0, %v2290
      %v2292 = vpop.f32.mrf.mxu0
      %v2293 = vadd.f32 0.0, %v2292
      %2294 = vmatmul.bf16.gmra.mxu0 %v1584
      %v2295 = vpop.f32.mrf.mxu0
      %v2296 = vadd.f32 0.0, %v2295
      %v2297 = vpop.f32.mrf.mxu0
      %v2298 = vadd.f32 0.0, %v2297
      %2299 = vmatmul.bf16.gmra.mxu0 %v769
      %v2300 = vpop.f32.mrf.mxu0
      %v2301 = vadd.f32 0.0, %v2300
      %v2302 = vpop.f32.mrf.mxu0
      %v2303 = vadd.f32 0.0, %v2302
      %2304 = vdwg.mxu0
      %v2305 = vadd.f32 %v2119, %v2226
      %v2306 = vadd.f32 %v2120, %v2228
      %v2307 = vadd.f32 %v2121, %v2231
      %v2308 = vadd.f32 %v2122, %v2233
      %v2309 = vadd.f32 %v2123, %v2236
      %v2310 = vadd.f32 %v2124, %v2238
      %v2311 = vadd.f32 %v2125, %v2241
      %v2312 = vadd.f32 %v2126, %v2243
      %v2313 = vadd.f32 %v2127, %v2246
      %v2314 = vadd.f32 %v2128, %v2248
      %v2315 = vadd.f32 %v2129, %v2251
      %v2316 = vadd.f32 %v2130, %v2253
      %v2317 = vadd.f32 %v2131, %v2256
      %v2318 = vadd.f32 %v2132, %v2258
      %v2319 = vadd.f32 %v2133, %v2261
      %v2320 = vadd.f32 %v2134, %v2263
      %v2321 = vadd.f32 %v2135, %v2266
      %v2322 = vadd.f32 %v2136, %v2268
      %v2323 = vadd.f32 %v2137, %v2271
      %v2324 = vadd.f32 %v2138, %v2273
      %v2325 = vadd.f32 %v2139, %v2276
      %v2326 = vadd.f32 %v2140, %v2278
      %v2327 = vadd.f32 %v2141, %v2281
      %v2328 = vadd.f32 %v2142, %v2283
      %v2329 = vadd.f32 %v2143, %v2286
      %v2330 = vadd.f32 %v2144, %v2288
      %v2331 = vadd.f32 %v2145, %v2291
      %v2332 = vadd.f32 %v2146, %v2293
      %v2333 = vadd.f32 %v2147, %v2296
      %v2334 = vadd.f32 %v2148, %v2298
      %v2335 = vadd.f32 %v2149, %v2301
      %v2336 = vadd.f32 %v2150, %v2303
      %s2337 = scalar_lea.vmem %s3, 512
      %v2338 = vld [vmem:[%s2337] sm:$0xf]
      %v2339 = vld [vmem:[%s2337 + $0x4] sm:$0xf]
      %v2340 = vld [vmem:[%s2337 + $0x8] sm:$0xf]
      %v2341 = vld [vmem:[%s2337 + $0xc] sm:$0xf]
      %v2342 = vld [vmem:[%s2337 + $0x10] sm:$0xf]
      %v2343 = vld [vmem:[%s2337 + $0x14] sm:$0xf]
      %v2344 = vld [vmem:[%s2337 + $0x18] sm:$0xf]
      %v2345 = vld [vmem:[%s2337 + $0x1c] sm:$0xf]
      %v2346 = vld [vmem:[%s2337 + $0x20] sm:$0xf]
      %v2347 = vld [vmem:[%s2337 + $0x24] sm:$0xf]
      %v2348 = vld [vmem:[%s2337 + $0x28] sm:$0xf]
      %v2349 = vld [vmem:[%s2337 + $0x2c] sm:$0xf]
      %v2350 = vld [vmem:[%s2337 + $0x30] sm:$0xf]
      %v2351 = vld [vmem:[%s2337 + $0x34] sm:$0xf]
      %v2352 = vld [vmem:[%s2337 + $0x38] sm:$0xf]
      %v2353 = vld [vmem:[%s2337 + $0x3c] sm:$0xf]
      %v2370 = vunpack.c.l.b16 %v2338
      %v2371 = vunpack.c.l.b16 %v2339
      %v2372 = vunpack.c.l.b16 %v2340
      %v2373 = vunpack.c.l.b16 %v2341
      %v2374 = vunpack.c.l.b16 %v2342
      %v2375 = vunpack.c.l.b16 %v2343
      %v2376 = vunpack.c.l.b16 %v2344
      %v2377 = vunpack.c.l.b16 %v2345
      %v2378 = vunpack.c.l.b16 %v2346
      %v2379 = vunpack.c.l.b16 %v2347
      %v2380 = vunpack.c.l.b16 %v2348
      %v2381 = vunpack.c.l.b16 %v2349
      %v2382 = vunpack.c.l.b16 %v2350
      %v2383 = vunpack.c.l.b16 %v2351
      %v2384 = vunpack.c.l.b16 %v2352
      %v2385 = vunpack.c.l.b16 %v2353
      %v2386 = vpack.c.b16 %v2371, %v2370
      %v2387 = vpack.c.b16 %v2373, %v2372
      %v2388 = vpack.c.b16 %v2375, %v2374
      %v2389 = vpack.c.b16 %v2377, %v2376
      %v2390 = vpack.c.b16 %v2379, %v2378
      %v2391 = vpack.c.b16 %v2381, %v2380
      %v2392 = vpack.c.b16 %v2383, %v2382
      %v2393 = vpack.c.b16 %v2385, %v2384
      %2402 = vmatpush.bf16.msra.mxu0 %v2393
      %2403 = vmatpush.bf16.msra.mxu0 %v2392
      %2404 = vmatpush.bf16.msra.mxu0 %v2391
      %2405 = vmatpush.bf16.msra.mxu0 %v2390
      %2406 = vmatpush.bf16.msra.mxu0 %v2389
      %2407 = vmatpush.bf16.msra.mxu0 %v2388
      %2408 = vmatpush.bf16.msra.mxu0 %v2387
      %2409 = vmatpush.bf16.msra.mxu0 %v2386
      %2410 = vmatmul.bf16.gmra.mxu0 %v1187
      %v2411 = vpop.f32.mrf.mxu0
      %v2412 = vadd.f32 0.0, %v2411
      %v2413 = vpop.f32.mrf.mxu0
      %v2414 = vadd.f32 0.0, %v2413
      %2415 = vmatmul.bf16.gmra.mxu0 %v1188
      %v2416 = vpop.f32.mrf.mxu0
      %v2417 = vadd.f32 0.0, %v2416
      %v2418 = vpop.f32.mrf.mxu0
      %v2419 = vadd.f32 0.0, %v2418
      %2420 = vmatmul.bf16.gmra.mxu0 %v1189
      %v2421 = vpop.f32.mrf.mxu0
      %v2422 = vadd.f32 0.0, %v2421
      %v2423 = vpop.f32.mrf.mxu0
      %v2424 = vadd.f32 0.0, %v2423
      %2425 = vmatmul.bf16.gmra.mxu0 %v1190
      %v2426 = vpop.f32.mrf.mxu0
      %v2427 = vadd.f32 0.0, %v2426
      %v2428 = vpop.f32.mrf.mxu0
      %v2429 = vadd.f32 0.0, %v2428
      %2430 = vmatmul.bf16.gmra.mxu0 %v1191
      %v2431 = vpop.f32.mrf.mxu0
      %v2432 = vadd.f32 0.0, %v2431
      %v2433 = vpop.f32.mrf.mxu0
      %v2434 = vadd.f32 0.0, %v2433
      %2435 = vmatmul.bf16.gmra.mxu0 %v1192
      %v2436 = vpop.f32.mrf.mxu0
      %v2437 = vadd.f32 0.0, %v2436
      %v2438 = vpop.f32.mrf.mxu0
      %v2439 = vadd.f32 0.0, %v2438
      %2440 = vmatmul.bf16.gmra.mxu0 %v1193
      %v2441 = vpop.f32.mrf.mxu0
      %v2442 = vadd.f32 0.0, %v2441
      %v2443 = vpop.f32.mrf.mxu0
      %v2444 = vadd.f32 0.0, %v2443
      %2445 = vmatmul.bf16.gmra.mxu0 %v1194
      %v2446 = vpop.f32.mrf.mxu0
      %v2447 = vadd.f32 0.0, %v2446
      %v2448 = vpop.f32.mrf.mxu0
      %v2449 = vadd.f32 0.0, %v2448
      %2450 = vmatmul.bf16.gmra.mxu0 %v1195
      %v2451 = vpop.f32.mrf.mxu0
      %v2452 = vadd.f32 0.0, %v2451
      %v2453 = vpop.f32.mrf.mxu0
      %v2454 = vadd.f32 0.0, %v2453
      %2455 = vmatmul.bf16.gmra.mxu0 %v1196
      %v2456 = vpop.f32.mrf.mxu0
      %v2457 = vadd.f32 0.0, %v2456
      %v2458 = vpop.f32.mrf.mxu0
      %v2459 = vadd.f32 0.0, %v2458
      %2460 = vmatmul.bf16.gmra.mxu0 %v1197
      %v2461 = vpop.f32.mrf.mxu0
      %v2462 = vadd.f32 0.0, %v2461
      %v2463 = vpop.f32.mrf.mxu0
      %v2464 = vadd.f32 0.0, %v2463
      %2465 = vmatmul.bf16.gmra.mxu0 %v1198
      %v2466 = vpop.f32.mrf.mxu0
      %v2467 = vadd.f32 0.0, %v2466
      %v2468 = vpop.f32.mrf.mxu0
      %v2469 = vadd.f32 0.0, %v2468
      %2470 = vmatmul.bf16.gmra.mxu0 %v1199
      %v2471 = vpop.f32.mrf.mxu0
      %v2472 = vadd.f32 0.0, %v2471
      %v2473 = vpop.f32.mrf.mxu0
      %v2474 = vadd.f32 0.0, %v2473
      %2475 = vmatmul.bf16.gmra.mxu0 %v1200
      %v2476 = vpop.f32.mrf.mxu0
      %v2477 = vadd.f32 0.0, %v2476
      %v2478 = vpop.f32.mrf.mxu0
      %v2479 = vadd.f32 0.0, %v2478
      %2480 = vmatmul.bf16.gmra.mxu0 %v1778
      %v2481 = vpop.f32.mrf.mxu0
      %v2482 = vadd.f32 0.0, %v2481
      %v2483 = vpop.f32.mrf.mxu0
      %v2484 = vadd.f32 0.0, %v2483
      %2485 = vmatmul.bf16.gmra.mxu0 %v1185
      %v2486 = vpop.f32.mrf.mxu0
      %v2487 = vadd.f32 0.0, %v2486
      %v2488 = vpop.f32.mrf.mxu0
      %v2489 = vadd.f32 0.0, %v2488
      %2490 = vdwg.mxu0
      %v2491 = vadd.f32 %v2305, %v2412
      %v2492 = vadd.f32 %v2306, %v2414
      %v2493 = vadd.f32 %v2307, %v2417
      %v2494 = vadd.f32 %v2308, %v2419
      %v2495 = vadd.f32 %v2309, %v2422
      %v2496 = vadd.f32 %v2310, %v2424
      %v2497 = vadd.f32 %v2311, %v2427
      %v2498 = vadd.f32 %v2312, %v2429
      %v2499 = vadd.f32 %v2313, %v2432
      %v2500 = vadd.f32 %v2314, %v2434
      %v2501 = vadd.f32 %v2315, %v2437
      %v2502 = vadd.f32 %v2316, %v2439
      %v2503 = vadd.f32 %v2317, %v2442
      %v2504 = vadd.f32 %v2318, %v2444
      %v2505 = vadd.f32 %v2319, %v2447
      %v2506 = vadd.f32 %v2320, %v2449
      %v2507 = vadd.f32 %v2321, %v2452
      %v2508 = vadd.f32 %v2322, %v2454
      %v2509 = vadd.f32 %v2323, %v2457
      %v2510 = vadd.f32 %v2324, %v2459
      %v2511 = vadd.f32 %v2325, %v2462
      %v2512 = vadd.f32 %v2326, %v2464
      %v2513 = vadd.f32 %v2327, %v2467
      %v2514 = vadd.f32 %v2328, %v2469
      %v2515 = vadd.f32 %v2329, %v2472
      %v2516 = vadd.f32 %v2330, %v2474
      %v2517 = vadd.f32 %v2331, %v2477
      %v2518 = vadd.f32 %v2332, %v2479
      %v2519 = vadd.f32 %v2333, %v2482
      %v2520 = vadd.f32 %v2334, %v2484
      %v2521 = vadd.f32 %v2335, %v2487
      %v2522 = vadd.f32 %v2336, %v2489
      %v2523 = vld [vmem:[%s4] sm:$0x1]
      %v2525 = vperm.slane %v2523, 0
      %v2527 = vadd.f32 %v2491, %v2525
      %v2528 = vadd.f32 %v2492, %v2525
      %v2529 = vadd.f32 %v2493, %v2525
      %v2530 = vadd.f32 %v2494, %v2525
      %v2531 = vadd.f32 %v2495, %v2525
      %v2532 = vadd.f32 %v2496, %v2525
      %v2533 = vadd.f32 %v2497, %v2525
      %v2534 = vadd.f32 %v2498, %v2525
      %v2535 = vadd.f32 %v2499, %v2525
      %v2536 = vadd.f32 %v2500, %v2525
      %v2537 = vadd.f32 %v2501, %v2525
      %v2538 = vadd.f32 %v2502, %v2525
      %v2539 = vadd.f32 %v2503, %v2525
      %v2540 = vadd.f32 %v2504, %v2525
      %v2541 = vadd.f32 %v2505, %v2525
      %v2542 = vadd.f32 %v2506, %v2525
      %v2543 = vadd.f32 %v2507, %v2525
      %v2544 = vadd.f32 %v2508, %v2525
      %v2545 = vadd.f32 %v2509, %v2525
      %v2546 = vadd.f32 %v2510, %v2525
      %v2547 = vadd.f32 %v2511, %v2525
      %v2548 = vadd.f32 %v2512, %v2525
      %v2549 = vadd.f32 %v2513, %v2525
      %v2550 = vadd.f32 %v2514, %v2525
      %v2551 = vadd.f32 %v2515, %v2525
      %v2552 = vadd.f32 %v2516, %v2525
      %v2553 = vadd.f32 %v2517, %v2525
      %v2554 = vadd.f32 %v2518, %v2525
      %v2555 = vadd.f32 %v2519, %v2525
      %v2556 = vadd.f32 %v2520, %v2525
      %v2557 = vadd.f32 %v2521, %v2525
      %v2558 = vadd.f32 %v2522, %v2525
      %v2559 = vtanh.pop %v2527
      %v2560 = vtanh.pop %v2528
      %v2561 = vtanh.pop %v2529
      %v2562 = vtanh.pop %v2530
      %v2563 = vtanh.pop %v2531
      %v2564 = vtanh.pop %v2532
      %v2565 = vtanh.pop %v2533
      %v2566 = vtanh.pop %v2534
      %v2567 = vtanh.pop %v2535
      %v2568 = vtanh.pop %v2536
      %v2569 = vtanh.pop %v2537
      %v2570 = vtanh.pop %v2538
      %v2571 = vtanh.pop %v2539
      %v2572 = vtanh.pop %v2540
      %v2573 = vtanh.pop %v2541
      %v2574 = vtanh.pop %v2542
      %v2575 = vtanh.pop %v2543
      %v2576 = vtanh.pop %v2544
      %v2577 = vtanh.pop %v2545
      %v2578 = vtanh.pop %v2546
      %v2579 = vtanh.pop %v2547
      %v2580 = vtanh.pop %v2548
      %v2581 = vtanh.pop %v2549
      %v2582 = vtanh.pop %v2550
      %v2583 = vtanh.pop %v2551
      %v2584 = vtanh.pop %v2552
      %v2585 = vtanh.pop %v2553
      %v2586 = vtanh.pop %v2554
      %v2587 = vtanh.pop %v2555
      %v2588 = vtanh.pop %v2556
      %v2589 = vtanh.pop %v2557
      %v2590 = vtanh.pop %v2558
      %2591 = vst [vmem:[%s224] sm:$0xff] %v2559
      %2592 = vst [vmem:[%s224 + $0x8] sm:$0xff] %v2560
      %2593 = vst [vmem:[%s224 + $0x10] sm:$0xff] %v2561
      %2594 = vst [vmem:[%s224 + $0x18] sm:$0xff] %v2562
      %2595 = vst [vmem:[%s224 + $0x20] sm:$0xff] %v2563
      %2596 = vst [vmem:[%s224 + $0x28] sm:$0xff] %v2564
      %2597 = vst [vmem:[%s224 + $0x30] sm:$0xff] %v2565
      %2598 = vst [vmem:[%s224 + $0x38] sm:$0xff] %v2566
      %2599 = vst [vmem:[%s224 + $0x40] sm:$0xff] %v2567
      %2600 = vst [vmem:[%s224 + $0x48] sm:$0xff] %v2568
      %2601 = vst [vmem:[%s224 + $0x50] sm:$0xff] %v2569
      %2602 = vst [vmem:[%s224 + $0x58] sm:$0xff] %v2570
      %2603 = vst [vmem:[%s224 + $0x60] sm:$0xff] %v2571
      %2604 = vst [vmem:[%s224 + $0x68] sm:$0xff] %v2572
      %2605 = vst [vmem:[%s224 + $0x70] sm:$0xff] %v2573
      %2606 = vst [vmem:[%s224 + $0x78] sm:$0xff] %v2574
      %2607 = vst [vmem:[%s224 + $0x80] sm:$0xff] %v2575
      %2608 = vst [vmem:[%s224 + $0x88] sm:$0xff] %v2576
      %2609 = vst [vmem:[%s224 + $0x90] sm:$0xff] %v2577
      %2610 = vst [vmem:[%s224 + $0x98] sm:$0xff] %v2578
      %2611 = vst [vmem:[%s224 + $0xa0] sm:$0xff] %v2579
      %2612 = vst [vmem:[%s224 + $0xa8] sm:$0xff] %v2580
      %2613 = vst [vmem:[%s224 + $0xb0] sm:$0xff] %v2581
      %2614 = vst [vmem:[%s224 + $0xb8] sm:$0xff] %v2582
      %2615 = vst [vmem:[%s224 + $0xc0] sm:$0xff] %v2583
      %2616 = vst [vmem:[%s224 + $0xc8] sm:$0xff] %v2584
      %2617 = vst [vmem:[%s224 + $0xd0] sm:$0xff] %v2585
      %2618 = vst [vmem:[%s224 + $0xd8] sm:$0xff] %v2586
      %2619 = vst [vmem:[%s224 + $0xe0] sm:$0xff] %v2587
      %2620 = vst [vmem:[%s224 + $0xe8] sm:$0xff] %v2588
      %2621 = vst [vmem:[%s224 + $0xf0] sm:$0xff] %v2589
      %2622 = vst [vmem:[%s224 + $0xf8] sm:$0xff] %v2590
      %p2623 = scmp.lt.s32.totalorder %s16, 1
      %s2624 = scalar_select %p2623, %s16, 1
      %s2625 = smul.addr %s2624, 32
      %s2626 = smul.addr %s2625, 8
      %s2627 = scalar_lea.vmem %s5, %s2626
      // Predicated region
      $region41: #{generator_forward.9} parent=39 // pred_check
        %p2628 = pneg %p144
      $region42: #{generator_forward.9} parent=39 // pred_check_branch
        %2630 = sbr.rel (%p2628) target = $region44
      $region43: #{generator_forward.9} parent=39 // pred_region
        _
      $region44: #{generator_forward.9} parent=39 // pred_fallthru
        _
    $region40: #{generator_forward.9} parent=5 // pred_fallthru
      _
    %p2631 = scmp.le.s32.totalorder 2, %s11
    // Predicated region
    $region45: #{generator_forward.9} parent=5 // pred_check
      %p2632 = pneg %p2631
    $region46: #{generator_forward.9} parent=5 // pred_check_branch
      %2634 = sbr.rel (%p2632) target = $region48
    $region47: #{generator_forward.9} parent=5 // pred_region
      %s2635 = ssub.s32 %s11, 2
      // Predicated region
      $region49: #{generator_forward.9} parent=47 // pred_check
        %p2636 = pneg %p150
      $region50: #{generator_forward.9} parent=47 // pred_check_branch
        %2638 = sbr.rel (%p2636) target = $region52
      $region51: #{generator_forward.9} parent=47 // pred_region
        %p2639 = scmp.lt.s32.totalorder %s17, 1
        %s2640 = scalar_select %p2639, %s17, 1
        %s2641 = smul.addr %s2640, 32
        %s2642 = smul.addr %s2641, 8
        %s2643 = scalar_lea.vmem %s5, %s2642
      $region52: #{generator_forward.9} parent=47 // pred_fallthru
        _
    $region48: #{generator_forward.9} parent=5 // pred_fallthru
      _
  $region6: #{generator_forward.9} parent=0 // loop_footer
    %s15 = sadd.s32 1, %s11
  $region7: #{generator_forward.9} parent=0 // loop_footer_branch
    %10 = sbr.rel target = $region3
  $region8: #{generator_forward.9} parent=0 // loop_exit
    _

</llo_original>
